<compile_context>
chip_gen: v7x
topology: tpu7x:2x2x1
jax: 0.10.0
libtpu: 0.0.40
codegen_flags: <defaults>
</compile_context>

<pallas_src>
import functools
import math

import jax
import jax.numpy as jnp
from jax.experimental import pallas as pl
from jax.experimental.pallas import tpu as pltpu


# ----------------------------------------------------------------------------
# Fused RCAB kernel (one batch element per grid step)
# ----------------------------------------------------------------------------

def _rcab_kernel(x_ref, w1_ref, b1_ref, w2_ref, b2_ref,
                 cw1_ref, cb1_ref, cw2_ref, cb2_ref,
                 o_ref, *, H, W, C, K):
    """Fused RCAB for one image.

    x_ref  : (1, H, W, C)        NHWC input block
    w1/w2  : (K*K*C, C)          conv weights, row = (ky*K+kx)*C + ci
    b1/b2  : (1, C)
    cw1    : (C, C//r), cb1: (1, C//r)   channel-attention FC1
    cw2    : (C//r, C), cb2: (1, C)      channel-attention FC2
    o_ref  : (1, H, W, C)
    """
    pad = K // 2
    HW = H * W
    f32 = jnp.float32

    def conv_kxk(img, w_ref, b_ref):
        # img: (H, W, C) f32 -> (HW, C) f32, "same" KxK conv + bias.
        # Zero halo built with value-level concatenation (no ref sub-stores).
        xp = img
        if pad:
            zc = jnp.zeros((H, pad, C), f32)
            xp = jnp.concatenate([zc, xp, zc], axis=1)          # (H, W+2p, C)
            zr = jnp.zeros((pad, W + 2 * pad, C), f32)
            xp = jnp.concatenate([zr, xp, zr], axis=0)          # (H+2p, W+2p, C)
        acc = jnp.zeros((HW, C), f32)
        for ky in range(K):
            for kx in range(K):
                # Static, sublane-aligned slices of input tap and weight block.
                tap = xp[ky:ky + H, kx:kx + W, :].reshape(HW, C)
                wk = w_ref[pl.ds((ky * K + kx) * C, C), :]       # (C, C)
                acc = acc + jnp.dot(tap, wk, preferred_element_type=f32)
        return acc + b_ref[...].astype(f32)

    x = x_ref[0].astype(f32)                                     # (H, W, C)

    # --- conv1 (same) + bias + ReLU ---
    t = jnp.maximum(conv_kxk(x, w1_ref, b1_ref), 0.0)            # (HW, C)

    # --- conv2 (same) + bias ---
    res = conv_kxk(t.reshape(H, W, C), w2_ref, b2_ref)           # (HW, C)

    # --- channel attention: avgpool -> FC -> ReLU -> FC -> sigmoid ---
    y = jnp.sum(res, axis=0, keepdims=True) * (1.0 / HW)         # (1, C)
    z = jnp.dot(y, cw1_ref[...].astype(f32),
                preferred_element_type=f32) + cb1_ref[...].astype(f32)
    z = jnp.maximum(z, 0.0)                                      # (1, C//r)
    s = jnp.dot(z, cw2_ref[...].astype(f32),
                preferred_element_type=f32) + cb2_ref[...].astype(f32)
    s = jax.nn.sigmoid(s)                                        # (1, C)

    # --- scale + residual add ---
    out = res * s + x.reshape(HW, C)
    o_ref[0] = out.reshape(H, W, C).astype(o_ref.dtype)


# ----------------------------------------------------------------------------
# Wrapper: NCHW in / NCHW out (PyTorch semantics)
# ----------------------------------------------------------------------------

def rcab_forward(x_nchw, params):
    """RCABlock forward. x_nchw: (N, C, H, W) -> (N, C, H, W)."""
    x = jnp.transpose(x_nchw, (0, 2, 3, 1))                      # NHWC
    N, H, W, C = x.shape
    KKC = params["w1"].shape[0]
    K = int(round(math.sqrt(KKC // C)))
    Cr = params["ca_w1"].shape[-1]

    kernel = functools.partial(_rcab_kernel, H=H, W=W, C=C, K=K)
    out = pl.pallas_call(
        kernel,
        out_shape=jax.ShapeDtypeStruct((N, H, W, C), x.dtype),
        grid_spec=pltpu.PrefetchScalarGridSpec(
            num_scalar_prefetch=0,
            grid=(N,),
            in_specs=[
                pl.BlockSpec((1, H, W, C), lambda n: (n, 0, 0, 0)),
                pl.BlockSpec((KKC, C), lambda n: (0, 0)),
                pl.BlockSpec((1, C), lambda n: (0, 0)),
                pl.BlockSpec((KKC, C), lambda n: (0, 0)),
                pl.BlockSpec((1, C), lambda n: (0, 0)),
                pl.BlockSpec((C, Cr), lambda n: (0, 0)),
                pl.BlockSpec((1, Cr), lambda n: (0, 0)),
                pl.BlockSpec((Cr, C), lambda n: (0, 0)),
                pl.BlockSpec((1, C), lambda n: (0, 0)),
            ],
            out_specs=pl.BlockSpec((1, H, W, C), lambda n: (n, 0, 0, 0)),
        ),
        # batch elements are independent -> "parallel" lets v7x shard over its 2 TCs
        compiler_params=pltpu.CompilerParams(dimension_semantics=("parallel",)),
    )(x, params["w1"], params["b1"], params["w2"], params["b2"],
      params["ca_w1"], params["ca_b1"], params["ca_w2"], params["ca_b2"])
    return jnp.transpose(out, (0, 3, 1, 2))                      # back to NCHW


# ----------------------------------------------------------------------------
# Deterministic parameter construction (PyTorch Conv2d-style uniform init)
# ----------------------------------------------------------------------------

def make_params(key, C=64, K=3, reduction=16):
    Cr = C // reduction
    keys = jax.random.split(key, 8)

    def conv_init(kw, kb, cin, cout, ksz):
        bound = 1.0 / math.sqrt(cin * ksz * ksz)
        w = jax.random.uniform(kw, (ksz, ksz, cin, cout), jnp.float32, -bound, bound)
        b = jax.random.uniform(kb, (1, cout), jnp.float32, -bound, bound)
        return w, b

    w1, b1 = conv_init(keys[0], keys[1], C, C, K)
    w2, b2 = conv_init(keys[2], keys[3], C, C, K)
    cw1, cb1 = conv_init(keys[4], keys[5], C, Cr, 1)
    cw2, cb2 = conv_init(keys[6], keys[7], Cr, C, 1)

    return {
        "w1": w1.reshape(K * K * C, C), "b1": b1,
        "w2": w2.reshape(K * K * C, C), "b2": b2,
        "ca_w1": cw1.reshape(C, Cr), "ca_b1": cb1,
        "ca_w2": cw2.reshape(Cr, C), "ca_b2": cb2,
    }


# ----------------------------------------------------------------------------
# Pure-JAX reference (correctness check for the Pallas path)
# ----------------------------------------------------------------------------

def rcab_ref(x_nchw, p, K=3):
    x = jnp.transpose(x_nchw, (0, 2, 3, 1))                      # NHWC
    C = x.shape[-1]
    pad = K // 2

    def conv(h, w, b, relu=False):
        wk = w.reshape(K, K, C, C)                               # HWIO
        y = jax.lax.conv_general_dilated(
            h, wk, (1, 1), [(pad, pad), (pad, pad)],
            dimension_numbers=("NHWC", "HWIO", "NHWC"),
            precision=jax.lax.Precision.HIGHEST)
        y = y + b.reshape(1, 1, 1, C)
        return jnp.maximum(y, 0.0) if relu else y

    r = conv(x, p["w1"], p["b1"], relu=True)
    r = conv(r, p["w2"], p["b2"])
    y = jnp.mean(r, axis=(1, 2), keepdims=True)                  # (N,1,1,C)
    z = jnp.einsum("nijc,cd->nijd", y, p["ca_w1"],
                   precision=jax.lax.Precision.HIGHEST) + p["ca_b1"].reshape(1, 1, 1, -1)
    z = jnp.maximum(z, 0.0)
    s = jnp.einsum("nijd,dc->nijc", z, p["ca_w2"],
                   precision=jax.lax.Precision.HIGHEST) + p["ca_b2"].reshape(1, 1, 1, -1)
    s = jax.nn.sigmoid(s)
    out = r * s + x
    return jnp.transpose(out, (0, 3, 1, 2))


# ----------------------------------------------------------------------------
# Main
# ----------------------------------------------------------------------------

if __name__ == "__main__":
    key = jax.random.PRNGKey(0)
    kx, kp = jax.random.split(key)

    # num_feature must be >= reduction (=16) for CALayer; 64 is the typical RCAB width.
    N, C, H, W = 2, 64, 16, 16
    x = jax.random.normal(kx, (N, C, H, W), jnp.float32)         # NCHW, like PyTorch
    params = make_params(kp, C=C, K=3, reduction=16)

    out = jax.jit(rcab_forward)(x, params)
    out = jax.block_until_ready(out)
    assert out.shape == (N, C, H, W), out.shape

    ref = rcab_ref(x, params)
    max_err = float(jnp.max(jnp.abs(out - ref)))
    # Tolerance covers MXU default-precision f32 matmuls vs HIGHEST-precision reference.
    assert max_err < 3e-2, f"max abs error {max_err}"

    print("KERNEL_OK")
</pallas_src>

<mosaic_0001>
module attributes {stable_mosaic.version = 11 : i64} {
  func.func @_rcab_kernel(%arg0: i32, %arg1: memref<1x16x16x64xf32, #tpu.memory_space<vmem>>, %arg2: memref<576x64xf32, #tpu.memory_space<vmem>>, %arg3: memref<1x64xf32, #tpu.memory_space<vmem>>, %arg4: memref<576x64xf32, #tpu.memory_space<vmem>>, %arg5: memref<1x64xf32, #tpu.memory_space<vmem>>, %arg6: memref<64x4xf32, #tpu.memory_space<vmem>>, %arg7: memref<1x4xf32, #tpu.memory_space<vmem>>, %arg8: memref<4x64xf32, #tpu.memory_space<vmem>>, %arg9: memref<1x64xf32, #tpu.memory_space<vmem>>, %arg10: memref<1x16x16x64xf32, #tpu.memory_space<vmem>>) attributes {dimension_semantics = [#tpu.dimension_semantics<parallel>], iteration_bounds = array<i64: 2>, scalar_prefetch = 0 : i64, scratch_operands = 0 : i64, tpu.core_type = #tpu.core_type<tc>, window_params = [{transform_indices = @transform_0, window_bounds = array<i64: 1, 16, 16, 64>}, {pipeline_mode = #tpu.pipeline_mode<synchronous>, transform_indices = @transform_1, window_bounds = array<i64: 576, 64>}, {pipeline_mode = #tpu.pipeline_mode<synchronous>, transform_indices = @transform_2, window_bounds = array<i64: 1, 64>}, {pipeline_mode = #tpu.pipeline_mode<synchronous>, transform_indices = @transform_3, window_bounds = array<i64: 576, 64>}, {pipeline_mode = #tpu.pipeline_mode<synchronous>, transform_indices = @transform_4, window_bounds = array<i64: 1, 64>}, {pipeline_mode = #tpu.pipeline_mode<synchronous>, transform_indices = @transform_5, window_bounds = array<i64: 64, 4>}, {pipeline_mode = #tpu.pipeline_mode<synchronous>, transform_indices = @transform_6, window_bounds = array<i64: 1, 4>}, {pipeline_mode = #tpu.pipeline_mode<synchronous>, transform_indices = @transform_7, window_bounds = array<i64: 4, 64>}, {pipeline_mode = #tpu.pipeline_mode<synchronous>, transform_indices = @transform_8, window_bounds = array<i64: 1, 64>}, {transform_indices = @transform_9, window_bounds = array<i64: 1, 16, 16, 64>}]} {
    %c0 = arith.constant 0 : index
    %c0_0 = arith.constant 0 : index
    %c0_1 = arith.constant 0 : index
    %c0_2 = arith.constant 0 : index
    %0 = vector.load %arg1[%c0, %c0_0, %c0_1, %c0_2] : memref<1x16x16x64xf32, #tpu.memory_space<vmem>>, vector<1x16x16x64xf32>
    %1 = vector.shape_cast %0 : vector<1x16x16x64xf32> to vector<16x16x64xf32>
    %cst = arith.constant 0.000000e+00 : f32
    %2 = vector.broadcast %cst : f32 to vector<16x1x64xf32>
    %3 = tpu.concatenate %2, %1, %2 in 1 : vector<16x1x64xf32>, vector<16x16x64xf32>, vector<16x1x64xf32> -> vector<16x18x64xf32>
    %cst_3 = arith.constant 0.000000e+00 : f32
    %4 = vector.broadcast %cst_3 : f32 to vector<1x18x64xf32>
    %5 = tpu.concatenate %4, %3, %4 in 0 : vector<1x18x64xf32>, vector<16x18x64xf32>, vector<1x18x64xf32> -> vector<18x18x64xf32>
    %cst_4 = arith.constant 0.000000e+00 : f32
    %6 = vector.broadcast %cst_4 : f32 to vector<256x64xf32>
    %7 = vector.extract_strided_slice %5 {offsets = [0, 0, 0], sizes = [16, 16, 64], strides = [1, 1, 1]} : vector<18x18x64xf32> to vector<16x16x64xf32>
    %8 = vector.shape_cast %7 : vector<16x16x64xf32> to vector<256x64xf32>
    %c0_5 = arith.constant 0 : index
    %c0_6 = arith.constant 0 : index
    %9 = vector.load %arg2[%c0_5, %c0_6] : memref<576x64xf32, #tpu.memory_space<vmem>>, vector<64x64xf32>
    %cst_7 = arith.constant dense<0.000000e+00> : vector<256x64xf32>
    %10 = tpu.matmul %8, %9, %cst_7 {dimension_numbers = #tpu.dot_dimension_numbers<[1], [0], [0], [1], [0, 0, 1, 1], [], []>} : vector<256x64xf32>, vector<64x64xf32>, vector<256x64xf32> -> vector<256x64xf32>
    %11 = arith.addf %6, %10 : vector<256x64xf32>
    %12 = vector.extract_strided_slice %5 {offsets = [0, 1, 0], sizes = [16, 16, 64], strides = [1, 1, 1]} : vector<18x18x64xf32> to vector<16x16x64xf32>
    %13 = vector.shape_cast %12 : vector<16x16x64xf32> to vector<256x64xf32>
    %c64 = arith.constant 64 : index
    %c0_8 = arith.constant 0 : index
    %14 = vector.load %arg2[%c64, %c0_8] : memref<576x64xf32, #tpu.memory_space<vmem>>, vector<64x64xf32>
    %cst_9 = arith.constant dense<0.000000e+00> : vector<256x64xf32>
    %15 = tpu.matmul %13, %14, %cst_9 {dimension_numbers = #tpu.dot_dimension_numbers<[1], [0], [0], [1], [0, 0, 1, 1], [], []>} : vector<256x64xf32>, vector<64x64xf32>, vector<256x64xf32> -> vector<256x64xf32>
    %16 = arith.addf %11, %15 : vector<256x64xf32>
    %17 = vector.extract_strided_slice %5 {offsets = [0, 2, 0], sizes = [16, 16, 64], strides = [1, 1, 1]} : vector<18x18x64xf32> to vector<16x16x64xf32>
    %18 = vector.shape_cast %17 : vector<16x16x64xf32> to vector<256x64xf32>
    %c128 = arith.constant 128 : index
    %c0_10 = arith.constant 0 : index
    %19 = vector.load %arg2[%c128, %c0_10] : memref<576x64xf32, #tpu.memory_space<vmem>>, vector<64x64xf32>
    %cst_11 = arith.constant dense<0.000000e+00> : vector<256x64xf32>
    %20 = tpu.matmul %18, %19, %cst_11 {dimension_numbers = #tpu.dot_dimension_numbers<[1], [0], [0], [1], [0, 0, 1, 1], [], []>} : vector<256x64xf32>, vector<64x64xf32>, vector<256x64xf32> -> vector<256x64xf32>
    %21 = arith.addf %16, %20 : vector<256x64xf32>
    %22 = vector.extract_strided_slice %5 {offsets = [1, 0, 0], sizes = [16, 16, 64], strides = [1, 1, 1]} : vector<18x18x64xf32> to vector<16x16x64xf32>
    %23 = vector.shape_cast %22 : vector<16x16x64xf32> to vector<256x64xf32>
    %c192 = arith.constant 192 : index
    %c0_12 = arith.constant 0 : index
    %24 = vector.load %arg2[%c192, %c0_12] : memref<576x64xf32, #tpu.memory_space<vmem>>, vector<64x64xf32>
    %cst_13 = arith.constant dense<0.000000e+00> : vector<256x64xf32>
    %25 = tpu.matmul %23, %24, %cst_13 {dimension_numbers = #tpu.dot_dimension_numbers<[1], [0], [0], [1], [0, 0, 1, 1], [], []>} : vector<256x64xf32>, vector<64x64xf32>, vector<256x64xf32> -> vector<256x64xf32>
    %26 = arith.addf %21, %25 : vector<256x64xf32>
    %27 = vector.extract_strided_slice %5 {offsets = [1, 1, 0], sizes = [16, 16, 64], strides = [1, 1, 1]} : vector<18x18x64xf32> to vector<16x16x64xf32>
    %28 = vector.shape_cast %27 : vector<16x16x64xf32> to vector<256x64xf32>
    %c256 = arith.constant 256 : index
    %c0_14 = arith.constant 0 : index
    %29 = vector.load %arg2[%c256, %c0_14] : memref<576x64xf32, #tpu.memory_space<vmem>>, vector<64x64xf32>
    %cst_15 = arith.constant dense<0.000000e+00> : vector<256x64xf32>
    %30 = tpu.matmul %28, %29, %cst_15 {dimension_numbers = #tpu.dot_dimension_numbers<[1], [0], [0], [1], [0, 0, 1, 1], [], []>} : vector<256x64xf32>, vector<64x64xf32>, vector<256x64xf32> -> vector<256x64xf32>
    %31 = arith.addf %26, %30 : vector<256x64xf32>
    %32 = vector.extract_strided_slice %5 {offsets = [1, 2, 0], sizes = [16, 16, 64], strides = [1, 1, 1]} : vector<18x18x64xf32> to vector<16x16x64xf32>
    %33 = vector.shape_cast %32 : vector<16x16x64xf32> to vector<256x64xf32>
    %c320 = arith.constant 320 : index
    %c0_16 = arith.constant 0 : index
    %34 = vector.load %arg2[%c320, %c0_16] : memref<576x64xf32, #tpu.memory_space<vmem>>, vector<64x64xf32>
    %cst_17 = arith.constant dense<0.000000e+00> : vector<256x64xf32>
    %35 = tpu.matmul %33, %34, %cst_17 {dimension_numbers = #tpu.dot_dimension_numbers<[1], [0], [0], [1], [0, 0, 1, 1], [], []>} : vector<256x64xf32>, vector<64x64xf32>, vector<256x64xf32> -> vector<256x64xf32>
    %36 = arith.addf %31, %35 : vector<256x64xf32>
    %37 = vector.extract_strided_slice %5 {offsets = [2, 0, 0], sizes = [16, 16, 64], strides = [1, 1, 1]} : vector<18x18x64xf32> to vector<16x16x64xf32>
    %38 = vector.shape_cast %37 : vector<16x16x64xf32> to vector<256x64xf32>
    %c384 = arith.constant 384 : index
    %c0_18 = arith.constant 0 : index
    %39 = vector.load %arg2[%c384, %c0_18] : memref<576x64xf32, #tpu.memory_space<vmem>>, vector<64x64xf32>
    %cst_19 = arith.constant dense<0.000000e+00> : vector<256x64xf32>
    %40 = tpu.matmul %38, %39, %cst_19 {dimension_numbers = #tpu.dot_dimension_numbers<[1], [0], [0], [1], [0, 0, 1, 1], [], []>} : vector<256x64xf32>, vector<64x64xf32>, vector<256x64xf32> -> vector<256x64xf32>
    %41 = arith.addf %36, %40 : vector<256x64xf32>
    %42 = vector.extract_strided_slice %5 {offsets = [2, 1, 0], sizes = [16, 16, 64], strides = [1, 1, 1]} : vector<18x18x64xf32> to vector<16x16x64xf32>
    %43 = vector.shape_cast %42 : vector<16x16x64xf32> to vector<256x64xf32>
    %c448 = arith.constant 448 : index
    %c0_20 = arith.constant 0 : index
    %44 = vector.load %arg2[%c448, %c0_20] : memref<576x64xf32, #tpu.memory_space<vmem>>, vector<64x64xf32>
    %cst_21 = arith.constant dense<0.000000e+00> : vector<256x64xf32>
    %45 = tpu.matmul %43, %44, %cst_21 {dimension_numbers = #tpu.dot_dimension_numbers<[1], [0], [0], [1], [0, 0, 1, 1], [], []>} : vector<256x64xf32>, vector<64x64xf32>, vector<256x64xf32> -> vector<256x64xf32>
    %46 = arith.addf %41, %45 : vector<256x64xf32>
    %47 = vector.extract_strided_slice %5 {offsets = [2, 2, 0], sizes = [16, 16, 64], strides = [1, 1, 1]} : vector<18x18x64xf32> to vector<16x16x64xf32>
    %48 = vector.shape_cast %47 : vector<16x16x64xf32> to vector<256x64xf32>
    %c512 = arith.constant 512 : index
    %c0_22 = arith.constant 0 : index
    %49 = vector.load %arg2[%c512, %c0_22] : memref<576x64xf32, #tpu.memory_space<vmem>>, vector<64x64xf32>
    %cst_23 = arith.constant dense<0.000000e+00> : vector<256x64xf32>
    %50 = tpu.matmul %48, %49, %cst_23 {dimension_numbers = #tpu.dot_dimension_numbers<[1], [0], [0], [1], [0, 0, 1, 1], [], []>} : vector<256x64xf32>, vector<64x64xf32>, vector<256x64xf32> -> vector<256x64xf32>
    %51 = arith.addf %46, %50 : vector<256x64xf32>
    %c0_24 = arith.constant 0 : index
    %c0_25 = arith.constant 0 : index
    %52 = vector.load %arg3[%c0_24, %c0_25] : memref<1x64xf32, #tpu.memory_space<vmem>>, vector<1x64xf32>
    %53 = vector.broadcast %52 : vector<1x64xf32> to vector<256x64xf32>
    %54 = arith.addf %51, %53 : vector<256x64xf32>
    %cst_26 = arith.constant 0.000000e+00 : f32
    %55 = vector.broadcast %cst_26 : f32 to vector<256x64xf32>
    %56 = arith.maximumf %54, %55 : vector<256x64xf32>
    %57 = vector.shape_cast %56 : vector<256x64xf32> to vector<16x16x64xf32>
    %cst_27 = arith.constant 0.000000e+00 : f32
    %58 = vector.broadcast %cst_27 : f32 to vector<16x1x64xf32>
    %59 = tpu.concatenate %58, %57, %58 in 1 : vector<16x1x64xf32>, vector<16x16x64xf32>, vector<16x1x64xf32> -> vector<16x18x64xf32>
    %cst_28 = arith.constant 0.000000e+00 : f32
    %60 = vector.broadcast %cst_28 : f32 to vector<1x18x64xf32>
    %61 = tpu.concatenate %60, %59, %60 in 0 : vector<1x18x64xf32>, vector<16x18x64xf32>, vector<1x18x64xf32> -> vector<18x18x64xf32>
    %cst_29 = arith.constant 0.000000e+00 : f32
    %62 = vector.broadcast %cst_29 : f32 to vector<256x64xf32>
    %63 = vector.extract_strided_slice %61 {offsets = [0, 0, 0], sizes = [16, 16, 64], strides = [1, 1, 1]} : vector<18x18x64xf32> to vector<16x16x64xf32>
    %64 = vector.shape_cast %63 : vector<16x16x64xf32> to vector<256x64xf32>
    %c0_30 = arith.constant 0 : index
    %c0_31 = arith.constant 0 : index
    %65 = vector.load %arg4[%c0_30, %c0_31] : memref<576x64xf32, #tpu.memory_space<vmem>>, vector<64x64xf32>
    %cst_32 = arith.constant dense<0.000000e+00> : vector<256x64xf32>
    %66 = tpu.matmul %64, %65, %cst_32 {dimension_numbers = #tpu.dot_dimension_numbers<[1], [0], [0], [1], [0, 0, 1, 1], [], []>} : vector<256x64xf32>, vector<64x64xf32>, vector<256x64xf32> -> vector<256x64xf32>
    %67 = arith.addf %62, %66 : vector<256x64xf32>
    %68 = vector.extract_strided_slice %61 {offsets = [0, 1, 0], sizes = [16, 16, 64], strides = [1, 1, 1]} : vector<18x18x64xf32> to vector<16x16x64xf32>
    %69 = vector.shape_cast %68 : vector<16x16x64xf32> to vector<256x64xf32>
    %c64_33 = arith.constant 64 : index
    %c0_34 = arith.constant 0 : index
    %70 = vector.load %arg4[%c64_33, %c0_34] : memref<576x64xf32, #tpu.memory_space<vmem>>, vector<64x64xf32>
    %cst_35 = arith.constant dense<0.000000e+00> : vector<256x64xf32>
    %71 = tpu.matmul %69, %70, %cst_35 {dimension_numbers = #tpu.dot_dimension_numbers<[1], [0], [0], [1], [0, 0, 1, 1], [], []>} : vector<256x64xf32>, vector<64x64xf32>, vector<256x64xf32> -> vector<256x64xf32>
    %72 = arith.addf %67, %71 : vector<256x64xf32>
    %73 = vector.extract_strided_slice %61 {offsets = [0, 2, 0], sizes = [16, 16, 64], strides = [1, 1, 1]} : vector<18x18x64xf32> to vector<16x16x64xf32>
    %74 = vector.shape_cast %73 : vector<16x16x64xf32> to vector<256x64xf32>
    %c128_36 = arith.constant 128 : index
    %c0_37 = arith.constant 0 : index
    %75 = vector.load %arg4[%c128_36, %c0_37] : memref<576x64xf32, #tpu.memory_space<vmem>>, vector<64x64xf32>
    %cst_38 = arith.constant dense<0.000000e+00> : vector<256x64xf32>
    %76 = tpu.matmul %74, %75, %cst_38 {dimension_numbers = #tpu.dot_dimension_numbers<[1], [0], [0], [1], [0, 0, 1, 1], [], []>} : vector<256x64xf32>, vector<64x64xf32>, vector<256x64xf32> -> vector<256x64xf32>
    %77 = arith.addf %72, %76 : vector<256x64xf32>
    %78 = vector.extract_strided_slice %61 {offsets = [1, 0, 0], sizes = [16, 16, 64], strides = [1, 1, 1]} : vector<18x18x64xf32> to vector<16x16x64xf32>
    %79 = vector.shape_cast %78 : vector<16x16x64xf32> to vector<256x64xf32>
    %c192_39 = arith.constant 192 : index
    %c0_40 = arith.constant 0 : index
    %80 = vector.load %arg4[%c192_39, %c0_40] : memref<576x64xf32, #tpu.memory_space<vmem>>, vector<64x64xf32>
    %cst_41 = arith.constant dense<0.000000e+00> : vector<256x64xf32>
    %81 = tpu.matmul %79, %80, %cst_41 {dimension_numbers = #tpu.dot_dimension_numbers<[1], [0], [0], [1], [0, 0, 1, 1], [], []>} : vector<256x64xf32>, vector<64x64xf32>, vector<256x64xf32> -> vector<256x64xf32>
    %82 = arith.addf %77, %81 : vector<256x64xf32>
    %83 = vector.extract_strided_slice %61 {offsets = [1, 1, 0], sizes = [16, 16, 64], strides = [1, 1, 1]} : vector<18x18x64xf32> to vector<16x16x64xf32>
    %84 = vector.shape_cast %83 : vector<16x16x64xf32> to vector<256x64xf32>
    %c256_42 = arith.constant 256 : index
    %c0_43 = arith.constant 0 : index
    %85 = vector.load %arg4[%c256_42, %c0_43] : memref<576x64xf32, #tpu.memory_space<vmem>>, vector<64x64xf32>
    %cst_44 = arith.constant dense<0.000000e+00> : vector<256x64xf32>
    %86 = tpu.matmul %84, %85, %cst_44 {dimension_numbers = #tpu.dot_dimension_numbers<[1], [0], [0], [1], [0, 0, 1, 1], [], []>} : vector<256x64xf32>, vector<64x64xf32>, vector<256x64xf32> -> vector<256x64xf32>
    %87 = arith.addf %82, %86 : vector<256x64xf32>
    %88 = vector.extract_strided_slice %61 {offsets = [1, 2, 0], sizes = [16, 16, 64], strides = [1, 1, 1]} : vector<18x18x64xf32> to vector<16x16x64xf32>
    %89 = vector.shape_cast %88 : vector<16x16x64xf32> to vector<256x64xf32>
    %c320_45 = arith.constant 320 : index
    %c0_46 = arith.constant 0 : index
    %90 = vector.load %arg4[%c320_45, %c0_46] : memref<576x64xf32, #tpu.memory_space<vmem>>, vector<64x64xf32>
    %cst_47 = arith.constant dense<0.000000e+00> : vector<256x64xf32>
    %91 = tpu.matmul %89, %90, %cst_47 {dimension_numbers = #tpu.dot_dimension_numbers<[1], [0], [0], [1], [0, 0, 1, 1], [], []>} : vector<256x64xf32>, vector<64x64xf32>, vector<256x64xf32> -> vector<256x64xf32>
    %92 = arith.addf %87, %91 : vector<256x64xf32>
    %93 = vector.extract_strided_slice %61 {offsets = [2, 0, 0], sizes = [16, 16, 64], strides = [1, 1, 1]} : vector<18x18x64xf32> to vector<16x16x64xf32>
    %94 = vector.shape_cast %93 : vector<16x16x64xf32> to vector<256x64xf32>
    %c384_48 = arith.constant 384 : index
    %c0_49 = arith.constant 0 : index
    %95 = vector.load %arg4[%c384_48, %c0_49] : memref<576x64xf32, #tpu.memory_space<vmem>>, vector<64x64xf32>
    %cst_50 = arith.constant dense<0.000000e+00> : vector<256x64xf32>
    %96 = tpu.matmul %94, %95, %cst_50 {dimension_numbers = #tpu.dot_dimension_numbers<[1], [0], [0], [1], [0, 0, 1, 1], [], []>} : vector<256x64xf32>, vector<64x64xf32>, vector<256x64xf32> -> vector<256x64xf32>
    %97 = arith.addf %92, %96 : vector<256x64xf32>
    %98 = vector.extract_strided_slice %61 {offsets = [2, 1, 0], sizes = [16, 16, 64], strides = [1, 1, 1]} : vector<18x18x64xf32> to vector<16x16x64xf32>
    %99 = vector.shape_cast %98 : vector<16x16x64xf32> to vector<256x64xf32>
    %c448_51 = arith.constant 448 : index
    %c0_52 = arith.constant 0 : index
    %100 = vector.load %arg4[%c448_51, %c0_52] : memref<576x64xf32, #tpu.memory_space<vmem>>, vector<64x64xf32>
    %cst_53 = arith.constant dense<0.000000e+00> : vector<256x64xf32>
    %101 = tpu.matmul %99, %100, %cst_53 {dimension_numbers = #tpu.dot_dimension_numbers<[1], [0], [0], [1], [0, 0, 1, 1], [], []>} : vector<256x64xf32>, vector<64x64xf32>, vector<256x64xf32> -> vector<256x64xf32>
    %102 = arith.addf %97, %101 : vector<256x64xf32>
    %103 = vector.extract_strided_slice %61 {offsets = [2, 2, 0], sizes = [16, 16, 64], strides = [1, 1, 1]} : vector<18x18x64xf32> to vector<16x16x64xf32>
    %104 = vector.shape_cast %103 : vector<16x16x64xf32> to vector<256x64xf32>
    %c512_54 = arith.constant 512 : index
    %c0_55 = arith.constant 0 : index
    %105 = vector.load %arg4[%c512_54, %c0_55] : memref<576x64xf32, #tpu.memory_space<vmem>>, vector<64x64xf32>
    %cst_56 = arith.constant dense<0.000000e+00> : vector<256x64xf32>
    %106 = tpu.matmul %104, %105, %cst_56 {dimension_numbers = #tpu.dot_dimension_numbers<[1], [0], [0], [1], [0, 0, 1, 1], [], []>} : vector<256x64xf32>, vector<64x64xf32>, vector<256x64xf32> -> vector<256x64xf32>
    %107 = arith.addf %102, %106 : vector<256x64xf32>
    %c0_57 = arith.constant 0 : index
    %c0_58 = arith.constant 0 : index
    %108 = vector.load %arg5[%c0_57, %c0_58] : memref<1x64xf32, #tpu.memory_space<vmem>>, vector<1x64xf32>
    %109 = vector.broadcast %108 : vector<1x64xf32> to vector<256x64xf32>
    %110 = arith.addf %107, %109 : vector<256x64xf32>
    %cst_59 = arith.constant dense<0.000000e+00> : vector<64xf32>
    %111 = vector.multi_reduction <add>, %110, %cst_59 [0] : vector<256x64xf32> to vector<64xf32>
    %112 = vector.shape_cast %111 : vector<64xf32> to vector<1x64xf32>
    %cst_60 = arith.constant 3.906250e-03 : f32
    %113 = vector.broadcast %cst_60 : f32 to vector<1x64xf32>
    %114 = arith.mulf %112, %113 : vector<1x64xf32>
    %c0_61 = arith.constant 0 : index
    %c0_62 = arith.constant 0 : index
    %115 = vector.load %arg6[%c0_61, %c0_62] : memref<64x4xf32, #tpu.memory_space<vmem>>, vector<64x4xf32>
    %cst_63 = arith.constant dense<0.000000e+00> : vector<1x4xf32>
    %116 = tpu.matmul %114, %115, %cst_63 {dimension_numbers = #tpu.dot_dimension_numbers<[1], [0], [0], [1], [0, 0, 1, 1], [], []>} : vector<1x64xf32>, vector<64x4xf32>, vector<1x4xf32> -> vector<1x4xf32>
    %c0_64 = arith.constant 0 : index
    %c0_65 = arith.constant 0 : index
    %117 = vector.load %arg7[%c0_64, %c0_65] : memref<1x4xf32, #tpu.memory_space<vmem>>, vector<1x4xf32>
    %118 = arith.addf %116, %117 : vector<1x4xf32>
    %cst_66 = arith.constant 0.000000e+00 : f32
    %119 = vector.broadcast %cst_66 : f32 to vector<1x4xf32>
    %120 = arith.maximumf %118, %119 : vector<1x4xf32>
    %c0_67 = arith.constant 0 : index
    %c0_68 = arith.constant 0 : index
    %121 = vector.load %arg8[%c0_67, %c0_68] : memref<4x64xf32, #tpu.memory_space<vmem>>, vector<4x64xf32>
    %cst_69 = arith.constant dense<0.000000e+00> : vector<1x64xf32>
    %122 = tpu.matmul %120, %121, %cst_69 {dimension_numbers = #tpu.dot_dimension_numbers<[1], [0], [0], [1], [0, 0, 1, 1], [], []>} : vector<1x4xf32>, vector<4x64xf32>, vector<1x64xf32> -> vector<1x64xf32>
    %c0_70 = arith.constant 0 : index
    %c0_71 = arith.constant 0 : index
    %123 = vector.load %arg9[%c0_70, %c0_71] : memref<1x64xf32, #tpu.memory_space<vmem>>, vector<1x64xf32>
    %124 = arith.addf %122, %123 : vector<1x64xf32>
    %125 = arith.negf %124 : vector<1x64xf32>
    %126 = math.exp %125 : vector<1x64xf32>
    %cst_72 = arith.constant 1.000000e+00 : f32
    %127 = vector.broadcast %cst_72 : f32 to vector<1x64xf32>
    %128 = arith.addf %127, %126 : vector<1x64xf32>
    %129 = arith.divf %127, %128 : vector<1x64xf32>
    %130 = vector.broadcast %129 : vector<1x64xf32> to vector<256x64xf32>
    %131 = arith.mulf %110, %130 : vector<256x64xf32>
    %132 = vector.shape_cast %1 : vector<16x16x64xf32> to vector<256x64xf32>
    %133 = arith.addf %131, %132 : vector<256x64xf32>
    %134 = vector.shape_cast %133 : vector<256x64xf32> to vector<16x16x64xf32>
    %c0_73 = arith.constant 0 : index
    %c0_74 = arith.constant 0 : index
    %c0_75 = arith.constant 0 : index
    %c0_76 = arith.constant 0 : index
    %135 = vector.load %arg10[%c0_73, %c0_74, %c0_75, %c0_76] : memref<1x16x16x64xf32, #tpu.memory_space<vmem>>, vector<1x16x16x64xf32>
    %136 = vector.shape_cast %135 : vector<1x16x16x64xf32> to vector<16x16x64xf32>
    %137 = vector.shape_cast %134 : vector<16x16x64xf32> to vector<1x16x16x64xf32>
    tpu.vector_store %arg10[%c0_73, %c0_74, %c0_75, %c0_76], %137 {strides = array<i32>} : memref<1x16x16x64xf32, #tpu.memory_space<vmem>>, vector<1x16x16x64xf32>,
    return
  }
  func.func @transform_0(%arg0: i32) -> (i32, i32, i32, i32) {
    %c0_i32 = arith.constant 0 : i32
    %c0_i32_0 = arith.constant 0 : i32
    %c0_i32_1 = arith.constant 0 : i32
    %c0_i32_2 = arith.constant 0 : i32
    return %arg0, %c0_i32, %c0_i32_0, %c0_i32_1 : i32, i32, i32, i32
  }
  func.func @transform_1(%arg0: i32) -> (i32, i32) {
    %c0_i32 = arith.constant 0 : i32
    %c0_i32_0 = arith.constant 0 : i32
    %c0_i32_1 = arith.constant 0 : i32
    return %c0_i32, %c0_i32_0 : i32, i32
  }
  func.func @transform_2(%arg0: i32) -> (i32, i32) {
    %c0_i32 = arith.constant 0 : i32
    %c0_i32_0 = arith.constant 0 : i32
    %c0_i32_1 = arith.constant 0 : i32
    return %c0_i32, %c0_i32_0 : i32, i32
  }
  func.func @transform_3(%arg0: i32) -> (i32, i32) {
    %c0_i32 = arith.constant 0 : i32
    %c0_i32_0 = arith.constant 0 : i32
    %c0_i32_1 = arith.constant 0 : i32
    return %c0_i32, %c0_i32_0 : i32, i32
  }
  func.func @transform_4(%arg0: i32) -> (i32, i32) {
    %c0_i32 = arith.constant 0 : i32
    %c0_i32_0 = arith.constant 0 : i32
    %c0_i32_1 = arith.constant 0 : i32
    return %c0_i32, %c0_i32_0 : i32, i32
  }
  func.func @transform_5(%arg0: i32) -> (i32, i32) {
    %c0_i32 = arith.constant 0 : i32
    %c0_i32_0 = arith.constant 0 : i32
    %c0_i32_1 = arith.constant 0 : i32
    return %c0_i32, %c0_i32_0 : i32, i32
  }
  func.func @transform_6(%arg0: i32) -> (i32, i32) {
    %c0_i32 = arith.constant 0 : i32
    %c0_i32_0 = arith.constant 0 : i32
    %c0_i32_1 = arith.constant 0 : i32
    return %c0_i32, %c0_i32_0 : i32, i32
  }
  func.func @transform_7(%arg0: i32) -> (i32, i32) {
    %c0_i32 = arith.constant 0 : i32
    %c0_i32_0 = arith.constant 0 : i32
    %c0_i32_1 = arith.constant 0 : i32
    return %c0_i32, %c0_i32_0 : i32, i32
  }
  func.func @transform_8(%arg0: i32) -> (i32, i32) {
    %c0_i32 = arith.constant 0 : i32
    %c0_i32_0 = arith.constant 0 : i32
    %c0_i32_1 = arith.constant 0 : i32
    return %c0_i32, %c0_i32_0 : i32, i32
  }
  func.func @transform_9(%arg0: i32) -> (i32, i32, i32, i32) {
    %c0_i32 = arith.constant 0 : i32
    %c0_i32_0 = arith.constant 0 : i32
    %c0_i32_1 = arith.constant 0 : i32
    %c0_i32_2 = arith.constant 0 : i32
    return %arg0, %c0_i32, %c0_i32_0, %c0_i32_1 : i32, i32, i32, i32
  }
}

</mosaic_0001>

<llo_original>
// kernel: rcab_forward.1
$region0: #{rcab_forward.1}
  #allocation0 [shape = 'u32[]', space=smem, size = 0x4, offset = 0x4, fixed_abs, tag = 'smem constant byte address 0x4 - core index']
  #allocation1 [shape = 'u32[144,128]{1,0:T(1,128)}', space=vmem, size = 0x12000, scoped, tag = 'internal scratch']
  %s0 = inlined_call_operand.vmem [shape: f32[2,16,16,64], index: 0, kind: input, shape index: {}]
  %s1 = inlined_call_operand.vmem [shape: f32[576,64], index: 1, kind: input, shape index: {}]
  %s2 = inlined_call_operand.vmem [shape: f32[1,64], index: 2, kind: input, shape index: {}]
  %s3 = inlined_call_operand.vmem [shape: f32[576,64], index: 3, kind: input, shape index: {}]
  %s4 = inlined_call_operand.vmem [shape: f32[1,64], index: 4, kind: input, shape index: {}]
  %s5 = inlined_call_operand.vmem [shape: f32[64,4], index: 5, kind: input, shape index: {}]
  %s6 = inlined_call_operand.vmem [shape: f32[1,4], index: 6, kind: input, shape index: {}]
  %s7 = inlined_call_operand.vmem [shape: f32[4,64], index: 7, kind: input, shape index: {}]
  %s8 = inlined_call_operand.vmem [shape: f32[1,64], index: 8, kind: input, shape index: {}]
  %s9 = inlined_call_operand.hbm [shape: f32[2,16,16,64], index: 9, kind: output, shape index: {}]
  %s10 = sld [smem:[#allocation0]]
  $region69: #{rcab_forward.1} parent=0
    _
  %s12 = ssub.s32 1, %s10
  %s13 = scalar_select 0, %s12, %s10
  $region1: #{rcab_forward.1} parent=0
    #allocation2 [shape = 'u8[262144]{0}', space=vmem, size = 0x40000, scoped, tag = 'output window, operand 0']
    #allocation3 [shape = 's32[2]{0}', space=sflag, size = 0x8, scoped, tag = 'scoped memory for rcab_forward.1']
    %14 = vsyncpa [#allocation3], 0
    %s15 = scalar_lea.sflag [#allocation3], 1
    %16 = vsyncpa %s15, 0
    loop: start=0, step=1, limit=4
    $region2: #{rcab_forward.1} parent=1 // loop_pre_header
      _
    $region3: #{rcab_forward.1} parent=1 // loop_header
      %s18 = sphi 0, %s22
      %p19 = scmp.ge.s32.totalorder %s18, 4
      %s28 = sphi 0, %s30
      %s31 = sphi 0, %s28
      %s32 = sphi 0, %s31
      %s48 = sphi 0, %s32
      %s52 = sphi 0, %s52
      %s54 = sphi 0, %s52
      %s55 = sphi 0, %s54
      %s69 = sphi 0, %s55
      %s73 = sphi 0, %s73
      %s75 = sphi 0, %s73
      %s76 = sphi 0, %s75
      %s90 = sphi 0, %s76
      %s94 = sphi 0, %s94
      %s96 = sphi 0, %s94
      %s97 = sphi 0, %s96
      %s111 = sphi 0, %s97
      %s115 = sphi 0, %s115
      %s117 = sphi 0, %s115
      %s118 = sphi 0, %s117
      %s132 = sphi 0, %s118
      %s136 = sphi 0, %s136
      %s138 = sphi 0, %s136
      %s139 = sphi 0, %s138
      %s153 = sphi 0, %s139
      %s157 = sphi 0, %s157
      %s159 = sphi 0, %s157
      %s160 = sphi 0, %s159
      %s174 = sphi 0, %s160
      %s178 = sphi 0, %s178
      %s180 = sphi 0, %s178
      %s181 = sphi 0, %s180
      %s195 = sphi 0, %s181
      %s199 = sphi 0, %s199
      %s201 = sphi 0, %s199
      %s202 = sphi 0, %s201
      %s216 = sphi 0, %s202
      %s222 = sphi 0, %s224
      %s225 = sphi 0, %s222
      %s226 = sphi 0, %s225
      %s242 = sphi 0, %s226
    $region4: #{rcab_forward.1} parent=1 // loop_header_branch
      %21 = sbr.rel (%p19) target = $region8
    $region5: #{rcab_forward.1} parent=1 // loop_body
      %s23 = ssub.s32 %s18, 1
      %s24 = ssub.s32 %s18, 2
      %s25 = sadd.s32 %s18, 1
      %s26 = ssub.s32 %s18, %s25
      %p27 = scmp.eq.s32.totalorder %s26, 0
      %s29 = sadd.s32 %s28, 1
      %s30 = scalar_select %p27, %s28, %s29
      %p33 = pneg %p27
      %p34 = scmp.eq.s32.totalorder %s18, 1
      %p35 = por %p33, %p34
      %p36 = scmp.ne.s32.totalorder %s28, %s31
      %p37 = scmp.eq.s32.totalorder %s18, 0
      %p38 = por %p36, %p37
      %p39 = scmp.ne.s32.totalorder %s28, %s31
      %p40 = scmp.eq.s32.totalorder %s23, 1
      %p41 = por %p39, %p40
      %p42 = scmp.ne.s32.totalorder %s31, %s32
      %p43 = scmp.eq.s32.totalorder %s23, 0
      %p44 = por %p42, %p43
      %p45 = scmp.ne.s32.totalorder %s31, %s32
      %p46 = scmp.eq.s32.totalorder %s24, 1
      %p47 = por %p45, %p46
      %p49 = scmp.ne.s32.totalorder %s32, %s48
      %p50 = scmp.eq.s32.totalorder %s24, 0
      %p51 = por %p49, %p50
      %s53 = sadd.s32 %s52, 1
      %p56 = scmp.eq.s32.totalorder %s18, 1
      %p57 = scmp.ne.s32.totalorder %s52, %s54
      %p58 = scmp.eq.s32.totalorder %s18, 0
      %p59 = por %p57, %p58
      %p60 = scmp.ne.s32.totalorder %s52, %s54
      %p61 = scmp.eq.s32.totalorder %s23, 1
      %p62 = por %p60, %p61
      %p63 = scmp.ne.s32.totalorder %s54, %s55
      %p64 = scmp.eq.s32.totalorder %s23, 0
      %p65 = por %p63, %p64
      %p66 = scmp.ne.s32.totalorder %s54, %s55
      %p67 = scmp.eq.s32.totalorder %s24, 1
      %p68 = por %p66, %p67
      %p70 = scmp.ne.s32.totalorder %s55, %s69
      %p71 = scmp.eq.s32.totalorder %s24, 0
      %p72 = por %p70, %p71
      %s74 = sadd.s32 %s73, 1
      %p77 = scmp.eq.s32.totalorder %s18, 1
      %p78 = scmp.ne.s32.totalorder %s73, %s75
      %p79 = scmp.eq.s32.totalorder %s18, 0
      %p80 = por %p78, %p79
      %p81 = scmp.ne.s32.totalorder %s73, %s75
      %p82 = scmp.eq.s32.totalorder %s23, 1
      %p83 = por %p81, %p82
      %p84 = scmp.ne.s32.totalorder %s75, %s76
      %p85 = scmp.eq.s32.totalorder %s23, 0
      %p86 = por %p84, %p85
      %p87 = scmp.ne.s32.totalorder %s75, %s76
      %p88 = scmp.eq.s32.totalorder %s24, 1
      %p89 = por %p87, %p88
      %p91 = scmp.ne.s32.totalorder %s76, %s90
      %p92 = scmp.eq.s32.totalorder %s24, 0
      %p93 = por %p91, %p92
      %s95 = sadd.s32 %s94, 1
      %p98 = scmp.eq.s32.totalorder %s18, 1
      %p99 = scmp.ne.s32.totalorder %s94, %s96
      %p100 = scmp.eq.s32.totalorder %s18, 0
      %p101 = por %p99, %p100
      %p102 = scmp.ne.s32.totalorder %s94, %s96
      %p103 = scmp.eq.s32.totalorder %s23, 1
      %p104 = por %p102, %p103
      %p105 = scmp.ne.s32.totalorder %s96, %s97
      %p106 = scmp.eq.s32.totalorder %s23, 0
      %p107 = por %p105, %p106
      %p108 = scmp.ne.s32.totalorder %s96, %s97
      %p109 = scmp.eq.s32.totalorder %s24, 1
      %p110 = por %p108, %p109
      %p112 = scmp.ne.s32.totalorder %s97, %s111
      %p113 = scmp.eq.s32.totalorder %s24, 0
      %p114 = por %p112, %p113
      %s116 = sadd.s32 %s115, 1
      %p119 = scmp.eq.s32.totalorder %s18, 1
      %p120 = scmp.ne.s32.totalorder %s115, %s117
      %p121 = scmp.eq.s32.totalorder %s18, 0
      %p122 = por %p120, %p121
      %p123 = scmp.ne.s32.totalorder %s115, %s117
      %p124 = scmp.eq.s32.totalorder %s23, 1
      %p125 = por %p123, %p124
      %p126 = scmp.ne.s32.totalorder %s117, %s118
      %p127 = scmp.eq.s32.totalorder %s23, 0
      %p128 = por %p126, %p127
      %p129 = scmp.ne.s32.totalorder %s117, %s118
      %p130 = scmp.eq.s32.totalorder %s24, 1
      %p131 = por %p129, %p130
      %p133 = scmp.ne.s32.totalorder %s118, %s132
      %p134 = scmp.eq.s32.totalorder %s24, 0
      %p135 = por %p133, %p134
      %s137 = sadd.s32 %s136, 1
      %p140 = scmp.eq.s32.totalorder %s18, 1
      %p141 = scmp.ne.s32.totalorder %s136, %s138
      %p142 = scmp.eq.s32.totalorder %s18, 0
      %p143 = por %p141, %p142
      %p144 = scmp.ne.s32.totalorder %s136, %s138
      %p145 = scmp.eq.s32.totalorder %s23, 1
      %p146 = por %p144, %p145
      %p147 = scmp.ne.s32.totalorder %s138, %s139
      %p148 = scmp.eq.s32.totalorder %s23, 0
      %p149 = por %p147, %p148
      %p150 = scmp.ne.s32.totalorder %s138, %s139
      %p151 = scmp.eq.s32.totalorder %s24, 1
      %p152 = por %p150, %p151
      %p154 = scmp.ne.s32.totalorder %s139, %s153
      %p155 = scmp.eq.s32.totalorder %s24, 0
      %p156 = por %p154, %p155
      %s158 = sadd.s32 %s157, 1
      %p161 = scmp.eq.s32.totalorder %s18, 1
      %p162 = scmp.ne.s32.totalorder %s157, %s159
      %p163 = scmp.eq.s32.totalorder %s18, 0
      %p164 = por %p162, %p163
      %p165 = scmp.ne.s32.totalorder %s157, %s159
      %p166 = scmp.eq.s32.totalorder %s23, 1
      %p167 = por %p165, %p166
      %p168 = scmp.ne.s32.totalorder %s159, %s160
      %p169 = scmp.eq.s32.totalorder %s23, 0
      %p170 = por %p168, %p169
      %p171 = scmp.ne.s32.totalorder %s159, %s160
      %p172 = scmp.eq.s32.totalorder %s24, 1
      %p173 = por %p171, %p172
      %p175 = scmp.ne.s32.totalorder %s160, %s174
      %p176 = scmp.eq.s32.totalorder %s24, 0
      %p177 = por %p175, %p176
      %s179 = sadd.s32 %s178, 1
      %p182 = scmp.eq.s32.totalorder %s18, 1
      %p183 = scmp.ne.s32.totalorder %s178, %s180
      %p184 = scmp.eq.s32.totalorder %s18, 0
      %p185 = por %p183, %p184
      %p186 = scmp.ne.s32.totalorder %s178, %s180
      %p187 = scmp.eq.s32.totalorder %s23, 1
      %p188 = por %p186, %p187
      %p189 = scmp.ne.s32.totalorder %s180, %s181
      %p190 = scmp.eq.s32.totalorder %s23, 0
      %p191 = por %p189, %p190
      %p192 = scmp.ne.s32.totalorder %s180, %s181
      %p193 = scmp.eq.s32.totalorder %s24, 1
      %p194 = por %p192, %p193
      %p196 = scmp.ne.s32.totalorder %s181, %s195
      %p197 = scmp.eq.s32.totalorder %s24, 0
      %p198 = por %p196, %p197
      %s200 = sadd.s32 %s199, 1
      %p203 = scmp.eq.s32.totalorder %s18, 1
      %p204 = scmp.ne.s32.totalorder %s199, %s201
      %p205 = scmp.eq.s32.totalorder %s18, 0
      %p206 = por %p204, %p205
      %p207 = scmp.ne.s32.totalorder %s199, %s201
      %p208 = scmp.eq.s32.totalorder %s23, 1
      %p209 = por %p207, %p208
      %p210 = scmp.ne.s32.totalorder %s201, %s202
      %p211 = scmp.eq.s32.totalorder %s23, 0
      %p212 = por %p210, %p211
      %p213 = scmp.ne.s32.totalorder %s201, %s202
      %p214 = scmp.eq.s32.totalorder %s24, 1
      %p215 = por %p213, %p214
      %p217 = scmp.ne.s32.totalorder %s202, %s216
      %p218 = scmp.eq.s32.totalorder %s24, 0
      %p219 = por %p217, %p218
      %s220 = ssub.s32 %s18, %s25
      %p221 = scmp.eq.s32.totalorder %s220, 0
      %s223 = sadd.s32 %s222, 1
      %s224 = scalar_select %p221, %s222, %s223
      %p227 = pneg %p221
      %p228 = scmp.eq.s32.totalorder %s18, 1
      %p229 = por %p227, %p228
      %p230 = scmp.ne.s32.totalorder %s222, %s225
      %p231 = scmp.eq.s32.totalorder %s18, 0
      %p232 = por %p230, %p231
      %p233 = scmp.ne.s32.totalorder %s222, %s225
      %p234 = scmp.eq.s32.totalorder %s23, 1
      %p235 = por %p233, %p234
      %p236 = scmp.ne.s32.totalorder %s225, %s226
      %p237 = scmp.eq.s32.totalorder %s23, 0
      %p238 = por %p236, %p237
      %p239 = scmp.ne.s32.totalorder %s225, %s226
      %p240 = scmp.eq.s32.totalorder %s24, 1
      %p241 = por %p239, %p240
      %p243 = scmp.ne.s32.totalorder %s226, %s242
      %p244 = scmp.eq.s32.totalorder %s24, 0
      %p245 = por %p243, %p244
      %p246 = scmp.le.s32.totalorder 1, %s18
      %p247 = scmp.lt.s32.totalorder %s18, 3
      %p248 = pnand %p246, %p247
      %p249 = pneg %p248
      // Predicated region
      $region9: #{rcab_forward.1} parent=5 // pred_check
        _
      $region10: #{rcab_forward.1} parent=5 // pred_check_branch
        %251 = sbr.rel (%p248) target = $region12
      $region11: #{rcab_forward.1} parent=5 // pred_region
        %s252 = ssub.s32 %s18, 1
        // Predicated region
        $region13: #{rcab_forward.1} parent=11 // pred_check
          %p253 = pneg %p65
        $region14: #{rcab_forward.1} parent=11 // pred_check_branch
          %255 = sbr.rel (%p253) target = $region16
        $region15: #{rcab_forward.1} parent=11 // pred_region
          _
        $region16: #{rcab_forward.1} parent=11 // pred_fallthru
          _
        // Predicated region
        $region17: #{rcab_forward.1} parent=11 // pred_check
          %p256 = pneg %p86
        $region18: #{rcab_forward.1} parent=11 // pred_check_branch
          %258 = sbr.rel (%p256) target = $region20
        $region19: #{rcab_forward.1} parent=11 // pred_region
          _
        $region20: #{rcab_forward.1} parent=11 // pred_fallthru
          _
        // Predicated region
        $region21: #{rcab_forward.1} parent=11 // pred_check
          %p259 = pneg %p107
        $region22: #{rcab_forward.1} parent=11 // pred_check_branch
          %261 = sbr.rel (%p259) target = $region24
        $region23: #{rcab_forward.1} parent=11 // pred_region
          _
        $region24: #{rcab_forward.1} parent=11 // pred_fallthru
          _
        // Predicated region
        $region25: #{rcab_forward.1} parent=11 // pred_check
          %p262 = pneg %p128
        $region26: #{rcab_forward.1} parent=11 // pred_check_branch
          %264 = sbr.rel (%p262) target = $region28
        $region27: #{rcab_forward.1} parent=11 // pred_region
          _
        $region28: #{rcab_forward.1} parent=11 // pred_fallthru
          _
        // Predicated region
        $region29: #{rcab_forward.1} parent=11 // pred_check
          %p265 = pneg %p149
        $region30: #{rcab_forward.1} parent=11 // pred_check_branch
          %267 = sbr.rel (%p265) target = $region32
        $region31: #{rcab_forward.1} parent=11 // pred_region
          _
        $region32: #{rcab_forward.1} parent=11 // pred_fallthru
          _
        // Predicated region
        $region33: #{rcab_forward.1} parent=11 // pred_check
          %p268 = pneg %p170
        $region34: #{rcab_forward.1} parent=11 // pred_check_branch
          %270 = sbr.rel (%p268) target = $region36
        $region35: #{rcab_forward.1} parent=11 // pred_region
          _
        $region36: #{rcab_forward.1} parent=11 // pred_fallthru
          _
        // Predicated region
        $region37: #{rcab_forward.1} parent=11 // pred_check
          %p271 = pneg %p191
        $region38: #{rcab_forward.1} parent=11 // pred_check_branch
          %273 = sbr.rel (%p271) target = $region40
        $region39: #{rcab_forward.1} parent=11 // pred_region
          _
        $region40: #{rcab_forward.1} parent=11 // pred_fallthru
          _
        // Predicated region
        $region41: #{rcab_forward.1} parent=11 // pred_check
          %p274 = pneg %p212
        $region42: #{rcab_forward.1} parent=11 // pred_check_branch
          %276 = sbr.rel (%p274) target = $region44
        $region43: #{rcab_forward.1} parent=11 // pred_region
          _
        $region44: #{rcab_forward.1} parent=11 // pred_fallthru
          _
      $region12: #{rcab_forward.1} parent=5 // pred_fallthru
        _
      %p277 = scmp.lt.s32.totalorder %s18, 2
      // Predicated region
      $region45: #{rcab_forward.1} parent=5 // pred_check
        %p278 = pneg %p277
      $region46: #{rcab_forward.1} parent=5 // pred_check_branch
        %280 = sbr.rel (%p278) target = $region48
      $region47: #{rcab_forward.1} parent=5 // pred_region
        // Predicated region
        $region49: #{rcab_forward.1} parent=47 // pred_check
          %p281 = pneg %p38
        $region50: #{rcab_forward.1} parent=47 // pred_check_branch
          %283 = sbr.rel (%p281) target = $region52
        $region51: #{rcab_forward.1} parent=47 // pred_region
          %p284 = scmp.lt.s32.totalorder %s18, 1
          %s285 = scalar_select %p284, %s18, 1
          %s286 = smul.addr %s285, 32
          %s287 = smul.addr %s286, 8
          %s288 = scalar_lea.vmem %s0, %s287
        $region52: #{rcab_forward.1} parent=47 // pred_fallthru
          _
      $region48: #{rcab_forward.1} parent=5 // pred_fallthru
        _
      %p289 = scmp.le.s32.totalorder 1, %s18
      %p290 = scmp.lt.s32.totalorder %s18, 3
      %p291 = pnand %p289, %p290
      %p292 = pneg %p291
      // Predicated region
      $region53: #{rcab_forward.1} parent=5 // pred_check
        _
      $region54: #{rcab_forward.1} parent=5 // pred_check_branch
        %294 = sbr.rel (%p291) target = $region56
      $region55: #{rcab_forward.1} parent=5 // pred_region
        %s295 = ssub.s32 %s18, 1
        %p296 = scmp.lt.s32.totalorder %s23, 1
        %s297 = scalar_select %p296, %s23, 1
        %s298 = smul.addr %s297, 32
        %s299 = smul.addr %s298, 8
        %s300 = scalar_lea.vmem %s0, %s299
        %p301 = pneg %p44
        %p302 = pneg %p41
        %p303 = pneg %p65
        %p304 = pneg %p62
        %p305 = pneg %p86
        %p306 = pneg %p83
        %p307 = pneg %p107
        %p308 = pneg %p104
        %p309 = pneg %p128
        %p310 = pneg %p125
        %p311 = pneg %p149
        %p312 = pneg %p146
        %p313 = pneg %p170
        %p314 = pneg %p167
        %p315 = pneg %p191
        %p316 = pneg %p188
        %p317 = pneg %p212
        %p318 = pneg %p209
        %p319 = pneg %p238
        %p320 = pneg %p235
        %s321 = sand.u32 %s225, 1
        %s322 = scalar_lea.sflag [#allocation3], %s321
        %s323 = sand.u32 %s225, 1
        %s324 = smul.addr %s323, 256
        %s325 = scalar_lea.vmem [#allocation2], %s324
        %p326 = scmp.lt.s32.totalorder %s23, 1
        %s327 = scalar_select %p326, %s23, 1
        %s328 = smul.addr %s327, 32
        %s329 = smul.addr %s328, 8
        %s330 = scalar_lea.vmem %s0, %s329
        %v331 = vld [vmem:[%s330] sm:$0xff]
        %v332 = vld [vmem:[%s330 + $0x8] sm:$0xff]
        %v333 = vld [vmem:[%s330 + $0x10] sm:$0xff]
        %v334 = vld [vmem:[%s330 + $0x18] sm:$0xff]
        %v335 = vld [vmem:[%s330 + $0x20] sm:$0xff]
        %v336 = vld [vmem:[%s330 + $0x28] sm:$0xff]
        %v337 = vld [vmem:[%s330 + $0x30] sm:$0xff]
        %v338 = vld [vmem:[%s330 + $0x38] sm:$0xff]
        %v339 = vld [vmem:[%s330 + $0x40] sm:$0xff]
        %v340 = vld [vmem:[%s330 + $0x48] sm:$0xff]
        %v341 = vld [vmem:[%s330 + $0x50] sm:$0xff]
        %v342 = vld [vmem:[%s330 + $0x58] sm:$0xff]
        %v343 = vld [vmem:[%s330 + $0x60] sm:$0xff]
        %v344 = vld [vmem:[%s330 + $0x68] sm:$0xff]
        %v345 = vld [vmem:[%s330 + $0x70] sm:$0xff]
        %v346 = vld [vmem:[%s330 + $0x78] sm:$0xff]
        %v347 = vld [vmem:[%s330 + $0x80] sm:$0xff]
        %v348 = vld [vmem:[%s330 + $0x88] sm:$0xff]
        %v349 = vld [vmem:[%s330 + $0x90] sm:$0xff]
        %v350 = vld [vmem:[%s330 + $0x98] sm:$0xff]
        %v351 = vld [vmem:[%s330 + $0xa0] sm:$0xff]
        %v352 = vld [vmem:[%s330 + $0xa8] sm:$0xff]
        %v353 = vld [vmem:[%s330 + $0xb0] sm:$0xff]
        %v354 = vld [vmem:[%s330 + $0xb8] sm:$0xff]
        %v355 = vld [vmem:[%s330 + $0xc0] sm:$0xff]
        %v356 = vld [vmem:[%s330 + $0xc8] sm:$0xff]
        %v357 = vld [vmem:[%s330 + $0xd0] sm:$0xff]
        %v358 = vld [vmem:[%s330 + $0xd8] sm:$0xff]
        %v359 = vld [vmem:[%s330 + $0xe0] sm:$0xff]
        %v360 = vld [vmem:[%s330 + $0xe8] sm:$0xff]
        %v361 = vld [vmem:[%s330 + $0xf0] sm:$0xff]
        %v362 = vld [vmem:[%s330 + $0xf8] sm:$0xff]
        %vm395 = vcmask 1040384
        %v396 = vrot.slane %v331, 7
        %v397 = vrot.slane %v332, 7
        %v398 = vsel %vm395, %v396, %v397
        %v399 = vrot.slane %v333, 7
        %v400 = vrot.slane %v334, 7
        %v401 = vsel %vm395, %v399, %v400
        %v402 = vrot.slane %v335, 7
        %v403 = vrot.slane %v336, 7
        %v404 = vsel %vm395, %v402, %v403
        %v405 = vrot.slane %v337, 7
        %v406 = vrot.slane %v338, 7
        %v407 = vsel %vm395, %v405, %v406
        %v408 = vrot.slane %v339, 7
        %v409 = vrot.slane %v340, 7
        %v410 = vsel %vm395, %v408, %v409
        %v411 = vrot.slane %v341, 7
        %v412 = vrot.slane %v342, 7
        %v413 = vsel %vm395, %v411, %v412
        %v414 = vrot.slane %v343, 7
        %v415 = vrot.slane %v344, 7
        %v416 = vsel %vm395, %v414, %v415
        %v417 = vrot.slane %v345, 7
        %v418 = vrot.slane %v346, 7
        %v419 = vsel %vm395, %v417, %v418
        %v420 = vrot.slane %v347, 7
        %v421 = vrot.slane %v348, 7
        %v422 = vsel %vm395, %v420, %v421
        %v423 = vrot.slane %v349, 7
        %v424 = vrot.slane %v350, 7
        %v425 = vsel %vm395, %v423, %v424
        %v426 = vrot.slane %v351, 7
        %v427 = vrot.slane %v352, 7
        %v428 = vsel %vm395, %v426, %v427
        %v429 = vrot.slane %v353, 7
        %v430 = vrot.slane %v354, 7
        %v431 = vsel %vm395, %v429, %v430
        %v432 = vrot.slane %v355, 7
        %v433 = vrot.slane %v356, 7
        %v434 = vsel %vm395, %v432, %v433
        %v435 = vrot.slane %v357, 7
        %v436 = vrot.slane %v358, 7
        %v437 = vsel %vm395, %v435, %v436
        %v438 = vrot.slane %v359, 7
        %v439 = vrot.slane %v360, 7
        %v440 = vsel %vm395, %v438, %v439
        %v441 = vrot.slane %v361, 7
        %v442 = vrot.slane %v362, 7
        %v443 = vsel %vm395, %v441, %v442
        %v476 = vsel %vm395, 0.0, %v396
        %v477 = vsel %vm395, 0.0, %v399
        %v478 = vsel %vm395, 0.0, %v402
        %v479 = vsel %vm395, 0.0, %v405
        %v480 = vsel %vm395, 0.0, %v408
        %v481 = vsel %vm395, 0.0, %v411
        %v482 = vsel %vm395, 0.0, %v414
        %v483 = vsel %vm395, 0.0, %v417
        %v484 = vsel %vm395, 0.0, %v420
        %v485 = vsel %vm395, 0.0, %v423
        %v486 = vsel %vm395, 0.0, %v426
        %v487 = vsel %vm395, 0.0, %v429
        %v488 = vsel %vm395, 0.0, %v432
        %v489 = vsel %vm395, 0.0, %v435
        %v490 = vsel %vm395, 0.0, %v438
        %v491 = vsel %vm395, 0.0, %v441
        %v492 = vsel %vm395, %v397, 0.0
        %v493 = vsel %vm395, %v400, 0.0
        %v494 = vsel %vm395, %v403, 0.0
        %v495 = vsel %vm395, %v406, 0.0
        %v496 = vsel %vm395, %v409, 0.0
        %v497 = vsel %vm395, %v412, 0.0
        %v498 = vsel %vm395, %v415, 0.0
        %v499 = vsel %vm395, %v418, 0.0
        %v500 = vsel %vm395, %v421, 0.0
        %v501 = vsel %vm395, %v424, 0.0
        %v502 = vsel %vm395, %v427, 0.0
        %v503 = vsel %vm395, %v430, 0.0
        %v504 = vsel %vm395, %v433, 0.0
        %v505 = vsel %vm395, %v436, 0.0
        %v506 = vsel %vm395, %v439, 0.0
        %v507 = vsel %vm395, %v442, 0.0
        %v508 = vld [vmem:[%s1] sm:$0xff]
        %v509 = vld [vmem:[%s1 + $0x8] sm:$0xff]
        %v510 = vld [vmem:[%s1 + $0x10] sm:$0xff]
        %v511 = vld [vmem:[%s1 + $0x18] sm:$0xff]
        %v512 = vld [vmem:[%s1 + $0x20] sm:$0xff]
        %v513 = vld [vmem:[%s1 + $0x28] sm:$0xff]
        %v514 = vld [vmem:[%s1 + $0x30] sm:$0xff]
        %v515 = vld [vmem:[%s1 + $0x38] sm:$0xff]
        %vm547 = vcmask 1046528
        %v548 = vrot.slane 0.0, 1
        %v549 = vsel %vm547, %v548, %v548
        %v550 = vrot.slane %v476, 1
        %v551 = vrot.slane %v398, 1
        %v552 = vsel %vm547, %v550, %v551
        %v553 = vrot.slane %v492, 1
        %v554 = vsel %vm547, %v551, %v553
        %v555 = vrot.slane %v477, 1
        %v556 = vrot.slane %v401, 1
        %v557 = vsel %vm547, %v555, %v556
        %v558 = vrot.slane %v493, 1
        %v559 = vsel %vm547, %v556, %v558
        %v560 = vrot.slane %v478, 1
        %v561 = vrot.slane %v404, 1
        %v562 = vsel %vm547, %v560, %v561
        %v563 = vrot.slane %v494, 1
        %v564 = vsel %vm547, %v561, %v563
        %v565 = vrot.slane %v479, 1
        %v566 = vrot.slane %v407, 1
        %v567 = vsel %vm547, %v565, %v566
        %v568 = vrot.slane %v495, 1
        %v569 = vsel %vm547, %v566, %v568
        %v570 = vrot.slane %v480, 1
        %v571 = vrot.slane %v410, 1
        %v572 = vsel %vm547, %v570, %v571
        %v573 = vrot.slane %v496, 1
        %v574 = vsel %vm547, %v571, %v573
        %v575 = vrot.slane %v481, 1
        %v576 = vrot.slane %v413, 1
        %v577 = vsel %vm547, %v575, %v576
        %v578 = vrot.slane %v497, 1
        %v579 = vsel %vm547, %v576, %v578
        %v580 = vrot.slane %v482, 1
        %v581 = vrot.slane %v416, 1
        %v582 = vsel %vm547, %v580, %v581
        %v583 = vrot.slane %v498, 1
        %v584 = vsel %vm547, %v581, %v583
        %v585 = vrot.slane %v483, 1
        %v586 = vrot.slane %v419, 1
        %v587 = vsel %vm547, %v585, %v586
        %v588 = vrot.slane %v499, 1
        %v589 = vsel %vm547, %v586, %v588
        %v590 = vrot.slane %v484, 1
        %v591 = vrot.slane %v422, 1
        %v592 = vsel %vm547, %v590, %v591
        %v593 = vrot.slane %v500, 1
        %v594 = vsel %vm547, %v591, %v593
        %v595 = vrot.slane %v485, 1
        %v596 = vrot.slane %v425, 1
        %v597 = vsel %vm547, %v595, %v596
        %v598 = vrot.slane %v501, 1
        %v599 = vsel %vm547, %v596, %v598
        %v600 = vrot.slane %v486, 1
        %v601 = vrot.slane %v428, 1
        %v602 = vsel %vm547, %v600, %v601
        %v603 = vrot.slane %v502, 1
        %v604 = vsel %vm547, %v601, %v603
        %v605 = vrot.slane %v487, 1
        %v606 = vrot.slane %v431, 1
        %v607 = vsel %vm547, %v605, %v606
        %v608 = vrot.slane %v503, 1
        %v609 = vsel %vm547, %v606, %v608
        %v610 = vrot.slane %v488, 1
        %v611 = vrot.slane %v434, 1
        %v612 = vsel %vm547, %v610, %v611
        %v613 = vrot.slane %v504, 1
        %v614 = vsel %vm547, %v611, %v613
        %v615 = vrot.slane %v489, 1
        %v616 = vrot.slane %v437, 1
        %v617 = vsel %vm547, %v615, %v616
        %v618 = vrot.slane %v505, 1
        %v619 = vsel %vm547, %v616, %v618
        %v620 = vrot.slane %v490, 1
        %v621 = vrot.slane %v440, 1
        %v622 = vsel %vm547, %v620, %v621
        %v623 = vrot.slane %v506, 1
        %v624 = vsel %vm547, %v621, %v623
        %v625 = vld [vmem:[%s1 + $0x40] sm:$0xff]
        %v626 = vld [vmem:[%s1 + $0x48] sm:$0xff]
        %v627 = vld [vmem:[%s1 + $0x50] sm:$0xff]
        %v628 = vld [vmem:[%s1 + $0x58] sm:$0xff]
        %v629 = vld [vmem:[%s1 + $0x60] sm:$0xff]
        %v630 = vld [vmem:[%s1 + $0x68] sm:$0xff]
        %v631 = vld [vmem:[%s1 + $0x70] sm:$0xff]
        %v632 = vld [vmem:[%s1 + $0x78] sm:$0xff]
        %vm633 = vcmask 523264
        %v634 = vsel %vm633, %v549, 0
        %v636 = vsel %vm633, %v552, 0
        %v638 = vsel %vm633, %v554, 0
        %v640 = vsel %vm633, %v557, 0
        %v642 = vsel %vm633, %v559, 0
        %v644 = vsel %vm633, %v562, 0
        %v646 = vsel %vm633, %v564, 0
        %v648 = vsel %vm633, %v567, 0
        %v650 = vsel %vm633, %v569, 0
        %v652 = vsel %vm633, %v572, 0
        %v654 = vsel %vm633, %v574, 0
        %v656 = vsel %vm633, %v577, 0
        %v658 = vsel %vm633, %v579, 0
        %v660 = vsel %vm633, %v582, 0
        %v662 = vsel %vm633, %v584, 0
        %v664 = vsel %vm633, %v587, 0
        %v666 = vsel %vm633, %v589, 0
        %v668 = vsel %vm633, %v592, 0
        %v670 = vsel %vm633, %v594, 0
        %v672 = vsel %vm633, %v597, 0
        %v674 = vsel %vm633, %v599, 0
        %v676 = vsel %vm633, %v602, 0
        %v678 = vsel %vm633, %v604, 0
        %v680 = vsel %vm633, %v607, 0
        %v682 = vsel %vm633, %v609, 0
        %v684 = vsel %vm633, %v612, 0
        %v686 = vsel %vm633, %v614, 0
        %v688 = vsel %vm633, %v617, 0
        %v690 = vsel %vm633, %v619, 0
        %v692 = vsel %vm633, %v622, 0
        %v694 = vsel %vm633, %v624, 0
        %696 = vmatprep.subr.mxu0 0.0
        %697 = vmatpush1.msra.mxu0 %v625
        %698 = vmatprep.subr.mxu0 0.0
        %699 = vmatpush1.msra.mxu0 %v626
        %700 = vmatprep.subr.mxu0 0.0
        %701 = vmatpush1.msra.mxu0 %v627
        %702 = vmatprep.subr.mxu0 0.0
        %703 = vmatpush1.msra.mxu0 %v628
        %704 = vmatprep.subr.mxu0 0.0
        %705 = vmatpush1.msra.mxu0 %v629
        %706 = vmatprep.subr.mxu0 0.0
        %707 = vmatpush1.msra.mxu0 %v630
        %708 = vmatprep.subr.mxu0 0.0
        %709 = vmatpush1.msra.mxu0 %v631
        %710 = vmatprep.subr.mxu0 0.0
        %711 = vmatpush1.msra.mxu0 %v632
        %712 = vmatprep.subr.mxu0 0.0
        %713 = vmatpush1.msra.mxu0 0.0
        %714 = vmatprep.subr.mxu0 0.0
        %715 = vmatpush1.msra.mxu0 0.0
        %716 = vmatprep.subr.mxu0 0.0
        %717 = vmatpush1.msra.mxu0 0.0
        %718 = vmatprep.subr.mxu0 0.0
        %719 = vmatpush1.msra.mxu0 0.0
        %720 = vmatprep.subr.mxu0 0.0
        %721 = vmatpush1.msra.mxu0 0.0
        %722 = vmatprep.subr.mxu0 0.0
        %723 = vmatpush1.msra.mxu0 0.0
        %724 = vmatprep.subr.mxu0 0.0
        %725 = vmatpush1.msra.mxu0 0.0
        %726 = vmatprep.subr.mxu0 0.0
        %727 = vmatpush1.msra.mxu0 0.0
        %728 = vmatprep.subr.mxu0 0.0
        %729 = vmatpush1.msra.mxu0 0.0
        %730 = vmatprep.subr.mxu0 0.0
        %731 = vmatpush1.msra.mxu0 0.0
        %732 = vmatprep.subr.mxu0 0.0
        %733 = vmatpush1.msra.mxu0 0.0
        %734 = vmatprep.subr.mxu0 0.0
        %735 = vmatpush1.msra.mxu0 0.0
        %736 = vmatprep.subr.mxu0 0.0
        %737 = vmatpush1.msra.mxu0 0.0
        %738 = vmatprep.subr.mxu0 0.0
        %739 = vmatpush1.msra.mxu0 0.0
        %740 = vmatprep.subr.mxu0 0.0
        %741 = vmatpush1.msra.mxu0 0.0
        %742 = vmatprep.subr.mxu0 0.0
        %743 = vmatpush1.msra.mxu0 0.0
        %744 = vmatprep.subr.mxu0 0.0
        %745 = vmatpush1.msra.mxu0 0.0
        %746 = vmatprep.subr.mxu0 0.0
        %747 = vmatpush1.msra.mxu0 0.0
        %748 = vmatprep.subr.mxu0 0.0
        %749 = vmatpush1.msra.mxu0 0.0
        %750 = vmatprep.subr.mxu0 0.0
        %751 = vmatpush1.msra.mxu0 0.0
        %752 = vmatprep.subr.mxu0 0.0
        %753 = vmatpush1.msra.mxu0 0.0
        %754 = vmatprep.subr.mxu0 0.0
        %755 = vmatpush1.msra.mxu0 0.0
        %756 = vmatprep.subr.mxu0 0.0
        %757 = vmatpush1.msra.mxu0 0.0
        %758 = vmatprep.subr.mxu0 0.0
        %759 = vmatpush1.msra.mxu0 0.0
        %760 = vmatprep.mubr.f32.mxu0 0.0
        %761 = vmatmul.mubr.f32.gmra.mrb[0].mxu0 %v634
        %v762 = vpop.f32.mrb[0].mxu0
        %v763 = vadd.f32 0.0, %v762
        %v764 = vpop.f32.mrb[0].mxu0
        %765 = vmatprep.mubr.f32.mxu0 0.0
        %766 = vmatmul.mubr.f32.gmra.mrb[0].mxu0 %v634
        %v767 = vpop.f32.mrb[0].mxu0
        %v768 = vadd.f32 0.0, %v767
        %v769 = vpop.f32.mrb[0].mxu0
        %770 = vmatprep.mubr.f32.mxu0 0.0
        %771 = vmatmul.mubr.f32.gmra.mrb[0].mxu0 %v636
        %v772 = vpop.f32.mrb[0].mxu0
        %v773 = vadd.f32 0.0, %v772
        %v774 = vpop.f32.mrb[0].mxu0
        %775 = vmatprep.mubr.f32.mxu0 0.0
        %776 = vmatmul.mubr.f32.gmra.mrb[0].mxu0 %v638
        %v777 = vpop.f32.mrb[0].mxu0
        %v778 = vadd.f32 0.0, %v777
        %v779 = vpop.f32.mrb[0].mxu0
        %780 = vmatprep.mubr.f32.mxu0 0.0
        %781 = vmatmul.mubr.f32.gmra.mrb[0].mxu0 %v640
        %v782 = vpop.f32.mrb[0].mxu0
        %v783 = vadd.f32 0.0, %v782
        %v784 = vpop.f32.mrb[0].mxu0
        %785 = vmatprep.mubr.f32.mxu0 0.0
        %786 = vmatmul.mubr.f32.gmra.mrb[0].mxu0 %v642
        %v787 = vpop.f32.mrb[0].mxu0
        %v788 = vadd.f32 0.0, %v787
        %v789 = vpop.f32.mrb[0].mxu0
        %790 = vmatprep.mubr.f32.mxu0 0.0
        %791 = vmatmul.mubr.f32.gmra.mrb[0].mxu0 %v644
        %v792 = vpop.f32.mrb[0].mxu0
        %v793 = vadd.f32 0.0, %v792
        %v794 = vpop.f32.mrb[0].mxu0
        %795 = vmatprep.mubr.f32.mxu0 0.0
        %796 = vmatmul.mubr.f32.gmra.mrb[0].mxu0 %v646
        %v797 = vpop.f32.mrb[0].mxu0
        %v798 = vadd.f32 0.0, %v797
        %v799 = vpop.f32.mrb[0].mxu0
        %800 = vmatprep.mubr.f32.mxu0 0.0
        %801 = vmatmul.mubr.f32.gmra.mrb[0].mxu0 %v648
        %v802 = vpop.f32.mrb[0].mxu0
        %v803 = vadd.f32 0.0, %v802
        %v804 = vpop.f32.mrb[0].mxu0
        %805 = vmatprep.mubr.f32.mxu0 0.0
        %806 = vmatmul.mubr.f32.gmra.mrb[0].mxu0 %v650
        %v807 = vpop.f32.mrb[0].mxu0
        %v808 = vadd.f32 0.0, %v807
        %v809 = vpop.f32.mrb[0].mxu0
        %810 = vmatprep.mubr.f32.mxu0 0.0
        %811 = vmatmul.mubr.f32.gmra.mrb[0].mxu0 %v652
        %v812 = vpop.f32.mrb[0].mxu0
        %v813 = vadd.f32 0.0, %v812
        %v814 = vpop.f32.mrb[0].mxu0
        %815 = vmatprep.mubr.f32.mxu0 0.0
        %816 = vmatmul.mubr.f32.gmra.mrb[0].mxu0 %v654
        %v817 = vpop.f32.mrb[0].mxu0
        %v818 = vadd.f32 0.0, %v817
        %v819 = vpop.f32.mrb[0].mxu0
        %820 = vmatprep.mubr.f32.mxu0 0.0
        %821 = vmatmul.mubr.f32.gmra.mrb[0].mxu0 %v656
        %v822 = vpop.f32.mrb[0].mxu0
        %v823 = vadd.f32 0.0, %v822
        %v824 = vpop.f32.mrb[0].mxu0
        %825 = vmatprep.mubr.f32.mxu0 0.0
        %826 = vmatmul.mubr.f32.gmra.mrb[0].mxu0 %v658
        %v827 = vpop.f32.mrb[0].mxu0
        %v828 = vadd.f32 0.0, %v827
        %v829 = vpop.f32.mrb[0].mxu0
        %830 = vmatprep.mubr.f32.mxu0 0.0
        %831 = vmatmul.mubr.f32.gmra.mrb[0].mxu0 %v660
        %v832 = vpop.f32.mrb[0].mxu0
        %v833 = vadd.f32 0.0, %v832
        %v834 = vpop.f32.mrb[0].mxu0
        %835 = vmatprep.mubr.f32.mxu0 0.0
        %836 = vmatmul.mubr.f32.gmra.mrb[0].mxu0 %v662
        %v837 = vpop.f32.mrb[0].mxu0
        %v838 = vadd.f32 0.0, %v837
        %v839 = vpop.f32.mrb[0].mxu0
        %840 = vmatprep.mubr.f32.mxu0 0.0
        %841 = vmatmul.mubr.f32.gmra.mrb[0].mxu0 %v664
        %v842 = vpop.f32.mrb[0].mxu0
        %v843 = vadd.f32 0.0, %v842
        %v844 = vpop.f32.mrb[0].mxu0
        %845 = vmatprep.mubr.f32.mxu0 0.0
        %846 = vmatmul.mubr.f32.gmra.mrb[0].mxu0 %v666
        %v847 = vpop.f32.mrb[0].mxu0
        %v848 = vadd.f32 0.0, %v847
        %v849 = vpop.f32.mrb[0].mxu0
        %850 = vmatprep.mubr.f32.mxu0 0.0
        %851 = vmatmul.mubr.f32.gmra.mrb[0].mxu0 %v668
        %v852 = vpop.f32.mrb[0].mxu0
        %v853 = vadd.f32 0.0, %v852
        %v854 = vpop.f32.mrb[0].mxu0
        %855 = vmatprep.mubr.f32.mxu0 0.0
        %856 = vmatmul.mubr.f32.gmra.mrb[0].mxu0 %v670
        %v857 = vpop.f32.mrb[0].mxu0
        %v858 = vadd.f32 0.0, %v857
        %v859 = vpop.f32.mrb[0].mxu0
        %860 = vmatprep.mubr.f32.mxu0 0.0
        %861 = vmatmul.mubr.f32.gmra.mrb[0].mxu0 %v672
        %v862 = vpop.f32.mrb[0].mxu0
        %v863 = vadd.f32 0.0, %v862
        %v864 = vpop.f32.mrb[0].mxu0
        %865 = vmatprep.mubr.f32.mxu0 0.0
        %866 = vmatmul.mubr.f32.gmra.mrb[0].mxu0 %v674
        %v867 = vpop.f32.mrb[0].mxu0
        %v868 = vadd.f32 0.0, %v867
        %v869 = vpop.f32.mrb[0].mxu0
        %870 = vmatprep.mubr.f32.mxu0 0.0
        %871 = vmatmul.mubr.f32.gmra.mrb[0].mxu0 %v676
        %v872 = vpop.f32.mrb[0].mxu0
        %v873 = vadd.f32 0.0, %v872
        %v874 = vpop.f32.mrb[0].mxu0
        %875 = vmatprep.mubr.f32.mxu0 0.0
        %876 = vmatmul.mubr.f32.gmra.mrb[0].mxu0 %v678
        %v877 = vpop.f32.mrb[0].mxu0
        %v878 = vadd.f32 0.0, %v877
        %v879 = vpop.f32.mrb[0].mxu0
        %880 = vmatprep.mubr.f32.mxu0 0.0
        %881 = vmatmul.mubr.f32.gmra.mrb[0].mxu0 %v680
        %v882 = vpop.f32.mrb[0].mxu0
        %v883 = vadd.f32 0.0, %v882
        %v884 = vpop.f32.mrb[0].mxu0
        %885 = vmatprep.mubr.f32.mxu0 0.0
        %886 = vmatmul.mubr.f32.gmra.mrb[0].mxu0 %v682
        %v887 = vpop.f32.mrb[0].mxu0
        %v888 = vadd.f32 0.0, %v887
        %v889 = vpop.f32.mrb[0].mxu0
        %890 = vmatprep.mubr.f32.mxu0 0.0
        %891 = vmatmul.mubr.f32.gmra.mrb[0].mxu0 %v684
        %v892 = vpop.f32.mrb[0].mxu0
        %v893 = vadd.f32 0.0, %v892
        %v894 = vpop.f32.mrb[0].mxu0
        %895 = vmatprep.mubr.f32.mxu0 0.0
        %896 = vmatmul.mubr.f32.gmra.mrb[0].mxu0 %v686
        %v897 = vpop.f32.mrb[0].mxu0
        %v898 = vadd.f32 0.0, %v897
        %v899 = vpop.f32.mrb[0].mxu0
        %900 = vmatprep.mubr.f32.mxu0 0.0
        %901 = vmatmul.mubr.f32.gmra.mrb[0].mxu0 %v688
        %v902 = vpop.f32.mrb[0].mxu0
        %v903 = vadd.f32 0.0, %v902
        %v904 = vpop.f32.mrb[0].mxu0
        %905 = vmatprep.mubr.f32.mxu0 0.0
        %906 = vmatmul.mubr.f32.gmra.mrb[0].mxu0 %v690
        %v907 = vpop.f32.mrb[0].mxu0
        %v908 = vadd.f32 0.0, %v907
        %v909 = vpop.f32.mrb[0].mxu0
        %910 = vmatprep.mubr.f32.mxu0 0.0
        %911 = vmatmul.mubr.f32.gmra.mrb[0].mxu0 %v692
        %v912 = vpop.f32.mrb[0].mxu0
        %v913 = vadd.f32 0.0, %v912
        %v914 = vpop.f32.mrb[0].mxu0
        %915 = vmatprep.mubr.f32.mxu0 0.0
        %916 = vmatmul.mubr.f32.gmra.mrb[0].mxu0 %v694
        %v917 = vpop.f32.mrb[0].mxu0
        %v918 = vadd.f32 0.0, %v917
        %v919 = vpop.f32.mrb[0].mxu0
        %920 = vdwg.mxu0
        %v921 = vsel %vm633, 0.0, 0
        %v923 = vsel %vm633, %v476, 0
        %v925 = vsel %vm633, %v398, 0
        %v927 = vsel %vm633, %v477, 0
        %v929 = vsel %vm633, %v401, 0
        %v931 = vsel %vm633, %v478, 0
        %v933 = vsel %vm633, %v404, 0
        %v935 = vsel %vm633, %v479, 0
        %v937 = vsel %vm633, %v407, 0
        %v939 = vsel %vm633, %v480, 0
        %v941 = vsel %vm633, %v410, 0
        %v943 = vsel %vm633, %v481, 0
        %v945 = vsel %vm633, %v413, 0
        %v947 = vsel %vm633, %v482, 0
        %v949 = vsel %vm633, %v416, 0
        %v951 = vsel %vm633, %v483, 0
        %v953 = vsel %vm633, %v419, 0
        %v955 = vsel %vm633, %v484, 0
        %v957 = vsel %vm633, %v422, 0
        %v959 = vsel %vm633, %v485, 0
        %v961 = vsel %vm633, %v425, 0
        %v963 = vsel %vm633, %v486, 0
        %v965 = vsel %vm633, %v428, 0
        %v967 = vsel %vm633, %v487, 0
        %v969 = vsel %vm633, %v431, 0
        %v971 = vsel %vm633, %v488, 0
        %v973 = vsel %vm633, %v434, 0
        %v975 = vsel %vm633, %v489, 0
        %v977 = vsel %vm633, %v437, 0
        %v979 = vsel %vm633, %v490, 0
        %v981 = vsel %vm633, %v440, 0
        %983 = vmatprep.subr.mxu0 0.0
        %984 = vmatpush1.msra.mxu0 %v508
        %985 = vmatprep.subr.mxu0 0.0
        %986 = vmatpush1.msra.mxu0 %v509
        %987 = vmatprep.subr.mxu0 0.0
        %988 = vmatpush1.msra.mxu0 %v510
        %989 = vmatprep.subr.mxu0 0.0
        %990 = vmatpush1.msra.mxu0 %v511
        %991 = vmatprep.subr.mxu0 0.0
        %992 = vmatpush1.msra.mxu0 %v512
        %993 = vmatprep.subr.mxu0 0.0
        %994 = vmatpush1.msra.mxu0 %v513
        %995 = vmatprep.subr.mxu0 0.0
        %996 = vmatpush1.msra.mxu0 %v514
        %997 = vmatprep.subr.mxu0 0.0
        %998 = vmatpush1.msra.mxu0 %v515
        %999 = vmatprep.subr.mxu0 0.0
        %1000 = vmatpush1.msra.mxu0 0.0
        %1001 = vmatprep.subr.mxu0 0.0
        %1002 = vmatpush1.msra.mxu0 0.0
        %1003 = vmatprep.subr.mxu0 0.0
        %1004 = vmatpush1.msra.mxu0 0.0
        %1005 = vmatprep.subr.mxu0 0.0
        %1006 = vmatpush1.msra.mxu0 0.0
        %1007 = vmatprep.subr.mxu0 0.0
        %1008 = vmatpush1.msra.mxu0 0.0
        %1009 = vmatprep.subr.mxu0 0.0
        %1010 = vmatpush1.msra.mxu0 0.0
        %1011 = vmatprep.subr.mxu0 0.0
        %1012 = vmatpush1.msra.mxu0 0.0
        %1013 = vmatprep.subr.mxu0 0.0
        %1014 = vmatpush1.msra.mxu0 0.0
        %1015 = vmatprep.subr.mxu0 0.0
        %1016 = vmatpush1.msra.mxu0 0.0
        %1017 = vmatprep.subr.mxu0 0.0
        %1018 = vmatpush1.msra.mxu0 0.0
        %1019 = vmatprep.subr.mxu0 0.0
        %1020 = vmatpush1.msra.mxu0 0.0
        %1021 = vmatprep.subr.mxu0 0.0
        %1022 = vmatpush1.msra.mxu0 0.0
        %1023 = vmatprep.subr.mxu0 0.0
        %1024 = vmatpush1.msra.mxu0 0.0
        %1025 = vmatprep.subr.mxu0 0.0
        %1026 = vmatpush1.msra.mxu0 0.0
        %1027 = vmatprep.subr.mxu0 0.0
        %1028 = vmatpush1.msra.mxu0 0.0
        %1029 = vmatprep.subr.mxu0 0.0
        %1030 = vmatpush1.msra.mxu0 0.0
        %1031 = vmatprep.subr.mxu0 0.0
        %1032 = vmatpush1.msra.mxu0 0.0
        %1033 = vmatprep.subr.mxu0 0.0
        %1034 = vmatpush1.msra.mxu0 0.0
        %1035 = vmatprep.subr.mxu0 0.0
        %1036 = vmatpush1.msra.mxu0 0.0
        %1037 = vmatprep.subr.mxu0 0.0
        %1038 = vmatpush1.msra.mxu0 0.0
        %1039 = vmatprep.subr.mxu0 0.0
        %1040 = vmatpush1.msra.mxu0 0.0
        %1041 = vmatprep.subr.mxu0 0.0
        %1042 = vmatpush1.msra.mxu0 0.0
        %1043 = vmatprep.subr.mxu0 0.0
        %1044 = vmatpush1.msra.mxu0 0.0
        %1045 = vmatprep.subr.mxu0 0.0
        %1046 = vmatpush1.msra.mxu0 0.0
        %1047 = vmatprep.mubr.f32.mxu0 0.0
        %1048 = vmatmul.mubr.f32.gmra.mrb[0].mxu0 %v921
        %v1049 = vpop.f32.mrb[0].mxu0
        %v1050 = vadd.f32 %v763, %v1049
        %v1051 = vpop.f32.mrb[0].mxu0
        %1052 = vmatprep.mubr.f32.mxu0 0.0
        %1053 = vmatmul.mubr.f32.gmra.mrb[0].mxu0 %v921
        %v1054 = vpop.f32.mrb[0].mxu0
        %v1055 = vadd.f32 %v768, %v1054
        %v1056 = vpop.f32.mrb[0].mxu0
        %1057 = vmatprep.mubr.f32.mxu0 0.0
        %1058 = vmatmul.mubr.f32.gmra.mrb[0].mxu0 %v923
        %v1059 = vpop.f32.mrb[0].mxu0
        %v1060 = vadd.f32 %v773, %v1059
        %v1061 = vpop.f32.mrb[0].mxu0
        %1062 = vmatprep.mubr.f32.mxu0 0.0
        %1063 = vmatmul.mubr.f32.gmra.mrb[0].mxu0 %v925
        %v1064 = vpop.f32.mrb[0].mxu0
        %v1065 = vadd.f32 %v778, %v1064
        %v1066 = vpop.f32.mrb[0].mxu0
        %1067 = vmatprep.mubr.f32.mxu0 0.0
        %1068 = vmatmul.mubr.f32.gmra.mrb[0].mxu0 %v927
        %v1069 = vpop.f32.mrb[0].mxu0
        %v1070 = vadd.f32 %v783, %v1069
        %v1071 = vpop.f32.mrb[0].mxu0
        %1072 = vmatprep.mubr.f32.mxu0 0.0
        %1073 = vmatmul.mubr.f32.gmra.mrb[0].mxu0 %v929
        %v1074 = vpop.f32.mrb[0].mxu0
        %v1075 = vadd.f32 %v788, %v1074
        %v1076 = vpop.f32.mrb[0].mxu0
        %1077 = vmatprep.mubr.f32.mxu0 0.0
        %1078 = vmatmul.mubr.f32.gmra.mrb[0].mxu0 %v931
        %v1079 = vpop.f32.mrb[0].mxu0
        %v1080 = vadd.f32 %v793, %v1079
        %v1081 = vpop.f32.mrb[0].mxu0
        %1082 = vmatprep.mubr.f32.mxu0 0.0
        %1083 = vmatmul.mubr.f32.gmra.mrb[0].mxu0 %v933
        %v1084 = vpop.f32.mrb[0].mxu0
        %v1085 = vadd.f32 %v798, %v1084
        %v1086 = vpop.f32.mrb[0].mxu0
        %1087 = vmatprep.mubr.f32.mxu0 0.0
        %1088 = vmatmul.mubr.f32.gmra.mrb[0].mxu0 %v935
        %v1089 = vpop.f32.mrb[0].mxu0
        %v1090 = vadd.f32 %v803, %v1089
        %v1091 = vpop.f32.mrb[0].mxu0
        %1092 = vmatprep.mubr.f32.mxu0 0.0
        %1093 = vmatmul.mubr.f32.gmra.mrb[0].mxu0 %v937
        %v1094 = vpop.f32.mrb[0].mxu0
        %v1095 = vadd.f32 %v808, %v1094
        %v1096 = vpop.f32.mrb[0].mxu0
        %1097 = vmatprep.mubr.f32.mxu0 0.0
        %1098 = vmatmul.mubr.f32.gmra.mrb[0].mxu0 %v939
        %v1099 = vpop.f32.mrb[0].mxu0
        %v1100 = vadd.f32 %v813, %v1099
        %v1101 = vpop.f32.mrb[0].mxu0
        %1102 = vmatprep.mubr.f32.mxu0 0.0
        %1103 = vmatmul.mubr.f32.gmra.mrb[0].mxu0 %v941
        %v1104 = vpop.f32.mrb[0].mxu0
        %v1105 = vadd.f32 %v818, %v1104
        %v1106 = vpop.f32.mrb[0].mxu0
        %1107 = vmatprep.mubr.f32.mxu0 0.0
        %1108 = vmatmul.mubr.f32.gmra.mrb[0].mxu0 %v943
        %v1109 = vpop.f32.mrb[0].mxu0
        %v1110 = vadd.f32 %v823, %v1109
        %v1111 = vpop.f32.mrb[0].mxu0
        %1112 = vmatprep.mubr.f32.mxu0 0.0
        %1113 = vmatmul.mubr.f32.gmra.mrb[0].mxu0 %v945
        %v1114 = vpop.f32.mrb[0].mxu0
        %v1115 = vadd.f32 %v828, %v1114
        %v1116 = vpop.f32.mrb[0].mxu0
        %1117 = vmatprep.mubr.f32.mxu0 0.0
        %1118 = vmatmul.mubr.f32.gmra.mrb[0].mxu0 %v947
        %v1119 = vpop.f32.mrb[0].mxu0
        %v1120 = vadd.f32 %v833, %v1119
        %v1121 = vpop.f32.mrb[0].mxu0
        %1122 = vmatprep.mubr.f32.mxu0 0.0
        %1123 = vmatmul.mubr.f32.gmra.mrb[0].mxu0 %v949
        %v1124 = vpop.f32.mrb[0].mxu0
        %v1125 = vadd.f32 %v838, %v1124
        %v1126 = vpop.f32.mrb[0].mxu0
        %1127 = vmatprep.mubr.f32.mxu0 0.0
        %1128 = vmatmul.mubr.f32.gmra.mrb[0].mxu0 %v951
        %v1129 = vpop.f32.mrb[0].mxu0
        %v1130 = vadd.f32 %v843, %v1129
        %v1131 = vpop.f32.mrb[0].mxu0
        %1132 = vmatprep.mubr.f32.mxu0 0.0
        %1133 = vmatmul.mubr.f32.gmra.mrb[0].mxu0 %v953
        %v1134 = vpop.f32.mrb[0].mxu0
        %v1135 = vadd.f32 %v848, %v1134
        %v1136 = vpop.f32.mrb[0].mxu0
        %1137 = vmatprep.mubr.f32.mxu0 0.0
        %1138 = vmatmul.mubr.f32.gmra.mrb[0].mxu0 %v955
        %v1139 = vpop.f32.mrb[0].mxu0
        %v1140 = vadd.f32 %v853, %v1139
        %v1141 = vpop.f32.mrb[0].mxu0
        %1142 = vmatprep.mubr.f32.mxu0 0.0
        %1143 = vmatmul.mubr.f32.gmra.mrb[0].mxu0 %v957
        %v1144 = vpop.f32.mrb[0].mxu0
        %v1145 = vadd.f32 %v858, %v1144
        %v1146 = vpop.f32.mrb[0].mxu0
        %1147 = vmatprep.mubr.f32.mxu0 0.0
        %1148 = vmatmul.mubr.f32.gmra.mrb[0].mxu0 %v959
        %v1149 = vpop.f32.mrb[0].mxu0
        %v1150 = vadd.f32 %v863, %v1149
        %v1151 = vpop.f32.mrb[0].mxu0
        %1152 = vmatprep.mubr.f32.mxu0 0.0
        %1153 = vmatmul.mubr.f32.gmra.mrb[0].mxu0 %v961
        %v1154 = vpop.f32.mrb[0].mxu0
        %v1155 = vadd.f32 %v868, %v1154
        %v1156 = vpop.f32.mrb[0].mxu0
        %1157 = vmatprep.mubr.f32.mxu0 0.0
        %1158 = vmatmul.mubr.f32.gmra.mrb[0].mxu0 %v963
        %v1159 = vpop.f32.mrb[0].mxu0
        %v1160 = vadd.f32 %v873, %v1159
        %v1161 = vpop.f32.mrb[0].mxu0
        %1162 = vmatprep.mubr.f32.mxu0 0.0
        %1163 = vmatmul.mubr.f32.gmra.mrb[0].mxu0 %v965
        %v1164 = vpop.f32.mrb[0].mxu0
        %v1165 = vadd.f32 %v878, %v1164
        %v1166 = vpop.f32.mrb[0].mxu0
        %1167 = vmatprep.mubr.f32.mxu0 0.0
        %1168 = vmatmul.mubr.f32.gmra.mrb[0].mxu0 %v967
        %v1169 = vpop.f32.mrb[0].mxu0
        %v1170 = vadd.f32 %v883, %v1169
        %v1171 = vpop.f32.mrb[0].mxu0
        %1172 = vmatprep.mubr.f32.mxu0 0.0
        %1173 = vmatmul.mubr.f32.gmra.mrb[0].mxu0 %v969
        %v1174 = vpop.f32.mrb[0].mxu0
        %v1175 = vadd.f32 %v888, %v1174
        %v1176 = vpop.f32.mrb[0].mxu0
        %1177 = vmatprep.mubr.f32.mxu0 0.0
        %1178 = vmatmul.mubr.f32.gmra.mrb[0].mxu0 %v971
        %v1179 = vpop.f32.mrb[0].mxu0
        %v1180 = vadd.f32 %v893, %v1179
        %v1181 = vpop.f32.mrb[0].mxu0
        %1182 = vmatprep.mubr.f32.mxu0 0.0
        %1183 = vmatmul.mubr.f32.gmra.mrb[0].mxu0 %v973
        %v1184 = vpop.f32.mrb[0].mxu0
        %v1185 = vadd.f32 %v898, %v1184
        %v1186 = vpop.f32.mrb[0].mxu0
        %1187 = vmatprep.mubr.f32.mxu0 0.0
        %1188 = vmatmul.mubr.f32.gmra.mrb[0].mxu0 %v975
        %v1189 = vpop.f32.mrb[0].mxu0
        %v1190 = vadd.f32 %v903, %v1189
        %v1191 = vpop.f32.mrb[0].mxu0
        %1192 = vmatprep.mubr.f32.mxu0 0.0
        %1193 = vmatmul.mubr.f32.gmra.mrb[0].mxu0 %v977
        %v1194 = vpop.f32.mrb[0].mxu0
        %v1195 = vadd.f32 %v908, %v1194
        %v1196 = vpop.f32.mrb[0].mxu0
        %1197 = vmatprep.mubr.f32.mxu0 0.0
        %1198 = vmatmul.mubr.f32.gmra.mrb[0].mxu0 %v979
        %v1199 = vpop.f32.mrb[0].mxu0
        %v1200 = vadd.f32 %v913, %v1199
        %v1201 = vpop.f32.mrb[0].mxu0
        %1202 = vmatprep.mubr.f32.mxu0 0.0
        %1203 = vmatmul.mubr.f32.gmra.mrb[0].mxu0 %v981
        %v1204 = vpop.f32.mrb[0].mxu0
        %v1205 = vadd.f32 %v918, %v1204
        %v1206 = vpop.f32.mrb[0].mxu0
        %1207 = vdwg.mxu0
        %vm1208 = vcmask 1045504
        %v1209 = vrot.slane 0.0, 2
        %v1210 = vsel %vm1208, %v1209, %v1209
        %v1211 = vrot.slane %v476, 2
        %v1212 = vrot.slane %v398, 2
        %v1213 = vsel %vm1208, %v1211, %v1212
        %v1214 = vrot.slane %v492, 2
        %v1215 = vsel %vm1208, %v1212, %v1214
        %v1216 = vrot.slane %v477, 2
        %v1217 = vrot.slane %v401, 2
        %v1218 = vsel %vm1208, %v1216, %v1217
        %v1219 = vrot.slane %v493, 2
        %v1220 = vsel %vm1208, %v1217, %v1219
        %v1221 = vrot.slane %v478, 2
        %v1222 = vrot.slane %v404, 2
        %v1223 = vsel %vm1208, %v1221, %v1222
        %v1224 = vrot.slane %v494, 2
        %v1225 = vsel %vm1208, %v1222, %v1224
        %v1226 = vrot.slane %v479, 2
        %v1227 = vrot.slane %v407, 2
        %v1228 = vsel %vm1208, %v1226, %v1227
        %v1229 = vrot.slane %v495, 2
        %v1230 = vsel %vm1208, %v1227, %v1229
        %v1231 = vrot.slane %v480, 2
        %v1232 = vrot.slane %v410, 2
        %v1233 = vsel %vm1208, %v1231, %v1232
        %v1234 = vrot.slane %v496, 2
        %v1235 = vsel %vm1208, %v1232, %v1234
        %v1236 = vrot.slane %v481, 2
        %v1237 = vrot.slane %v413, 2
        %v1238 = vsel %vm1208, %v1236, %v1237
        %v1239 = vrot.slane %v497, 2
        %v1240 = vsel %vm1208, %v1237, %v1239
        %v1241 = vrot.slane %v482, 2
        %v1242 = vrot.slane %v416, 2
        %v1243 = vsel %vm1208, %v1241, %v1242
        %v1244 = vrot.slane %v498, 2
        %v1245 = vsel %vm1208, %v1242, %v1244
        %v1246 = vrot.slane %v483, 2
        %v1247 = vrot.slane %v419, 2
        %v1248 = vsel %vm1208, %v1246, %v1247
        %v1249 = vrot.slane %v499, 2
        %v1250 = vsel %vm1208, %v1247, %v1249
        %v1251 = vrot.slane %v484, 2
        %v1252 = vrot.slane %v422, 2
        %v1253 = vsel %vm1208, %v1251, %v1252
        %v1254 = vrot.slane %v500, 2
        %v1255 = vsel %vm1208, %v1252, %v1254
        %v1256 = vrot.slane %v485, 2
        %v1257 = vrot.slane %v425, 2
        %v1258 = vsel %vm1208, %v1256, %v1257
        %v1259 = vrot.slane %v501, 2
        %v1260 = vsel %vm1208, %v1257, %v1259
        %v1261 = vrot.slane %v486, 2
        %v1262 = vrot.slane %v428, 2
        %v1263 = vsel %vm1208, %v1261, %v1262
        %v1264 = vrot.slane %v502, 2
        %v1265 = vsel %vm1208, %v1262, %v1264
        %v1266 = vrot.slane %v487, 2
        %v1267 = vrot.slane %v431, 2
        %v1268 = vsel %vm1208, %v1266, %v1267
        %v1269 = vrot.slane %v503, 2
        %v1270 = vsel %vm1208, %v1267, %v1269
        %v1271 = vrot.slane %v488, 2
        %v1272 = vrot.slane %v434, 2
        %v1273 = vsel %vm1208, %v1271, %v1272
        %v1274 = vrot.slane %v504, 2
        %v1275 = vsel %vm1208, %v1272, %v1274
        %v1276 = vrot.slane %v489, 2
        %v1277 = vrot.slane %v437, 2
        %v1278 = vsel %vm1208, %v1276, %v1277
        %v1279 = vrot.slane %v505, 2
        %v1280 = vsel %vm1208, %v1277, %v1279
        %v1281 = vrot.slane %v490, 2
        %v1282 = vrot.slane %v440, 2
        %v1283 = vsel %vm1208, %v1281, %v1282
        %v1284 = vrot.slane %v506, 2
        %v1285 = vsel %vm1208, %v1282, %v1284
        %v1286 = vld [vmem:[%s1 + $0x80] sm:$0xff]
        %v1287 = vld [vmem:[%s1 + $0x88] sm:$0xff]
        %v1288 = vld [vmem:[%s1 + $0x90] sm:$0xff]
        %v1289 = vld [vmem:[%s1 + $0x98] sm:$0xff]
        %v1290 = vld [vmem:[%s1 + $0xa0] sm:$0xff]
        %v1291 = vld [vmem:[%s1 + $0xa8] sm:$0xff]
        %v1292 = vld [vmem:[%s1 + $0xb0] sm:$0xff]
        %v1293 = vld [vmem:[%s1 + $0xb8] sm:$0xff]
        %v1294 = vsel %vm633, %v1210, 0
        %v1296 = vsel %vm633, %v1213, 0
        %v1298 = vsel %vm633, %v1215, 0
        %v1300 = vsel %vm633, %v1218, 0
        %v1302 = vsel %vm633, %v1220, 0
        %v1304 = vsel %vm633, %v1223, 0
        %v1306 = vsel %vm633, %v1225, 0
        %v1308 = vsel %vm633, %v1228, 0
        %v1310 = vsel %vm633, %v1230, 0
        %v1312 = vsel %vm633, %v1233, 0
        %v1314 = vsel %vm633, %v1235, 0
        %v1316 = vsel %vm633, %v1238, 0
        %v1318 = vsel %vm633, %v1240, 0
        %v1320 = vsel %vm633, %v1243, 0
        %v1322 = vsel %vm633, %v1245, 0
        %v1324 = vsel %vm633, %v1248, 0
        %v1326 = vsel %vm633, %v1250, 0
        %v1328 = vsel %vm633, %v1253, 0
        %v1330 = vsel %vm633, %v1255, 0
        %v1332 = vsel %vm633, %v1258, 0
        %v1334 = vsel %vm633, %v1260, 0
        %v1336 = vsel %vm633, %v1263, 0
        %v1338 = vsel %vm633, %v1265, 0
        %v1340 = vsel %vm633, %v1268, 0
        %v1342 = vsel %vm633, %v1270, 0
        %v1344 = vsel %vm633, %v1273, 0
        %v1346 = vsel %vm633, %v1275, 0
        %v1348 = vsel %vm633, %v1278, 0
        %v1350 = vsel %vm633, %v1280, 0
        %v1352 = vsel %vm633, %v1283, 0
        %v1354 = vsel %vm633, %v1285, 0
        %1356 = vmatprep.subr.mxu0 0.0
        %1357 = vmatpush1.msra.mxu0 %v1286
        %1358 = vmatprep.subr.mxu0 0.0
        %1359 = vmatpush1.msra.mxu0 %v1287
        %1360 = vmatprep.subr.mxu0 0.0
        %1361 = vmatpush1.msra.mxu0 %v1288
        %1362 = vmatprep.subr.mxu0 0.0
        %1363 = vmatpush1.msra.mxu0 %v1289
        %1364 = vmatprep.subr.mxu0 0.0
        %1365 = vmatpush1.msra.mxu0 %v1290
        %1366 = vmatprep.subr.mxu0 0.0
        %1367 = vmatpush1.msra.mxu0 %v1291
        %1368 = vmatprep.subr.mxu0 0.0
        %1369 = vmatpush1.msra.mxu0 %v1292
        %1370 = vmatprep.subr.mxu0 0.0
        %1371 = vmatpush1.msra.mxu0 %v1293
        %1372 = vmatprep.subr.mxu0 0.0
        %1373 = vmatpush1.msra.mxu0 0.0
        %1374 = vmatprep.subr.mxu0 0.0
        %1375 = vmatpush1.msra.mxu0 0.0
        %1376 = vmatprep.subr.mxu0 0.0
        %1377 = vmatpush1.msra.mxu0 0.0
        %1378 = vmatprep.subr.mxu0 0.0
        %1379 = vmatpush1.msra.mxu0 0.0
        %1380 = vmatprep.subr.mxu0 0.0
        %1381 = vmatpush1.msra.mxu0 0.0
        %1382 = vmatprep.subr.mxu0 0.0
        %1383 = vmatpush1.msra.mxu0 0.0
        %1384 = vmatprep.subr.mxu0 0.0
        %1385 = vmatpush1.msra.mxu0 0.0
        %1386 = vmatprep.subr.mxu0 0.0
        %1387 = vmatpush1.msra.mxu0 0.0
        %1388 = vmatprep.subr.mxu0 0.0
        %1389 = vmatpush1.msra.mxu0 0.0
        %1390 = vmatprep.subr.mxu0 0.0
        %1391 = vmatpush1.msra.mxu0 0.0
        %1392 = vmatprep.subr.mxu0 0.0
        %1393 = vmatpush1.msra.mxu0 0.0
        %1394 = vmatprep.subr.mxu0 0.0
        %1395 = vmatpush1.msra.mxu0 0.0
        %1396 = vmatprep.subr.mxu0 0.0
        %1397 = vmatpush1.msra.mxu0 0.0
        %1398 = vmatprep.subr.mxu0 0.0
        %1399 = vmatpush1.msra.mxu0 0.0
        %1400 = vmatprep.subr.mxu0 0.0
        %1401 = vmatpush1.msra.mxu0 0.0
        %1402 = vmatprep.subr.mxu0 0.0
        %1403 = vmatpush1.msra.mxu0 0.0
        %1404 = vmatprep.subr.mxu0 0.0
        %1405 = vmatpush1.msra.mxu0 0.0
        %1406 = vmatprep.subr.mxu0 0.0
        %1407 = vmatpush1.msra.mxu0 0.0
        %1408 = vmatprep.subr.mxu0 0.0
        %1409 = vmatpush1.msra.mxu0 0.0
        %1410 = vmatprep.subr.mxu0 0.0
        %1411 = vmatpush1.msra.mxu0 0.0
        %1412 = vmatprep.subr.mxu0 0.0
        %1413 = vmatpush1.msra.mxu0 0.0
        %1414 = vmatprep.subr.mxu0 0.0
        %1415 = vmatpush1.msra.mxu0 0.0
        %1416 = vmatprep.subr.mxu0 0.0
        %1417 = vmatpush1.msra.mxu0 0.0
        %1418 = vmatprep.subr.mxu0 0.0
        %1419 = vmatpush1.msra.mxu0 0.0
        %1420 = vmatprep.mubr.f32.mxu0 0.0
        %1421 = vmatmul.mubr.f32.gmra.mrb[0].mxu0 %v1294
        %v1422 = vpop.f32.mrb[0].mxu0
        %v1423 = vadd.f32 0.0, %v1422
        %v1424 = vpop.f32.mrb[0].mxu0
        %1425 = vmatprep.mubr.f32.mxu0 0.0
        %1426 = vmatmul.mubr.f32.gmra.mrb[0].mxu0 %v1294
        %v1427 = vpop.f32.mrb[0].mxu0
        %v1428 = vadd.f32 0.0, %v1427
        %v1429 = vpop.f32.mrb[0].mxu0
        %1430 = vmatprep.mubr.f32.mxu0 0.0
        %1431 = vmatmul.mubr.f32.gmra.mrb[0].mxu0 %v1296
        %v1432 = vpop.f32.mrb[0].mxu0
        %v1433 = vadd.f32 0.0, %v1432
        %v1434 = vpop.f32.mrb[0].mxu0
        %1435 = vmatprep.mubr.f32.mxu0 0.0
        %1436 = vmatmul.mubr.f32.gmra.mrb[0].mxu0 %v1298
        %v1437 = vpop.f32.mrb[0].mxu0
        %v1438 = vadd.f32 0.0, %v1437
        %v1439 = vpop.f32.mrb[0].mxu0
        %1440 = vmatprep.mubr.f32.mxu0 0.0
        %1441 = vmatmul.mubr.f32.gmra.mrb[0].mxu0 %v1300
        %v1442 = vpop.f32.mrb[0].mxu0
        %v1443 = vadd.f32 0.0, %v1442
        %v1444 = vpop.f32.mrb[0].mxu0
        %1445 = vmatprep.mubr.f32.mxu0 0.0
        %1446 = vmatmul.mubr.f32.gmra.mrb[0].mxu0 %v1302
        %v1447 = vpop.f32.mrb[0].mxu0
        %v1448 = vadd.f32 0.0, %v1447
        %v1449 = vpop.f32.mrb[0].mxu0
        %1450 = vmatprep.mubr.f32.mxu0 0.0
        %1451 = vmatmul.mubr.f32.gmra.mrb[0].mxu0 %v1304
        %v1452 = vpop.f32.mrb[0].mxu0
        %v1453 = vadd.f32 0.0, %v1452
        %v1454 = vpop.f32.mrb[0].mxu0
        %1455 = vmatprep.mubr.f32.mxu0 0.0
        %1456 = vmatmul.mubr.f32.gmra.mrb[0].mxu0 %v1306
        %v1457 = vpop.f32.mrb[0].mxu0
        %v1458 = vadd.f32 0.0, %v1457
        %v1459 = vpop.f32.mrb[0].mxu0
        %1460 = vmatprep.mubr.f32.mxu0 0.0
        %1461 = vmatmul.mubr.f32.gmra.mrb[0].mxu0 %v1308
        %v1462 = vpop.f32.mrb[0].mxu0
        %v1463 = vadd.f32 0.0, %v1462
        %v1464 = vpop.f32.mrb[0].mxu0
        %1465 = vmatprep.mubr.f32.mxu0 0.0
        %1466 = vmatmul.mubr.f32.gmra.mrb[0].mxu0 %v1310
        %v1467 = vpop.f32.mrb[0].mxu0
        %v1468 = vadd.f32 0.0, %v1467
        %v1469 = vpop.f32.mrb[0].mxu0
        %1470 = vmatprep.mubr.f32.mxu0 0.0
        %1471 = vmatmul.mubr.f32.gmra.mrb[0].mxu0 %v1312
        %v1472 = vpop.f32.mrb[0].mxu0
        %v1473 = vadd.f32 0.0, %v1472
        %v1474 = vpop.f32.mrb[0].mxu0
        %1475 = vmatprep.mubr.f32.mxu0 0.0
        %1476 = vmatmul.mubr.f32.gmra.mrb[0].mxu0 %v1314
        %v1477 = vpop.f32.mrb[0].mxu0
        %v1478 = vadd.f32 0.0, %v1477
        %v1479 = vpop.f32.mrb[0].mxu0
        %1480 = vmatprep.mubr.f32.mxu0 0.0
        %1481 = vmatmul.mubr.f32.gmra.mrb[0].mxu0 %v1316
        %v1482 = vpop.f32.mrb[0].mxu0
        %v1483 = vadd.f32 0.0, %v1482
        %v1484 = vpop.f32.mrb[0].mxu0
        %1485 = vmatprep.mubr.f32.mxu0 0.0
        %1486 = vmatmul.mubr.f32.gmra.mrb[0].mxu0 %v1318
        %v1487 = vpop.f32.mrb[0].mxu0
        %v1488 = vadd.f32 0.0, %v1487
        %v1489 = vpop.f32.mrb[0].mxu0
        %1490 = vmatprep.mubr.f32.mxu0 0.0
        %1491 = vmatmul.mubr.f32.gmra.mrb[0].mxu0 %v1320
        %v1492 = vpop.f32.mrb[0].mxu0
        %v1493 = vadd.f32 0.0, %v1492
        %v1494 = vpop.f32.mrb[0].mxu0
        %1495 = vmatprep.mubr.f32.mxu0 0.0
        %1496 = vmatmul.mubr.f32.gmra.mrb[0].mxu0 %v1322
        %v1497 = vpop.f32.mrb[0].mxu0
        %v1498 = vadd.f32 0.0, %v1497
        %v1499 = vpop.f32.mrb[0].mxu0
        %1500 = vmatprep.mubr.f32.mxu0 0.0
        %1501 = vmatmul.mubr.f32.gmra.mrb[0].mxu0 %v1324
        %v1502 = vpop.f32.mrb[0].mxu0
        %v1503 = vadd.f32 0.0, %v1502
        %v1504 = vpop.f32.mrb[0].mxu0
        %1505 = vmatprep.mubr.f32.mxu0 0.0
        %1506 = vmatmul.mubr.f32.gmra.mrb[0].mxu0 %v1326
        %v1507 = vpop.f32.mrb[0].mxu0
        %v1508 = vadd.f32 0.0, %v1507
        %v1509 = vpop.f32.mrb[0].mxu0
        %1510 = vmatprep.mubr.f32.mxu0 0.0
        %1511 = vmatmul.mubr.f32.gmra.mrb[0].mxu0 %v1328
        %v1512 = vpop.f32.mrb[0].mxu0
        %v1513 = vadd.f32 0.0, %v1512
        %v1514 = vpop.f32.mrb[0].mxu0
        %1515 = vmatprep.mubr.f32.mxu0 0.0
        %1516 = vmatmul.mubr.f32.gmra.mrb[0].mxu0 %v1330
        %v1517 = vpop.f32.mrb[0].mxu0
        %v1518 = vadd.f32 0.0, %v1517
        %v1519 = vpop.f32.mrb[0].mxu0
        %1520 = vmatprep.mubr.f32.mxu0 0.0
        %1521 = vmatmul.mubr.f32.gmra.mrb[0].mxu0 %v1332
        %v1522 = vpop.f32.mrb[0].mxu0
        %v1523 = vadd.f32 0.0, %v1522
        %v1524 = vpop.f32.mrb[0].mxu0
        %1525 = vmatprep.mubr.f32.mxu0 0.0
        %1526 = vmatmul.mubr.f32.gmra.mrb[0].mxu0 %v1334
        %v1527 = vpop.f32.mrb[0].mxu0
        %v1528 = vadd.f32 0.0, %v1527
        %v1529 = vpop.f32.mrb[0].mxu0
        %1530 = vmatprep.mubr.f32.mxu0 0.0
        %1531 = vmatmul.mubr.f32.gmra.mrb[0].mxu0 %v1336
        %v1532 = vpop.f32.mrb[0].mxu0
        %v1533 = vadd.f32 0.0, %v1532
        %v1534 = vpop.f32.mrb[0].mxu0
        %1535 = vmatprep.mubr.f32.mxu0 0.0
        %1536 = vmatmul.mubr.f32.gmra.mrb[0].mxu0 %v1338
        %v1537 = vpop.f32.mrb[0].mxu0
        %v1538 = vadd.f32 0.0, %v1537
        %v1539 = vpop.f32.mrb[0].mxu0
        %1540 = vmatprep.mubr.f32.mxu0 0.0
        %1541 = vmatmul.mubr.f32.gmra.mrb[0].mxu0 %v1340
        %v1542 = vpop.f32.mrb[0].mxu0
        %v1543 = vadd.f32 0.0, %v1542
        %v1544 = vpop.f32.mrb[0].mxu0
        %1545 = vmatprep.mubr.f32.mxu0 0.0
        %1546 = vmatmul.mubr.f32.gmra.mrb[0].mxu0 %v1342
        %v1547 = vpop.f32.mrb[0].mxu0
        %v1548 = vadd.f32 0.0, %v1547
        %v1549 = vpop.f32.mrb[0].mxu0
        %1550 = vmatprep.mubr.f32.mxu0 0.0
        %1551 = vmatmul.mubr.f32.gmra.mrb[0].mxu0 %v1344
        %v1552 = vpop.f32.mrb[0].mxu0
        %v1553 = vadd.f32 0.0, %v1552
        %v1554 = vpop.f32.mrb[0].mxu0
        %1555 = vmatprep.mubr.f32.mxu0 0.0
        %1556 = vmatmul.mubr.f32.gmra.mrb[0].mxu0 %v1346
        %v1557 = vpop.f32.mrb[0].mxu0
        %v1558 = vadd.f32 0.0, %v1557
        %v1559 = vpop.f32.mrb[0].mxu0
        %1560 = vmatprep.mubr.f32.mxu0 0.0
        %1561 = vmatmul.mubr.f32.gmra.mrb[0].mxu0 %v1348
        %v1562 = vpop.f32.mrb[0].mxu0
        %v1563 = vadd.f32 0.0, %v1562
        %v1564 = vpop.f32.mrb[0].mxu0
        %1565 = vmatprep.mubr.f32.mxu0 0.0
        %1566 = vmatmul.mubr.f32.gmra.mrb[0].mxu0 %v1350
        %v1567 = vpop.f32.mrb[0].mxu0
        %v1568 = vadd.f32 0.0, %v1567
        %v1569 = vpop.f32.mrb[0].mxu0
        %1570 = vmatprep.mubr.f32.mxu0 0.0
        %1571 = vmatmul.mubr.f32.gmra.mrb[0].mxu0 %v1352
        %v1572 = vpop.f32.mrb[0].mxu0
        %v1573 = vadd.f32 0.0, %v1572
        %v1574 = vpop.f32.mrb[0].mxu0
        %1575 = vmatprep.mubr.f32.mxu0 0.0
        %1576 = vmatmul.mubr.f32.gmra.mrb[0].mxu0 %v1354
        %v1577 = vpop.f32.mrb[0].mxu0
        %v1578 = vadd.f32 0.0, %v1577
        %v1579 = vpop.f32.mrb[0].mxu0
        %1580 = vdwg.mxu0
        %v1581 = vadd.f32 %v1050, %v1423
        %v1582 = vadd.f32 %v1055, %v1428
        %v1583 = vadd.f32 %v1060, %v1433
        %v1584 = vadd.f32 %v1065, %v1438
        %v1585 = vadd.f32 %v1070, %v1443
        %v1586 = vadd.f32 %v1075, %v1448
        %v1587 = vadd.f32 %v1080, %v1453
        %v1588 = vadd.f32 %v1085, %v1458
        %v1589 = vadd.f32 %v1090, %v1463
        %v1590 = vadd.f32 %v1095, %v1468
        %v1591 = vadd.f32 %v1100, %v1473
        %v1592 = vadd.f32 %v1105, %v1478
        %v1593 = vadd.f32 %v1110, %v1483
        %v1594 = vadd.f32 %v1115, %v1488
        %v1595 = vadd.f32 %v1120, %v1493
        %v1596 = vadd.f32 %v1125, %v1498
        %v1597 = vadd.f32 %v1130, %v1503
        %v1598 = vadd.f32 %v1135, %v1508
        %v1599 = vadd.f32 %v1140, %v1513
        %v1600 = vadd.f32 %v1145, %v1518
        %v1601 = vadd.f32 %v1150, %v1523
        %v1602 = vadd.f32 %v1155, %v1528
        %v1603 = vadd.f32 %v1160, %v1533
        %v1604 = vadd.f32 %v1165, %v1538
        %v1605 = vadd.f32 %v1170, %v1543
        %v1606 = vadd.f32 %v1175, %v1548
        %v1607 = vadd.f32 %v1180, %v1553
        %v1608 = vadd.f32 %v1185, %v1558
        %v1609 = vadd.f32 %v1190, %v1563
        %v1610 = vadd.f32 %v1195, %v1568
        %v1611 = vadd.f32 %v1200, %v1573
        %v1612 = vadd.f32 %v1205, %v1578
        %v1613 = vld [vmem:[%s1 + $0xc0] sm:$0xff]
        %v1614 = vld [vmem:[%s1 + $0xc8] sm:$0xff]
        %v1615 = vld [vmem:[%s1 + $0xd0] sm:$0xff]
        %v1616 = vld [vmem:[%s1 + $0xd8] sm:$0xff]
        %v1617 = vld [vmem:[%s1 + $0xe0] sm:$0xff]
        %v1618 = vld [vmem:[%s1 + $0xe8] sm:$0xff]
        %v1619 = vld [vmem:[%s1 + $0xf0] sm:$0xff]
        %v1620 = vld [vmem:[%s1 + $0xf8] sm:$0xff]
        %v1622 = vsel %vm633, %v491, 0
        %v1624 = vsel %vm633, %v443, 0
        %1626 = vmatprep.subr.mxu0 0.0
        %1627 = vmatpush1.msra.mxu0 %v1613
        %1628 = vmatprep.subr.mxu0 0.0
        %1629 = vmatpush1.msra.mxu0 %v1614
        %1630 = vmatprep.subr.mxu0 0.0
        %1631 = vmatpush1.msra.mxu0 %v1615
        %1632 = vmatprep.subr.mxu0 0.0
        %1633 = vmatpush1.msra.mxu0 %v1616
        %1634 = vmatprep.subr.mxu0 0.0
        %1635 = vmatpush1.msra.mxu0 %v1617
        %1636 = vmatprep.subr.mxu0 0.0
        %1637 = vmatpush1.msra.mxu0 %v1618
        %1638 = vmatprep.subr.mxu0 0.0
        %1639 = vmatpush1.msra.mxu0 %v1619
        %1640 = vmatprep.subr.mxu0 0.0
        %1641 = vmatpush1.msra.mxu0 %v1620
        %1642 = vmatprep.subr.mxu0 0.0
        %1643 = vmatpush1.msra.mxu0 0.0
        %1644 = vmatprep.subr.mxu0 0.0
        %1645 = vmatpush1.msra.mxu0 0.0
        %1646 = vmatprep.subr.mxu0 0.0
        %1647 = vmatpush1.msra.mxu0 0.0
        %1648 = vmatprep.subr.mxu0 0.0
        %1649 = vmatpush1.msra.mxu0 0.0
        %1650 = vmatprep.subr.mxu0 0.0
        %1651 = vmatpush1.msra.mxu0 0.0
        %1652 = vmatprep.subr.mxu0 0.0
        %1653 = vmatpush1.msra.mxu0 0.0
        %1654 = vmatprep.subr.mxu0 0.0
        %1655 = vmatpush1.msra.mxu0 0.0
        %1656 = vmatprep.subr.mxu0 0.0
        %1657 = vmatpush1.msra.mxu0 0.0
        %1658 = vmatprep.subr.mxu0 0.0
        %1659 = vmatpush1.msra.mxu0 0.0
        %1660 = vmatprep.subr.mxu0 0.0
        %1661 = vmatpush1.msra.mxu0 0.0
        %1662 = vmatprep.subr.mxu0 0.0
        %1663 = vmatpush1.msra.mxu0 0.0
        %1664 = vmatprep.subr.mxu0 0.0
        %1665 = vmatpush1.msra.mxu0 0.0
        %1666 = vmatprep.subr.mxu0 0.0
        %1667 = vmatpush1.msra.mxu0 0.0
        %1668 = vmatprep.subr.mxu0 0.0
        %1669 = vmatpush1.msra.mxu0 0.0
        %1670 = vmatprep.subr.mxu0 0.0
        %1671 = vmatpush1.msra.mxu0 0.0
        %1672 = vmatprep.subr.mxu0 0.0
        %1673 = vmatpush1.msra.mxu0 0.0
        %1674 = vmatprep.subr.mxu0 0.0
        %1675 = vmatpush1.msra.mxu0 0.0
        %1676 = vmatprep.subr.mxu0 0.0
        %1677 = vmatpush1.msra.mxu0 0.0
        %1678 = vmatprep.subr.mxu0 0.0
        %1679 = vmatpush1.msra.mxu0 0.0
        %1680 = vmatprep.subr.mxu0 0.0
        %1681 = vmatpush1.msra.mxu0 0.0
        %1682 = vmatprep.subr.mxu0 0.0
        %1683 = vmatpush1.msra.mxu0 0.0
        %1684 = vmatprep.subr.mxu0 0.0
        %1685 = vmatpush1.msra.mxu0 0.0
        %1686 = vmatprep.subr.mxu0 0.0
        %1687 = vmatpush1.msra.mxu0 0.0
        %1688 = vmatprep.subr.mxu0 0.0
        %1689 = vmatpush1.msra.mxu0 0.0
        %1690 = vmatprep.mubr.f32.mxu0 0.0
        %1691 = vmatmul.mubr.f32.gmra.mrb[0].mxu0 %v923
        %v1692 = vpop.f32.mrb[0].mxu0
        %v1693 = vadd.f32 0.0, %v1692
        %v1694 = vpop.f32.mrb[0].mxu0
        %1695 = vmatprep.mubr.f32.mxu0 0.0
        %1696 = vmatmul.mubr.f32.gmra.mrb[0].mxu0 %v925
        %v1697 = vpop.f32.mrb[0].mxu0
        %v1698 = vadd.f32 0.0, %v1697
        %v1699 = vpop.f32.mrb[0].mxu0
        %1700 = vmatprep.mubr.f32.mxu0 0.0
        %1701 = vmatmul.mubr.f32.gmra.mrb[0].mxu0 %v927
        %v1702 = vpop.f32.mrb[0].mxu0
        %v1703 = vadd.f32 0.0, %v1702
        %v1704 = vpop.f32.mrb[0].mxu0
        %1705 = vmatprep.mubr.f32.mxu0 0.0
        %1706 = vmatmul.mubr.f32.gmra.mrb[0].mxu0 %v929
        %v1707 = vpop.f32.mrb[0].mxu0
        %v1708 = vadd.f32 0.0, %v1707
        %v1709 = vpop.f32.mrb[0].mxu0
        %1710 = vmatprep.mubr.f32.mxu0 0.0
        %1711 = vmatmul.mubr.f32.gmra.mrb[0].mxu0 %v931
        %v1712 = vpop.f32.mrb[0].mxu0
        %v1713 = vadd.f32 0.0, %v1712
        %v1714 = vpop.f32.mrb[0].mxu0
        %1715 = vmatprep.mubr.f32.mxu0 0.0
        %1716 = vmatmul.mubr.f32.gmra.mrb[0].mxu0 %v933
        %v1717 = vpop.f32.mrb[0].mxu0
        %v1718 = vadd.f32 0.0, %v1717
        %v1719 = vpop.f32.mrb[0].mxu0
        %1720 = vmatprep.mubr.f32.mxu0 0.0
        %1721 = vmatmul.mubr.f32.gmra.mrb[0].mxu0 %v935
        %v1722 = vpop.f32.mrb[0].mxu0
        %v1723 = vadd.f32 0.0, %v1722
        %v1724 = vpop.f32.mrb[0].mxu0
        %1725 = vmatprep.mubr.f32.mxu0 0.0
        %1726 = vmatmul.mubr.f32.gmra.mrb[0].mxu0 %v937
        %v1727 = vpop.f32.mrb[0].mxu0
        %v1728 = vadd.f32 0.0, %v1727
        %v1729 = vpop.f32.mrb[0].mxu0
        %1730 = vmatprep.mubr.f32.mxu0 0.0
        %1731 = vmatmul.mubr.f32.gmra.mrb[0].mxu0 %v939
        %v1732 = vpop.f32.mrb[0].mxu0
        %v1733 = vadd.f32 0.0, %v1732
        %v1734 = vpop.f32.mrb[0].mxu0
        %1735 = vmatprep.mubr.f32.mxu0 0.0
        %1736 = vmatmul.mubr.f32.gmra.mrb[0].mxu0 %v941
        %v1737 = vpop.f32.mrb[0].mxu0
        %v1738 = vadd.f32 0.0, %v1737
        %v1739 = vpop.f32.mrb[0].mxu0
        %1740 = vmatprep.mubr.f32.mxu0 0.0
        %1741 = vmatmul.mubr.f32.gmra.mrb[0].mxu0 %v943
        %v1742 = vpop.f32.mrb[0].mxu0
        %v1743 = vadd.f32 0.0, %v1742
        %v1744 = vpop.f32.mrb[0].mxu0
        %1745 = vmatprep.mubr.f32.mxu0 0.0
        %1746 = vmatmul.mubr.f32.gmra.mrb[0].mxu0 %v945
        %v1747 = vpop.f32.mrb[0].mxu0
        %v1748 = vadd.f32 0.0, %v1747
        %v1749 = vpop.f32.mrb[0].mxu0
        %1750 = vmatprep.mubr.f32.mxu0 0.0
        %1751 = vmatmul.mubr.f32.gmra.mrb[0].mxu0 %v947
        %v1752 = vpop.f32.mrb[0].mxu0
        %v1753 = vadd.f32 0.0, %v1752
        %v1754 = vpop.f32.mrb[0].mxu0
        %1755 = vmatprep.mubr.f32.mxu0 0.0
        %1756 = vmatmul.mubr.f32.gmra.mrb[0].mxu0 %v949
        %v1757 = vpop.f32.mrb[0].mxu0
        %v1758 = vadd.f32 0.0, %v1757
        %v1759 = vpop.f32.mrb[0].mxu0
        %1760 = vmatprep.mubr.f32.mxu0 0.0
        %1761 = vmatmul.mubr.f32.gmra.mrb[0].mxu0 %v951
        %v1762 = vpop.f32.mrb[0].mxu0
        %v1763 = vadd.f32 0.0, %v1762
        %v1764 = vpop.f32.mrb[0].mxu0
        %1765 = vmatprep.mubr.f32.mxu0 0.0
        %1766 = vmatmul.mubr.f32.gmra.mrb[0].mxu0 %v953
        %v1767 = vpop.f32.mrb[0].mxu0
        %v1768 = vadd.f32 0.0, %v1767
        %v1769 = vpop.f32.mrb[0].mxu0
        %1770 = vmatprep.mubr.f32.mxu0 0.0
        %1771 = vmatmul.mubr.f32.gmra.mrb[0].mxu0 %v955
        %v1772 = vpop.f32.mrb[0].mxu0
        %v1773 = vadd.f32 0.0, %v1772
        %v1774 = vpop.f32.mrb[0].mxu0
        %1775 = vmatprep.mubr.f32.mxu0 0.0
        %1776 = vmatmul.mubr.f32.gmra.mrb[0].mxu0 %v957
        %v1777 = vpop.f32.mrb[0].mxu0
        %v1778 = vadd.f32 0.0, %v1777
        %v1779 = vpop.f32.mrb[0].mxu0
        %1780 = vmatprep.mubr.f32.mxu0 0.0
        %1781 = vmatmul.mubr.f32.gmra.mrb[0].mxu0 %v959
        %v1782 = vpop.f32.mrb[0].mxu0
        %v1783 = vadd.f32 0.0, %v1782
        %v1784 = vpop.f32.mrb[0].mxu0
        %1785 = vmatprep.mubr.f32.mxu0 0.0
        %1786 = vmatmul.mubr.f32.gmra.mrb[0].mxu0 %v961
        %v1787 = vpop.f32.mrb[0].mxu0
        %v1788 = vadd.f32 0.0, %v1787
        %v1789 = vpop.f32.mrb[0].mxu0
        %1790 = vmatprep.mubr.f32.mxu0 0.0
        %1791 = vmatmul.mubr.f32.gmra.mrb[0].mxu0 %v963
        %v1792 = vpop.f32.mrb[0].mxu0
        %v1793 = vadd.f32 0.0, %v1792
        %v1794 = vpop.f32.mrb[0].mxu0
        %1795 = vmatprep.mubr.f32.mxu0 0.0
        %1796 = vmatmul.mubr.f32.gmra.mrb[0].mxu0 %v965
        %v1797 = vpop.f32.mrb[0].mxu0
        %v1798 = vadd.f32 0.0, %v1797
        %v1799 = vpop.f32.mrb[0].mxu0
        %1800 = vmatprep.mubr.f32.mxu0 0.0
        %1801 = vmatmul.mubr.f32.gmra.mrb[0].mxu0 %v967
        %v1802 = vpop.f32.mrb[0].mxu0
        %v1803 = vadd.f32 0.0, %v1802
        %v1804 = vpop.f32.mrb[0].mxu0
        %1805 = vmatprep.mubr.f32.mxu0 0.0
        %1806 = vmatmul.mubr.f32.gmra.mrb[0].mxu0 %v969
        %v1807 = vpop.f32.mrb[0].mxu0
        %v1808 = vadd.f32 0.0, %v1807
        %v1809 = vpop.f32.mrb[0].mxu0
        %1810 = vmatprep.mubr.f32.mxu0 0.0
        %1811 = vmatmul.mubr.f32.gmra.mrb[0].mxu0 %v971
        %v1812 = vpop.f32.mrb[0].mxu0
        %v1813 = vadd.f32 0.0, %v1812
        %v1814 = vpop.f32.mrb[0].mxu0
        %1815 = vmatprep.mubr.f32.mxu0 0.0
        %1816 = vmatmul.mubr.f32.gmra.mrb[0].mxu0 %v973
        %v1817 = vpop.f32.mrb[0].mxu0
        %v1818 = vadd.f32 0.0, %v1817
        %v1819 = vpop.f32.mrb[0].mxu0
        %1820 = vmatprep.mubr.f32.mxu0 0.0
        %1821 = vmatmul.mubr.f32.gmra.mrb[0].mxu0 %v975
        %v1822 = vpop.f32.mrb[0].mxu0
        %v1823 = vadd.f32 0.0, %v1822
        %v1824 = vpop.f32.mrb[0].mxu0
        %1825 = vmatprep.mubr.f32.mxu0 0.0
        %1826 = vmatmul.mubr.f32.gmra.mrb[0].mxu0 %v977
        %v1827 = vpop.f32.mrb[0].mxu0
        %v1828 = vadd.f32 0.0, %v1827
        %v1829 = vpop.f32.mrb[0].mxu0
        %1830 = vmatprep.mubr.f32.mxu0 0.0
        %1831 = vmatmul.mubr.f32.gmra.mrb[0].mxu0 %v979
        %v1832 = vpop.f32.mrb[0].mxu0
        %v1833 = vadd.f32 0.0, %v1832
        %v1834 = vpop.f32.mrb[0].mxu0
        %1835 = vmatprep.mubr.f32.mxu0 0.0
        %1836 = vmatmul.mubr.f32.gmra.mrb[0].mxu0 %v981
        %v1837 = vpop.f32.mrb[0].mxu0
        %v1838 = vadd.f32 0.0, %v1837
        %v1839 = vpop.f32.mrb[0].mxu0
        %1840 = vmatprep.mubr.f32.mxu0 0.0
        %1841 = vmatmul.mubr.f32.gmra.mrb[0].mxu0 %v1622
        %v1842 = vpop.f32.mrb[0].mxu0
        %v1843 = vadd.f32 0.0, %v1842
        %v1844 = vpop.f32.mrb[0].mxu0
        %1845 = vmatprep.mubr.f32.mxu0 0.0
        %1846 = vmatmul.mubr.f32.gmra.mrb[0].mxu0 %v1624
        %v1847 = vpop.f32.mrb[0].mxu0
        %v1848 = vadd.f32 0.0, %v1847
        %v1849 = vpop.f32.mrb[0].mxu0
        %1850 = vdwg.mxu0
        %v1851 = vadd.f32 %v1581, %v1693
        %v1852 = vadd.f32 %v1582, %v1698
        %v1853 = vadd.f32 %v1583, %v1703
        %v1854 = vadd.f32 %v1584, %v1708
        %v1855 = vadd.f32 %v1585, %v1713
        %v1856 = vadd.f32 %v1586, %v1718
        %v1857 = vadd.f32 %v1587, %v1723
        %v1858 = vadd.f32 %v1588, %v1728
        %v1859 = vadd.f32 %v1589, %v1733
        %v1860 = vadd.f32 %v1590, %v1738
        %v1861 = vadd.f32 %v1591, %v1743
        %v1862 = vadd.f32 %v1592, %v1748
        %v1863 = vadd.f32 %v1593, %v1753
        %v1864 = vadd.f32 %v1594, %v1758
        %v1865 = vadd.f32 %v1595, %v1763
        %v1866 = vadd.f32 %v1596, %v1768
        %v1867 = vadd.f32 %v1597, %v1773
        %v1868 = vadd.f32 %v1598, %v1778
        %v1869 = vadd.f32 %v1599, %v1783
        %v1870 = vadd.f32 %v1600, %v1788
        %v1871 = vadd.f32 %v1601, %v1793
        %v1872 = vadd.f32 %v1602, %v1798
        %v1873 = vadd.f32 %v1603, %v1803
        %v1874 = vadd.f32 %v1604, %v1808
        %v1875 = vadd.f32 %v1605, %v1813
        %v1876 = vadd.f32 %v1606, %v1818
        %v1877 = vadd.f32 %v1607, %v1823
        %v1878 = vadd.f32 %v1608, %v1828
        %v1879 = vadd.f32 %v1609, %v1833
        %v1880 = vadd.f32 %v1610, %v1838
        %v1881 = vadd.f32 %v1611, %v1843
        %v1882 = vadd.f32 %v1612, %v1848
        %v1884 = vrot.slane %v491, 1
        %v1885 = vrot.slane %v443, 1
        %v1886 = vsel %vm547, %v1884, %v1885
        %v1887 = vrot.slane %v507, 1
        %v1888 = vsel %vm547, %v1885, %v1887
        %v1889 = vld [vmem:[%s1 + $0x100] sm:$0xff]
        %v1890 = vld [vmem:[%s1 + $0x108] sm:$0xff]
        %v1891 = vld [vmem:[%s1 + $0x110] sm:$0xff]
        %v1892 = vld [vmem:[%s1 + $0x118] sm:$0xff]
        %v1893 = vld [vmem:[%s1 + $0x120] sm:$0xff]
        %v1894 = vld [vmem:[%s1 + $0x128] sm:$0xff]
        %v1895 = vld [vmem:[%s1 + $0x130] sm:$0xff]
        %v1896 = vld [vmem:[%s1 + $0x138] sm:$0xff]
        %v1897 = vsel %vm633, %v1886, 0
        %v1899 = vsel %vm633, %v1888, 0
        %1901 = vmatprep.subr.mxu0 0.0
        %1902 = vmatpush1.msra.mxu0 %v1889
        %1903 = vmatprep.subr.mxu0 0.0
        %1904 = vmatpush1.msra.mxu0 %v1890
        %1905 = vmatprep.subr.mxu0 0.0
        %1906 = vmatpush1.msra.mxu0 %v1891
        %1907 = vmatprep.subr.mxu0 0.0
        %1908 = vmatpush1.msra.mxu0 %v1892
        %1909 = vmatprep.subr.mxu0 0.0
        %1910 = vmatpush1.msra.mxu0 %v1893
        %1911 = vmatprep.subr.mxu0 0.0
        %1912 = vmatpush1.msra.mxu0 %v1894
        %1913 = vmatprep.subr.mxu0 0.0
        %1914 = vmatpush1.msra.mxu0 %v1895
        %1915 = vmatprep.subr.mxu0 0.0
        %1916 = vmatpush1.msra.mxu0 %v1896
        %1917 = vmatprep.subr.mxu0 0.0
        %1918 = vmatpush1.msra.mxu0 0.0
        %1919 = vmatprep.subr.mxu0 0.0
        %1920 = vmatpush1.msra.mxu0 0.0
        %1921 = vmatprep.subr.mxu0 0.0
        %1922 = vmatpush1.msra.mxu0 0.0
        %1923 = vmatprep.subr.mxu0 0.0
        %1924 = vmatpush1.msra.mxu0 0.0
        %1925 = vmatprep.subr.mxu0 0.0
        %1926 = vmatpush1.msra.mxu0 0.0
        %1927 = vmatprep.subr.mxu0 0.0
        %1928 = vmatpush1.msra.mxu0 0.0
        %1929 = vmatprep.subr.mxu0 0.0
        %1930 = vmatpush1.msra.mxu0 0.0
        %1931 = vmatprep.subr.mxu0 0.0
        %1932 = vmatpush1.msra.mxu0 0.0
        %1933 = vmatprep.subr.mxu0 0.0
        %1934 = vmatpush1.msra.mxu0 0.0
        %1935 = vmatprep.subr.mxu0 0.0
        %1936 = vmatpush1.msra.mxu0 0.0
        %1937 = vmatprep.subr.mxu0 0.0
        %1938 = vmatpush1.msra.mxu0 0.0
        %1939 = vmatprep.subr.mxu0 0.0
        %1940 = vmatpush1.msra.mxu0 0.0
        %1941 = vmatprep.subr.mxu0 0.0
        %1942 = vmatpush1.msra.mxu0 0.0
        %1943 = vmatprep.subr.mxu0 0.0
        %1944 = vmatpush1.msra.mxu0 0.0
        %1945 = vmatprep.subr.mxu0 0.0
        %1946 = vmatpush1.msra.mxu0 0.0
        %1947 = vmatprep.subr.mxu0 0.0
        %1948 = vmatpush1.msra.mxu0 0.0
        %1949 = vmatprep.subr.mxu0 0.0
        %1950 = vmatpush1.msra.mxu0 0.0
        %1951 = vmatprep.subr.mxu0 0.0
        %1952 = vmatpush1.msra.mxu0 0.0
        %1953 = vmatprep.subr.mxu0 0.0
        %1954 = vmatpush1.msra.mxu0 0.0
        %1955 = vmatprep.subr.mxu0 0.0
        %1956 = vmatpush1.msra.mxu0 0.0
        %1957 = vmatprep.subr.mxu0 0.0
        %1958 = vmatpush1.msra.mxu0 0.0
        %1959 = vmatprep.subr.mxu0 0.0
        %1960 = vmatpush1.msra.mxu0 0.0
        %1961 = vmatprep.subr.mxu0 0.0
        %1962 = vmatpush1.msra.mxu0 0.0
        %1963 = vmatprep.subr.mxu0 0.0
        %1964 = vmatpush1.msra.mxu0 0.0
        %1965 = vmatprep.mubr.f32.mxu0 0.0
        %1966 = vmatmul.mubr.f32.gmra.mrb[0].mxu0 %v636
        %v1967 = vpop.f32.mrb[0].mxu0
        %v1968 = vadd.f32 0.0, %v1967
        %v1969 = vpop.f32.mrb[0].mxu0
        %1970 = vmatprep.mubr.f32.mxu0 0.0
        %1971 = vmatmul.mubr.f32.gmra.mrb[0].mxu0 %v638
        %v1972 = vpop.f32.mrb[0].mxu0
        %v1973 = vadd.f32 0.0, %v1972
        %v1974 = vpop.f32.mrb[0].mxu0
        %1975 = vmatprep.mubr.f32.mxu0 0.0
        %1976 = vmatmul.mubr.f32.gmra.mrb[0].mxu0 %v640
        %v1977 = vpop.f32.mrb[0].mxu0
        %v1978 = vadd.f32 0.0, %v1977
        %v1979 = vpop.f32.mrb[0].mxu0
        %1980 = vmatprep.mubr.f32.mxu0 0.0
        %1981 = vmatmul.mubr.f32.gmra.mrb[0].mxu0 %v642
        %v1982 = vpop.f32.mrb[0].mxu0
        %v1983 = vadd.f32 0.0, %v1982
        %v1984 = vpop.f32.mrb[0].mxu0
        %1985 = vmatprep.mubr.f32.mxu0 0.0
        %1986 = vmatmul.mubr.f32.gmra.mrb[0].mxu0 %v644
        %v1987 = vpop.f32.mrb[0].mxu0
        %v1988 = vadd.f32 0.0, %v1987
        %v1989 = vpop.f32.mrb[0].mxu0
        %1990 = vmatprep.mubr.f32.mxu0 0.0
        %1991 = vmatmul.mubr.f32.gmra.mrb[0].mxu0 %v646
        %v1992 = vpop.f32.mrb[0].mxu0
        %v1993 = vadd.f32 0.0, %v1992
        %v1994 = vpop.f32.mrb[0].mxu0
        %1995 = vmatprep.mubr.f32.mxu0 0.0
        %1996 = vmatmul.mubr.f32.gmra.mrb[0].mxu0 %v648
        %v1997 = vpop.f32.mrb[0].mxu0
        %v1998 = vadd.f32 0.0, %v1997
        %v1999 = vpop.f32.mrb[0].mxu0
        %2000 = vmatprep.mubr.f32.mxu0 0.0
        %2001 = vmatmul.mubr.f32.gmra.mrb[0].mxu0 %v650
        %v2002 = vpop.f32.mrb[0].mxu0
        %v2003 = vadd.f32 0.0, %v2002
        %v2004 = vpop.f32.mrb[0].mxu0
        %2005 = vmatprep.mubr.f32.mxu0 0.0
        %2006 = vmatmul.mubr.f32.gmra.mrb[0].mxu0 %v652
        %v2007 = vpop.f32.mrb[0].mxu0
        %v2008 = vadd.f32 0.0, %v2007
        %v2009 = vpop.f32.mrb[0].mxu0
        %2010 = vmatprep.mubr.f32.mxu0 0.0
        %2011 = vmatmul.mubr.f32.gmra.mrb[0].mxu0 %v654
        %v2012 = vpop.f32.mrb[0].mxu0
        %v2013 = vadd.f32 0.0, %v2012
        %v2014 = vpop.f32.mrb[0].mxu0
        %2015 = vmatprep.mubr.f32.mxu0 0.0
        %2016 = vmatmul.mubr.f32.gmra.mrb[0].mxu0 %v656
        %v2017 = vpop.f32.mrb[0].mxu0
        %v2018 = vadd.f32 0.0, %v2017
        %v2019 = vpop.f32.mrb[0].mxu0
        %2020 = vmatprep.mubr.f32.mxu0 0.0
        %2021 = vmatmul.mubr.f32.gmra.mrb[0].mxu0 %v658
        %v2022 = vpop.f32.mrb[0].mxu0
        %v2023 = vadd.f32 0.0, %v2022
        %v2024 = vpop.f32.mrb[0].mxu0
        %2025 = vmatprep.mubr.f32.mxu0 0.0
        %2026 = vmatmul.mubr.f32.gmra.mrb[0].mxu0 %v660
        %v2027 = vpop.f32.mrb[0].mxu0
        %v2028 = vadd.f32 0.0, %v2027
        %v2029 = vpop.f32.mrb[0].mxu0
        %2030 = vmatprep.mubr.f32.mxu0 0.0
        %2031 = vmatmul.mubr.f32.gmra.mrb[0].mxu0 %v662
        %v2032 = vpop.f32.mrb[0].mxu0
        %v2033 = vadd.f32 0.0, %v2032
        %v2034 = vpop.f32.mrb[0].mxu0
        %2035 = vmatprep.mubr.f32.mxu0 0.0
        %2036 = vmatmul.mubr.f32.gmra.mrb[0].mxu0 %v664
        %v2037 = vpop.f32.mrb[0].mxu0
        %v2038 = vadd.f32 0.0, %v2037
        %v2039 = vpop.f32.mrb[0].mxu0
        %2040 = vmatprep.mubr.f32.mxu0 0.0
        %2041 = vmatmul.mubr.f32.gmra.mrb[0].mxu0 %v666
        %v2042 = vpop.f32.mrb[0].mxu0
        %v2043 = vadd.f32 0.0, %v2042
        %v2044 = vpop.f32.mrb[0].mxu0
        %2045 = vmatprep.mubr.f32.mxu0 0.0
        %2046 = vmatmul.mubr.f32.gmra.mrb[0].mxu0 %v668
        %v2047 = vpop.f32.mrb[0].mxu0
        %v2048 = vadd.f32 0.0, %v2047
        %v2049 = vpop.f32.mrb[0].mxu0
        %2050 = vmatprep.mubr.f32.mxu0 0.0
        %2051 = vmatmul.mubr.f32.gmra.mrb[0].mxu0 %v670
        %v2052 = vpop.f32.mrb[0].mxu0
        %v2053 = vadd.f32 0.0, %v2052
        %v2054 = vpop.f32.mrb[0].mxu0
        %2055 = vmatprep.mubr.f32.mxu0 0.0
        %2056 = vmatmul.mubr.f32.gmra.mrb[0].mxu0 %v672
        %v2057 = vpop.f32.mrb[0].mxu0
        %v2058 = vadd.f32 0.0, %v2057
        %v2059 = vpop.f32.mrb[0].mxu0
        %2060 = vmatprep.mubr.f32.mxu0 0.0
        %2061 = vmatmul.mubr.f32.gmra.mrb[0].mxu0 %v674
        %v2062 = vpop.f32.mrb[0].mxu0
        %v2063 = vadd.f32 0.0, %v2062
        %v2064 = vpop.f32.mrb[0].mxu0
        %2065 = vmatprep.mubr.f32.mxu0 0.0
        %2066 = vmatmul.mubr.f32.gmra.mrb[0].mxu0 %v676
        %v2067 = vpop.f32.mrb[0].mxu0
        %v2068 = vadd.f32 0.0, %v2067
        %v2069 = vpop.f32.mrb[0].mxu0
        %2070 = vmatprep.mubr.f32.mxu0 0.0
        %2071 = vmatmul.mubr.f32.gmra.mrb[0].mxu0 %v678
        %v2072 = vpop.f32.mrb[0].mxu0
        %v2073 = vadd.f32 0.0, %v2072
        %v2074 = vpop.f32.mrb[0].mxu0
        %2075 = vmatprep.mubr.f32.mxu0 0.0
        %2076 = vmatmul.mubr.f32.gmra.mrb[0].mxu0 %v680
        %v2077 = vpop.f32.mrb[0].mxu0
        %v2078 = vadd.f32 0.0, %v2077
        %v2079 = vpop.f32.mrb[0].mxu0
        %2080 = vmatprep.mubr.f32.mxu0 0.0
        %2081 = vmatmul.mubr.f32.gmra.mrb[0].mxu0 %v682
        %v2082 = vpop.f32.mrb[0].mxu0
        %v2083 = vadd.f32 0.0, %v2082
        %v2084 = vpop.f32.mrb[0].mxu0
        %2085 = vmatprep.mubr.f32.mxu0 0.0
        %2086 = vmatmul.mubr.f32.gmra.mrb[0].mxu0 %v684
        %v2087 = vpop.f32.mrb[0].mxu0
        %v2088 = vadd.f32 0.0, %v2087
        %v2089 = vpop.f32.mrb[0].mxu0
        %2090 = vmatprep.mubr.f32.mxu0 0.0
        %2091 = vmatmul.mubr.f32.gmra.mrb[0].mxu0 %v686
        %v2092 = vpop.f32.mrb[0].mxu0
        %v2093 = vadd.f32 0.0, %v2092
        %v2094 = vpop.f32.mrb[0].mxu0
        %2095 = vmatprep.mubr.f32.mxu0 0.0
        %2096 = vmatmul.mubr.f32.gmra.mrb[0].mxu0 %v688
        %v2097 = vpop.f32.mrb[0].mxu0
        %v2098 = vadd.f32 0.0, %v2097
        %v2099 = vpop.f32.mrb[0].mxu0
        %2100 = vmatprep.mubr.f32.mxu0 0.0
        %2101 = vmatmul.mubr.f32.gmra.mrb[0].mxu0 %v690
        %v2102 = vpop.f32.mrb[0].mxu0
        %v2103 = vadd.f32 0.0, %v2102
        %v2104 = vpop.f32.mrb[0].mxu0
        %2105 = vmatprep.mubr.f32.mxu0 0.0
        %2106 = vmatmul.mubr.f32.gmra.mrb[0].mxu0 %v692
        %v2107 = vpop.f32.mrb[0].mxu0
        %v2108 = vadd.f32 0.0, %v2107
        %v2109 = vpop.f32.mrb[0].mxu0
        %2110 = vmatprep.mubr.f32.mxu0 0.0
        %2111 = vmatmul.mubr.f32.gmra.mrb[0].mxu0 %v694
        %v2112 = vpop.f32.mrb[0].mxu0
        %v2113 = vadd.f32 0.0, %v2112
        %v2114 = vpop.f32.mrb[0].mxu0
        %2115 = vmatprep.mubr.f32.mxu0 0.0
        %2116 = vmatmul.mubr.f32.gmra.mrb[0].mxu0 %v1897
        %v2117 = vpop.f32.mrb[0].mxu0
        %v2118 = vadd.f32 0.0, %v2117
        %v2119 = vpop.f32.mrb[0].mxu0
        %2120 = vmatprep.mubr.f32.mxu0 0.0
        %2121 = vmatmul.mubr.f32.gmra.mrb[0].mxu0 %v1899
        %v2122 = vpop.f32.mrb[0].mxu0
        %v2123 = vadd.f32 0.0, %v2122
        %v2124 = vpop.f32.mrb[0].mxu0
        %2125 = vdwg.mxu0
        %v2126 = vadd.f32 %v1851, %v1968
        %v2127 = vadd.f32 %v1852, %v1973
        %v2128 = vadd.f32 %v1853, %v1978
        %v2129 = vadd.f32 %v1854, %v1983
        %v2130 = vadd.f32 %v1855, %v1988
        %v2131 = vadd.f32 %v1856, %v1993
        %v2132 = vadd.f32 %v1857, %v1998
        %v2133 = vadd.f32 %v1858, %v2003
        %v2134 = vadd.f32 %v1859, %v2008
        %v2135 = vadd.f32 %v1860, %v2013
        %v2136 = vadd.f32 %v1861, %v2018
        %v2137 = vadd.f32 %v1862, %v2023
        %v2138 = vadd.f32 %v1863, %v2028
        %v2139 = vadd.f32 %v1864, %v2033
        %v2140 = vadd.f32 %v1865, %v2038
        %v2141 = vadd.f32 %v1866, %v2043
        %v2142 = vadd.f32 %v1867, %v2048
        %v2143 = vadd.f32 %v1868, %v2053
        %v2144 = vadd.f32 %v1869, %v2058
        %v2145 = vadd.f32 %v1870, %v2063
        %v2146 = vadd.f32 %v1871, %v2068
        %v2147 = vadd.f32 %v1872, %v2073
        %v2148 = vadd.f32 %v1873, %v2078
        %v2149 = vadd.f32 %v1874, %v2083
        %v2150 = vadd.f32 %v1875, %v2088
        %v2151 = vadd.f32 %v1876, %v2093
        %v2152 = vadd.f32 %v1877, %v2098
        %v2153 = vadd.f32 %v1878, %v2103
        %v2154 = vadd.f32 %v1879, %v2108
        %v2155 = vadd.f32 %v1880, %v2113
        %v2156 = vadd.f32 %v1881, %v2118
        %v2157 = vadd.f32 %v1882, %v2123
        %v2158 = vrot.slane %v491, 2
        %v2159 = vrot.slane %v443, 2
        %v2160 = vsel %vm1208, %v2158, %v2159
        %v2161 = vrot.slane %v507, 2
        %v2162 = vsel %vm1208, %v2159, %v2161
        %v2163 = vld [vmem:[%s1 + $0x140] sm:$0xff]
        %v2164 = vld [vmem:[%s1 + $0x148] sm:$0xff]
        %v2165 = vld [vmem:[%s1 + $0x150] sm:$0xff]
        %v2166 = vld [vmem:[%s1 + $0x158] sm:$0xff]
        %v2167 = vld [vmem:[%s1 + $0x160] sm:$0xff]
        %v2168 = vld [vmem:[%s1 + $0x168] sm:$0xff]
        %v2169 = vld [vmem:[%s1 + $0x170] sm:$0xff]
        %v2170 = vld [vmem:[%s1 + $0x178] sm:$0xff]
        %v2171 = vsel %vm633, %v2160, 0
        %v2173 = vsel %vm633, %v2162, 0
        %2175 = vmatprep.subr.mxu0 0.0
        %2176 = vmatpush1.msra.mxu0 %v2163
        %2177 = vmatprep.subr.mxu0 0.0
        %2178 = vmatpush1.msra.mxu0 %v2164
        %2179 = vmatprep.subr.mxu0 0.0
        %2180 = vmatpush1.msra.mxu0 %v2165
        %2181 = vmatprep.subr.mxu0 0.0
        %2182 = vmatpush1.msra.mxu0 %v2166
        %2183 = vmatprep.subr.mxu0 0.0
        %2184 = vmatpush1.msra.mxu0 %v2167
        %2185 = vmatprep.subr.mxu0 0.0
        %2186 = vmatpush1.msra.mxu0 %v2168
        %2187 = vmatprep.subr.mxu0 0.0
        %2188 = vmatpush1.msra.mxu0 %v2169
        %2189 = vmatprep.subr.mxu0 0.0
        %2190 = vmatpush1.msra.mxu0 %v2170
        %2191 = vmatprep.subr.mxu0 0.0
        %2192 = vmatpush1.msra.mxu0 0.0
        %2193 = vmatprep.subr.mxu0 0.0
        %2194 = vmatpush1.msra.mxu0 0.0
        %2195 = vmatprep.subr.mxu0 0.0
        %2196 = vmatpush1.msra.mxu0 0.0
        %2197 = vmatprep.subr.mxu0 0.0
        %2198 = vmatpush1.msra.mxu0 0.0
        %2199 = vmatprep.subr.mxu0 0.0
        %2200 = vmatpush1.msra.mxu0 0.0
        %2201 = vmatprep.subr.mxu0 0.0
        %2202 = vmatpush1.msra.mxu0 0.0
        %2203 = vmatprep.subr.mxu0 0.0
        %2204 = vmatpush1.msra.mxu0 0.0
        %2205 = vmatprep.subr.mxu0 0.0
        %2206 = vmatpush1.msra.mxu0 0.0
        %2207 = vmatprep.subr.mxu0 0.0
        %2208 = vmatpush1.msra.mxu0 0.0
        %2209 = vmatprep.subr.mxu0 0.0
        %2210 = vmatpush1.msra.mxu0 0.0
        %2211 = vmatprep.subr.mxu0 0.0
        %2212 = vmatpush1.msra.mxu0 0.0
        %2213 = vmatprep.subr.mxu0 0.0
        %2214 = vmatpush1.msra.mxu0 0.0
        %2215 = vmatprep.subr.mxu0 0.0
        %2216 = vmatpush1.msra.mxu0 0.0
        %2217 = vmatprep.subr.mxu0 0.0
        %2218 = vmatpush1.msra.mxu0 0.0
        %2219 = vmatprep.subr.mxu0 0.0
        %2220 = vmatpush1.msra.mxu0 0.0
        %2221 = vmatprep.subr.mxu0 0.0
        %2222 = vmatpush1.msra.mxu0 0.0
        %2223 = vmatprep.subr.mxu0 0.0
        %2224 = vmatpush1.msra.mxu0 0.0
        %2225 = vmatprep.subr.mxu0 0.0
        %2226 = vmatpush1.msra.mxu0 0.0
        %2227 = vmatprep.subr.mxu0 0.0
        %2228 = vmatpush1.msra.mxu0 0.0
        %2229 = vmatprep.subr.mxu0 0.0
        %2230 = vmatpush1.msra.mxu0 0.0
        %2231 = vmatprep.subr.mxu0 0.0
        %2232 = vmatpush1.msra.mxu0 0.0
        %2233 = vmatprep.subr.mxu0 0.0
        %2234 = vmatpush1.msra.mxu0 0.0
        %2235 = vmatprep.subr.mxu0 0.0
        %2236 = vmatpush1.msra.mxu0 0.0
        %2237 = vmatprep.subr.mxu0 0.0
        %2238 = vmatpush1.msra.mxu0 0.0
        %2239 = vmatprep.mubr.f32.mxu0 0.0
        %2240 = vmatmul.mubr.f32.gmra.mrb[0].mxu0 %v1296
        %v2241 = vpop.f32.mrb[0].mxu0
        %v2242 = vadd.f32 0.0, %v2241
        %v2243 = vpop.f32.mrb[0].mxu0
        %2244 = vmatprep.mubr.f32.mxu0 0.0
        %2245 = vmatmul.mubr.f32.gmra.mrb[0].mxu0 %v1298
        %v2246 = vpop.f32.mrb[0].mxu0
        %v2247 = vadd.f32 0.0, %v2246
        %v2248 = vpop.f32.mrb[0].mxu0
        %2249 = vmatprep.mubr.f32.mxu0 0.0
        %2250 = vmatmul.mubr.f32.gmra.mrb[0].mxu0 %v1300
        %v2251 = vpop.f32.mrb[0].mxu0
        %v2252 = vadd.f32 0.0, %v2251
        %v2253 = vpop.f32.mrb[0].mxu0
        %2254 = vmatprep.mubr.f32.mxu0 0.0
        %2255 = vmatmul.mubr.f32.gmra.mrb[0].mxu0 %v1302
        %v2256 = vpop.f32.mrb[0].mxu0
        %v2257 = vadd.f32 0.0, %v2256
        %v2258 = vpop.f32.mrb[0].mxu0
        %2259 = vmatprep.mubr.f32.mxu0 0.0
        %2260 = vmatmul.mubr.f32.gmra.mrb[0].mxu0 %v1304
        %v2261 = vpop.f32.mrb[0].mxu0
        %v2262 = vadd.f32 0.0, %v2261
        %v2263 = vpop.f32.mrb[0].mxu0
        %2264 = vmatprep.mubr.f32.mxu0 0.0
        %2265 = vmatmul.mubr.f32.gmra.mrb[0].mxu0 %v1306
        %v2266 = vpop.f32.mrb[0].mxu0
        %v2267 = vadd.f32 0.0, %v2266
        %v2268 = vpop.f32.mrb[0].mxu0
        %2269 = vmatprep.mubr.f32.mxu0 0.0
        %2270 = vmatmul.mubr.f32.gmra.mrb[0].mxu0 %v1308
        %v2271 = vpop.f32.mrb[0].mxu0
        %v2272 = vadd.f32 0.0, %v2271
        %v2273 = vpop.f32.mrb[0].mxu0
        %2274 = vmatprep.mubr.f32.mxu0 0.0
        %2275 = vmatmul.mubr.f32.gmra.mrb[0].mxu0 %v1310
        %v2276 = vpop.f32.mrb[0].mxu0
        %v2277 = vadd.f32 0.0, %v2276
        %v2278 = vpop.f32.mrb[0].mxu0
        %2279 = vmatprep.mubr.f32.mxu0 0.0
        %2280 = vmatmul.mubr.f32.gmra.mrb[0].mxu0 %v1312
        %v2281 = vpop.f32.mrb[0].mxu0
        %v2282 = vadd.f32 0.0, %v2281
        %v2283 = vpop.f32.mrb[0].mxu0
        %2284 = vmatprep.mubr.f32.mxu0 0.0
        %2285 = vmatmul.mubr.f32.gmra.mrb[0].mxu0 %v1314
        %v2286 = vpop.f32.mrb[0].mxu0
        %v2287 = vadd.f32 0.0, %v2286
        %v2288 = vpop.f32.mrb[0].mxu0
        %2289 = vmatprep.mubr.f32.mxu0 0.0
        %2290 = vmatmul.mubr.f32.gmra.mrb[0].mxu0 %v1316
        %v2291 = vpop.f32.mrb[0].mxu0
        %v2292 = vadd.f32 0.0, %v2291
        %v2293 = vpop.f32.mrb[0].mxu0
        %2294 = vmatprep.mubr.f32.mxu0 0.0
        %2295 = vmatmul.mubr.f32.gmra.mrb[0].mxu0 %v1318
        %v2296 = vpop.f32.mrb[0].mxu0
        %v2297 = vadd.f32 0.0, %v2296
        %v2298 = vpop.f32.mrb[0].mxu0
        %2299 = vmatprep.mubr.f32.mxu0 0.0
        %2300 = vmatmul.mubr.f32.gmra.mrb[0].mxu0 %v1320
        %v2301 = vpop.f32.mrb[0].mxu0
        %v2302 = vadd.f32 0.0, %v2301
        %v2303 = vpop.f32.mrb[0].mxu0
        %2304 = vmatprep.mubr.f32.mxu0 0.0
        %2305 = vmatmul.mubr.f32.gmra.mrb[0].mxu0 %v1322
        %v2306 = vpop.f32.mrb[0].mxu0
        %v2307 = vadd.f32 0.0, %v2306
        %v2308 = vpop.f32.mrb[0].mxu0
        %2309 = vmatprep.mubr.f32.mxu0 0.0
        %2310 = vmatmul.mubr.f32.gmra.mrb[0].mxu0 %v1324
        %v2311 = vpop.f32.mrb[0].mxu0
        %v2312 = vadd.f32 0.0, %v2311
        %v2313 = vpop.f32.mrb[0].mxu0
        %2314 = vmatprep.mubr.f32.mxu0 0.0
        %2315 = vmatmul.mubr.f32.gmra.mrb[0].mxu0 %v1326
        %v2316 = vpop.f32.mrb[0].mxu0
        %v2317 = vadd.f32 0.0, %v2316
        %v2318 = vpop.f32.mrb[0].mxu0
        %2319 = vmatprep.mubr.f32.mxu0 0.0
        %2320 = vmatmul.mubr.f32.gmra.mrb[0].mxu0 %v1328
        %v2321 = vpop.f32.mrb[0].mxu0
        %v2322 = vadd.f32 0.0, %v2321
        %v2323 = vpop.f32.mrb[0].mxu0
        %2324 = vmatprep.mubr.f32.mxu0 0.0
        %2325 = vmatmul.mubr.f32.gmra.mrb[0].mxu0 %v1330
        %v2326 = vpop.f32.mrb[0].mxu0
        %v2327 = vadd.f32 0.0, %v2326
        %v2328 = vpop.f32.mrb[0].mxu0
        %2329 = vmatprep.mubr.f32.mxu0 0.0
        %2330 = vmatmul.mubr.f32.gmra.mrb[0].mxu0 %v1332
        %v2331 = vpop.f32.mrb[0].mxu0
        %v2332 = vadd.f32 0.0, %v2331
        %v2333 = vpop.f32.mrb[0].mxu0
        %2334 = vmatprep.mubr.f32.mxu0 0.0
        %2335 = vmatmul.mubr.f32.gmra.mrb[0].mxu0 %v1334
        %v2336 = vpop.f32.mrb[0].mxu0
        %v2337 = vadd.f32 0.0, %v2336
        %v2338 = vpop.f32.mrb[0].mxu0
        %2339 = vmatprep.mubr.f32.mxu0 0.0
        %2340 = vmatmul.mubr.f32.gmra.mrb[0].mxu0 %v1336
        %v2341 = vpop.f32.mrb[0].mxu0
        %v2342 = vadd.f32 0.0, %v2341
        %v2343 = vpop.f32.mrb[0].mxu0
        %2344 = vmatprep.mubr.f32.mxu0 0.0
        %2345 = vmatmul.mubr.f32.gmra.mrb[0].mxu0 %v1338
        %v2346 = vpop.f32.mrb[0].mxu0
        %v2347 = vadd.f32 0.0, %v2346
        %v2348 = vpop.f32.mrb[0].mxu0
        %2349 = vmatprep.mubr.f32.mxu0 0.0
        %2350 = vmatmul.mubr.f32.gmra.mrb[0].mxu0 %v1340
        %v2351 = vpop.f32.mrb[0].mxu0
        %v2352 = vadd.f32 0.0, %v2351
        %v2353 = vpop.f32.mrb[0].mxu0
        %2354 = vmatprep.mubr.f32.mxu0 0.0
        %2355 = vmatmul.mubr.f32.gmra.mrb[0].mxu0 %v1342
        %v2356 = vpop.f32.mrb[0].mxu0
        %v2357 = vadd.f32 0.0, %v2356
        %v2358 = vpop.f32.mrb[0].mxu0
        %2359 = vmatprep.mubr.f32.mxu0 0.0
        %2360 = vmatmul.mubr.f32.gmra.mrb[0].mxu0 %v1344
        %v2361 = vpop.f32.mrb[0].mxu0
        %v2362 = vadd.f32 0.0, %v2361
        %v2363 = vpop.f32.mrb[0].mxu0
        %2364 = vmatprep.mubr.f32.mxu0 0.0
        %2365 = vmatmul.mubr.f32.gmra.mrb[0].mxu0 %v1346
        %v2366 = vpop.f32.mrb[0].mxu0
        %v2367 = vadd.f32 0.0, %v2366
        %v2368 = vpop.f32.mrb[0].mxu0
        %2369 = vmatprep.mubr.f32.mxu0 0.0
        %2370 = vmatmul.mubr.f32.gmra.mrb[0].mxu0 %v1348
        %v2371 = vpop.f32.mrb[0].mxu0
        %v2372 = vadd.f32 0.0, %v2371
        %v2373 = vpop.f32.mrb[0].mxu0
        %2374 = vmatprep.mubr.f32.mxu0 0.0
        %2375 = vmatmul.mubr.f32.gmra.mrb[0].mxu0 %v1350
        %v2376 = vpop.f32.mrb[0].mxu0
        %v2377 = vadd.f32 0.0, %v2376
        %v2378 = vpop.f32.mrb[0].mxu0
        %2379 = vmatprep.mubr.f32.mxu0 0.0
        %2380 = vmatmul.mubr.f32.gmra.mrb[0].mxu0 %v1352
        %v2381 = vpop.f32.mrb[0].mxu0
        %v2382 = vadd.f32 0.0, %v2381
        %v2383 = vpop.f32.mrb[0].mxu0
        %2384 = vmatprep.mubr.f32.mxu0 0.0
        %2385 = vmatmul.mubr.f32.gmra.mrb[0].mxu0 %v1354
        %v2386 = vpop.f32.mrb[0].mxu0
        %v2387 = vadd.f32 0.0, %v2386
        %v2388 = vpop.f32.mrb[0].mxu0
        %2389 = vmatprep.mubr.f32.mxu0 0.0
        %2390 = vmatmul.mubr.f32.gmra.mrb[0].mxu0 %v2171
        %v2391 = vpop.f32.mrb[0].mxu0
        %v2392 = vadd.f32 0.0, %v2391
        %v2393 = vpop.f32.mrb[0].mxu0
        %2394 = vmatprep.mubr.f32.mxu0 0.0
        %2395 = vmatmul.mubr.f32.gmra.mrb[0].mxu0 %v2173
        %v2396 = vpop.f32.mrb[0].mxu0
        %v2397 = vadd.f32 0.0, %v2396
        %v2398 = vpop.f32.mrb[0].mxu0
        %2399 = vdwg.mxu0
        %v2400 = vadd.f32 %v2126, %v2242
        %v2401 = vadd.f32 %v2127, %v2247
        %v2402 = vadd.f32 %v2128, %v2252
        %v2403 = vadd.f32 %v2129, %v2257
        %v2404 = vadd.f32 %v2130, %v2262
        %v2405 = vadd.f32 %v2131, %v2267
        %v2406 = vadd.f32 %v2132, %v2272
        %v2407 = vadd.f32 %v2133, %v2277
        %v2408 = vadd.f32 %v2134, %v2282
        %v2409 = vadd.f32 %v2135, %v2287
        %v2410 = vadd.f32 %v2136, %v2292
        %v2411 = vadd.f32 %v2137, %v2297
        %v2412 = vadd.f32 %v2138, %v2302
        %v2413 = vadd.f32 %v2139, %v2307
        %v2414 = vadd.f32 %v2140, %v2312
        %v2415 = vadd.f32 %v2141, %v2317
        %v2416 = vadd.f32 %v2142, %v2322
        %v2417 = vadd.f32 %v2143, %v2327
        %v2418 = vadd.f32 %v2144, %v2332
        %v2419 = vadd.f32 %v2145, %v2337
        %v2420 = vadd.f32 %v2146, %v2342
        %v2421 = vadd.f32 %v2147, %v2347
        %v2422 = vadd.f32 %v2148, %v2352
        %v2423 = vadd.f32 %v2149, %v2357
        %v2424 = vadd.f32 %v2150, %v2362
        %v2425 = vadd.f32 %v2151, %v2367
        %v2426 = vadd.f32 %v2152, %v2372
        %v2427 = vadd.f32 %v2153, %v2377
        %v2428 = vadd.f32 %v2154, %v2382
        %v2429 = vadd.f32 %v2155, %v2387
        %v2430 = vadd.f32 %v2156, %v2392
        %v2431 = vadd.f32 %v2157, %v2397
        %v2432 = vld [vmem:[%s1 + $0x180] sm:$0xff]
        %v2433 = vld [vmem:[%s1 + $0x188] sm:$0xff]
        %v2434 = vld [vmem:[%s1 + $0x190] sm:$0xff]
        %v2435 = vld [vmem:[%s1 + $0x198] sm:$0xff]
        %v2436 = vld [vmem:[%s1 + $0x1a0] sm:$0xff]
        %v2437 = vld [vmem:[%s1 + $0x1a8] sm:$0xff]
        %v2438 = vld [vmem:[%s1 + $0x1b0] sm:$0xff]
        %v2439 = vld [vmem:[%s1 + $0x1b8] sm:$0xff]
        %2440 = vmatprep.subr.mxu0 0.0
        %2441 = vmatpush1.msra.mxu0 %v2432
        %2442 = vmatprep.subr.mxu0 0.0
        %2443 = vmatpush1.msra.mxu0 %v2433
        %2444 = vmatprep.subr.mxu0 0.0
        %2445 = vmatpush1.msra.mxu0 %v2434
        %2446 = vmatprep.subr.mxu0 0.0
        %2447 = vmatpush1.msra.mxu0 %v2435
        %2448 = vmatprep.subr.mxu0 0.0
        %2449 = vmatpush1.msra.mxu0 %v2436
        %2450 = vmatprep.subr.mxu0 0.0
        %2451 = vmatpush1.msra.mxu0 %v2437
        %2452 = vmatprep.subr.mxu0 0.0
        %2453 = vmatpush1.msra.mxu0 %v2438
        %2454 = vmatprep.subr.mxu0 0.0
        %2455 = vmatpush1.msra.mxu0 %v2439
        %2456 = vmatprep.subr.mxu0 0.0
        %2457 = vmatpush1.msra.mxu0 0.0
        %2458 = vmatprep.subr.mxu0 0.0
        %2459 = vmatpush1.msra.mxu0 0.0
        %2460 = vmatprep.subr.mxu0 0.0
        %2461 = vmatpush1.msra.mxu0 0.0
        %2462 = vmatprep.subr.mxu0 0.0
        %2463 = vmatpush1.msra.mxu0 0.0
        %2464 = vmatprep.subr.mxu0 0.0
        %2465 = vmatpush1.msra.mxu0 0.0
        %2466 = vmatprep.subr.mxu0 0.0
        %2467 = vmatpush1.msra.mxu0 0.0
        %2468 = vmatprep.subr.mxu0 0.0
        %2469 = vmatpush1.msra.mxu0 0.0
        %2470 = vmatprep.subr.mxu0 0.0
        %2471 = vmatpush1.msra.mxu0 0.0
        %2472 = vmatprep.subr.mxu0 0.0
        %2473 = vmatpush1.msra.mxu0 0.0
        %2474 = vmatprep.subr.mxu0 0.0
        %2475 = vmatpush1.msra.mxu0 0.0
        %2476 = vmatprep.subr.mxu0 0.0
        %2477 = vmatpush1.msra.mxu0 0.0
        %2478 = vmatprep.subr.mxu0 0.0
        %2479 = vmatpush1.msra.mxu0 0.0
        %2480 = vmatprep.subr.mxu0 0.0
        %2481 = vmatpush1.msra.mxu0 0.0
        %2482 = vmatprep.subr.mxu0 0.0
        %2483 = vmatpush1.msra.mxu0 0.0
        %2484 = vmatprep.subr.mxu0 0.0
        %2485 = vmatpush1.msra.mxu0 0.0
        %2486 = vmatprep.subr.mxu0 0.0
        %2487 = vmatpush1.msra.mxu0 0.0
        %2488 = vmatprep.subr.mxu0 0.0
        %2489 = vmatpush1.msra.mxu0 0.0
        %2490 = vmatprep.subr.mxu0 0.0
        %2491 = vmatpush1.msra.mxu0 0.0
        %2492 = vmatprep.subr.mxu0 0.0
        %2493 = vmatpush1.msra.mxu0 0.0
        %2494 = vmatprep.subr.mxu0 0.0
        %2495 = vmatpush1.msra.mxu0 0.0
        %2496 = vmatprep.subr.mxu0 0.0
        %2497 = vmatpush1.msra.mxu0 0.0
        %2498 = vmatprep.subr.mxu0 0.0
        %2499 = vmatpush1.msra.mxu0 0.0
        %2500 = vmatprep.subr.mxu0 0.0
        %2501 = vmatpush1.msra.mxu0 0.0
        %2502 = vmatprep.subr.mxu0 0.0
        %2503 = vmatpush1.msra.mxu0 0.0
        %2504 = vmatprep.mubr.f32.mxu0 0.0
        %2505 = vmatmul.mubr.f32.gmra.mrb[0].mxu0 %v927
        %v2506 = vpop.f32.mrb[0].mxu0
        %v2507 = vadd.f32 0.0, %v2506
        %v2508 = vpop.f32.mrb[0].mxu0
        %2509 = vmatprep.mubr.f32.mxu0 0.0
        %2510 = vmatmul.mubr.f32.gmra.mrb[0].mxu0 %v929
        %v2511 = vpop.f32.mrb[0].mxu0
        %v2512 = vadd.f32 0.0, %v2511
        %v2513 = vpop.f32.mrb[0].mxu0
        %2514 = vmatprep.mubr.f32.mxu0 0.0
        %2515 = vmatmul.mubr.f32.gmra.mrb[0].mxu0 %v931
        %v2516 = vpop.f32.mrb[0].mxu0
        %v2517 = vadd.f32 0.0, %v2516
        %v2518 = vpop.f32.mrb[0].mxu0
        %2519 = vmatprep.mubr.f32.mxu0 0.0
        %2520 = vmatmul.mubr.f32.gmra.mrb[0].mxu0 %v933
        %v2521 = vpop.f32.mrb[0].mxu0
        %v2522 = vadd.f32 0.0, %v2521
        %v2523 = vpop.f32.mrb[0].mxu0
        %2524 = vmatprep.mubr.f32.mxu0 0.0
        %2525 = vmatmul.mubr.f32.gmra.mrb[0].mxu0 %v935
        %v2526 = vpop.f32.mrb[0].mxu0
        %v2527 = vadd.f32 0.0, %v2526
        %v2528 = vpop.f32.mrb[0].mxu0
        %2529 = vmatprep.mubr.f32.mxu0 0.0
        %2530 = vmatmul.mubr.f32.gmra.mrb[0].mxu0 %v937
        %v2531 = vpop.f32.mrb[0].mxu0
        %v2532 = vadd.f32 0.0, %v2531
        %v2533 = vpop.f32.mrb[0].mxu0
        %2534 = vmatprep.mubr.f32.mxu0 0.0
        %2535 = vmatmul.mubr.f32.gmra.mrb[0].mxu0 %v939
        %v2536 = vpop.f32.mrb[0].mxu0
        %v2537 = vadd.f32 0.0, %v2536
        %v2538 = vpop.f32.mrb[0].mxu0
        %2539 = vmatprep.mubr.f32.mxu0 0.0
        %2540 = vmatmul.mubr.f32.gmra.mrb[0].mxu0 %v941
        %v2541 = vpop.f32.mrb[0].mxu0
        %v2542 = vadd.f32 0.0, %v2541
        %v2543 = vpop.f32.mrb[0].mxu0
        %2544 = vmatprep.mubr.f32.mxu0 0.0
        %2545 = vmatmul.mubr.f32.gmra.mrb[0].mxu0 %v943
        %v2546 = vpop.f32.mrb[0].mxu0
        %v2547 = vadd.f32 0.0, %v2546
        %v2548 = vpop.f32.mrb[0].mxu0
        %2549 = vmatprep.mubr.f32.mxu0 0.0
        %2550 = vmatmul.mubr.f32.gmra.mrb[0].mxu0 %v945
        %v2551 = vpop.f32.mrb[0].mxu0
        %v2552 = vadd.f32 0.0, %v2551
        %v2553 = vpop.f32.mrb[0].mxu0
        %2554 = vmatprep.mubr.f32.mxu0 0.0
        %2555 = vmatmul.mubr.f32.gmra.mrb[0].mxu0 %v947
        %v2556 = vpop.f32.mrb[0].mxu0
        %v2557 = vadd.f32 0.0, %v2556
        %v2558 = vpop.f32.mrb[0].mxu0
        %2559 = vmatprep.mubr.f32.mxu0 0.0
        %2560 = vmatmul.mubr.f32.gmra.mrb[0].mxu0 %v949
        %v2561 = vpop.f32.mrb[0].mxu0
        %v2562 = vadd.f32 0.0, %v2561
        %v2563 = vpop.f32.mrb[0].mxu0
        %2564 = vmatprep.mubr.f32.mxu0 0.0
        %2565 = vmatmul.mubr.f32.gmra.mrb[0].mxu0 %v951
        %v2566 = vpop.f32.mrb[0].mxu0
        %v2567 = vadd.f32 0.0, %v2566
        %v2568 = vpop.f32.mrb[0].mxu0
        %2569 = vmatprep.mubr.f32.mxu0 0.0
        %2570 = vmatmul.mubr.f32.gmra.mrb[0].mxu0 %v953
        %v2571 = vpop.f32.mrb[0].mxu0
        %v2572 = vadd.f32 0.0, %v2571
        %v2573 = vpop.f32.mrb[0].mxu0
        %2574 = vmatprep.mubr.f32.mxu0 0.0
        %2575 = vmatmul.mubr.f32.gmra.mrb[0].mxu0 %v955
        %v2576 = vpop.f32.mrb[0].mxu0
        %v2577 = vadd.f32 0.0, %v2576
        %v2578 = vpop.f32.mrb[0].mxu0
        %2579 = vmatprep.mubr.f32.mxu0 0.0
        %2580 = vmatmul.mubr.f32.gmra.mrb[0].mxu0 %v957
        %v2581 = vpop.f32.mrb[0].mxu0
        %v2582 = vadd.f32 0.0, %v2581
        %v2583 = vpop.f32.mrb[0].mxu0
        %2584 = vmatprep.mubr.f32.mxu0 0.0
        %2585 = vmatmul.mubr.f32.gmra.mrb[0].mxu0 %v959
        %v2586 = vpop.f32.mrb[0].mxu0
        %v2587 = vadd.f32 0.0, %v2586
        %v2588 = vpop.f32.mrb[0].mxu0
        %2589 = vmatprep.mubr.f32.mxu0 0.0
        %2590 = vmatmul.mubr.f32.gmra.mrb[0].mxu0 %v961
        %v2591 = vpop.f32.mrb[0].mxu0
        %v2592 = vadd.f32 0.0, %v2591
        %v2593 = vpop.f32.mrb[0].mxu0
        %2594 = vmatprep.mubr.f32.mxu0 0.0
        %2595 = vmatmul.mubr.f32.gmra.mrb[0].mxu0 %v963
        %v2596 = vpop.f32.mrb[0].mxu0
        %v2597 = vadd.f32 0.0, %v2596
        %v2598 = vpop.f32.mrb[0].mxu0
        %2599 = vmatprep.mubr.f32.mxu0 0.0
        %2600 = vmatmul.mubr.f32.gmra.mrb[0].mxu0 %v965
        %v2601 = vpop.f32.mrb[0].mxu0
        %v2602 = vadd.f32 0.0, %v2601
        %v2603 = vpop.f32.mrb[0].mxu0
        %2604 = vmatprep.mubr.f32.mxu0 0.0
        %2605 = vmatmul.mubr.f32.gmra.mrb[0].mxu0 %v967
        %v2606 = vpop.f32.mrb[0].mxu0
        %v2607 = vadd.f32 0.0, %v2606
        %v2608 = vpop.f32.mrb[0].mxu0
        %2609 = vmatprep.mubr.f32.mxu0 0.0
        %2610 = vmatmul.mubr.f32.gmra.mrb[0].mxu0 %v969
        %v2611 = vpop.f32.mrb[0].mxu0
        %v2612 = vadd.f32 0.0, %v2611
        %v2613 = vpop.f32.mrb[0].mxu0
        %2614 = vmatprep.mubr.f32.mxu0 0.0
        %2615 = vmatmul.mubr.f32.gmra.mrb[0].mxu0 %v971
        %v2616 = vpop.f32.mrb[0].mxu0
        %v2617 = vadd.f32 0.0, %v2616
        %v2618 = vpop.f32.mrb[0].mxu0
        %2619 = vmatprep.mubr.f32.mxu0 0.0
        %2620 = vmatmul.mubr.f32.gmra.mrb[0].mxu0 %v973
        %v2621 = vpop.f32.mrb[0].mxu0
        %v2622 = vadd.f32 0.0, %v2621
        %v2623 = vpop.f32.mrb[0].mxu0
        %2624 = vmatprep.mubr.f32.mxu0 0.0
        %2625 = vmatmul.mubr.f32.gmra.mrb[0].mxu0 %v975
        %v2626 = vpop.f32.mrb[0].mxu0
        %v2627 = vadd.f32 0.0, %v2626
        %v2628 = vpop.f32.mrb[0].mxu0
        %2629 = vmatprep.mubr.f32.mxu0 0.0
        %2630 = vmatmul.mubr.f32.gmra.mrb[0].mxu0 %v977
        %v2631 = vpop.f32.mrb[0].mxu0
        %v2632 = vadd.f32 0.0, %v2631
        %v2633 = vpop.f32.mrb[0].mxu0
        %2634 = vmatprep.mubr.f32.mxu0 0.0
        %2635 = vmatmul.mubr.f32.gmra.mrb[0].mxu0 %v979
        %v2636 = vpop.f32.mrb[0].mxu0
        %v2637 = vadd.f32 0.0, %v2636
        %v2638 = vpop.f32.mrb[0].mxu0
        %2639 = vmatprep.mubr.f32.mxu0 0.0
        %2640 = vmatmul.mubr.f32.gmra.mrb[0].mxu0 %v981
        %v2641 = vpop.f32.mrb[0].mxu0
        %v2642 = vadd.f32 0.0, %v2641
        %v2643 = vpop.f32.mrb[0].mxu0
        %2644 = vmatprep.mubr.f32.mxu0 0.0
        %2645 = vmatmul.mubr.f32.gmra.mrb[0].mxu0 %v1622
        %v2646 = vpop.f32.mrb[0].mxu0
        %v2647 = vadd.f32 0.0, %v2646
        %v2648 = vpop.f32.mrb[0].mxu0
        %2649 = vmatprep.mubr.f32.mxu0 0.0
        %2650 = vmatmul.mubr.f32.gmra.mrb[0].mxu0 %v1624
        %v2651 = vpop.f32.mrb[0].mxu0
        %v2652 = vadd.f32 0.0, %v2651
        %v2653 = vpop.f32.mrb[0].mxu0
        %2654 = vmatprep.mubr.f32.mxu0 0.0
        %2655 = vmatmul.mubr.f32.gmra.mrb[0].mxu0 %v921
        %v2656 = vpop.f32.mrb[0].mxu0
        %v2657 = vadd.f32 0.0, %v2656
        %v2658 = vpop.f32.mrb[0].mxu0
        %2659 = vmatprep.mubr.f32.mxu0 0.0
        %2660 = vmatmul.mubr.f32.gmra.mrb[0].mxu0 %v921
        %v2661 = vpop.f32.mrb[0].mxu0
        %v2662 = vadd.f32 0.0, %v2661
        %v2663 = vpop.f32.mrb[0].mxu0
        %2664 = vdwg.mxu0
        %v2665 = vadd.f32 %v2400, %v2507
        %v2666 = vadd.f32 %v2401, %v2512
        %v2667 = vadd.f32 %v2402, %v2517
        %v2668 = vadd.f32 %v2403, %v2522
        %v2669 = vadd.f32 %v2404, %v2527
        %v2670 = vadd.f32 %v2405, %v2532
        %v2671 = vadd.f32 %v2406, %v2537
        %v2672 = vadd.f32 %v2407, %v2542
        %v2673 = vadd.f32 %v2408, %v2547
        %v2674 = vadd.f32 %v2409, %v2552
        %v2675 = vadd.f32 %v2410, %v2557
        %v2676 = vadd.f32 %v2411, %v2562
        %v2677 = vadd.f32 %v2412, %v2567
        %v2678 = vadd.f32 %v2413, %v2572
        %v2679 = vadd.f32 %v2414, %v2577
        %v2680 = vadd.f32 %v2415, %v2582
        %v2681 = vadd.f32 %v2416, %v2587
        %v2682 = vadd.f32 %v2417, %v2592
        %v2683 = vadd.f32 %v2418, %v2597
        %v2684 = vadd.f32 %v2419, %v2602
        %v2685 = vadd.f32 %v2420, %v2607
        %v2686 = vadd.f32 %v2421, %v2612
        %v2687 = vadd.f32 %v2422, %v2617
        %v2688 = vadd.f32 %v2423, %v2622
        %v2689 = vadd.f32 %v2424, %v2627
        %v2690 = vadd.f32 %v2425, %v2632
        %v2691 = vadd.f32 %v2426, %v2637
        %v2692 = vadd.f32 %v2427, %v2642
        %v2693 = vadd.f32 %v2428, %v2647
        %v2694 = vadd.f32 %v2429, %v2652
        %v2695 = vadd.f32 %v2430, %v2657
        %v2696 = vadd.f32 %v2431, %v2662
        %v2697 = vld [vmem:[%s1 + $0x1c0] sm:$0xff]
        %v2698 = vld [vmem:[%s1 + $0x1c8] sm:$0xff]
        %v2699 = vld [vmem:[%s1 + $0x1d0] sm:$0xff]
        %v2700 = vld [vmem:[%s1 + $0x1d8] sm:$0xff]
        %v2701 = vld [vmem:[%s1 + $0x1e0] sm:$0xff]
        %v2702 = vld [vmem:[%s1 + $0x1e8] sm:$0xff]
        %v2703 = vld [vmem:[%s1 + $0x1f0] sm:$0xff]
        %v2704 = vld [vmem:[%s1 + $0x1f8] sm:$0xff]
        %2705 = vmatprep.subr.mxu0 0.0
        %2706 = vmatpush1.msra.mxu0 %v2697
        %2707 = vmatprep.subr.mxu0 0.0
        %2708 = vmatpush1.msra.mxu0 %v2698
        %2709 = vmatprep.subr.mxu0 0.0
        %2710 = vmatpush1.msra.mxu0 %v2699
        %2711 = vmatprep.subr.mxu0 0.0
        %2712 = vmatpush1.msra.mxu0 %v2700
        %2713 = vmatprep.subr.mxu0 0.0
        %2714 = vmatpush1.msra.mxu0 %v2701
        %2715 = vmatprep.subr.mxu0 0.0
        %2716 = vmatpush1.msra.mxu0 %v2702
        %2717 = vmatprep.subr.mxu0 0.0
        %2718 = vmatpush1.msra.mxu0 %v2703
        %2719 = vmatprep.subr.mxu0 0.0
        %2720 = vmatpush1.msra.mxu0 %v2704
        %2721 = vmatprep.subr.mxu0 0.0
        %2722 = vmatpush1.msra.mxu0 0.0
        %2723 = vmatprep.subr.mxu0 0.0
        %2724 = vmatpush1.msra.mxu0 0.0
        %2725 = vmatprep.subr.mxu0 0.0
        %2726 = vmatpush1.msra.mxu0 0.0
        %2727 = vmatprep.subr.mxu0 0.0
        %2728 = vmatpush1.msra.mxu0 0.0
        %2729 = vmatprep.subr.mxu0 0.0
        %2730 = vmatpush1.msra.mxu0 0.0
        %2731 = vmatprep.subr.mxu0 0.0
        %2732 = vmatpush1.msra.mxu0 0.0
        %2733 = vmatprep.subr.mxu0 0.0
        %2734 = vmatpush1.msra.mxu0 0.0
        %2735 = vmatprep.subr.mxu0 0.0
        %2736 = vmatpush1.msra.mxu0 0.0
        %2737 = vmatprep.subr.mxu0 0.0
        %2738 = vmatpush1.msra.mxu0 0.0
        %2739 = vmatprep.subr.mxu0 0.0
        %2740 = vmatpush1.msra.mxu0 0.0
        %2741 = vmatprep.subr.mxu0 0.0
        %2742 = vmatpush1.msra.mxu0 0.0
        %2743 = vmatprep.subr.mxu0 0.0
        %2744 = vmatpush1.msra.mxu0 0.0
        %2745 = vmatprep.subr.mxu0 0.0
        %2746 = vmatpush1.msra.mxu0 0.0
        %2747 = vmatprep.subr.mxu0 0.0
        %2748 = vmatpush1.msra.mxu0 0.0
        %2749 = vmatprep.subr.mxu0 0.0
        %2750 = vmatpush1.msra.mxu0 0.0
        %2751 = vmatprep.subr.mxu0 0.0
        %2752 = vmatpush1.msra.mxu0 0.0
        %2753 = vmatprep.subr.mxu0 0.0
        %2754 = vmatpush1.msra.mxu0 0.0
        %2755 = vmatprep.subr.mxu0 0.0
        %2756 = vmatpush1.msra.mxu0 0.0
        %2757 = vmatprep.subr.mxu0 0.0
        %2758 = vmatpush1.msra.mxu0 0.0
        %2759 = vmatprep.subr.mxu0 0.0
        %2760 = vmatpush1.msra.mxu0 0.0
        %2761 = vmatprep.subr.mxu0 0.0
        %2762 = vmatpush1.msra.mxu0 0.0
        %2763 = vmatprep.subr.mxu0 0.0
        %2764 = vmatpush1.msra.mxu0 0.0
        %2765 = vmatprep.subr.mxu0 0.0
        %2766 = vmatpush1.msra.mxu0 0.0
        %2767 = vmatprep.subr.mxu0 0.0
        %2768 = vmatpush1.msra.mxu0 0.0
        %2769 = vmatprep.mubr.f32.mxu0 0.0
        %2770 = vmatmul.mubr.f32.gmra.mrb[0].mxu0 %v640
        %v2771 = vpop.f32.mrb[0].mxu0
        %v2772 = vadd.f32 0.0, %v2771
        %v2773 = vpop.f32.mrb[0].mxu0
        %2774 = vmatprep.mubr.f32.mxu0 0.0
        %2775 = vmatmul.mubr.f32.gmra.mrb[0].mxu0 %v642
        %v2776 = vpop.f32.mrb[0].mxu0
        %v2777 = vadd.f32 0.0, %v2776
        %v2778 = vpop.f32.mrb[0].mxu0
        %2779 = vmatprep.mubr.f32.mxu0 0.0
        %2780 = vmatmul.mubr.f32.gmra.mrb[0].mxu0 %v644
        %v2781 = vpop.f32.mrb[0].mxu0
        %v2782 = vadd.f32 0.0, %v2781
        %v2783 = vpop.f32.mrb[0].mxu0
        %2784 = vmatprep.mubr.f32.mxu0 0.0
        %2785 = vmatmul.mubr.f32.gmra.mrb[0].mxu0 %v646
        %v2786 = vpop.f32.mrb[0].mxu0
        %v2787 = vadd.f32 0.0, %v2786
        %v2788 = vpop.f32.mrb[0].mxu0
        %2789 = vmatprep.mubr.f32.mxu0 0.0
        %2790 = vmatmul.mubr.f32.gmra.mrb[0].mxu0 %v648
        %v2791 = vpop.f32.mrb[0].mxu0
        %v2792 = vadd.f32 0.0, %v2791
        %v2793 = vpop.f32.mrb[0].mxu0
        %2794 = vmatprep.mubr.f32.mxu0 0.0
        %2795 = vmatmul.mubr.f32.gmra.mrb[0].mxu0 %v650
        %v2796 = vpop.f32.mrb[0].mxu0
        %v2797 = vadd.f32 0.0, %v2796
        %v2798 = vpop.f32.mrb[0].mxu0
        %2799 = vmatprep.mubr.f32.mxu0 0.0
        %2800 = vmatmul.mubr.f32.gmra.mrb[0].mxu0 %v652
        %v2801 = vpop.f32.mrb[0].mxu0
        %v2802 = vadd.f32 0.0, %v2801
        %v2803 = vpop.f32.mrb[0].mxu0
        %2804 = vmatprep.mubr.f32.mxu0 0.0
        %2805 = vmatmul.mubr.f32.gmra.mrb[0].mxu0 %v654
        %v2806 = vpop.f32.mrb[0].mxu0
        %v2807 = vadd.f32 0.0, %v2806
        %v2808 = vpop.f32.mrb[0].mxu0
        %2809 = vmatprep.mubr.f32.mxu0 0.0
        %2810 = vmatmul.mubr.f32.gmra.mrb[0].mxu0 %v656
        %v2811 = vpop.f32.mrb[0].mxu0
        %v2812 = vadd.f32 0.0, %v2811
        %v2813 = vpop.f32.mrb[0].mxu0
        %2814 = vmatprep.mubr.f32.mxu0 0.0
        %2815 = vmatmul.mubr.f32.gmra.mrb[0].mxu0 %v658
        %v2816 = vpop.f32.mrb[0].mxu0
        %v2817 = vadd.f32 0.0, %v2816
        %v2818 = vpop.f32.mrb[0].mxu0
        %2819 = vmatprep.mubr.f32.mxu0 0.0
        %2820 = vmatmul.mubr.f32.gmra.mrb[0].mxu0 %v660
        %v2821 = vpop.f32.mrb[0].mxu0
        %v2822 = vadd.f32 0.0, %v2821
        %v2823 = vpop.f32.mrb[0].mxu0
        %2824 = vmatprep.mubr.f32.mxu0 0.0
        %2825 = vmatmul.mubr.f32.gmra.mrb[0].mxu0 %v662
        %v2826 = vpop.f32.mrb[0].mxu0
        %v2827 = vadd.f32 0.0, %v2826
        %v2828 = vpop.f32.mrb[0].mxu0
        %2829 = vmatprep.mubr.f32.mxu0 0.0
        %2830 = vmatmul.mubr.f32.gmra.mrb[0].mxu0 %v664
        %v2831 = vpop.f32.mrb[0].mxu0
        %v2832 = vadd.f32 0.0, %v2831
        %v2833 = vpop.f32.mrb[0].mxu0
        %2834 = vmatprep.mubr.f32.mxu0 0.0
        %2835 = vmatmul.mubr.f32.gmra.mrb[0].mxu0 %v666
        %v2836 = vpop.f32.mrb[0].mxu0
        %v2837 = vadd.f32 0.0, %v2836
        %v2838 = vpop.f32.mrb[0].mxu0
        %2839 = vmatprep.mubr.f32.mxu0 0.0
        %2840 = vmatmul.mubr.f32.gmra.mrb[0].mxu0 %v668
        %v2841 = vpop.f32.mrb[0].mxu0
        %v2842 = vadd.f32 0.0, %v2841
        %v2843 = vpop.f32.mrb[0].mxu0
        %2844 = vmatprep.mubr.f32.mxu0 0.0
        %2845 = vmatmul.mubr.f32.gmra.mrb[0].mxu0 %v670
        %v2846 = vpop.f32.mrb[0].mxu0
        %v2847 = vadd.f32 0.0, %v2846
        %v2848 = vpop.f32.mrb[0].mxu0
        %2849 = vmatprep.mubr.f32.mxu0 0.0
        %2850 = vmatmul.mubr.f32.gmra.mrb[0].mxu0 %v672
        %v2851 = vpop.f32.mrb[0].mxu0
        %v2852 = vadd.f32 0.0, %v2851
        %v2853 = vpop.f32.mrb[0].mxu0
        %2854 = vmatprep.mubr.f32.mxu0 0.0
        %2855 = vmatmul.mubr.f32.gmra.mrb[0].mxu0 %v674
        %v2856 = vpop.f32.mrb[0].mxu0
        %v2857 = vadd.f32 0.0, %v2856
        %v2858 = vpop.f32.mrb[0].mxu0
        %2859 = vmatprep.mubr.f32.mxu0 0.0
        %2860 = vmatmul.mubr.f32.gmra.mrb[0].mxu0 %v676
        %v2861 = vpop.f32.mrb[0].mxu0
        %v2862 = vadd.f32 0.0, %v2861
        %v2863 = vpop.f32.mrb[0].mxu0
        %2864 = vmatprep.mubr.f32.mxu0 0.0
        %2865 = vmatmul.mubr.f32.gmra.mrb[0].mxu0 %v678
        %v2866 = vpop.f32.mrb[0].mxu0
        %v2867 = vadd.f32 0.0, %v2866
        %v2868 = vpop.f32.mrb[0].mxu0
        %2869 = vmatprep.mubr.f32.mxu0 0.0
        %2870 = vmatmul.mubr.f32.gmra.mrb[0].mxu0 %v680
        %v2871 = vpop.f32.mrb[0].mxu0
        %v2872 = vadd.f32 0.0, %v2871
        %v2873 = vpop.f32.mrb[0].mxu0
        %2874 = vmatprep.mubr.f32.mxu0 0.0
        %2875 = vmatmul.mubr.f32.gmra.mrb[0].mxu0 %v682
        %v2876 = vpop.f32.mrb[0].mxu0
        %v2877 = vadd.f32 0.0, %v2876
        %v2878 = vpop.f32.mrb[0].mxu0
        %2879 = vmatprep.mubr.f32.mxu0 0.0
        %2880 = vmatmul.mubr.f32.gmra.mrb[0].mxu0 %v684
        %v2881 = vpop.f32.mrb[0].mxu0
        %v2882 = vadd.f32 0.0, %v2881
        %v2883 = vpop.f32.mrb[0].mxu0
        %2884 = vmatprep.mubr.f32.mxu0 0.0
        %2885 = vmatmul.mubr.f32.gmra.mrb[0].mxu0 %v686
        %v2886 = vpop.f32.mrb[0].mxu0
        %v2887 = vadd.f32 0.0, %v2886
        %v2888 = vpop.f32.mrb[0].mxu0
        %2889 = vmatprep.mubr.f32.mxu0 0.0
        %2890 = vmatmul.mubr.f32.gmra.mrb[0].mxu0 %v688
        %v2891 = vpop.f32.mrb[0].mxu0
        %v2892 = vadd.f32 0.0, %v2891
        %v2893 = vpop.f32.mrb[0].mxu0
        %2894 = vmatprep.mubr.f32.mxu0 0.0
        %2895 = vmatmul.mubr.f32.gmra.mrb[0].mxu0 %v690
        %v2896 = vpop.f32.mrb[0].mxu0
        %v2897 = vadd.f32 0.0, %v2896
        %v2898 = vpop.f32.mrb[0].mxu0
        %2899 = vmatprep.mubr.f32.mxu0 0.0
        %2900 = vmatmul.mubr.f32.gmra.mrb[0].mxu0 %v692
        %v2901 = vpop.f32.mrb[0].mxu0
        %v2902 = vadd.f32 0.0, %v2901
        %v2903 = vpop.f32.mrb[0].mxu0
        %2904 = vmatprep.mubr.f32.mxu0 0.0
        %2905 = vmatmul.mubr.f32.gmra.mrb[0].mxu0 %v694
        %v2906 = vpop.f32.mrb[0].mxu0
        %v2907 = vadd.f32 0.0, %v2906
        %v2908 = vpop.f32.mrb[0].mxu0
        %2909 = vmatprep.mubr.f32.mxu0 0.0
        %2910 = vmatmul.mubr.f32.gmra.mrb[0].mxu0 %v1897
        %v2911 = vpop.f32.mrb[0].mxu0
        %v2912 = vadd.f32 0.0, %v2911
        %v2913 = vpop.f32.mrb[0].mxu0
        %2914 = vmatprep.mubr.f32.mxu0 0.0
        %2915 = vmatmul.mubr.f32.gmra.mrb[0].mxu0 %v1899
        %v2916 = vpop.f32.mrb[0].mxu0
        %v2917 = vadd.f32 0.0, %v2916
        %v2918 = vpop.f32.mrb[0].mxu0
        %2919 = vmatprep.mubr.f32.mxu0 0.0
        %2920 = vmatmul.mubr.f32.gmra.mrb[0].mxu0 %v634
        %v2921 = vpop.f32.mrb[0].mxu0
        %v2922 = vadd.f32 0.0, %v2921
        %v2923 = vpop.f32.mrb[0].mxu0
        %2924 = vmatprep.mubr.f32.mxu0 0.0
        %2925 = vmatmul.mubr.f32.gmra.mrb[0].mxu0 %v634
        %v2926 = vpop.f32.mrb[0].mxu0
        %v2927 = vadd.f32 0.0, %v2926
        %v2928 = vpop.f32.mrb[0].mxu0
        %2929 = vdwg.mxu0
        %v2930 = vadd.f32 %v2665, %v2772
        %v2931 = vadd.f32 %v2666, %v2777
        %v2932 = vadd.f32 %v2667, %v2782
        %v2933 = vadd.f32 %v2668, %v2787
        %v2934 = vadd.f32 %v2669, %v2792
        %v2935 = vadd.f32 %v2670, %v2797
        %v2936 = vadd.f32 %v2671, %v2802
        %v2937 = vadd.f32 %v2672, %v2807
        %v2938 = vadd.f32 %v2673, %v2812
        %v2939 = vadd.f32 %v2674, %v2817
        %v2940 = vadd.f32 %v2675, %v2822
        %v2941 = vadd.f32 %v2676, %v2827
        %v2942 = vadd.f32 %v2677, %v2832
        %v2943 = vadd.f32 %v2678, %v2837
        %v2944 = vadd.f32 %v2679, %v2842
        %v2945 = vadd.f32 %v2680, %v2847
        %v2946 = vadd.f32 %v2681, %v2852
        %v2947 = vadd.f32 %v2682, %v2857
        %v2948 = vadd.f32 %v2683, %v2862
        %v2949 = vadd.f32 %v2684, %v2867
        %v2950 = vadd.f32 %v2685, %v2872
        %v2951 = vadd.f32 %v2686, %v2877
        %v2952 = vadd.f32 %v2687, %v2882
        %v2953 = vadd.f32 %v2688, %v2887
        %v2954 = vadd.f32 %v2689, %v2892
        %v2955 = vadd.f32 %v2690, %v2897
        %v2956 = vadd.f32 %v2691, %v2902
        %v2957 = vadd.f32 %v2692, %v2907
        %v2958 = vadd.f32 %v2693, %v2912
        %v2959 = vadd.f32 %v2694, %v2917
        %v2960 = vadd.f32 %v2695, %v2922
        %v2961 = vadd.f32 %v2696, %v2927
        %v2962 = vld [vmem:[%s1 + $0x200] sm:$0xff]
        %v2963 = vld [vmem:[%s1 + $0x208] sm:$0xff]
        %v2964 = vld [vmem:[%s1 + $0x210] sm:$0xff]
        %v2965 = vld [vmem:[%s1 + $0x218] sm:$0xff]
        %v2966 = vld [vmem:[%s1 + $0x220] sm:$0xff]
        %v2967 = vld [vmem:[%s1 + $0x228] sm:$0xff]
        %v2968 = vld [vmem:[%s1 + $0x230] sm:$0xff]
        %v2969 = vld [vmem:[%s1 + $0x238] sm:$0xff]
        %2970 = vmatprep.subr.mxu0 0.0
        %2971 = vmatpush1.msra.mxu0 %v2962
        %2972 = vmatprep.subr.mxu0 0.0
        %2973 = vmatpush1.msra.mxu0 %v2963
        %2974 = vmatprep.subr.mxu0 0.0
        %2975 = vmatpush1.msra.mxu0 %v2964
        %2976 = vmatprep.subr.mxu0 0.0
        %2977 = vmatpush1.msra.mxu0 %v2965
        %2978 = vmatprep.subr.mxu0 0.0
        %2979 = vmatpush1.msra.mxu0 %v2966
        %2980 = vmatprep.subr.mxu0 0.0
        %2981 = vmatpush1.msra.mxu0 %v2967
        %2982 = vmatprep.subr.mxu0 0.0
        %2983 = vmatpush1.msra.mxu0 %v2968
        %2984 = vmatprep.subr.mxu0 0.0
        %2985 = vmatpush1.msra.mxu0 %v2969
        %2986 = vmatprep.subr.mxu0 0.0
        %2987 = vmatpush1.msra.mxu0 0.0
        %2988 = vmatprep.subr.mxu0 0.0
        %2989 = vmatpush1.msra.mxu0 0.0
        %2990 = vmatprep.subr.mxu0 0.0
        %2991 = vmatpush1.msra.mxu0 0.0
        %2992 = vmatprep.subr.mxu0 0.0
        %2993 = vmatpush1.msra.mxu0 0.0
        %2994 = vmatprep.subr.mxu0 0.0
        %2995 = vmatpush1.msra.mxu0 0.0
        %2996 = vmatprep.subr.mxu0 0.0
        %2997 = vmatpush1.msra.mxu0 0.0
        %2998 = vmatprep.subr.mxu0 0.0
        %2999 = vmatpush1.msra.mxu0 0.0
        %3000 = vmatprep.subr.mxu0 0.0
        %3001 = vmatpush1.msra.mxu0 0.0
        %3002 = vmatprep.subr.mxu0 0.0
        %3003 = vmatpush1.msra.mxu0 0.0
        %3004 = vmatprep.subr.mxu0 0.0
        %3005 = vmatpush1.msra.mxu0 0.0
        %3006 = vmatprep.subr.mxu0 0.0
        %3007 = vmatpush1.msra.mxu0 0.0
        %3008 = vmatprep.subr.mxu0 0.0
        %3009 = vmatpush1.msra.mxu0 0.0
        %3010 = vmatprep.subr.mxu0 0.0
        %3011 = vmatpush1.msra.mxu0 0.0
        %3012 = vmatprep.subr.mxu0 0.0
        %3013 = vmatpush1.msra.mxu0 0.0
        %3014 = vmatprep.subr.mxu0 0.0
        %3015 = vmatpush1.msra.mxu0 0.0
        %3016 = vmatprep.subr.mxu0 0.0
        %3017 = vmatpush1.msra.mxu0 0.0
        %3018 = vmatprep.subr.mxu0 0.0
        %3019 = vmatpush1.msra.mxu0 0.0
        %3020 = vmatprep.subr.mxu0 0.0
        %3021 = vmatpush1.msra.mxu0 0.0
        %3022 = vmatprep.subr.mxu0 0.0
        %3023 = vmatpush1.msra.mxu0 0.0
        %3024 = vmatprep.subr.mxu0 0.0
        %3025 = vmatpush1.msra.mxu0 0.0
        %3026 = vmatprep.subr.mxu0 0.0
        %3027 = vmatpush1.msra.mxu0 0.0
        %3028 = vmatprep.subr.mxu0 0.0
        %3029 = vmatpush1.msra.mxu0 0.0
        %3030 = vmatprep.subr.mxu0 0.0
        %3031 = vmatpush1.msra.mxu0 0.0
        %3032 = vmatprep.subr.mxu0 0.0
        %3033 = vmatpush1.msra.mxu0 0.0
        %3034 = vmatprep.mubr.f32.mxu0 0.0
        %3035 = vmatmul.mubr.f32.gmra.mrb[0].mxu0 %v1300
        %v3036 = vpop.f32.mrb[0].mxu0
        %v3037 = vadd.f32 0.0, %v3036
        %v3038 = vpop.f32.mrb[0].mxu0
        %3039 = vmatprep.mubr.f32.mxu0 0.0
        %3040 = vmatmul.mubr.f32.gmra.mrb[0].mxu0 %v1302
        %v3041 = vpop.f32.mrb[0].mxu0
        %v3042 = vadd.f32 0.0, %v3041
        %v3043 = vpop.f32.mrb[0].mxu0
        %3044 = vmatprep.mubr.f32.mxu0 0.0
        %3045 = vmatmul.mubr.f32.gmra.mrb[0].mxu0 %v1304
        %v3046 = vpop.f32.mrb[0].mxu0
        %v3047 = vadd.f32 0.0, %v3046
        %v3048 = vpop.f32.mrb[0].mxu0
        %3049 = vmatprep.mubr.f32.mxu0 0.0
        %3050 = vmatmul.mubr.f32.gmra.mrb[0].mxu0 %v1306
        %v3051 = vpop.f32.mrb[0].mxu0
        %v3052 = vadd.f32 0.0, %v3051
        %v3053 = vpop.f32.mrb[0].mxu0
        %3054 = vmatprep.mubr.f32.mxu0 0.0
        %3055 = vmatmul.mubr.f32.gmra.mrb[0].mxu0 %v1308
        %v3056 = vpop.f32.mrb[0].mxu0
        %v3057 = vadd.f32 0.0, %v3056
        %v3058 = vpop.f32.mrb[0].mxu0
        %3059 = vmatprep.mubr.f32.mxu0 0.0
        %3060 = vmatmul.mubr.f32.gmra.mrb[0].mxu0 %v1310
        %v3061 = vpop.f32.mrb[0].mxu0
        %v3062 = vadd.f32 0.0, %v3061
        %v3063 = vpop.f32.mrb[0].mxu0
        %3064 = vmatprep.mubr.f32.mxu0 0.0
        %3065 = vmatmul.mubr.f32.gmra.mrb[0].mxu0 %v1312
        %v3066 = vpop.f32.mrb[0].mxu0
        %v3067 = vadd.f32 0.0, %v3066
        %v3068 = vpop.f32.mrb[0].mxu0
        %3069 = vmatprep.mubr.f32.mxu0 0.0
        %3070 = vmatmul.mubr.f32.gmra.mrb[0].mxu0 %v1314
        %v3071 = vpop.f32.mrb[0].mxu0
        %v3072 = vadd.f32 0.0, %v3071
        %v3073 = vpop.f32.mrb[0].mxu0
        %3074 = vmatprep.mubr.f32.mxu0 0.0
        %3075 = vmatmul.mubr.f32.gmra.mrb[0].mxu0 %v1316
        %v3076 = vpop.f32.mrb[0].mxu0
        %v3077 = vadd.f32 0.0, %v3076
        %v3078 = vpop.f32.mrb[0].mxu0
        %3079 = vmatprep.mubr.f32.mxu0 0.0
        %3080 = vmatmul.mubr.f32.gmra.mrb[0].mxu0 %v1318
        %v3081 = vpop.f32.mrb[0].mxu0
        %v3082 = vadd.f32 0.0, %v3081
        %v3083 = vpop.f32.mrb[0].mxu0
        %3084 = vmatprep.mubr.f32.mxu0 0.0
        %3085 = vmatmul.mubr.f32.gmra.mrb[0].mxu0 %v1320
        %v3086 = vpop.f32.mrb[0].mxu0
        %v3087 = vadd.f32 0.0, %v3086
        %v3088 = vpop.f32.mrb[0].mxu0
        %3089 = vmatprep.mubr.f32.mxu0 0.0
        %3090 = vmatmul.mubr.f32.gmra.mrb[0].mxu0 %v1322
        %v3091 = vpop.f32.mrb[0].mxu0
        %v3092 = vadd.f32 0.0, %v3091
        %v3093 = vpop.f32.mrb[0].mxu0
        %3094 = vmatprep.mubr.f32.mxu0 0.0
        %3095 = vmatmul.mubr.f32.gmra.mrb[0].mxu0 %v1324
        %v3096 = vpop.f32.mrb[0].mxu0
        %v3097 = vadd.f32 0.0, %v3096
        %v3098 = vpop.f32.mrb[0].mxu0
        %3099 = vmatprep.mubr.f32.mxu0 0.0
        %3100 = vmatmul.mubr.f32.gmra.mrb[0].mxu0 %v1326
        %v3101 = vpop.f32.mrb[0].mxu0
        %v3102 = vadd.f32 0.0, %v3101
        %v3103 = vpop.f32.mrb[0].mxu0
        %3104 = vmatprep.mubr.f32.mxu0 0.0
        %3105 = vmatmul.mubr.f32.gmra.mrb[0].mxu0 %v1328
        %v3106 = vpop.f32.mrb[0].mxu0
        %v3107 = vadd.f32 0.0, %v3106
        %v3108 = vpop.f32.mrb[0].mxu0
        %3109 = vmatprep.mubr.f32.mxu0 0.0
        %3110 = vmatmul.mubr.f32.gmra.mrb[0].mxu0 %v1330
        %v3111 = vpop.f32.mrb[0].mxu0
        %v3112 = vadd.f32 0.0, %v3111
        %v3113 = vpop.f32.mrb[0].mxu0
        %3114 = vmatprep.mubr.f32.mxu0 0.0
        %3115 = vmatmul.mubr.f32.gmra.mrb[0].mxu0 %v1332
        %v3116 = vpop.f32.mrb[0].mxu0
        %v3117 = vadd.f32 0.0, %v3116
        %v3118 = vpop.f32.mrb[0].mxu0
        %3119 = vmatprep.mubr.f32.mxu0 0.0
        %3120 = vmatmul.mubr.f32.gmra.mrb[0].mxu0 %v1334
        %v3121 = vpop.f32.mrb[0].mxu0
        %v3122 = vadd.f32 0.0, %v3121
        %v3123 = vpop.f32.mrb[0].mxu0
        %3124 = vmatprep.mubr.f32.mxu0 0.0
        %3125 = vmatmul.mubr.f32.gmra.mrb[0].mxu0 %v1336
        %v3126 = vpop.f32.mrb[0].mxu0
        %v3127 = vadd.f32 0.0, %v3126
        %v3128 = vpop.f32.mrb[0].mxu0
        %3129 = vmatprep.mubr.f32.mxu0 0.0
        %3130 = vmatmul.mubr.f32.gmra.mrb[0].mxu0 %v1338
        %v3131 = vpop.f32.mrb[0].mxu0
        %v3132 = vadd.f32 0.0, %v3131
        %v3133 = vpop.f32.mrb[0].mxu0
        %3134 = vmatprep.mubr.f32.mxu0 0.0
        %3135 = vmatmul.mubr.f32.gmra.mrb[0].mxu0 %v1340
        %v3136 = vpop.f32.mrb[0].mxu0
        %v3137 = vadd.f32 0.0, %v3136
        %v3138 = vpop.f32.mrb[0].mxu0
        %3139 = vmatprep.mubr.f32.mxu0 0.0
        %3140 = vmatmul.mubr.f32.gmra.mrb[0].mxu0 %v1342
        %v3141 = vpop.f32.mrb[0].mxu0
        %v3142 = vadd.f32 0.0, %v3141
        %v3143 = vpop.f32.mrb[0].mxu0
        %3144 = vmatprep.mubr.f32.mxu0 0.0
        %3145 = vmatmul.mubr.f32.gmra.mrb[0].mxu0 %v1344
        %v3146 = vpop.f32.mrb[0].mxu0
        %v3147 = vadd.f32 0.0, %v3146
        %v3148 = vpop.f32.mrb[0].mxu0
        %3149 = vmatprep.mubr.f32.mxu0 0.0
        %3150 = vmatmul.mubr.f32.gmra.mrb[0].mxu0 %v1346
        %v3151 = vpop.f32.mrb[0].mxu0
        %v3152 = vadd.f32 0.0, %v3151
        %v3153 = vpop.f32.mrb[0].mxu0
        %3154 = vmatprep.mubr.f32.mxu0 0.0
        %3155 = vmatmul.mubr.f32.gmra.mrb[0].mxu0 %v1348
        %v3156 = vpop.f32.mrb[0].mxu0
        %v3157 = vadd.f32 0.0, %v3156
        %v3158 = vpop.f32.mrb[0].mxu0
        %3159 = vmatprep.mubr.f32.mxu0 0.0
        %3160 = vmatmul.mubr.f32.gmra.mrb[0].mxu0 %v1350
        %v3161 = vpop.f32.mrb[0].mxu0
        %v3162 = vadd.f32 0.0, %v3161
        %v3163 = vpop.f32.mrb[0].mxu0
        %3164 = vmatprep.mubr.f32.mxu0 0.0
        %3165 = vmatmul.mubr.f32.gmra.mrb[0].mxu0 %v1352
        %v3166 = vpop.f32.mrb[0].mxu0
        %v3167 = vadd.f32 0.0, %v3166
        %v3168 = vpop.f32.mrb[0].mxu0
        %3169 = vmatprep.mubr.f32.mxu0 0.0
        %3170 = vmatmul.mubr.f32.gmra.mrb[0].mxu0 %v1354
        %v3171 = vpop.f32.mrb[0].mxu0
        %v3172 = vadd.f32 0.0, %v3171
        %v3173 = vpop.f32.mrb[0].mxu0
        %3174 = vmatprep.mubr.f32.mxu0 0.0
        %3175 = vmatmul.mubr.f32.gmra.mrb[0].mxu0 %v2171
        %v3176 = vpop.f32.mrb[0].mxu0
        %v3177 = vadd.f32 0.0, %v3176
        %v3178 = vpop.f32.mrb[0].mxu0
        %3179 = vmatprep.mubr.f32.mxu0 0.0
        %3180 = vmatmul.mubr.f32.gmra.mrb[0].mxu0 %v2173
        %v3181 = vpop.f32.mrb[0].mxu0
        %v3182 = vadd.f32 0.0, %v3181
        %v3183 = vpop.f32.mrb[0].mxu0
        %3184 = vmatprep.mubr.f32.mxu0 0.0
        %3185 = vmatmul.mubr.f32.gmra.mrb[0].mxu0 %v1294
        %v3186 = vpop.f32.mrb[0].mxu0
        %v3187 = vadd.f32 0.0, %v3186
        %v3188 = vpop.f32.mrb[0].mxu0
        %3189 = vmatprep.mubr.f32.mxu0 0.0
        %3190 = vmatmul.mubr.f32.gmra.mrb[0].mxu0 %v1294
        %v3191 = vpop.f32.mrb[0].mxu0
        %v3192 = vadd.f32 0.0, %v3191
        %v3193 = vpop.f32.mrb[0].mxu0
        %3194 = vdwg.mxu0
        %v3195 = vadd.f32 %v2930, %v3037
        %v3196 = vadd.f32 %v2931, %v3042
        %v3197 = vadd.f32 %v2932, %v3047
        %v3198 = vadd.f32 %v2933, %v3052
        %v3199 = vadd.f32 %v2934, %v3057
        %v3200 = vadd.f32 %v2935, %v3062
        %v3201 = vadd.f32 %v2936, %v3067
        %v3202 = vadd.f32 %v2937, %v3072
        %v3203 = vadd.f32 %v2938, %v3077
        %v3204 = vadd.f32 %v2939, %v3082
        %v3205 = vadd.f32 %v2940, %v3087
        %v3206 = vadd.f32 %v2941, %v3092
        %v3207 = vadd.f32 %v2942, %v3097
        %v3208 = vadd.f32 %v2943, %v3102
        %v3209 = vadd.f32 %v2944, %v3107
        %v3210 = vadd.f32 %v2945, %v3112
        %v3211 = vadd.f32 %v2946, %v3117
        %v3212 = vadd.f32 %v2947, %v3122
        %v3213 = vadd.f32 %v2948, %v3127
        %v3214 = vadd.f32 %v2949, %v3132
        %v3215 = vadd.f32 %v2950, %v3137
        %v3216 = vadd.f32 %v2951, %v3142
        %v3217 = vadd.f32 %v2952, %v3147
        %v3218 = vadd.f32 %v2953, %v3152
        %v3219 = vadd.f32 %v2954, %v3157
        %v3220 = vadd.f32 %v2955, %v3162
        %v3221 = vadd.f32 %v2956, %v3167
        %v3222 = vadd.f32 %v2957, %v3172
        %v3223 = vadd.f32 %v2958, %v3177
        %v3224 = vadd.f32 %v2959, %v3182
        %v3225 = vadd.f32 %v2960, %v3187
        %v3226 = vadd.f32 %v2961, %v3192
        %v3227 = vld [vmem:[%s2] sm:$0x1]
        %v3229 = vlaneseq
        %v3230 = vshrl.u32 %v3229, 7
        %v3231 = vsub.s32 0, %v3230
        %v3232 = vrot.slane %v3227, %v3231
        %v3234 = vadd.f32 %v3195, %v3232
        %v3235 = vadd.f32 %v3196, %v3232
        %v3236 = vadd.f32 %v3197, %v3232
        %v3237 = vadd.f32 %v3198, %v3232
        %v3238 = vadd.f32 %v3199, %v3232
        %v3239 = vadd.f32 %v3200, %v3232
        %v3240 = vadd.f32 %v3201, %v3232
        %v3241 = vadd.f32 %v3202, %v3232
        %v3242 = vadd.f32 %v3203, %v3232
        %v3243 = vadd.f32 %v3204, %v3232
        %v3244 = vadd.f32 %v3205, %v3232
        %v3245 = vadd.f32 %v3206, %v3232
        %v3246 = vadd.f32 %v3207, %v3232
        %v3247 = vadd.f32 %v3208, %v3232
        %v3248 = vadd.f32 %v3209, %v3232
        %v3249 = vadd.f32 %v3210, %v3232
        %v3250 = vadd.f32 %v3211, %v3232
        %v3251 = vadd.f32 %v3212, %v3232
        %v3252 = vadd.f32 %v3213, %v3232
        %v3253 = vadd.f32 %v3214, %v3232
        %v3254 = vadd.f32 %v3215, %v3232
        %v3255 = vadd.f32 %v3216, %v3232
        %v3256 = vadd.f32 %v3217, %v3232
        %v3257 = vadd.f32 %v3218, %v3232
        %v3258 = vadd.f32 %v3219, %v3232
        %v3259 = vadd.f32 %v3220, %v3232
        %v3260 = vadd.f32 %v3221, %v3232
        %v3261 = vadd.f32 %v3222, %v3232
        %v3262 = vadd.f32 %v3223, %v3232
        %v3263 = vadd.f32 %v3224, %v3232
        %v3264 = vadd.f32 %v3225, %v3232
        %v3265 = vadd.f32 %v3226, %v3232
        %v3266 = vmax.f32 %v3234, 0.0
        %v3267 = vmax.f32 %v3235, 0.0
        %v3268 = vmax.f32 %v3236, 0.0
        %v3269 = vmax.f32 %v3237, 0.0
        %v3270 = vmax.f32 %v3238, 0.0
        %v3271 = vmax.f32 %v3239, 0.0
        %v3272 = vmax.f32 %v3240, 0.0
        %v3273 = vmax.f32 %v3241, 0.0
        %v3274 = vmax.f32 %v3242, 0.0
        %v3275 = vmax.f32 %v3243, 0.0
        %v3276 = vmax.f32 %v3244, 0.0
        %v3277 = vmax.f32 %v3245, 0.0
        %v3278 = vmax.f32 %v3246, 0.0
        %v3279 = vmax.f32 %v3247, 0.0
        %v3280 = vmax.f32 %v3248, 0.0
        %v3281 = vmax.f32 %v3249, 0.0
        %v3282 = vmax.f32 %v3250, 0.0
        %v3283 = vmax.f32 %v3251, 0.0
        %v3284 = vmax.f32 %v3252, 0.0
        %v3285 = vmax.f32 %v3253, 0.0
        %v3286 = vmax.f32 %v3254, 0.0
        %v3287 = vmax.f32 %v3255, 0.0
        %v3288 = vmax.f32 %v3256, 0.0
        %v3289 = vmax.f32 %v3257, 0.0
        %v3290 = vmax.f32 %v3258, 0.0
        %v3291 = vmax.f32 %v3259, 0.0
        %v3292 = vmax.f32 %v3260, 0.0
        %v3293 = vmax.f32 %v3261, 0.0
        %v3294 = vmax.f32 %v3262, 0.0
        %v3295 = vmax.f32 %v3263, 0.0
        %v3296 = vmax.f32 %v3264, 0.0
        %v3297 = vmax.f32 %v3265, 0.0
        %v3330 = vrot.slane %v3266, 7
        %v3331 = vrot.slane %v3267, 7
        %v3332 = vsel %vm395, %v3330, %v3331
        %v3333 = vrot.slane %v3268, 7
        %v3334 = vrot.slane %v3269, 7
        %v3335 = vsel %vm395, %v3333, %v3334
        %v3336 = vrot.slane %v3270, 7
        %v3337 = vrot.slane %v3271, 7
        %v3338 = vsel %vm395, %v3336, %v3337
        %v3339 = vrot.slane %v3272, 7
        %v3340 = vrot.slane %v3273, 7
        %v3341 = vsel %vm395, %v3339, %v3340
        %v3342 = vrot.slane %v3274, 7
        %v3343 = vrot.slane %v3275, 7
        %v3344 = vsel %vm395, %v3342, %v3343
        %v3345 = vrot.slane %v3276, 7
        %v3346 = vrot.slane %v3277, 7
        %v3347 = vsel %vm395, %v3345, %v3346
        %v3348 = vrot.slane %v3278, 7
        %v3349 = vrot.slane %v3279, 7
        %v3350 = vsel %vm395, %v3348, %v3349
        %v3351 = vrot.slane %v3280, 7
        %v3352 = vrot.slane %v3281, 7
        %v3353 = vsel %vm395, %v3351, %v3352
        %v3354 = vrot.slane %v3282, 7
        %v3355 = vrot.slane %v3283, 7
        %v3356 = vsel %vm395, %v3354, %v3355
        %v3357 = vrot.slane %v3284, 7
        %v3358 = vrot.slane %v3285, 7
        %v3359 = vsel %vm395, %v3357, %v3358
        %v3360 = vrot.slane %v3286, 7
        %v3361 = vrot.slane %v3287, 7
        %v3362 = vsel %vm395, %v3360, %v3361
        %v3363 = vrot.slane %v3288, 7
        %v3364 = vrot.slane %v3289, 7
        %v3365 = vsel %vm395, %v3363, %v3364
        %v3366 = vrot.slane %v3290, 7
        %v3367 = vrot.slane %v3291, 7
        %v3368 = vsel %vm395, %v3366, %v3367
        %v3369 = vrot.slane %v3292, 7
        %v3370 = vrot.slane %v3293, 7
        %v3371 = vsel %vm395, %v3369, %v3370
        %v3372 = vrot.slane %v3294, 7
        %v3373 = vrot.slane %v3295, 7
        %v3374 = vsel %vm395, %v3372, %v3373
        %v3375 = vrot.slane %v3296, 7
        %v3376 = vrot.slane %v3297, 7
        %v3377 = vsel %vm395, %v3375, %v3376
        %v3410 = vsel %vm395, 0.0, %v3330
        %v3411 = vsel %vm395, 0.0, %v3333
        %v3412 = vsel %vm395, 0.0, %v3336
        %v3413 = vsel %vm395, 0.0, %v3339
        %v3414 = vsel %vm395, 0.0, %v3342
        %v3415 = vsel %vm395, 0.0, %v3345
        %v3416 = vsel %vm395, 0.0, %v3348
        %v3417 = vsel %vm395, 0.0, %v3351
        %v3418 = vsel %vm395, 0.0, %v3354
        %v3419 = vsel %vm395, 0.0, %v3357
        %v3420 = vsel %vm395, 0.0, %v3360
        %v3421 = vsel %vm395, 0.0, %v3363
        %v3422 = vsel %vm395, 0.0, %v3366
        %v3423 = vsel %vm395, 0.0, %v3369
        %v3424 = vsel %vm395, 0.0, %v3372
        %v3425 = vsel %vm395, 0.0, %v3375
        %v3426 = vsel %vm395, %v3331, 0.0
        %v3427 = vsel %vm395, %v3334, 0.0
        %v3428 = vsel %vm395, %v3337, 0.0
        %v3429 = vsel %vm395, %v3340, 0.0
        %v3430 = vsel %vm395, %v3343, 0.0
        %v3431 = vsel %vm395, %v3346, 0.0
        %v3432 = vsel %vm395, %v3349, 0.0
        %v3433 = vsel %vm395, %v3352, 0.0
        %v3434 = vsel %vm395, %v3355, 0.0
        %v3435 = vsel %vm395, %v3358, 0.0
        %v3436 = vsel %vm395, %v3361, 0.0
        %v3437 = vsel %vm395, %v3364, 0.0
        %v3438 = vsel %vm395, %v3367, 0.0
        %v3439 = vsel %vm395, %v3370, 0.0
        %v3440 = vsel %vm395, %v3373, 0.0
        %v3441 = vsel %vm395, %v3376, 0.0
        %v3442 = vld [vmem:[%s3] sm:$0xff]
        %v3443 = vld [vmem:[%s3 + $0x8] sm:$0xff]
        %v3444 = vld [vmem:[%s3 + $0x10] sm:$0xff]
        %v3445 = vld [vmem:[%s3 + $0x18] sm:$0xff]
        %v3446 = vld [vmem:[%s3 + $0x20] sm:$0xff]
        %v3447 = vld [vmem:[%s3 + $0x28] sm:$0xff]
        %v3448 = vld [vmem:[%s3 + $0x30] sm:$0xff]
        %v3449 = vld [vmem:[%s3 + $0x38] sm:$0xff]
        %v3480 = vrot.slane %v3410, 1
        %v3481 = vrot.slane %v3332, 1
        %v3482 = vsel %vm547, %v3480, %v3481
        %v3483 = vrot.slane %v3426, 1
        %v3484 = vsel %vm547, %v3481, %v3483
        %v3485 = vrot.slane %v3411, 1
        %v3486 = vrot.slane %v3335, 1
        %v3487 = vsel %vm547, %v3485, %v3486
        %v3488 = vrot.slane %v3427, 1
        %v3489 = vsel %vm547, %v3486, %v3488
        %v3490 = vrot.slane %v3412, 1
        %v3491 = vrot.slane %v3338, 1
        %v3492 = vsel %vm547, %v3490, %v3491
        %v3493 = vrot.slane %v3428, 1
        %v3494 = vsel %vm547, %v3491, %v3493
        %v3495 = vrot.slane %v3413, 1
        %v3496 = vrot.slane %v3341, 1
        %v3497 = vsel %vm547, %v3495, %v3496
        %v3498 = vrot.slane %v3429, 1
        %v3499 = vsel %vm547, %v3496, %v3498
        %v3500 = vrot.slane %v3414, 1
        %v3501 = vrot.slane %v3344, 1
        %v3502 = vsel %vm547, %v3500, %v3501
        %v3503 = vrot.slane %v3430, 1
        %v3504 = vsel %vm547, %v3501, %v3503
        %v3505 = vrot.slane %v3415, 1
        %v3506 = vrot.slane %v3347, 1
        %v3507 = vsel %vm547, %v3505, %v3506
        %v3508 = vrot.slane %v3431, 1
        %v3509 = vsel %vm547, %v3506, %v3508
        %v3510 = vrot.slane %v3416, 1
        %v3511 = vrot.slane %v3350, 1
        %v3512 = vsel %vm547, %v3510, %v3511
        %v3513 = vrot.slane %v3432, 1
        %v3514 = vsel %vm547, %v3511, %v3513
        %v3515 = vrot.slane %v3417, 1
        %v3516 = vrot.slane %v3353, 1
        %v3517 = vsel %vm547, %v3515, %v3516
        %v3518 = vrot.slane %v3433, 1
        %v3519 = vsel %vm547, %v3516, %v3518
        %v3520 = vrot.slane %v3418, 1
        %v3521 = vrot.slane %v3356, 1
        %v3522 = vsel %vm547, %v3520, %v3521
        %v3523 = vrot.slane %v3434, 1
        %v3524 = vsel %vm547, %v3521, %v3523
        %v3525 = vrot.slane %v3419, 1
        %v3526 = vrot.slane %v3359, 1
        %v3527 = vsel %vm547, %v3525, %v3526
        %v3528 = vrot.slane %v3435, 1
        %v3529 = vsel %vm547, %v3526, %v3528
        %v3530 = vrot.slane %v3420, 1
        %v3531 = vrot.slane %v3362, 1
        %v3532 = vsel %vm547, %v3530, %v3531
        %v3533 = vrot.slane %v3436, 1
        %v3534 = vsel %vm547, %v3531, %v3533
        %v3535 = vrot.slane %v3421, 1
        %v3536 = vrot.slane %v3365, 1
        %v3537 = vsel %vm547, %v3535, %v3536
        %v3538 = vrot.slane %v3437, 1
        %v3539 = vsel %vm547, %v3536, %v3538
        %v3540 = vrot.slane %v3422, 1
        %v3541 = vrot.slane %v3368, 1
        %v3542 = vsel %vm547, %v3540, %v3541
        %v3543 = vrot.slane %v3438, 1
        %v3544 = vsel %vm547, %v3541, %v3543
        %v3545 = vrot.slane %v3423, 1
        %v3546 = vrot.slane %v3371, 1
        %v3547 = vsel %vm547, %v3545, %v3546
        %v3548 = vrot.slane %v3439, 1
        %v3549 = vsel %vm547, %v3546, %v3548
        %v3550 = vrot.slane %v3424, 1
        %v3551 = vrot.slane %v3374, 1
        %v3552 = vsel %vm547, %v3550, %v3551
        %v3553 = vrot.slane %v3440, 1
        %v3554 = vsel %vm547, %v3551, %v3553
        %v3555 = vld [vmem:[%s3 + $0x40] sm:$0xff]
        %v3556 = vld [vmem:[%s3 + $0x48] sm:$0xff]
        %v3557 = vld [vmem:[%s3 + $0x50] sm:$0xff]
        %v3558 = vld [vmem:[%s3 + $0x58] sm:$0xff]
        %v3559 = vld [vmem:[%s3 + $0x60] sm:$0xff]
        %v3560 = vld [vmem:[%s3 + $0x68] sm:$0xff]
        %v3561 = vld [vmem:[%s3 + $0x70] sm:$0xff]
        %v3562 = vld [vmem:[%s3 + $0x78] sm:$0xff]
        %v3563 = vsel %vm633, %v3482, 0
        %v3565 = vsel %vm633, %v3484, 0
        %v3567 = vsel %vm633, %v3487, 0
        %v3569 = vsel %vm633, %v3489, 0
        %v3571 = vsel %vm633, %v3492, 0
        %v3573 = vsel %vm633, %v3494, 0
        %v3575 = vsel %vm633, %v3497, 0
        %v3577 = vsel %vm633, %v3499, 0
        %v3579 = vsel %vm633, %v3502, 0
        %v3581 = vsel %vm633, %v3504, 0
        %v3583 = vsel %vm633, %v3507, 0
        %v3585 = vsel %vm633, %v3509, 0
        %v3587 = vsel %vm633, %v3512, 0
        %v3589 = vsel %vm633, %v3514, 0
        %v3591 = vsel %vm633, %v3517, 0
        %v3593 = vsel %vm633, %v3519, 0
        %v3595 = vsel %vm633, %v3522, 0
        %v3597 = vsel %vm633, %v3524, 0
        %v3599 = vsel %vm633, %v3527, 0
        %v3601 = vsel %vm633, %v3529, 0
        %v3603 = vsel %vm633, %v3532, 0
        %v3605 = vsel %vm633, %v3534, 0
        %v3607 = vsel %vm633, %v3537, 0
        %v3609 = vsel %vm633, %v3539, 0
        %v3611 = vsel %vm633, %v3542, 0
        %v3613 = vsel %vm633, %v3544, 0
        %v3615 = vsel %vm633, %v3547, 0
        %v3617 = vsel %vm633, %v3549, 0
        %v3619 = vsel %vm633, %v3552, 0
        %v3621 = vsel %vm633, %v3554, 0
        %3623 = vmatprep.subr.mxu0 0.0
        %3624 = vmatpush1.msra.mxu0 %v3555
        %3625 = vmatprep.subr.mxu0 0.0
        %3626 = vmatpush1.msra.mxu0 %v3556
        %3627 = vmatprep.subr.mxu0 0.0
        %3628 = vmatpush1.msra.mxu0 %v3557
        %3629 = vmatprep.subr.mxu0 0.0
        %3630 = vmatpush1.msra.mxu0 %v3558
        %3631 = vmatprep.subr.mxu0 0.0
        %3632 = vmatpush1.msra.mxu0 %v3559
        %3633 = vmatprep.subr.mxu0 0.0
        %3634 = vmatpush1.msra.mxu0 %v3560
        %3635 = vmatprep.subr.mxu0 0.0
        %3636 = vmatpush1.msra.mxu0 %v3561
        %3637 = vmatprep.subr.mxu0 0.0
        %3638 = vmatpush1.msra.mxu0 %v3562
        %3639 = vmatprep.subr.mxu0 0.0
        %3640 = vmatpush1.msra.mxu0 0.0
        %3641 = vmatprep.subr.mxu0 0.0
        %3642 = vmatpush1.msra.mxu0 0.0
        %3643 = vmatprep.subr.mxu0 0.0
        %3644 = vmatpush1.msra.mxu0 0.0
        %3645 = vmatprep.subr.mxu0 0.0
        %3646 = vmatpush1.msra.mxu0 0.0
        %3647 = vmatprep.subr.mxu0 0.0
        %3648 = vmatpush1.msra.mxu0 0.0
        %3649 = vmatprep.subr.mxu0 0.0
        %3650 = vmatpush1.msra.mxu0 0.0
        %3651 = vmatprep.subr.mxu0 0.0
        %3652 = vmatpush1.msra.mxu0 0.0
        %3653 = vmatprep.subr.mxu0 0.0
        %3654 = vmatpush1.msra.mxu0 0.0
        %3655 = vmatprep.subr.mxu0 0.0
        %3656 = vmatpush1.msra.mxu0 0.0
        %3657 = vmatprep.subr.mxu0 0.0
        %3658 = vmatpush1.msra.mxu0 0.0
        %3659 = vmatprep.subr.mxu0 0.0
        %3660 = vmatpush1.msra.mxu0 0.0
        %3661 = vmatprep.subr.mxu0 0.0
        %3662 = vmatpush1.msra.mxu0 0.0
        %3663 = vmatprep.subr.mxu0 0.0
        %3664 = vmatpush1.msra.mxu0 0.0
        %3665 = vmatprep.subr.mxu0 0.0
        %3666 = vmatpush1.msra.mxu0 0.0
        %3667 = vmatprep.subr.mxu0 0.0
        %3668 = vmatpush1.msra.mxu0 0.0
        %3669 = vmatprep.subr.mxu0 0.0
        %3670 = vmatpush1.msra.mxu0 0.0
        %3671 = vmatprep.subr.mxu0 0.0
        %3672 = vmatpush1.msra.mxu0 0.0
        %3673 = vmatprep.subr.mxu0 0.0
        %3674 = vmatpush1.msra.mxu0 0.0
        %3675 = vmatprep.subr.mxu0 0.0
        %3676 = vmatpush1.msra.mxu0 0.0
        %3677 = vmatprep.subr.mxu0 0.0
        %3678 = vmatpush1.msra.mxu0 0.0
        %3679 = vmatprep.subr.mxu0 0.0
        %3680 = vmatpush1.msra.mxu0 0.0
        %3681 = vmatprep.subr.mxu0 0.0
        %3682 = vmatpush1.msra.mxu0 0.0
        %3683 = vmatprep.subr.mxu0 0.0
        %3684 = vmatpush1.msra.mxu0 0.0
        %3685 = vmatprep.subr.mxu0 0.0
        %3686 = vmatpush1.msra.mxu0 0.0
        %3687 = vmatprep.mubr.f32.mxu0 0.0
        %3688 = vmatmul.mubr.f32.gmra.mrb[0].mxu0 %v634
        %v3689 = vpop.f32.mrb[0].mxu0
        %v3690 = vadd.f32 0.0, %v3689
        %v3691 = vpop.f32.mrb[0].mxu0
        %3692 = vmatprep.mubr.f32.mxu0 0.0
        %3693 = vmatmul.mubr.f32.gmra.mrb[0].mxu0 %v634
        %v3694 = vpop.f32.mrb[0].mxu0
        %v3695 = vadd.f32 0.0, %v3694
        %v3696 = vpop.f32.mrb[0].mxu0
        %3697 = vmatprep.mubr.f32.mxu0 0.0
        %3698 = vmatmul.mubr.f32.gmra.mrb[0].mxu0 %v3563
        %v3699 = vpop.f32.mrb[0].mxu0
        %v3700 = vadd.f32 0.0, %v3699
        %v3701 = vpop.f32.mrb[0].mxu0
        %3702 = vmatprep.mubr.f32.mxu0 0.0
        %3703 = vmatmul.mubr.f32.gmra.mrb[0].mxu0 %v3565
        %v3704 = vpop.f32.mrb[0].mxu0
        %v3705 = vadd.f32 0.0, %v3704
        %v3706 = vpop.f32.mrb[0].mxu0
        %3707 = vmatprep.mubr.f32.mxu0 0.0
        %3708 = vmatmul.mubr.f32.gmra.mrb[0].mxu0 %v3567
        %v3709 = vpop.f32.mrb[0].mxu0
        %v3710 = vadd.f32 0.0, %v3709
        %v3711 = vpop.f32.mrb[0].mxu0
        %3712 = vmatprep.mubr.f32.mxu0 0.0
        %3713 = vmatmul.mubr.f32.gmra.mrb[0].mxu0 %v3569
        %v3714 = vpop.f32.mrb[0].mxu0
        %v3715 = vadd.f32 0.0, %v3714
        %v3716 = vpop.f32.mrb[0].mxu0
        %3717 = vmatprep.mubr.f32.mxu0 0.0
        %3718 = vmatmul.mubr.f32.gmra.mrb[0].mxu0 %v3571
        %v3719 = vpop.f32.mrb[0].mxu0
        %v3720 = vadd.f32 0.0, %v3719
        %v3721 = vpop.f32.mrb[0].mxu0
        %3722 = vmatprep.mubr.f32.mxu0 0.0
        %3723 = vmatmul.mubr.f32.gmra.mrb[0].mxu0 %v3573
        %v3724 = vpop.f32.mrb[0].mxu0
        %v3725 = vadd.f32 0.0, %v3724
        %v3726 = vpop.f32.mrb[0].mxu0
        %3727 = vmatprep.mubr.f32.mxu0 0.0
        %3728 = vmatmul.mubr.f32.gmra.mrb[0].mxu0 %v3575
        %v3729 = vpop.f32.mrb[0].mxu0
        %v3730 = vadd.f32 0.0, %v3729
        %v3731 = vpop.f32.mrb[0].mxu0
        %3732 = vmatprep.mubr.f32.mxu0 0.0
        %3733 = vmatmul.mubr.f32.gmra.mrb[0].mxu0 %v3577
        %v3734 = vpop.f32.mrb[0].mxu0
        %v3735 = vadd.f32 0.0, %v3734
        %v3736 = vpop.f32.mrb[0].mxu0
        %3737 = vmatprep.mubr.f32.mxu0 0.0
        %3738 = vmatmul.mubr.f32.gmra.mrb[0].mxu0 %v3579
        %v3739 = vpop.f32.mrb[0].mxu0
        %v3740 = vadd.f32 0.0, %v3739
        %v3741 = vpop.f32.mrb[0].mxu0
        %3742 = vmatprep.mubr.f32.mxu0 0.0
        %3743 = vmatmul.mubr.f32.gmra.mrb[0].mxu0 %v3581
        %v3744 = vpop.f32.mrb[0].mxu0
        %v3745 = vadd.f32 0.0, %v3744
        %v3746 = vpop.f32.mrb[0].mxu0
        %3747 = vmatprep.mubr.f32.mxu0 0.0
        %3748 = vmatmul.mubr.f32.gmra.mrb[0].mxu0 %v3583
        %v3749 = vpop.f32.mrb[0].mxu0
        %v3750 = vadd.f32 0.0, %v3749
        %v3751 = vpop.f32.mrb[0].mxu0
        %3752 = vmatprep.mubr.f32.mxu0 0.0
        %3753 = vmatmul.mubr.f32.gmra.mrb[0].mxu0 %v3585
        %v3754 = vpop.f32.mrb[0].mxu0
        %v3755 = vadd.f32 0.0, %v3754
        %v3756 = vpop.f32.mrb[0].mxu0
        %3757 = vmatprep.mubr.f32.mxu0 0.0
        %3758 = vmatmul.mubr.f32.gmra.mrb[0].mxu0 %v3587
        %v3759 = vpop.f32.mrb[0].mxu0
        %v3760 = vadd.f32 0.0, %v3759
        %v3761 = vpop.f32.mrb[0].mxu0
        %3762 = vmatprep.mubr.f32.mxu0 0.0
        %3763 = vmatmul.mubr.f32.gmra.mrb[0].mxu0 %v3589
        %v3764 = vpop.f32.mrb[0].mxu0
        %v3765 = vadd.f32 0.0, %v3764
        %v3766 = vpop.f32.mrb[0].mxu0
        %3767 = vmatprep.mubr.f32.mxu0 0.0
        %3768 = vmatmul.mubr.f32.gmra.mrb[0].mxu0 %v3591
        %v3769 = vpop.f32.mrb[0].mxu0
        %v3770 = vadd.f32 0.0, %v3769
        %v3771 = vpop.f32.mrb[0].mxu0
        %3772 = vmatprep.mubr.f32.mxu0 0.0
        %3773 = vmatmul.mubr.f32.gmra.mrb[0].mxu0 %v3593
        %v3774 = vpop.f32.mrb[0].mxu0
        %v3775 = vadd.f32 0.0, %v3774
        %v3776 = vpop.f32.mrb[0].mxu0
        %3777 = vmatprep.mubr.f32.mxu0 0.0
        %3778 = vmatmul.mubr.f32.gmra.mrb[0].mxu0 %v3595
        %v3779 = vpop.f32.mrb[0].mxu0
        %v3780 = vadd.f32 0.0, %v3779
        %v3781 = vpop.f32.mrb[0].mxu0
        %3782 = vmatprep.mubr.f32.mxu0 0.0
        %3783 = vmatmul.mubr.f32.gmra.mrb[0].mxu0 %v3597
        %v3784 = vpop.f32.mrb[0].mxu0
        %v3785 = vadd.f32 0.0, %v3784
        %v3786 = vpop.f32.mrb[0].mxu0
        %3787 = vmatprep.mubr.f32.mxu0 0.0
        %3788 = vmatmul.mubr.f32.gmra.mrb[0].mxu0 %v3599
        %v3789 = vpop.f32.mrb[0].mxu0
        %v3790 = vadd.f32 0.0, %v3789
        %v3791 = vpop.f32.mrb[0].mxu0
        %3792 = vmatprep.mubr.f32.mxu0 0.0
        %3793 = vmatmul.mubr.f32.gmra.mrb[0].mxu0 %v3601
        %v3794 = vpop.f32.mrb[0].mxu0
        %v3795 = vadd.f32 0.0, %v3794
        %v3796 = vpop.f32.mrb[0].mxu0
        %3797 = vmatprep.mubr.f32.mxu0 0.0
        %3798 = vmatmul.mubr.f32.gmra.mrb[0].mxu0 %v3603
        %v3799 = vpop.f32.mrb[0].mxu0
        %v3800 = vadd.f32 0.0, %v3799
        %v3801 = vpop.f32.mrb[0].mxu0
        %3802 = vmatprep.mubr.f32.mxu0 0.0
        %3803 = vmatmul.mubr.f32.gmra.mrb[0].mxu0 %v3605
        %v3804 = vpop.f32.mrb[0].mxu0
        %v3805 = vadd.f32 0.0, %v3804
        %v3806 = vpop.f32.mrb[0].mxu0
        %3807 = vmatprep.mubr.f32.mxu0 0.0
        %3808 = vmatmul.mubr.f32.gmra.mrb[0].mxu0 %v3607
        %v3809 = vpop.f32.mrb[0].mxu0
        %v3810 = vadd.f32 0.0, %v3809
        %v3811 = vpop.f32.mrb[0].mxu0
        %3812 = vmatprep.mubr.f32.mxu0 0.0
        %3813 = vmatmul.mubr.f32.gmra.mrb[0].mxu0 %v3609
        %v3814 = vpop.f32.mrb[0].mxu0
        %v3815 = vadd.f32 0.0, %v3814
        %v3816 = vpop.f32.mrb[0].mxu0
        %3817 = vmatprep.mubr.f32.mxu0 0.0
        %3818 = vmatmul.mubr.f32.gmra.mrb[0].mxu0 %v3611
        %v3819 = vpop.f32.mrb[0].mxu0
        %v3820 = vadd.f32 0.0, %v3819
        %v3821 = vpop.f32.mrb[0].mxu0
        %3822 = vmatprep.mubr.f32.mxu0 0.0
        %3823 = vmatmul.mubr.f32.gmra.mrb[0].mxu0 %v3613
        %v3824 = vpop.f32.mrb[0].mxu0
        %v3825 = vadd.f32 0.0, %v3824
        %v3826 = vpop.f32.mrb[0].mxu0
        %3827 = vmatprep.mubr.f32.mxu0 0.0
        %3828 = vmatmul.mubr.f32.gmra.mrb[0].mxu0 %v3615
        %v3829 = vpop.f32.mrb[0].mxu0
        %v3830 = vadd.f32 0.0, %v3829
        %v3831 = vpop.f32.mrb[0].mxu0
        %3832 = vmatprep.mubr.f32.mxu0 0.0
        %3833 = vmatmul.mubr.f32.gmra.mrb[0].mxu0 %v3617
        %v3834 = vpop.f32.mrb[0].mxu0
        %v3835 = vadd.f32 0.0, %v3834
        %v3836 = vpop.f32.mrb[0].mxu0
        %3837 = vmatprep.mubr.f32.mxu0 0.0
        %3838 = vmatmul.mubr.f32.gmra.mrb[0].mxu0 %v3619
        %v3839 = vpop.f32.mrb[0].mxu0
        %v3840 = vadd.f32 0.0, %v3839
        %v3841 = vpop.f32.mrb[0].mxu0
        %3842 = vmatprep.mubr.f32.mxu0 0.0
        %3843 = vmatmul.mubr.f32.gmra.mrb[0].mxu0 %v3621
        %v3844 = vpop.f32.mrb[0].mxu0
        %v3845 = vadd.f32 0.0, %v3844
        %v3846 = vpop.f32.mrb[0].mxu0
        %3847 = vdwg.mxu0
        %v3848 = vsel %vm633, %v3410, 0
        %v3850 = vsel %vm633, %v3332, 0
        %v3852 = vsel %vm633, %v3411, 0
        %v3854 = vsel %vm633, %v3335, 0
        %v3856 = vsel %vm633, %v3412, 0
        %v3858 = vsel %vm633, %v3338, 0
        %v3860 = vsel %vm633, %v3413, 0
        %v3862 = vsel %vm633, %v3341, 0
        %v3864 = vsel %vm633, %v3414, 0
        %v3866 = vsel %vm633, %v3344, 0
        %v3868 = vsel %vm633, %v3415, 0
        %v3870 = vsel %vm633, %v3347, 0
        %v3872 = vsel %vm633, %v3416, 0
        %v3874 = vsel %vm633, %v3350, 0
        %v3876 = vsel %vm633, %v3417, 0
        %v3878 = vsel %vm633, %v3353, 0
        %v3880 = vsel %vm633, %v3418, 0
        %v3882 = vsel %vm633, %v3356, 0
        %v3884 = vsel %vm633, %v3419, 0
        %v3886 = vsel %vm633, %v3359, 0
        %v3888 = vsel %vm633, %v3420, 0
        %v3890 = vsel %vm633, %v3362, 0
        %v3892 = vsel %vm633, %v3421, 0
        %v3894 = vsel %vm633, %v3365, 0
        %v3896 = vsel %vm633, %v3422, 0
        %v3898 = vsel %vm633, %v3368, 0
        %v3900 = vsel %vm633, %v3423, 0
        %v3902 = vsel %vm633, %v3371, 0
        %v3904 = vsel %vm633, %v3424, 0
        %v3906 = vsel %vm633, %v3374, 0
        %3908 = vmatprep.subr.mxu0 0.0
        %3909 = vmatpush1.msra.mxu0 %v3442
        %3910 = vmatprep.subr.mxu0 0.0
        %3911 = vmatpush1.msra.mxu0 %v3443
        %3912 = vmatprep.subr.mxu0 0.0
        %3913 = vmatpush1.msra.mxu0 %v3444
        %3914 = vmatprep.subr.mxu0 0.0
        %3915 = vmatpush1.msra.mxu0 %v3445
        %3916 = vmatprep.subr.mxu0 0.0
        %3917 = vmatpush1.msra.mxu0 %v3446
        %3918 = vmatprep.subr.mxu0 0.0
        %3919 = vmatpush1.msra.mxu0 %v3447
        %3920 = vmatprep.subr.mxu0 0.0
        %3921 = vmatpush1.msra.mxu0 %v3448
        %3922 = vmatprep.subr.mxu0 0.0
        %3923 = vmatpush1.msra.mxu0 %v3449
        %3924 = vmatprep.subr.mxu0 0.0
        %3925 = vmatpush1.msra.mxu0 0.0
        %3926 = vmatprep.subr.mxu0 0.0
        %3927 = vmatpush1.msra.mxu0 0.0
        %3928 = vmatprep.subr.mxu0 0.0
        %3929 = vmatpush1.msra.mxu0 0.0
        %3930 = vmatprep.subr.mxu0 0.0
        %3931 = vmatpush1.msra.mxu0 0.0
        %3932 = vmatprep.subr.mxu0 0.0
        %3933 = vmatpush1.msra.mxu0 0.0
        %3934 = vmatprep.subr.mxu0 0.0
        %3935 = vmatpush1.msra.mxu0 0.0
        %3936 = vmatprep.subr.mxu0 0.0
        %3937 = vmatpush1.msra.mxu0 0.0
        %3938 = vmatprep.subr.mxu0 0.0
        %3939 = vmatpush1.msra.mxu0 0.0
        %3940 = vmatprep.subr.mxu0 0.0
        %3941 = vmatpush1.msra.mxu0 0.0
        %3942 = vmatprep.subr.mxu0 0.0
        %3943 = vmatpush1.msra.mxu0 0.0
        %3944 = vmatprep.subr.mxu0 0.0
        %3945 = vmatpush1.msra.mxu0 0.0
        %3946 = vmatprep.subr.mxu0 0.0
        %3947 = vmatpush1.msra.mxu0 0.0
        %3948 = vmatprep.subr.mxu0 0.0
        %3949 = vmatpush1.msra.mxu0 0.0
        %3950 = vmatprep.subr.mxu0 0.0
        %3951 = vmatpush1.msra.mxu0 0.0
        %3952 = vmatprep.subr.mxu0 0.0
        %3953 = vmatpush1.msra.mxu0 0.0
        %3954 = vmatprep.subr.mxu0 0.0
        %3955 = vmatpush1.msra.mxu0 0.0
        %3956 = vmatprep.subr.mxu0 0.0
        %3957 = vmatpush1.msra.mxu0 0.0
        %3958 = vmatprep.subr.mxu0 0.0
        %3959 = vmatpush1.msra.mxu0 0.0
        %3960 = vmatprep.subr.mxu0 0.0
        %3961 = vmatpush1.msra.mxu0 0.0
        %3962 = vmatprep.subr.mxu0 0.0
        %3963 = vmatpush1.msra.mxu0 0.0
        %3964 = vmatprep.subr.mxu0 0.0
        %3965 = vmatpush1.msra.mxu0 0.0
        %3966 = vmatprep.subr.mxu0 0.0
        %3967 = vmatpush1.msra.mxu0 0.0
        %3968 = vmatprep.subr.mxu0 0.0
        %3969 = vmatpush1.msra.mxu0 0.0
        %3970 = vmatprep.subr.mxu0 0.0
        %3971 = vmatpush1.msra.mxu0 0.0
        %3972 = vmatprep.mubr.f32.mxu0 0.0
        %3973 = vmatmul.mubr.f32.gmra.mrb[0].mxu0 %v921
        %v3974 = vpop.f32.mrb[0].mxu0
        %v3975 = vadd.f32 %v3690, %v3974
        %v3976 = vpop.f32.mrb[0].mxu0
        %3977 = vmatprep.mubr.f32.mxu0 0.0
        %3978 = vmatmul.mubr.f32.gmra.mrb[0].mxu0 %v921
        %v3979 = vpop.f32.mrb[0].mxu0
        %v3980 = vadd.f32 %v3695, %v3979
        %v3981 = vpop.f32.mrb[0].mxu0
        %3982 = vmatprep.mubr.f32.mxu0 0.0
        %3983 = vmatmul.mubr.f32.gmra.mrb[0].mxu0 %v3848
        %v3984 = vpop.f32.mrb[0].mxu0
        %v3985 = vadd.f32 %v3700, %v3984
        %v3986 = vpop.f32.mrb[0].mxu0
        %3987 = vmatprep.mubr.f32.mxu0 0.0
        %3988 = vmatmul.mubr.f32.gmra.mrb[0].mxu0 %v3850
        %v3989 = vpop.f32.mrb[0].mxu0
        %v3990 = vadd.f32 %v3705, %v3989
        %v3991 = vpop.f32.mrb[0].mxu0
        %3992 = vmatprep.mubr.f32.mxu0 0.0
        %3993 = vmatmul.mubr.f32.gmra.mrb[0].mxu0 %v3852
        %v3994 = vpop.f32.mrb[0].mxu0
        %v3995 = vadd.f32 %v3710, %v3994
        %v3996 = vpop.f32.mrb[0].mxu0
        %3997 = vmatprep.mubr.f32.mxu0 0.0
        %3998 = vmatmul.mubr.f32.gmra.mrb[0].mxu0 %v3854
        %v3999 = vpop.f32.mrb[0].mxu0
        %v4000 = vadd.f32 %v3715, %v3999
        %v4001 = vpop.f32.mrb[0].mxu0
        %4002 = vmatprep.mubr.f32.mxu0 0.0
        %4003 = vmatmul.mubr.f32.gmra.mrb[0].mxu0 %v3856
        %v4004 = vpop.f32.mrb[0].mxu0
        %v4005 = vadd.f32 %v3720, %v4004
        %v4006 = vpop.f32.mrb[0].mxu0
        %4007 = vmatprep.mubr.f32.mxu0 0.0
        %4008 = vmatmul.mubr.f32.gmra.mrb[0].mxu0 %v3858
        %v4009 = vpop.f32.mrb[0].mxu0
        %v4010 = vadd.f32 %v3725, %v4009
        %v4011 = vpop.f32.mrb[0].mxu0
        %4012 = vmatprep.mubr.f32.mxu0 0.0
        %4013 = vmatmul.mubr.f32.gmra.mrb[0].mxu0 %v3860
        %v4014 = vpop.f32.mrb[0].mxu0
        %v4015 = vadd.f32 %v3730, %v4014
        %v4016 = vpop.f32.mrb[0].mxu0
        %4017 = vmatprep.mubr.f32.mxu0 0.0
        %4018 = vmatmul.mubr.f32.gmra.mrb[0].mxu0 %v3862
        %v4019 = vpop.f32.mrb[0].mxu0
        %v4020 = vadd.f32 %v3735, %v4019
        %v4021 = vpop.f32.mrb[0].mxu0
        %4022 = vmatprep.mubr.f32.mxu0 0.0
        %4023 = vmatmul.mubr.f32.gmra.mrb[0].mxu0 %v3864
        %v4024 = vpop.f32.mrb[0].mxu0
        %v4025 = vadd.f32 %v3740, %v4024
        %v4026 = vpop.f32.mrb[0].mxu0
        %4027 = vmatprep.mubr.f32.mxu0 0.0
        %4028 = vmatmul.mubr.f32.gmra.mrb[0].mxu0 %v3866
        %v4029 = vpop.f32.mrb[0].mxu0
        %v4030 = vadd.f32 %v3745, %v4029
        %v4031 = vpop.f32.mrb[0].mxu0
        %4032 = vmatprep.mubr.f32.mxu0 0.0
        %4033 = vmatmul.mubr.f32.gmra.mrb[0].mxu0 %v3868
        %v4034 = vpop.f32.mrb[0].mxu0
        %v4035 = vadd.f32 %v3750, %v4034
        %v4036 = vpop.f32.mrb[0].mxu0
        %4037 = vmatprep.mubr.f32.mxu0 0.0
        %4038 = vmatmul.mubr.f32.gmra.mrb[0].mxu0 %v3870
        %v4039 = vpop.f32.mrb[0].mxu0
        %v4040 = vadd.f32 %v3755, %v4039
        %v4041 = vpop.f32.mrb[0].mxu0
        %4042 = vmatprep.mubr.f32.mxu0 0.0
        %4043 = vmatmul.mubr.f32.gmra.mrb[0].mxu0 %v3872
        %v4044 = vpop.f32.mrb[0].mxu0
        %v4045 = vadd.f32 %v3760, %v4044
        %v4046 = vpop.f32.mrb[0].mxu0
        %4047 = vmatprep.mubr.f32.mxu0 0.0
        %4048 = vmatmul.mubr.f32.gmra.mrb[0].mxu0 %v3874
        %v4049 = vpop.f32.mrb[0].mxu0
        %v4050 = vadd.f32 %v3765, %v4049
        %v4051 = vpop.f32.mrb[0].mxu0
        %4052 = vmatprep.mubr.f32.mxu0 0.0
        %4053 = vmatmul.mubr.f32.gmra.mrb[0].mxu0 %v3876
        %v4054 = vpop.f32.mrb[0].mxu0
        %v4055 = vadd.f32 %v3770, %v4054
        %v4056 = vpop.f32.mrb[0].mxu0
        %4057 = vmatprep.mubr.f32.mxu0 0.0
        %4058 = vmatmul.mubr.f32.gmra.mrb[0].mxu0 %v3878
        %v4059 = vpop.f32.mrb[0].mxu0
        %v4060 = vadd.f32 %v3775, %v4059
        %v4061 = vpop.f32.mrb[0].mxu0
        %4062 = vmatprep.mubr.f32.mxu0 0.0
        %4063 = vmatmul.mubr.f32.gmra.mrb[0].mxu0 %v3880
        %v4064 = vpop.f32.mrb[0].mxu0
        %v4065 = vadd.f32 %v3780, %v4064
        %v4066 = vpop.f32.mrb[0].mxu0
        %4067 = vmatprep.mubr.f32.mxu0 0.0
        %4068 = vmatmul.mubr.f32.gmra.mrb[0].mxu0 %v3882
        %v4069 = vpop.f32.mrb[0].mxu0
        %v4070 = vadd.f32 %v3785, %v4069
        %v4071 = vpop.f32.mrb[0].mxu0
        %4072 = vmatprep.mubr.f32.mxu0 0.0
        %4073 = vmatmul.mubr.f32.gmra.mrb[0].mxu0 %v3884
        %v4074 = vpop.f32.mrb[0].mxu0
        %v4075 = vadd.f32 %v3790, %v4074
        %v4076 = vpop.f32.mrb[0].mxu0
        %4077 = vmatprep.mubr.f32.mxu0 0.0
        %4078 = vmatmul.mubr.f32.gmra.mrb[0].mxu0 %v3886
        %v4079 = vpop.f32.mrb[0].mxu0
        %v4080 = vadd.f32 %v3795, %v4079
        %v4081 = vpop.f32.mrb[0].mxu0
        %4082 = vmatprep.mubr.f32.mxu0 0.0
        %4083 = vmatmul.mubr.f32.gmra.mrb[0].mxu0 %v3888
        %v4084 = vpop.f32.mrb[0].mxu0
        %v4085 = vadd.f32 %v3800, %v4084
        %v4086 = vpop.f32.mrb[0].mxu0
        %4087 = vmatprep.mubr.f32.mxu0 0.0
        %4088 = vmatmul.mubr.f32.gmra.mrb[0].mxu0 %v3890
        %v4089 = vpop.f32.mrb[0].mxu0
        %v4090 = vadd.f32 %v3805, %v4089
        %v4091 = vpop.f32.mrb[0].mxu0
        %4092 = vmatprep.mubr.f32.mxu0 0.0
        %4093 = vmatmul.mubr.f32.gmra.mrb[0].mxu0 %v3892
        %v4094 = vpop.f32.mrb[0].mxu0
        %v4095 = vadd.f32 %v3810, %v4094
        %v4096 = vpop.f32.mrb[0].mxu0
        %4097 = vmatprep.mubr.f32.mxu0 0.0
        %4098 = vmatmul.mubr.f32.gmra.mrb[0].mxu0 %v3894
        %v4099 = vpop.f32.mrb[0].mxu0
        %v4100 = vadd.f32 %v3815, %v4099
        %v4101 = vpop.f32.mrb[0].mxu0
        %4102 = vmatprep.mubr.f32.mxu0 0.0
        %4103 = vmatmul.mubr.f32.gmra.mrb[0].mxu0 %v3896
        %v4104 = vpop.f32.mrb[0].mxu0
        %v4105 = vadd.f32 %v3820, %v4104
        %v4106 = vpop.f32.mrb[0].mxu0
        %4107 = vmatprep.mubr.f32.mxu0 0.0
        %4108 = vmatmul.mubr.f32.gmra.mrb[0].mxu0 %v3898
        %v4109 = vpop.f32.mrb[0].mxu0
        %v4110 = vadd.f32 %v3825, %v4109
        %v4111 = vpop.f32.mrb[0].mxu0
        %4112 = vmatprep.mubr.f32.mxu0 0.0
        %4113 = vmatmul.mubr.f32.gmra.mrb[0].mxu0 %v3900
        %v4114 = vpop.f32.mrb[0].mxu0
        %v4115 = vadd.f32 %v3830, %v4114
        %v4116 = vpop.f32.mrb[0].mxu0
        %4117 = vmatprep.mubr.f32.mxu0 0.0
        %4118 = vmatmul.mubr.f32.gmra.mrb[0].mxu0 %v3902
        %v4119 = vpop.f32.mrb[0].mxu0
        %v4120 = vadd.f32 %v3835, %v4119
        %v4121 = vpop.f32.mrb[0].mxu0
        %4122 = vmatprep.mubr.f32.mxu0 0.0
        %4123 = vmatmul.mubr.f32.gmra.mrb[0].mxu0 %v3904
        %v4124 = vpop.f32.mrb[0].mxu0
        %v4125 = vadd.f32 %v3840, %v4124
        %v4126 = vpop.f32.mrb[0].mxu0
        %4127 = vmatprep.mubr.f32.mxu0 0.0
        %4128 = vmatmul.mubr.f32.gmra.mrb[0].mxu0 %v3906
        %v4129 = vpop.f32.mrb[0].mxu0
        %v4130 = vadd.f32 %v3845, %v4129
        %v4131 = vpop.f32.mrb[0].mxu0
        %4132 = vdwg.mxu0
        %v4133 = vrot.slane %v3410, 2
        %v4134 = vrot.slane %v3332, 2
        %v4135 = vsel %vm1208, %v4133, %v4134
        %v4136 = vrot.slane %v3426, 2
        %v4137 = vsel %vm1208, %v4134, %v4136
        %v4138 = vrot.slane %v3411, 2
        %v4139 = vrot.slane %v3335, 2
        %v4140 = vsel %vm1208, %v4138, %v4139
        %v4141 = vrot.slane %v3427, 2
        %v4142 = vsel %vm1208, %v4139, %v4141
        %v4143 = vrot.slane %v3412, 2
        %v4144 = vrot.slane %v3338, 2
        %v4145 = vsel %vm1208, %v4143, %v4144
        %v4146 = vrot.slane %v3428, 2
        %v4147 = vsel %vm1208, %v4144, %v4146
        %v4148 = vrot.slane %v3413, 2
        %v4149 = vrot.slane %v3341, 2
        %v4150 = vsel %vm1208, %v4148, %v4149
        %v4151 = vrot.slane %v3429, 2
        %v4152 = vsel %vm1208, %v4149, %v4151
        %v4153 = vrot.slane %v3414, 2
        %v4154 = vrot.slane %v3344, 2
        %v4155 = vsel %vm1208, %v4153, %v4154
        %v4156 = vrot.slane %v3430, 2
        %v4157 = vsel %vm1208, %v4154, %v4156
        %v4158 = vrot.slane %v3415, 2
        %v4159 = vrot.slane %v3347, 2
        %v4160 = vsel %vm1208, %v4158, %v4159
        %v4161 = vrot.slane %v3431, 2
        %v4162 = vsel %vm1208, %v4159, %v4161
        %v4163 = vrot.slane %v3416, 2
        %v4164 = vrot.slane %v3350, 2
        %v4165 = vsel %vm1208, %v4163, %v4164
        %v4166 = vrot.slane %v3432, 2
        %v4167 = vsel %vm1208, %v4164, %v4166
        %v4168 = vrot.slane %v3417, 2
        %v4169 = vrot.slane %v3353, 2
        %v4170 = vsel %vm1208, %v4168, %v4169
        %v4171 = vrot.slane %v3433, 2
        %v4172 = vsel %vm1208, %v4169, %v4171
        %v4173 = vrot.slane %v3418, 2
        %v4174 = vrot.slane %v3356, 2
        %v4175 = vsel %vm1208, %v4173, %v4174
        %v4176 = vrot.slane %v3434, 2
        %v4177 = vsel %vm1208, %v4174, %v4176
        %v4178 = vrot.slane %v3419, 2
        %v4179 = vrot.slane %v3359, 2
        %v4180 = vsel %vm1208, %v4178, %v4179
        %v4181 = vrot.slane %v3435, 2
        %v4182 = vsel %vm1208, %v4179, %v4181
        %v4183 = vrot.slane %v3420, 2
        %v4184 = vrot.slane %v3362, 2
        %v4185 = vsel %vm1208, %v4183, %v4184
        %v4186 = vrot.slane %v3436, 2
        %v4187 = vsel %vm1208, %v4184, %v4186
        %v4188 = vrot.slane %v3421, 2
        %v4189 = vrot.slane %v3365, 2
        %v4190 = vsel %vm1208, %v4188, %v4189
        %v4191 = vrot.slane %v3437, 2
        %v4192 = vsel %vm1208, %v4189, %v4191
        %v4193 = vrot.slane %v3422, 2
        %v4194 = vrot.slane %v3368, 2
        %v4195 = vsel %vm1208, %v4193, %v4194
        %v4196 = vrot.slane %v3438, 2
        %v4197 = vsel %vm1208, %v4194, %v4196
        %v4198 = vrot.slane %v3423, 2
        %v4199 = vrot.slane %v3371, 2
        %v4200 = vsel %vm1208, %v4198, %v4199
        %v4201 = vrot.slane %v3439, 2
        %v4202 = vsel %vm1208, %v4199, %v4201
        %v4203 = vrot.slane %v3424, 2
        %v4204 = vrot.slane %v3374, 2
        %v4205 = vsel %vm1208, %v4203, %v4204
        %v4206 = vrot.slane %v3440, 2
        %v4207 = vsel %vm1208, %v4204, %v4206
        %v4208 = vld [vmem:[%s3 + $0x80] sm:$0xff]
        %v4209 = vld [vmem:[%s3 + $0x88] sm:$0xff]
        %v4210 = vld [vmem:[%s3 + $0x90] sm:$0xff]
        %v4211 = vld [vmem:[%s3 + $0x98] sm:$0xff]
        %v4212 = vld [vmem:[%s3 + $0xa0] sm:$0xff]
        %v4213 = vld [vmem:[%s3 + $0xa8] sm:$0xff]
        %v4214 = vld [vmem:[%s3 + $0xb0] sm:$0xff]
        %v4215 = vld [vmem:[%s3 + $0xb8] sm:$0xff]
        %v4216 = vsel %vm633, %v4135, 0
        %v4218 = vsel %vm633, %v4137, 0
        %v4220 = vsel %vm633, %v4140, 0
        %v4222 = vsel %vm633, %v4142, 0
        %v4224 = vsel %vm633, %v4145, 0
        %v4226 = vsel %vm633, %v4147, 0
        %v4228 = vsel %vm633, %v4150, 0
        %v4230 = vsel %vm633, %v4152, 0
        %v4232 = vsel %vm633, %v4155, 0
        %v4234 = vsel %vm633, %v4157, 0
        %v4236 = vsel %vm633, %v4160, 0
        %v4238 = vsel %vm633, %v4162, 0
        %v4240 = vsel %vm633, %v4165, 0
        %v4242 = vsel %vm633, %v4167, 0
        %v4244 = vsel %vm633, %v4170, 0
        %v4246 = vsel %vm633, %v4172, 0
        %v4248 = vsel %vm633, %v4175, 0
        %v4250 = vsel %vm633, %v4177, 0
        %v4252 = vsel %vm633, %v4180, 0
        %v4254 = vsel %vm633, %v4182, 0
        %v4256 = vsel %vm633, %v4185, 0
        %v4258 = vsel %vm633, %v4187, 0
        %v4260 = vsel %vm633, %v4190, 0
        %v4262 = vsel %vm633, %v4192, 0
        %v4264 = vsel %vm633, %v4195, 0
        %v4266 = vsel %vm633, %v4197, 0
        %v4268 = vsel %vm633, %v4200, 0
        %v4270 = vsel %vm633, %v4202, 0
        %v4272 = vsel %vm633, %v4205, 0
        %v4274 = vsel %vm633, %v4207, 0
        %4276 = vmatprep.subr.mxu0 0.0
        %4277 = vmatpush1.msra.mxu0 %v4208
        %4278 = vmatprep.subr.mxu0 0.0
        %4279 = vmatpush1.msra.mxu0 %v4209
        %4280 = vmatprep.subr.mxu0 0.0
        %4281 = vmatpush1.msra.mxu0 %v4210
        %4282 = vmatprep.subr.mxu0 0.0
        %4283 = vmatpush1.msra.mxu0 %v4211
        %4284 = vmatprep.subr.mxu0 0.0
        %4285 = vmatpush1.msra.mxu0 %v4212
        %4286 = vmatprep.subr.mxu0 0.0
        %4287 = vmatpush1.msra.mxu0 %v4213
        %4288 = vmatprep.subr.mxu0 0.0
        %4289 = vmatpush1.msra.mxu0 %v4214
        %4290 = vmatprep.subr.mxu0 0.0
        %4291 = vmatpush1.msra.mxu0 %v4215
        %4292 = vmatprep.subr.mxu0 0.0
        %4293 = vmatpush1.msra.mxu0 0.0
        %4294 = vmatprep.subr.mxu0 0.0
        %4295 = vmatpush1.msra.mxu0 0.0
        %4296 = vmatprep.subr.mxu0 0.0
        %4297 = vmatpush1.msra.mxu0 0.0
        %4298 = vmatprep.subr.mxu0 0.0
        %4299 = vmatpush1.msra.mxu0 0.0
        %4300 = vmatprep.subr.mxu0 0.0
        %4301 = vmatpush1.msra.mxu0 0.0
        %4302 = vmatprep.subr.mxu0 0.0
        %4303 = vmatpush1.msra.mxu0 0.0
        %4304 = vmatprep.subr.mxu0 0.0
        %4305 = vmatpush1.msra.mxu0 0.0
        %4306 = vmatprep.subr.mxu0 0.0
        %4307 = vmatpush1.msra.mxu0 0.0
        %4308 = vmatprep.subr.mxu0 0.0
        %4309 = vmatpush1.msra.mxu0 0.0
        %4310 = vmatprep.subr.mxu0 0.0
        %4311 = vmatpush1.msra.mxu0 0.0
        %4312 = vmatprep.subr.mxu0 0.0
        %4313 = vmatpush1.msra.mxu0 0.0
        %4314 = vmatprep.subr.mxu0 0.0
        %4315 = vmatpush1.msra.mxu0 0.0
        %4316 = vmatprep.subr.mxu0 0.0
        %4317 = vmatpush1.msra.mxu0 0.0
        %4318 = vmatprep.subr.mxu0 0.0
        %4319 = vmatpush1.msra.mxu0 0.0
        %4320 = vmatprep.subr.mxu0 0.0
        %4321 = vmatpush1.msra.mxu0 0.0
        %4322 = vmatprep.subr.mxu0 0.0
        %4323 = vmatpush1.msra.mxu0 0.0
        %4324 = vmatprep.subr.mxu0 0.0
        %4325 = vmatpush1.msra.mxu0 0.0
        %4326 = vmatprep.subr.mxu0 0.0
        %4327 = vmatpush1.msra.mxu0 0.0
        %4328 = vmatprep.subr.mxu0 0.0
        %4329 = vmatpush1.msra.mxu0 0.0
        %4330 = vmatprep.subr.mxu0 0.0
        %4331 = vmatpush1.msra.mxu0 0.0
        %4332 = vmatprep.subr.mxu0 0.0
        %4333 = vmatpush1.msra.mxu0 0.0
        %4334 = vmatprep.subr.mxu0 0.0
        %4335 = vmatpush1.msra.mxu0 0.0
        %4336 = vmatprep.subr.mxu0 0.0
        %4337 = vmatpush1.msra.mxu0 0.0
        %4338 = vmatprep.subr.mxu0 0.0
        %4339 = vmatpush1.msra.mxu0 0.0
        %4340 = vmatprep.mubr.f32.mxu0 0.0
        %4341 = vmatmul.mubr.f32.gmra.mrb[0].mxu0 %v1294
        %v4342 = vpop.f32.mrb[0].mxu0
        %v4343 = vadd.f32 0.0, %v4342
        %v4344 = vpop.f32.mrb[0].mxu0
        %4345 = vmatprep.mubr.f32.mxu0 0.0
        %4346 = vmatmul.mubr.f32.gmra.mrb[0].mxu0 %v1294
        %v4347 = vpop.f32.mrb[0].mxu0
        %v4348 = vadd.f32 0.0, %v4347
        %v4349 = vpop.f32.mrb[0].mxu0
        %4350 = vmatprep.mubr.f32.mxu0 0.0
        %4351 = vmatmul.mubr.f32.gmra.mrb[0].mxu0 %v4216
        %v4352 = vpop.f32.mrb[0].mxu0
        %v4353 = vadd.f32 0.0, %v4352
        %v4354 = vpop.f32.mrb[0].mxu0
        %4355 = vmatprep.mubr.f32.mxu0 0.0
        %4356 = vmatmul.mubr.f32.gmra.mrb[0].mxu0 %v4218
        %v4357 = vpop.f32.mrb[0].mxu0
        %v4358 = vadd.f32 0.0, %v4357
        %v4359 = vpop.f32.mrb[0].mxu0
        %4360 = vmatprep.mubr.f32.mxu0 0.0
        %4361 = vmatmul.mubr.f32.gmra.mrb[0].mxu0 %v4220
        %v4362 = vpop.f32.mrb[0].mxu0
        %v4363 = vadd.f32 0.0, %v4362
        %v4364 = vpop.f32.mrb[0].mxu0
        %4365 = vmatprep.mubr.f32.mxu0 0.0
        %4366 = vmatmul.mubr.f32.gmra.mrb[0].mxu0 %v4222
        %v4367 = vpop.f32.mrb[0].mxu0
        %v4368 = vadd.f32 0.0, %v4367
        %v4369 = vpop.f32.mrb[0].mxu0
        %4370 = vmatprep.mubr.f32.mxu0 0.0
        %4371 = vmatmul.mubr.f32.gmra.mrb[0].mxu0 %v4224
        %v4372 = vpop.f32.mrb[0].mxu0
        %v4373 = vadd.f32 0.0, %v4372
        %v4374 = vpop.f32.mrb[0].mxu0
        %4375 = vmatprep.mubr.f32.mxu0 0.0
        %4376 = vmatmul.mubr.f32.gmra.mrb[0].mxu0 %v4226
        %v4377 = vpop.f32.mrb[0].mxu0
        %v4378 = vadd.f32 0.0, %v4377
        %v4379 = vpop.f32.mrb[0].mxu0
        %4380 = vmatprep.mubr.f32.mxu0 0.0
        %4381 = vmatmul.mubr.f32.gmra.mrb[0].mxu0 %v4228
        %v4382 = vpop.f32.mrb[0].mxu0
        %v4383 = vadd.f32 0.0, %v4382
        %v4384 = vpop.f32.mrb[0].mxu0
        %4385 = vmatprep.mubr.f32.mxu0 0.0
        %4386 = vmatmul.mubr.f32.gmra.mrb[0].mxu0 %v4230
        %v4387 = vpop.f32.mrb[0].mxu0
        %v4388 = vadd.f32 0.0, %v4387
        %v4389 = vpop.f32.mrb[0].mxu0
        %4390 = vmatprep.mubr.f32.mxu0 0.0
        %4391 = vmatmul.mubr.f32.gmra.mrb[0].mxu0 %v4232
        %v4392 = vpop.f32.mrb[0].mxu0
        %v4393 = vadd.f32 0.0, %v4392
        %v4394 = vpop.f32.mrb[0].mxu0
        %4395 = vmatprep.mubr.f32.mxu0 0.0
        %4396 = vmatmul.mubr.f32.gmra.mrb[0].mxu0 %v4234
        %v4397 = vpop.f32.mrb[0].mxu0
        %v4398 = vadd.f32 0.0, %v4397
        %v4399 = vpop.f32.mrb[0].mxu0
        %4400 = vmatprep.mubr.f32.mxu0 0.0
        %4401 = vmatmul.mubr.f32.gmra.mrb[0].mxu0 %v4236
        %v4402 = vpop.f32.mrb[0].mxu0
        %v4403 = vadd.f32 0.0, %v4402
        %v4404 = vpop.f32.mrb[0].mxu0
        %4405 = vmatprep.mubr.f32.mxu0 0.0
        %4406 = vmatmul.mubr.f32.gmra.mrb[0].mxu0 %v4238
        %v4407 = vpop.f32.mrb[0].mxu0
        %v4408 = vadd.f32 0.0, %v4407
        %v4409 = vpop.f32.mrb[0].mxu0
        %4410 = vmatprep.mubr.f32.mxu0 0.0
        %4411 = vmatmul.mubr.f32.gmra.mrb[0].mxu0 %v4240
        %v4412 = vpop.f32.mrb[0].mxu0
        %v4413 = vadd.f32 0.0, %v4412
        %v4414 = vpop.f32.mrb[0].mxu0
        %4415 = vmatprep.mubr.f32.mxu0 0.0
        %4416 = vmatmul.mubr.f32.gmra.mrb[0].mxu0 %v4242
        %v4417 = vpop.f32.mrb[0].mxu0
        %v4418 = vadd.f32 0.0, %v4417
        %v4419 = vpop.f32.mrb[0].mxu0
        %4420 = vmatprep.mubr.f32.mxu0 0.0
        %4421 = vmatmul.mubr.f32.gmra.mrb[0].mxu0 %v4244
        %v4422 = vpop.f32.mrb[0].mxu0
        %v4423 = vadd.f32 0.0, %v4422
        %v4424 = vpop.f32.mrb[0].mxu0
        %4425 = vmatprep.mubr.f32.mxu0 0.0
        %4426 = vmatmul.mubr.f32.gmra.mrb[0].mxu0 %v4246
        %v4427 = vpop.f32.mrb[0].mxu0
        %v4428 = vadd.f32 0.0, %v4427
        %v4429 = vpop.f32.mrb[0].mxu0
        %4430 = vmatprep.mubr.f32.mxu0 0.0
        %4431 = vmatmul.mubr.f32.gmra.mrb[0].mxu0 %v4248
        %v4432 = vpop.f32.mrb[0].mxu0
        %v4433 = vadd.f32 0.0, %v4432
        %v4434 = vpop.f32.mrb[0].mxu0
        %4435 = vmatprep.mubr.f32.mxu0 0.0
        %4436 = vmatmul.mubr.f32.gmra.mrb[0].mxu0 %v4250
        %v4437 = vpop.f32.mrb[0].mxu0
        %v4438 = vadd.f32 0.0, %v4437
        %v4439 = vpop.f32.mrb[0].mxu0
        %4440 = vmatprep.mubr.f32.mxu0 0.0
        %4441 = vmatmul.mubr.f32.gmra.mrb[0].mxu0 %v4252
        %v4442 = vpop.f32.mrb[0].mxu0
        %v4443 = vadd.f32 0.0, %v4442
        %v4444 = vpop.f32.mrb[0].mxu0
        %4445 = vmatprep.mubr.f32.mxu0 0.0
        %4446 = vmatmul.mubr.f32.gmra.mrb[0].mxu0 %v4254
        %v4447 = vpop.f32.mrb[0].mxu0
        %v4448 = vadd.f32 0.0, %v4447
        %v4449 = vpop.f32.mrb[0].mxu0
        %4450 = vmatprep.mubr.f32.mxu0 0.0
        %4451 = vmatmul.mubr.f32.gmra.mrb[0].mxu0 %v4256
        %v4452 = vpop.f32.mrb[0].mxu0
        %v4453 = vadd.f32 0.0, %v4452
        %v4454 = vpop.f32.mrb[0].mxu0
        %4455 = vmatprep.mubr.f32.mxu0 0.0
        %4456 = vmatmul.mubr.f32.gmra.mrb[0].mxu0 %v4258
        %v4457 = vpop.f32.mrb[0].mxu0
        %v4458 = vadd.f32 0.0, %v4457
        %v4459 = vpop.f32.mrb[0].mxu0
        %4460 = vmatprep.mubr.f32.mxu0 0.0
        %4461 = vmatmul.mubr.f32.gmra.mrb[0].mxu0 %v4260
        %v4462 = vpop.f32.mrb[0].mxu0
        %v4463 = vadd.f32 0.0, %v4462
        %v4464 = vpop.f32.mrb[0].mxu0
        %4465 = vmatprep.mubr.f32.mxu0 0.0
        %4466 = vmatmul.mubr.f32.gmra.mrb[0].mxu0 %v4262
        %v4467 = vpop.f32.mrb[0].mxu0
        %v4468 = vadd.f32 0.0, %v4467
        %v4469 = vpop.f32.mrb[0].mxu0
        %4470 = vmatprep.mubr.f32.mxu0 0.0
        %4471 = vmatmul.mubr.f32.gmra.mrb[0].mxu0 %v4264
        %v4472 = vpop.f32.mrb[0].mxu0
        %v4473 = vadd.f32 0.0, %v4472
        %v4474 = vpop.f32.mrb[0].mxu0
        %4475 = vmatprep.mubr.f32.mxu0 0.0
        %4476 = vmatmul.mubr.f32.gmra.mrb[0].mxu0 %v4266
        %v4477 = vpop.f32.mrb[0].mxu0
        %v4478 = vadd.f32 0.0, %v4477
        %v4479 = vpop.f32.mrb[0].mxu0
        %4480 = vmatprep.mubr.f32.mxu0 0.0
        %4481 = vmatmul.mubr.f32.gmra.mrb[0].mxu0 %v4268
        %v4482 = vpop.f32.mrb[0].mxu0
        %v4483 = vadd.f32 0.0, %v4482
        %v4484 = vpop.f32.mrb[0].mxu0
        %4485 = vmatprep.mubr.f32.mxu0 0.0
        %4486 = vmatmul.mubr.f32.gmra.mrb[0].mxu0 %v4270
        %v4487 = vpop.f32.mrb[0].mxu0
        %v4488 = vadd.f32 0.0, %v4487
        %v4489 = vpop.f32.mrb[0].mxu0
        %4490 = vmatprep.mubr.f32.mxu0 0.0
        %4491 = vmatmul.mubr.f32.gmra.mrb[0].mxu0 %v4272
        %v4492 = vpop.f32.mrb[0].mxu0
        %v4493 = vadd.f32 0.0, %v4492
        %v4494 = vpop.f32.mrb[0].mxu0
        %4495 = vmatprep.mubr.f32.mxu0 0.0
        %4496 = vmatmul.mubr.f32.gmra.mrb[0].mxu0 %v4274
        %v4497 = vpop.f32.mrb[0].mxu0
        %v4498 = vadd.f32 0.0, %v4497
        %v4499 = vpop.f32.mrb[0].mxu0
        %4500 = vdwg.mxu0
        %v4501 = vadd.f32 %v3975, %v4343
        %v4502 = vadd.f32 %v3980, %v4348
        %v4503 = vadd.f32 %v3985, %v4353
        %v4504 = vadd.f32 %v3990, %v4358
        %v4505 = vadd.f32 %v3995, %v4363
        %v4506 = vadd.f32 %v4000, %v4368
        %v4507 = vadd.f32 %v4005, %v4373
        %v4508 = vadd.f32 %v4010, %v4378
        %v4509 = vadd.f32 %v4015, %v4383
        %v4510 = vadd.f32 %v4020, %v4388
        %v4511 = vadd.f32 %v4025, %v4393
        %v4512 = vadd.f32 %v4030, %v4398
        %v4513 = vadd.f32 %v4035, %v4403
        %v4514 = vadd.f32 %v4040, %v4408
        %v4515 = vadd.f32 %v4045, %v4413
        %v4516 = vadd.f32 %v4050, %v4418
        %v4517 = vadd.f32 %v4055, %v4423
        %v4518 = vadd.f32 %v4060, %v4428
        %v4519 = vadd.f32 %v4065, %v4433
        %v4520 = vadd.f32 %v4070, %v4438
        %v4521 = vadd.f32 %v4075, %v4443
        %v4522 = vadd.f32 %v4080, %v4448
        %v4523 = vadd.f32 %v4085, %v4453
        %v4524 = vadd.f32 %v4090, %v4458
        %v4525 = vadd.f32 %v4095, %v4463
        %v4526 = vadd.f32 %v4100, %v4468
        %v4527 = vadd.f32 %v4105, %v4473
        %v4528 = vadd.f32 %v4110, %v4478
        %v4529 = vadd.f32 %v4115, %v4483
        %v4530 = vadd.f32 %v4120, %v4488
        %v4531 = vadd.f32 %v4125, %v4493
        %v4532 = vadd.f32 %v4130, %v4498
        %v4533 = vld [vmem:[%s3 + $0xc0] sm:$0xff]
        %v4534 = vld [vmem:[%s3 + $0xc8] sm:$0xff]
        %v4535 = vld [vmem:[%s3 + $0xd0] sm:$0xff]
        %v4536 = vld [vmem:[%s3 + $0xd8] sm:$0xff]
        %v4537 = vld [vmem:[%s3 + $0xe0] sm:$0xff]
        %v4538 = vld [vmem:[%s3 + $0xe8] sm:$0xff]
        %v4539 = vld [vmem:[%s3 + $0xf0] sm:$0xff]
        %v4540 = vld [vmem:[%s3 + $0xf8] sm:$0xff]
        %v4542 = vsel %vm633, %v3425, 0
        %v4544 = vsel %vm633, %v3377, 0
        %4546 = vmatprep.subr.mxu0 0.0
        %4547 = vmatpush1.msra.mxu0 %v4533
        %4548 = vmatprep.subr.mxu0 0.0
        %4549 = vmatpush1.msra.mxu0 %v4534
        %4550 = vmatprep.subr.mxu0 0.0
        %4551 = vmatpush1.msra.mxu0 %v4535
        %4552 = vmatprep.subr.mxu0 0.0
        %4553 = vmatpush1.msra.mxu0 %v4536
        %4554 = vmatprep.subr.mxu0 0.0
        %4555 = vmatpush1.msra.mxu0 %v4537
        %4556 = vmatprep.subr.mxu0 0.0
        %4557 = vmatpush1.msra.mxu0 %v4538
        %4558 = vmatprep.subr.mxu0 0.0
        %4559 = vmatpush1.msra.mxu0 %v4539
        %4560 = vmatprep.subr.mxu0 0.0
        %4561 = vmatpush1.msra.mxu0 %v4540
        %4562 = vmatprep.subr.mxu0 0.0
        %4563 = vmatpush1.msra.mxu0 0.0
        %4564 = vmatprep.subr.mxu0 0.0
        %4565 = vmatpush1.msra.mxu0 0.0
        %4566 = vmatprep.subr.mxu0 0.0
        %4567 = vmatpush1.msra.mxu0 0.0
        %4568 = vmatprep.subr.mxu0 0.0
        %4569 = vmatpush1.msra.mxu0 0.0
        %4570 = vmatprep.subr.mxu0 0.0
        %4571 = vmatpush1.msra.mxu0 0.0
        %4572 = vmatprep.subr.mxu0 0.0
        %4573 = vmatpush1.msra.mxu0 0.0
        %4574 = vmatprep.subr.mxu0 0.0
        %4575 = vmatpush1.msra.mxu0 0.0
        %4576 = vmatprep.subr.mxu0 0.0
        %4577 = vmatpush1.msra.mxu0 0.0
        %4578 = vmatprep.subr.mxu0 0.0
        %4579 = vmatpush1.msra.mxu0 0.0
        %4580 = vmatprep.subr.mxu0 0.0
        %4581 = vmatpush1.msra.mxu0 0.0
        %4582 = vmatprep.subr.mxu0 0.0
        %4583 = vmatpush1.msra.mxu0 0.0
        %4584 = vmatprep.subr.mxu0 0.0
        %4585 = vmatpush1.msra.mxu0 0.0
        %4586 = vmatprep.subr.mxu0 0.0
        %4587 = vmatpush1.msra.mxu0 0.0
        %4588 = vmatprep.subr.mxu0 0.0
        %4589 = vmatpush1.msra.mxu0 0.0
        %4590 = vmatprep.subr.mxu0 0.0
        %4591 = vmatpush1.msra.mxu0 0.0
        %4592 = vmatprep.subr.mxu0 0.0
        %4593 = vmatpush1.msra.mxu0 0.0
        %4594 = vmatprep.subr.mxu0 0.0
        %4595 = vmatpush1.msra.mxu0 0.0
        %4596 = vmatprep.subr.mxu0 0.0
        %4597 = vmatpush1.msra.mxu0 0.0
        %4598 = vmatprep.subr.mxu0 0.0
        %4599 = vmatpush1.msra.mxu0 0.0
        %4600 = vmatprep.subr.mxu0 0.0
        %4601 = vmatpush1.msra.mxu0 0.0
        %4602 = vmatprep.subr.mxu0 0.0
        %4603 = vmatpush1.msra.mxu0 0.0
        %4604 = vmatprep.subr.mxu0 0.0
        %4605 = vmatpush1.msra.mxu0 0.0
        %4606 = vmatprep.subr.mxu0 0.0
        %4607 = vmatpush1.msra.mxu0 0.0
        %4608 = vmatprep.subr.mxu0 0.0
        %4609 = vmatpush1.msra.mxu0 0.0
        %4610 = vmatprep.mubr.f32.mxu0 0.0
        %4611 = vmatmul.mubr.f32.gmra.mrb[0].mxu0 %v3848
        %v4612 = vpop.f32.mrb[0].mxu0
        %v4613 = vadd.f32 0.0, %v4612
        %v4614 = vpop.f32.mrb[0].mxu0
        %4615 = vmatprep.mubr.f32.mxu0 0.0
        %4616 = vmatmul.mubr.f32.gmra.mrb[0].mxu0 %v3850
        %v4617 = vpop.f32.mrb[0].mxu0
        %v4618 = vadd.f32 0.0, %v4617
        %v4619 = vpop.f32.mrb[0].mxu0
        %4620 = vmatprep.mubr.f32.mxu0 0.0
        %4621 = vmatmul.mubr.f32.gmra.mrb[0].mxu0 %v3852
        %v4622 = vpop.f32.mrb[0].mxu0
        %v4623 = vadd.f32 0.0, %v4622
        %v4624 = vpop.f32.mrb[0].mxu0
        %4625 = vmatprep.mubr.f32.mxu0 0.0
        %4626 = vmatmul.mubr.f32.gmra.mrb[0].mxu0 %v3854
        %v4627 = vpop.f32.mrb[0].mxu0
        %v4628 = vadd.f32 0.0, %v4627
        %v4629 = vpop.f32.mrb[0].mxu0
        %4630 = vmatprep.mubr.f32.mxu0 0.0
        %4631 = vmatmul.mubr.f32.gmra.mrb[0].mxu0 %v3856
        %v4632 = vpop.f32.mrb[0].mxu0
        %v4633 = vadd.f32 0.0, %v4632
        %v4634 = vpop.f32.mrb[0].mxu0
        %4635 = vmatprep.mubr.f32.mxu0 0.0
        %4636 = vmatmul.mubr.f32.gmra.mrb[0].mxu0 %v3858
        %v4637 = vpop.f32.mrb[0].mxu0
        %v4638 = vadd.f32 0.0, %v4637
        %v4639 = vpop.f32.mrb[0].mxu0
        %4640 = vmatprep.mubr.f32.mxu0 0.0
        %4641 = vmatmul.mubr.f32.gmra.mrb[0].mxu0 %v3860
        %v4642 = vpop.f32.mrb[0].mxu0
        %v4643 = vadd.f32 0.0, %v4642
        %v4644 = vpop.f32.mrb[0].mxu0
        %4645 = vmatprep.mubr.f32.mxu0 0.0
        %4646 = vmatmul.mubr.f32.gmra.mrb[0].mxu0 %v3862
        %v4647 = vpop.f32.mrb[0].mxu0
        %v4648 = vadd.f32 0.0, %v4647
        %v4649 = vpop.f32.mrb[0].mxu0
        %4650 = vmatprep.mubr.f32.mxu0 0.0
        %4651 = vmatmul.mubr.f32.gmra.mrb[0].mxu0 %v3864
        %v4652 = vpop.f32.mrb[0].mxu0
        %v4653 = vadd.f32 0.0, %v4652
        %v4654 = vpop.f32.mrb[0].mxu0
        %4655 = vmatprep.mubr.f32.mxu0 0.0
        %4656 = vmatmul.mubr.f32.gmra.mrb[0].mxu0 %v3866
        %v4657 = vpop.f32.mrb[0].mxu0
        %v4658 = vadd.f32 0.0, %v4657
        %v4659 = vpop.f32.mrb[0].mxu0
        %4660 = vmatprep.mubr.f32.mxu0 0.0
        %4661 = vmatmul.mubr.f32.gmra.mrb[0].mxu0 %v3868
        %v4662 = vpop.f32.mrb[0].mxu0
        %v4663 = vadd.f32 0.0, %v4662
        %v4664 = vpop.f32.mrb[0].mxu0
        %4665 = vmatprep.mubr.f32.mxu0 0.0
        %4666 = vmatmul.mubr.f32.gmra.mrb[0].mxu0 %v3870
        %v4667 = vpop.f32.mrb[0].mxu0
        %v4668 = vadd.f32 0.0, %v4667
        %v4669 = vpop.f32.mrb[0].mxu0
        %4670 = vmatprep.mubr.f32.mxu0 0.0
        %4671 = vmatmul.mubr.f32.gmra.mrb[0].mxu0 %v3872
        %v4672 = vpop.f32.mrb[0].mxu0
        %v4673 = vadd.f32 0.0, %v4672
        %v4674 = vpop.f32.mrb[0].mxu0
        %4675 = vmatprep.mubr.f32.mxu0 0.0
        %4676 = vmatmul.mubr.f32.gmra.mrb[0].mxu0 %v3874
        %v4677 = vpop.f32.mrb[0].mxu0
        %v4678 = vadd.f32 0.0, %v4677
        %v4679 = vpop.f32.mrb[0].mxu0
        %4680 = vmatprep.mubr.f32.mxu0 0.0
        %4681 = vmatmul.mubr.f32.gmra.mrb[0].mxu0 %v3876
        %v4682 = vpop.f32.mrb[0].mxu0
        %v4683 = vadd.f32 0.0, %v4682
        %v4684 = vpop.f32.mrb[0].mxu0
        %4685 = vmatprep.mubr.f32.mxu0 0.0
        %4686 = vmatmul.mubr.f32.gmra.mrb[0].mxu0 %v3878
        %v4687 = vpop.f32.mrb[0].mxu0
        %v4688 = vadd.f32 0.0, %v4687
        %v4689 = vpop.f32.mrb[0].mxu0
        %4690 = vmatprep.mubr.f32.mxu0 0.0
        %4691 = vmatmul.mubr.f32.gmra.mrb[0].mxu0 %v3880
        %v4692 = vpop.f32.mrb[0].mxu0
        %v4693 = vadd.f32 0.0, %v4692
        %v4694 = vpop.f32.mrb[0].mxu0
        %4695 = vmatprep.mubr.f32.mxu0 0.0
        %4696 = vmatmul.mubr.f32.gmra.mrb[0].mxu0 %v3882
        %v4697 = vpop.f32.mrb[0].mxu0
        %v4698 = vadd.f32 0.0, %v4697
        %v4699 = vpop.f32.mrb[0].mxu0
        %4700 = vmatprep.mubr.f32.mxu0 0.0
        %4701 = vmatmul.mubr.f32.gmra.mrb[0].mxu0 %v3884
        %v4702 = vpop.f32.mrb[0].mxu0
        %v4703 = vadd.f32 0.0, %v4702
        %v4704 = vpop.f32.mrb[0].mxu0
        %4705 = vmatprep.mubr.f32.mxu0 0.0
        %4706 = vmatmul.mubr.f32.gmra.mrb[0].mxu0 %v3886
        %v4707 = vpop.f32.mrb[0].mxu0
        %v4708 = vadd.f32 0.0, %v4707
        %v4709 = vpop.f32.mrb[0].mxu0
        %4710 = vmatprep.mubr.f32.mxu0 0.0
        %4711 = vmatmul.mubr.f32.gmra.mrb[0].mxu0 %v3888
        %v4712 = vpop.f32.mrb[0].mxu0
        %v4713 = vadd.f32 0.0, %v4712
        %v4714 = vpop.f32.mrb[0].mxu0
        %4715 = vmatprep.mubr.f32.mxu0 0.0
        %4716 = vmatmul.mubr.f32.gmra.mrb[0].mxu0 %v3890
        %v4717 = vpop.f32.mrb[0].mxu0
        %v4718 = vadd.f32 0.0, %v4717
        %v4719 = vpop.f32.mrb[0].mxu0
        %4720 = vmatprep.mubr.f32.mxu0 0.0
        %4721 = vmatmul.mubr.f32.gmra.mrb[0].mxu0 %v3892
        %v4722 = vpop.f32.mrb[0].mxu0
        %v4723 = vadd.f32 0.0, %v4722
        %v4724 = vpop.f32.mrb[0].mxu0
        %4725 = vmatprep.mubr.f32.mxu0 0.0
        %4726 = vmatmul.mubr.f32.gmra.mrb[0].mxu0 %v3894
        %v4727 = vpop.f32.mrb[0].mxu0
        %v4728 = vadd.f32 0.0, %v4727
        %v4729 = vpop.f32.mrb[0].mxu0
        %4730 = vmatprep.mubr.f32.mxu0 0.0
        %4731 = vmatmul.mubr.f32.gmra.mrb[0].mxu0 %v3896
        %v4732 = vpop.f32.mrb[0].mxu0
        %v4733 = vadd.f32 0.0, %v4732
        %v4734 = vpop.f32.mrb[0].mxu0
        %4735 = vmatprep.mubr.f32.mxu0 0.0
        %4736 = vmatmul.mubr.f32.gmra.mrb[0].mxu0 %v3898
        %v4737 = vpop.f32.mrb[0].mxu0
        %v4738 = vadd.f32 0.0, %v4737
        %v4739 = vpop.f32.mrb[0].mxu0
        %4740 = vmatprep.mubr.f32.mxu0 0.0
        %4741 = vmatmul.mubr.f32.gmra.mrb[0].mxu0 %v3900
        %v4742 = vpop.f32.mrb[0].mxu0
        %v4743 = vadd.f32 0.0, %v4742
        %v4744 = vpop.f32.mrb[0].mxu0
        %4745 = vmatprep.mubr.f32.mxu0 0.0
        %4746 = vmatmul.mubr.f32.gmra.mrb[0].mxu0 %v3902
        %v4747 = vpop.f32.mrb[0].mxu0
        %v4748 = vadd.f32 0.0, %v4747
        %v4749 = vpop.f32.mrb[0].mxu0
        %4750 = vmatprep.mubr.f32.mxu0 0.0
        %4751 = vmatmul.mubr.f32.gmra.mrb[0].mxu0 %v3904
        %v4752 = vpop.f32.mrb[0].mxu0
        %v4753 = vadd.f32 0.0, %v4752
        %v4754 = vpop.f32.mrb[0].mxu0
        %4755 = vmatprep.mubr.f32.mxu0 0.0
        %4756 = vmatmul.mubr.f32.gmra.mrb[0].mxu0 %v3906
        %v4757 = vpop.f32.mrb[0].mxu0
        %v4758 = vadd.f32 0.0, %v4757
        %v4759 = vpop.f32.mrb[0].mxu0
        %4760 = vmatprep.mubr.f32.mxu0 0.0
        %4761 = vmatmul.mubr.f32.gmra.mrb[0].mxu0 %v4542
        %v4762 = vpop.f32.mrb[0].mxu0
        %v4763 = vadd.f32 0.0, %v4762
        %v4764 = vpop.f32.mrb[0].mxu0
        %4765 = vmatprep.mubr.f32.mxu0 0.0
        %4766 = vmatmul.mubr.f32.gmra.mrb[0].mxu0 %v4544
        %v4767 = vpop.f32.mrb[0].mxu0
        %v4768 = vadd.f32 0.0, %v4767
        %v4769 = vpop.f32.mrb[0].mxu0
        %4770 = vdwg.mxu0
        %v4771 = vadd.f32 %v4501, %v4613
        %v4772 = vadd.f32 %v4502, %v4618
        %v4773 = vadd.f32 %v4503, %v4623
        %v4774 = vadd.f32 %v4504, %v4628
        %v4775 = vadd.f32 %v4505, %v4633
        %v4776 = vadd.f32 %v4506, %v4638
        %v4777 = vadd.f32 %v4507, %v4643
        %v4778 = vadd.f32 %v4508, %v4648
        %v4779 = vadd.f32 %v4509, %v4653
        %v4780 = vadd.f32 %v4510, %v4658
        %v4781 = vadd.f32 %v4511, %v4663
        %v4782 = vadd.f32 %v4512, %v4668
        %v4783 = vadd.f32 %v4513, %v4673
        %v4784 = vadd.f32 %v4514, %v4678
        %v4785 = vadd.f32 %v4515, %v4683
        %v4786 = vadd.f32 %v4516, %v4688
        %v4787 = vadd.f32 %v4517, %v4693
        %v4788 = vadd.f32 %v4518, %v4698
        %v4789 = vadd.f32 %v4519, %v4703
        %v4790 = vadd.f32 %v4520, %v4708
        %v4791 = vadd.f32 %v4521, %v4713
        %v4792 = vadd.f32 %v4522, %v4718
        %v4793 = vadd.f32 %v4523, %v4723
        %v4794 = vadd.f32 %v4524, %v4728
        %v4795 = vadd.f32 %v4525, %v4733
        %v4796 = vadd.f32 %v4526, %v4738
        %v4797 = vadd.f32 %v4527, %v4743
        %v4798 = vadd.f32 %v4528, %v4748
        %v4799 = vadd.f32 %v4529, %v4753
        %v4800 = vadd.f32 %v4530, %v4758
        %v4801 = vadd.f32 %v4531, %v4763
        %v4802 = vadd.f32 %v4532, %v4768
        %v4804 = vrot.slane %v3425, 1
        %v4805 = vrot.slane %v3377, 1
        %v4806 = vsel %vm547, %v4804, %v4805
        %v4807 = vrot.slane %v3441, 1
        %v4808 = vsel %vm547, %v4805, %v4807
        %v4809 = vld [vmem:[%s3 + $0x100] sm:$0xff]
        %v4810 = vld [vmem:[%s3 + $0x108] sm:$0xff]
        %v4811 = vld [vmem:[%s3 + $0x110] sm:$0xff]
        %v4812 = vld [vmem:[%s3 + $0x118] sm:$0xff]
        %v4813 = vld [vmem:[%s3 + $0x120] sm:$0xff]
        %v4814 = vld [vmem:[%s3 + $0x128] sm:$0xff]
        %v4815 = vld [vmem:[%s3 + $0x130] sm:$0xff]
        %v4816 = vld [vmem:[%s3 + $0x138] sm:$0xff]
        %v4817 = vsel %vm633, %v4806, 0
        %v4819 = vsel %vm633, %v4808, 0
        %4821 = vmatprep.subr.mxu0 0.0
        %4822 = vmatpush1.msra.mxu0 %v4809
        %4823 = vmatprep.subr.mxu0 0.0
        %4824 = vmatpush1.msra.mxu0 %v4810
        %4825 = vmatprep.subr.mxu0 0.0
        %4826 = vmatpush1.msra.mxu0 %v4811
        %4827 = vmatprep.subr.mxu0 0.0
        %4828 = vmatpush1.msra.mxu0 %v4812
        %4829 = vmatprep.subr.mxu0 0.0
        %4830 = vmatpush1.msra.mxu0 %v4813
        %4831 = vmatprep.subr.mxu0 0.0
        %4832 = vmatpush1.msra.mxu0 %v4814
        %4833 = vmatprep.subr.mxu0 0.0
        %4834 = vmatpush1.msra.mxu0 %v4815
        %4835 = vmatprep.subr.mxu0 0.0
        %4836 = vmatpush1.msra.mxu0 %v4816
        %4837 = vmatprep.subr.mxu0 0.0
        %4838 = vmatpush1.msra.mxu0 0.0
        %4839 = vmatprep.subr.mxu0 0.0
        %4840 = vmatpush1.msra.mxu0 0.0
        %4841 = vmatprep.subr.mxu0 0.0
        %4842 = vmatpush1.msra.mxu0 0.0
        %4843 = vmatprep.subr.mxu0 0.0
        %4844 = vmatpush1.msra.mxu0 0.0
        %4845 = vmatprep.subr.mxu0 0.0
        %4846 = vmatpush1.msra.mxu0 0.0
        %4847 = vmatprep.subr.mxu0 0.0
        %4848 = vmatpush1.msra.mxu0 0.0
        %4849 = vmatprep.subr.mxu0 0.0
        %4850 = vmatpush1.msra.mxu0 0.0
        %4851 = vmatprep.subr.mxu0 0.0
        %4852 = vmatpush1.msra.mxu0 0.0
        %4853 = vmatprep.subr.mxu0 0.0
        %4854 = vmatpush1.msra.mxu0 0.0
        %4855 = vmatprep.subr.mxu0 0.0
        %4856 = vmatpush1.msra.mxu0 0.0
        %4857 = vmatprep.subr.mxu0 0.0
        %4858 = vmatpush1.msra.mxu0 0.0
        %4859 = vmatprep.subr.mxu0 0.0
        %4860 = vmatpush1.msra.mxu0 0.0
        %4861 = vmatprep.subr.mxu0 0.0
        %4862 = vmatpush1.msra.mxu0 0.0
        %4863 = vmatprep.subr.mxu0 0.0
        %4864 = vmatpush1.msra.mxu0 0.0
        %4865 = vmatprep.subr.mxu0 0.0
        %4866 = vmatpush1.msra.mxu0 0.0
        %4867 = vmatprep.subr.mxu0 0.0
        %4868 = vmatpush1.msra.mxu0 0.0
        %4869 = vmatprep.subr.mxu0 0.0
        %4870 = vmatpush1.msra.mxu0 0.0
        %4871 = vmatprep.subr.mxu0 0.0
        %4872 = vmatpush1.msra.mxu0 0.0
        %4873 = vmatprep.subr.mxu0 0.0
        %4874 = vmatpush1.msra.mxu0 0.0
        %4875 = vmatprep.subr.mxu0 0.0
        %4876 = vmatpush1.msra.mxu0 0.0
        %4877 = vmatprep.subr.mxu0 0.0
        %4878 = vmatpush1.msra.mxu0 0.0
        %4879 = vmatprep.subr.mxu0 0.0
        %4880 = vmatpush1.msra.mxu0 0.0
        %4881 = vmatprep.subr.mxu0 0.0
        %4882 = vmatpush1.msra.mxu0 0.0
        %4883 = vmatprep.subr.mxu0 0.0
        %4884 = vmatpush1.msra.mxu0 0.0
        %4885 = vmatprep.mubr.f32.mxu0 0.0
        %4886 = vmatmul.mubr.f32.gmra.mrb[0].mxu0 %v3563
        %v4887 = vpop.f32.mrb[0].mxu0
        %v4888 = vadd.f32 0.0, %v4887
        %v4889 = vpop.f32.mrb[0].mxu0
        %4890 = vmatprep.mubr.f32.mxu0 0.0
        %4891 = vmatmul.mubr.f32.gmra.mrb[0].mxu0 %v3565
        %v4892 = vpop.f32.mrb[0].mxu0
        %v4893 = vadd.f32 0.0, %v4892
        %v4894 = vpop.f32.mrb[0].mxu0
        %4895 = vmatprep.mubr.f32.mxu0 0.0
        %4896 = vmatmul.mubr.f32.gmra.mrb[0].mxu0 %v3567
        %v4897 = vpop.f32.mrb[0].mxu0
        %v4898 = vadd.f32 0.0, %v4897
        %v4899 = vpop.f32.mrb[0].mxu0
        %4900 = vmatprep.mubr.f32.mxu0 0.0
        %4901 = vmatmul.mubr.f32.gmra.mrb[0].mxu0 %v3569
        %v4902 = vpop.f32.mrb[0].mxu0
        %v4903 = vadd.f32 0.0, %v4902
        %v4904 = vpop.f32.mrb[0].mxu0
        %4905 = vmatprep.mubr.f32.mxu0 0.0
        %4906 = vmatmul.mubr.f32.gmra.mrb[0].mxu0 %v3571
        %v4907 = vpop.f32.mrb[0].mxu0
        %v4908 = vadd.f32 0.0, %v4907
        %v4909 = vpop.f32.mrb[0].mxu0
        %4910 = vmatprep.mubr.f32.mxu0 0.0
        %4911 = vmatmul.mubr.f32.gmra.mrb[0].mxu0 %v3573
        %v4912 = vpop.f32.mrb[0].mxu0
        %v4913 = vadd.f32 0.0, %v4912
        %v4914 = vpop.f32.mrb[0].mxu0
        %4915 = vmatprep.mubr.f32.mxu0 0.0
        %4916 = vmatmul.mubr.f32.gmra.mrb[0].mxu0 %v3575
        %v4917 = vpop.f32.mrb[0].mxu0
        %v4918 = vadd.f32 0.0, %v4917
        %v4919 = vpop.f32.mrb[0].mxu0
        %4920 = vmatprep.mubr.f32.mxu0 0.0
        %4921 = vmatmul.mubr.f32.gmra.mrb[0].mxu0 %v3577
        %v4922 = vpop.f32.mrb[0].mxu0
        %v4923 = vadd.f32 0.0, %v4922
        %v4924 = vpop.f32.mrb[0].mxu0
        %4925 = vmatprep.mubr.f32.mxu0 0.0
        %4926 = vmatmul.mubr.f32.gmra.mrb[0].mxu0 %v3579
        %v4927 = vpop.f32.mrb[0].mxu0
        %v4928 = vadd.f32 0.0, %v4927
        %v4929 = vpop.f32.mrb[0].mxu0
        %4930 = vmatprep.mubr.f32.mxu0 0.0
        %4931 = vmatmul.mubr.f32.gmra.mrb[0].mxu0 %v3581
        %v4932 = vpop.f32.mrb[0].mxu0
        %v4933 = vadd.f32 0.0, %v4932
        %v4934 = vpop.f32.mrb[0].mxu0
        %4935 = vmatprep.mubr.f32.mxu0 0.0
        %4936 = vmatmul.mubr.f32.gmra.mrb[0].mxu0 %v3583
        %v4937 = vpop.f32.mrb[0].mxu0
        %v4938 = vadd.f32 0.0, %v4937
        %v4939 = vpop.f32.mrb[0].mxu0
        %4940 = vmatprep.mubr.f32.mxu0 0.0
        %4941 = vmatmul.mubr.f32.gmra.mrb[0].mxu0 %v3585
        %v4942 = vpop.f32.mrb[0].mxu0
        %v4943 = vadd.f32 0.0, %v4942
        %v4944 = vpop.f32.mrb[0].mxu0
        %4945 = vmatprep.mubr.f32.mxu0 0.0
        %4946 = vmatmul.mubr.f32.gmra.mrb[0].mxu0 %v3587
        %v4947 = vpop.f32.mrb[0].mxu0
        %v4948 = vadd.f32 0.0, %v4947
        %v4949 = vpop.f32.mrb[0].mxu0
        %4950 = vmatprep.mubr.f32.mxu0 0.0
        %4951 = vmatmul.mubr.f32.gmra.mrb[0].mxu0 %v3589
        %v4952 = vpop.f32.mrb[0].mxu0
        %v4953 = vadd.f32 0.0, %v4952
        %v4954 = vpop.f32.mrb[0].mxu0
        %4955 = vmatprep.mubr.f32.mxu0 0.0
        %4956 = vmatmul.mubr.f32.gmra.mrb[0].mxu0 %v3591
        %v4957 = vpop.f32.mrb[0].mxu0
        %v4958 = vadd.f32 0.0, %v4957
        %v4959 = vpop.f32.mrb[0].mxu0
        %4960 = vmatprep.mubr.f32.mxu0 0.0
        %4961 = vmatmul.mubr.f32.gmra.mrb[0].mxu0 %v3593
        %v4962 = vpop.f32.mrb[0].mxu0
        %v4963 = vadd.f32 0.0, %v4962
        %v4964 = vpop.f32.mrb[0].mxu0
        %4965 = vmatprep.mubr.f32.mxu0 0.0
        %4966 = vmatmul.mubr.f32.gmra.mrb[0].mxu0 %v3595
        %v4967 = vpop.f32.mrb[0].mxu0
        %v4968 = vadd.f32 0.0, %v4967
        %v4969 = vpop.f32.mrb[0].mxu0
        %4970 = vmatprep.mubr.f32.mxu0 0.0
        %4971 = vmatmul.mubr.f32.gmra.mrb[0].mxu0 %v3597
        %v4972 = vpop.f32.mrb[0].mxu0
        %v4973 = vadd.f32 0.0, %v4972
        %v4974 = vpop.f32.mrb[0].mxu0
        %4975 = vmatprep.mubr.f32.mxu0 0.0
        %4976 = vmatmul.mubr.f32.gmra.mrb[0].mxu0 %v3599
        %v4977 = vpop.f32.mrb[0].mxu0
        %v4978 = vadd.f32 0.0, %v4977
        %v4979 = vpop.f32.mrb[0].mxu0
        %4980 = vmatprep.mubr.f32.mxu0 0.0
        %4981 = vmatmul.mubr.f32.gmra.mrb[0].mxu0 %v3601
        %v4982 = vpop.f32.mrb[0].mxu0
        %v4983 = vadd.f32 0.0, %v4982
        %v4984 = vpop.f32.mrb[0].mxu0
        %4985 = vmatprep.mubr.f32.mxu0 0.0
        %4986 = vmatmul.mubr.f32.gmra.mrb[0].mxu0 %v3603
        %v4987 = vpop.f32.mrb[0].mxu0
        %v4988 = vadd.f32 0.0, %v4987
        %v4989 = vpop.f32.mrb[0].mxu0
        %4990 = vmatprep.mubr.f32.mxu0 0.0
        %4991 = vmatmul.mubr.f32.gmra.mrb[0].mxu0 %v3605
        %v4992 = vpop.f32.mrb[0].mxu0
        %v4993 = vadd.f32 0.0, %v4992
        %v4994 = vpop.f32.mrb[0].mxu0
        %4995 = vmatprep.mubr.f32.mxu0 0.0
        %4996 = vmatmul.mubr.f32.gmra.mrb[0].mxu0 %v3607
        %v4997 = vpop.f32.mrb[0].mxu0
        %v4998 = vadd.f32 0.0, %v4997
        %v4999 = vpop.f32.mrb[0].mxu0
        %5000 = vmatprep.mubr.f32.mxu0 0.0
        %5001 = vmatmul.mubr.f32.gmra.mrb[0].mxu0 %v3609
        %v5002 = vpop.f32.mrb[0].mxu0
        %v5003 = vadd.f32 0.0, %v5002
        %v5004 = vpop.f32.mrb[0].mxu0
        %5005 = vmatprep.mubr.f32.mxu0 0.0
        %5006 = vmatmul.mubr.f32.gmra.mrb[0].mxu0 %v3611
        %v5007 = vpop.f32.mrb[0].mxu0
        %v5008 = vadd.f32 0.0, %v5007
        %v5009 = vpop.f32.mrb[0].mxu0
        %5010 = vmatprep.mubr.f32.mxu0 0.0
        %5011 = vmatmul.mubr.f32.gmra.mrb[0].mxu0 %v3613
        %v5012 = vpop.f32.mrb[0].mxu0
        %v5013 = vadd.f32 0.0, %v5012
        %v5014 = vpop.f32.mrb[0].mxu0
        %5015 = vmatprep.mubr.f32.mxu0 0.0
        %5016 = vmatmul.mubr.f32.gmra.mrb[0].mxu0 %v3615
        %v5017 = vpop.f32.mrb[0].mxu0
        %v5018 = vadd.f32 0.0, %v5017
        %v5019 = vpop.f32.mrb[0].mxu0
        %5020 = vmatprep.mubr.f32.mxu0 0.0
        %5021 = vmatmul.mubr.f32.gmra.mrb[0].mxu0 %v3617
        %v5022 = vpop.f32.mrb[0].mxu0
        %v5023 = vadd.f32 0.0, %v5022
        %v5024 = vpop.f32.mrb[0].mxu0
        %5025 = vmatprep.mubr.f32.mxu0 0.0
        %5026 = vmatmul.mubr.f32.gmra.mrb[0].mxu0 %v3619
        %v5027 = vpop.f32.mrb[0].mxu0
        %v5028 = vadd.f32 0.0, %v5027
        %v5029 = vpop.f32.mrb[0].mxu0
        %5030 = vmatprep.mubr.f32.mxu0 0.0
        %5031 = vmatmul.mubr.f32.gmra.mrb[0].mxu0 %v3621
        %v5032 = vpop.f32.mrb[0].mxu0
        %v5033 = vadd.f32 0.0, %v5032
        %v5034 = vpop.f32.mrb[0].mxu0
        %5035 = vmatprep.mubr.f32.mxu0 0.0
        %5036 = vmatmul.mubr.f32.gmra.mrb[0].mxu0 %v4817
        %v5037 = vpop.f32.mrb[0].mxu0
        %v5038 = vadd.f32 0.0, %v5037
        %v5039 = vpop.f32.mrb[0].mxu0
        %5040 = vmatprep.mubr.f32.mxu0 0.0
        %5041 = vmatmul.mubr.f32.gmra.mrb[0].mxu0 %v4819
        %v5042 = vpop.f32.mrb[0].mxu0
        %v5043 = vadd.f32 0.0, %v5042
        %v5044 = vpop.f32.mrb[0].mxu0
        %5045 = vdwg.mxu0
        %v5046 = vadd.f32 %v4771, %v4888
        %v5047 = vadd.f32 %v4772, %v4893
        %v5048 = vadd.f32 %v4773, %v4898
        %v5049 = vadd.f32 %v4774, %v4903
        %v5050 = vadd.f32 %v4775, %v4908
        %v5051 = vadd.f32 %v4776, %v4913
        %v5052 = vadd.f32 %v4777, %v4918
        %v5053 = vadd.f32 %v4778, %v4923
        %v5054 = vadd.f32 %v4779, %v4928
        %v5055 = vadd.f32 %v4780, %v4933
        %v5056 = vadd.f32 %v4781, %v4938
        %v5057 = vadd.f32 %v4782, %v4943
        %v5058 = vadd.f32 %v4783, %v4948
        %v5059 = vadd.f32 %v4784, %v4953
        %v5060 = vadd.f32 %v4785, %v4958
        %v5061 = vadd.f32 %v4786, %v4963
        %v5062 = vadd.f32 %v4787, %v4968
        %v5063 = vadd.f32 %v4788, %v4973
        %v5064 = vadd.f32 %v4789, %v4978
        %v5065 = vadd.f32 %v4790, %v4983
        %v5066 = vadd.f32 %v4791, %v4988
        %v5067 = vadd.f32 %v4792, %v4993
        %v5068 = vadd.f32 %v4793, %v4998
        %v5069 = vadd.f32 %v4794, %v5003
        %v5070 = vadd.f32 %v4795, %v5008
        %v5071 = vadd.f32 %v4796, %v5013
        %v5072 = vadd.f32 %v4797, %v5018
        %v5073 = vadd.f32 %v4798, %v5023
        %v5074 = vadd.f32 %v4799, %v5028
        %v5075 = vadd.f32 %v4800, %v5033
        %v5076 = vadd.f32 %v4801, %v5038
        %v5077 = vadd.f32 %v4802, %v5043
        %v5078 = vrot.slane %v3425, 2
        %v5079 = vrot.slane %v3377, 2
        %v5080 = vsel %vm1208, %v5078, %v5079
        %v5081 = vrot.slane %v3441, 2
        %v5082 = vsel %vm1208, %v5079, %v5081
        %v5083 = vld [vmem:[%s3 + $0x140] sm:$0xff]
        %v5084 = vld [vmem:[%s3 + $0x148] sm:$0xff]
        %v5085 = vld [vmem:[%s3 + $0x150] sm:$0xff]
        %v5086 = vld [vmem:[%s3 + $0x158] sm:$0xff]
        %v5087 = vld [vmem:[%s3 + $0x160] sm:$0xff]
        %v5088 = vld [vmem:[%s3 + $0x168] sm:$0xff]
        %v5089 = vld [vmem:[%s3 + $0x170] sm:$0xff]
        %v5090 = vld [vmem:[%s3 + $0x178] sm:$0xff]
        %v5091 = vsel %vm633, %v5080, 0
        %v5093 = vsel %vm633, %v5082, 0
        %5095 = vmatprep.subr.mxu0 0.0
        %5096 = vmatpush1.msra.mxu0 %v5083
        %5097 = vmatprep.subr.mxu0 0.0
        %5098 = vmatpush1.msra.mxu0 %v5084
        %5099 = vmatprep.subr.mxu0 0.0
        %5100 = vmatpush1.msra.mxu0 %v5085
        %5101 = vmatprep.subr.mxu0 0.0
        %5102 = vmatpush1.msra.mxu0 %v5086
        %5103 = vmatprep.subr.mxu0 0.0
        %5104 = vmatpush1.msra.mxu0 %v5087
        %5105 = vmatprep.subr.mxu0 0.0
        %5106 = vmatpush1.msra.mxu0 %v5088
        %5107 = vmatprep.subr.mxu0 0.0
        %5108 = vmatpush1.msra.mxu0 %v5089
        %5109 = vmatprep.subr.mxu0 0.0
        %5110 = vmatpush1.msra.mxu0 %v5090
        %5111 = vmatprep.subr.mxu0 0.0
        %5112 = vmatpush1.msra.mxu0 0.0
        %5113 = vmatprep.subr.mxu0 0.0
        %5114 = vmatpush1.msra.mxu0 0.0
        %5115 = vmatprep.subr.mxu0 0.0
        %5116 = vmatpush1.msra.mxu0 0.0
        %5117 = vmatprep.subr.mxu0 0.0
        %5118 = vmatpush1.msra.mxu0 0.0
        %5119 = vmatprep.subr.mxu0 0.0
        %5120 = vmatpush1.msra.mxu0 0.0
        %5121 = vmatprep.subr.mxu0 0.0
        %5122 = vmatpush1.msra.mxu0 0.0
        %5123 = vmatprep.subr.mxu0 0.0
        %5124 = vmatpush1.msra.mxu0 0.0
        %5125 = vmatprep.subr.mxu0 0.0
        %5126 = vmatpush1.msra.mxu0 0.0
        %5127 = vmatprep.subr.mxu0 0.0
        %5128 = vmatpush1.msra.mxu0 0.0
        %5129 = vmatprep.subr.mxu0 0.0
        %5130 = vmatpush1.msra.mxu0 0.0
        %5131 = vmatprep.subr.mxu0 0.0
        %5132 = vmatpush1.msra.mxu0 0.0
        %5133 = vmatprep.subr.mxu0 0.0
        %5134 = vmatpush1.msra.mxu0 0.0
        %5135 = vmatprep.subr.mxu0 0.0
        %5136 = vmatpush1.msra.mxu0 0.0
        %5137 = vmatprep.subr.mxu0 0.0
        %5138 = vmatpush1.msra.mxu0 0.0
        %5139 = vmatprep.subr.mxu0 0.0
        %5140 = vmatpush1.msra.mxu0 0.0
        %5141 = vmatprep.subr.mxu0 0.0
        %5142 = vmatpush1.msra.mxu0 0.0
        %5143 = vmatprep.subr.mxu0 0.0
        %5144 = vmatpush1.msra.mxu0 0.0
        %5145 = vmatprep.subr.mxu0 0.0
        %5146 = vmatpush1.msra.mxu0 0.0
        %5147 = vmatprep.subr.mxu0 0.0
        %5148 = vmatpush1.msra.mxu0 0.0
        %5149 = vmatprep.subr.mxu0 0.0
        %5150 = vmatpush1.msra.mxu0 0.0
        %5151 = vmatprep.subr.mxu0 0.0
        %5152 = vmatpush1.msra.mxu0 0.0
        %5153 = vmatprep.subr.mxu0 0.0
        %5154 = vmatpush1.msra.mxu0 0.0
        %5155 = vmatprep.subr.mxu0 0.0
        %5156 = vmatpush1.msra.mxu0 0.0
        %5157 = vmatprep.subr.mxu0 0.0
        %5158 = vmatpush1.msra.mxu0 0.0
        %5159 = vmatprep.mubr.f32.mxu0 0.0
        %5160 = vmatmul.mubr.f32.gmra.mrb[0].mxu0 %v4216
        %v5161 = vpop.f32.mrb[0].mxu0
        %v5162 = vadd.f32 0.0, %v5161
        %v5163 = vpop.f32.mrb[0].mxu0
        %5164 = vmatprep.mubr.f32.mxu0 0.0
        %5165 = vmatmul.mubr.f32.gmra.mrb[0].mxu0 %v4218
        %v5166 = vpop.f32.mrb[0].mxu0
        %v5167 = vadd.f32 0.0, %v5166
        %v5168 = vpop.f32.mrb[0].mxu0
        %5169 = vmatprep.mubr.f32.mxu0 0.0
        %5170 = vmatmul.mubr.f32.gmra.mrb[0].mxu0 %v4220
        %v5171 = vpop.f32.mrb[0].mxu0
        %v5172 = vadd.f32 0.0, %v5171
        %v5173 = vpop.f32.mrb[0].mxu0
        %5174 = vmatprep.mubr.f32.mxu0 0.0
        %5175 = vmatmul.mubr.f32.gmra.mrb[0].mxu0 %v4222
        %v5176 = vpop.f32.mrb[0].mxu0
        %v5177 = vadd.f32 0.0, %v5176
        %v5178 = vpop.f32.mrb[0].mxu0
        %5179 = vmatprep.mubr.f32.mxu0 0.0
        %5180 = vmatmul.mubr.f32.gmra.mrb[0].mxu0 %v4224
        %v5181 = vpop.f32.mrb[0].mxu0
        %v5182 = vadd.f32 0.0, %v5181
        %v5183 = vpop.f32.mrb[0].mxu0
        %5184 = vmatprep.mubr.f32.mxu0 0.0
        %5185 = vmatmul.mubr.f32.gmra.mrb[0].mxu0 %v4226
        %v5186 = vpop.f32.mrb[0].mxu0
        %v5187 = vadd.f32 0.0, %v5186
        %v5188 = vpop.f32.mrb[0].mxu0
        %5189 = vmatprep.mubr.f32.mxu0 0.0
        %5190 = vmatmul.mubr.f32.gmra.mrb[0].mxu0 %v4228
        %v5191 = vpop.f32.mrb[0].mxu0
        %v5192 = vadd.f32 0.0, %v5191
        %v5193 = vpop.f32.mrb[0].mxu0
        %5194 = vmatprep.mubr.f32.mxu0 0.0
        %5195 = vmatmul.mubr.f32.gmra.mrb[0].mxu0 %v4230
        %v5196 = vpop.f32.mrb[0].mxu0
        %v5197 = vadd.f32 0.0, %v5196
        %v5198 = vpop.f32.mrb[0].mxu0
        %5199 = vmatprep.mubr.f32.mxu0 0.0
        %5200 = vmatmul.mubr.f32.gmra.mrb[0].mxu0 %v4232
        %v5201 = vpop.f32.mrb[0].mxu0
        %v5202 = vadd.f32 0.0, %v5201
        %v5203 = vpop.f32.mrb[0].mxu0
        %5204 = vmatprep.mubr.f32.mxu0 0.0
        %5205 = vmatmul.mubr.f32.gmra.mrb[0].mxu0 %v4234
        %v5206 = vpop.f32.mrb[0].mxu0
        %v5207 = vadd.f32 0.0, %v5206
        %v5208 = vpop.f32.mrb[0].mxu0
        %5209 = vmatprep.mubr.f32.mxu0 0.0
        %5210 = vmatmul.mubr.f32.gmra.mrb[0].mxu0 %v4236
        %v5211 = vpop.f32.mrb[0].mxu0
        %v5212 = vadd.f32 0.0, %v5211
        %v5213 = vpop.f32.mrb[0].mxu0
        %5214 = vmatprep.mubr.f32.mxu0 0.0
        %5215 = vmatmul.mubr.f32.gmra.mrb[0].mxu0 %v4238
        %v5216 = vpop.f32.mrb[0].mxu0
        %v5217 = vadd.f32 0.0, %v5216
        %v5218 = vpop.f32.mrb[0].mxu0
        %5219 = vmatprep.mubr.f32.mxu0 0.0
        %5220 = vmatmul.mubr.f32.gmra.mrb[0].mxu0 %v4240
        %v5221 = vpop.f32.mrb[0].mxu0
        %v5222 = vadd.f32 0.0, %v5221
        %v5223 = vpop.f32.mrb[0].mxu0
        %5224 = vmatprep.mubr.f32.mxu0 0.0
        %5225 = vmatmul.mubr.f32.gmra.mrb[0].mxu0 %v4242
        %v5226 = vpop.f32.mrb[0].mxu0
        %v5227 = vadd.f32 0.0, %v5226
        %v5228 = vpop.f32.mrb[0].mxu0
        %5229 = vmatprep.mubr.f32.mxu0 0.0
        %5230 = vmatmul.mubr.f32.gmra.mrb[0].mxu0 %v4244
        %v5231 = vpop.f32.mrb[0].mxu0
        %v5232 = vadd.f32 0.0, %v5231
        %v5233 = vpop.f32.mrb[0].mxu0
        %5234 = vmatprep.mubr.f32.mxu0 0.0
        %5235 = vmatmul.mubr.f32.gmra.mrb[0].mxu0 %v4246
        %v5236 = vpop.f32.mrb[0].mxu0
        %v5237 = vadd.f32 0.0, %v5236
        %v5238 = vpop.f32.mrb[0].mxu0
        %5239 = vmatprep.mubr.f32.mxu0 0.0
        %5240 = vmatmul.mubr.f32.gmra.mrb[0].mxu0 %v4248
        %v5241 = vpop.f32.mrb[0].mxu0
        %v5242 = vadd.f32 0.0, %v5241
        %v5243 = vpop.f32.mrb[0].mxu0
        %5244 = vmatprep.mubr.f32.mxu0 0.0
        %5245 = vmatmul.mubr.f32.gmra.mrb[0].mxu0 %v4250
        %v5246 = vpop.f32.mrb[0].mxu0
        %v5247 = vadd.f32 0.0, %v5246
        %v5248 = vpop.f32.mrb[0].mxu0
        %5249 = vmatprep.mubr.f32.mxu0 0.0
        %5250 = vmatmul.mubr.f32.gmra.mrb[0].mxu0 %v4252
        %v5251 = vpop.f32.mrb[0].mxu0
        %v5252 = vadd.f32 0.0, %v5251
        %v5253 = vpop.f32.mrb[0].mxu0
        %5254 = vmatprep.mubr.f32.mxu0 0.0
        %5255 = vmatmul.mubr.f32.gmra.mrb[0].mxu0 %v4254
        %v5256 = vpop.f32.mrb[0].mxu0
        %v5257 = vadd.f32 0.0, %v5256
        %v5258 = vpop.f32.mrb[0].mxu0
        %5259 = vmatprep.mubr.f32.mxu0 0.0
        %5260 = vmatmul.mubr.f32.gmra.mrb[0].mxu0 %v4256
        %v5261 = vpop.f32.mrb[0].mxu0
        %v5262 = vadd.f32 0.0, %v5261
        %v5263 = vpop.f32.mrb[0].mxu0
        %5264 = vmatprep.mubr.f32.mxu0 0.0
        %5265 = vmatmul.mubr.f32.gmra.mrb[0].mxu0 %v4258
        %v5266 = vpop.f32.mrb[0].mxu0
        %v5267 = vadd.f32 0.0, %v5266
        %v5268 = vpop.f32.mrb[0].mxu0
        %5269 = vmatprep.mubr.f32.mxu0 0.0
        %5270 = vmatmul.mubr.f32.gmra.mrb[0].mxu0 %v4260
        %v5271 = vpop.f32.mrb[0].mxu0
        %v5272 = vadd.f32 0.0, %v5271
        %v5273 = vpop.f32.mrb[0].mxu0
        %5274 = vmatprep.mubr.f32.mxu0 0.0
        %5275 = vmatmul.mubr.f32.gmra.mrb[0].mxu0 %v4262
        %v5276 = vpop.f32.mrb[0].mxu0
        %v5277 = vadd.f32 0.0, %v5276
        %v5278 = vpop.f32.mrb[0].mxu0
        %5279 = vmatprep.mubr.f32.mxu0 0.0
        %5280 = vmatmul.mubr.f32.gmra.mrb[0].mxu0 %v4264
        %v5281 = vpop.f32.mrb[0].mxu0
        %v5282 = vadd.f32 0.0, %v5281
        %v5283 = vpop.f32.mrb[0].mxu0
        %5284 = vmatprep.mubr.f32.mxu0 0.0
        %5285 = vmatmul.mubr.f32.gmra.mrb[0].mxu0 %v4266
        %v5286 = vpop.f32.mrb[0].mxu0
        %v5287 = vadd.f32 0.0, %v5286
        %v5288 = vpop.f32.mrb[0].mxu0
        %5289 = vmatprep.mubr.f32.mxu0 0.0
        %5290 = vmatmul.mubr.f32.gmra.mrb[0].mxu0 %v4268
        %v5291 = vpop.f32.mrb[0].mxu0
        %v5292 = vadd.f32 0.0, %v5291
        %v5293 = vpop.f32.mrb[0].mxu0
        %5294 = vmatprep.mubr.f32.mxu0 0.0
        %5295 = vmatmul.mubr.f32.gmra.mrb[0].mxu0 %v4270
        %v5296 = vpop.f32.mrb[0].mxu0
        %v5297 = vadd.f32 0.0, %v5296
        %v5298 = vpop.f32.mrb[0].mxu0
        %5299 = vmatprep.mubr.f32.mxu0 0.0
        %5300 = vmatmul.mubr.f32.gmra.mrb[0].mxu0 %v4272
        %v5301 = vpop.f32.mrb[0].mxu0
        %v5302 = vadd.f32 0.0, %v5301
        %v5303 = vpop.f32.mrb[0].mxu0
        %5304 = vmatprep.mubr.f32.mxu0 0.0
        %5305 = vmatmul.mubr.f32.gmra.mrb[0].mxu0 %v4274
        %v5306 = vpop.f32.mrb[0].mxu0
        %v5307 = vadd.f32 0.0, %v5306
        %v5308 = vpop.f32.mrb[0].mxu0
        %5309 = vmatprep.mubr.f32.mxu0 0.0
        %5310 = vmatmul.mubr.f32.gmra.mrb[0].mxu0 %v5091
        %v5311 = vpop.f32.mrb[0].mxu0
        %v5312 = vadd.f32 0.0, %v5311
        %v5313 = vpop.f32.mrb[0].mxu0
        %5314 = vmatprep.mubr.f32.mxu0 0.0
        %5315 = vmatmul.mubr.f32.gmra.mrb[0].mxu0 %v5093
        %v5316 = vpop.f32.mrb[0].mxu0
        %v5317 = vadd.f32 0.0, %v5316
        %v5318 = vpop.f32.mrb[0].mxu0
        %5319 = vdwg.mxu0
        %v5320 = vadd.f32 %v5046, %v5162
        %v5321 = vadd.f32 %v5047, %v5167
        %v5322 = vadd.f32 %v5048, %v5172
        %v5323 = vadd.f32 %v5049, %v5177
        %v5324 = vadd.f32 %v5050, %v5182
        %v5325 = vadd.f32 %v5051, %v5187
        %v5326 = vadd.f32 %v5052, %v5192
        %v5327 = vadd.f32 %v5053, %v5197
        %v5328 = vadd.f32 %v5054, %v5202
        %v5329 = vadd.f32 %v5055, %v5207
        %v5330 = vadd.f32 %v5056, %v5212
        %v5331 = vadd.f32 %v5057, %v5217
        %v5332 = vadd.f32 %v5058, %v5222
        %v5333 = vadd.f32 %v5059, %v5227
        %v5334 = vadd.f32 %v5060, %v5232
        %v5335 = vadd.f32 %v5061, %v5237
        %v5336 = vadd.f32 %v5062, %v5242
        %v5337 = vadd.f32 %v5063, %v5247
        %v5338 = vadd.f32 %v5064, %v5252
        %v5339 = vadd.f32 %v5065, %v5257
        %v5340 = vadd.f32 %v5066, %v5262
        %v5341 = vadd.f32 %v5067, %v5267
        %v5342 = vadd.f32 %v5068, %v5272
        %v5343 = vadd.f32 %v5069, %v5277
        %v5344 = vadd.f32 %v5070, %v5282
        %v5345 = vadd.f32 %v5071, %v5287
        %v5346 = vadd.f32 %v5072, %v5292
        %v5347 = vadd.f32 %v5073, %v5297
        %v5348 = vadd.f32 %v5074, %v5302
        %v5349 = vadd.f32 %v5075, %v5307
        %v5350 = vadd.f32 %v5076, %v5312
        %v5351 = vadd.f32 %v5077, %v5317
        %v5352 = vld [vmem:[%s3 + $0x180] sm:$0xff]
        %v5353 = vld [vmem:[%s3 + $0x188] sm:$0xff]
        %v5354 = vld [vmem:[%s3 + $0x190] sm:$0xff]
        %v5355 = vld [vmem:[%s3 + $0x198] sm:$0xff]
        %v5356 = vld [vmem:[%s3 + $0x1a0] sm:$0xff]
        %v5357 = vld [vmem:[%s3 + $0x1a8] sm:$0xff]
        %v5358 = vld [vmem:[%s3 + $0x1b0] sm:$0xff]
        %v5359 = vld [vmem:[%s3 + $0x1b8] sm:$0xff]
        %5360 = vmatprep.subr.mxu0 0.0
        %5361 = vmatpush1.msra.mxu0 %v5352
        %5362 = vmatprep.subr.mxu0 0.0
        %5363 = vmatpush1.msra.mxu0 %v5353
        %5364 = vmatprep.subr.mxu0 0.0
        %5365 = vmatpush1.msra.mxu0 %v5354
        %5366 = vmatprep.subr.mxu0 0.0
        %5367 = vmatpush1.msra.mxu0 %v5355
        %5368 = vmatprep.subr.mxu0 0.0
        %5369 = vmatpush1.msra.mxu0 %v5356
        %5370 = vmatprep.subr.mxu0 0.0
        %5371 = vmatpush1.msra.mxu0 %v5357
        %5372 = vmatprep.subr.mxu0 0.0
        %5373 = vmatpush1.msra.mxu0 %v5358
        %5374 = vmatprep.subr.mxu0 0.0
        %5375 = vmatpush1.msra.mxu0 %v5359
        %5376 = vmatprep.subr.mxu0 0.0
        %5377 = vmatpush1.msra.mxu0 0.0
        %5378 = vmatprep.subr.mxu0 0.0
        %5379 = vmatpush1.msra.mxu0 0.0
        %5380 = vmatprep.subr.mxu0 0.0
        %5381 = vmatpush1.msra.mxu0 0.0
        %5382 = vmatprep.subr.mxu0 0.0
        %5383 = vmatpush1.msra.mxu0 0.0
        %5384 = vmatprep.subr.mxu0 0.0
        %5385 = vmatpush1.msra.mxu0 0.0
        %5386 = vmatprep.subr.mxu0 0.0
        %5387 = vmatpush1.msra.mxu0 0.0
        %5388 = vmatprep.subr.mxu0 0.0
        %5389 = vmatpush1.msra.mxu0 0.0
        %5390 = vmatprep.subr.mxu0 0.0
        %5391 = vmatpush1.msra.mxu0 0.0
        %5392 = vmatprep.subr.mxu0 0.0
        %5393 = vmatpush1.msra.mxu0 0.0
        %5394 = vmatprep.subr.mxu0 0.0
        %5395 = vmatpush1.msra.mxu0 0.0
        %5396 = vmatprep.subr.mxu0 0.0
        %5397 = vmatpush1.msra.mxu0 0.0
        %5398 = vmatprep.subr.mxu0 0.0
        %5399 = vmatpush1.msra.mxu0 0.0
        %5400 = vmatprep.subr.mxu0 0.0
        %5401 = vmatpush1.msra.mxu0 0.0
        %5402 = vmatprep.subr.mxu0 0.0
        %5403 = vmatpush1.msra.mxu0 0.0
        %5404 = vmatprep.subr.mxu0 0.0
        %5405 = vmatpush1.msra.mxu0 0.0
        %5406 = vmatprep.subr.mxu0 0.0
        %5407 = vmatpush1.msra.mxu0 0.0
        %5408 = vmatprep.subr.mxu0 0.0
        %5409 = vmatpush1.msra.mxu0 0.0
        %5410 = vmatprep.subr.mxu0 0.0
        %5411 = vmatpush1.msra.mxu0 0.0
        %5412 = vmatprep.subr.mxu0 0.0
        %5413 = vmatpush1.msra.mxu0 0.0
        %5414 = vmatprep.subr.mxu0 0.0
        %5415 = vmatpush1.msra.mxu0 0.0
        %5416 = vmatprep.subr.mxu0 0.0
        %5417 = vmatpush1.msra.mxu0 0.0
        %5418 = vmatprep.subr.mxu0 0.0
        %5419 = vmatpush1.msra.mxu0 0.0
        %5420 = vmatprep.subr.mxu0 0.0
        %5421 = vmatpush1.msra.mxu0 0.0
        %5422 = vmatprep.subr.mxu0 0.0
        %5423 = vmatpush1.msra.mxu0 0.0
        %5424 = vmatprep.mubr.f32.mxu0 0.0
        %5425 = vmatmul.mubr.f32.gmra.mrb[0].mxu0 %v3852
        %v5426 = vpop.f32.mrb[0].mxu0
        %v5427 = vadd.f32 0.0, %v5426
        %v5428 = vpop.f32.mrb[0].mxu0
        %5429 = vmatprep.mubr.f32.mxu0 0.0
        %5430 = vmatmul.mubr.f32.gmra.mrb[0].mxu0 %v3854
        %v5431 = vpop.f32.mrb[0].mxu0
        %v5432 = vadd.f32 0.0, %v5431
        %v5433 = vpop.f32.mrb[0].mxu0
        %5434 = vmatprep.mubr.f32.mxu0 0.0
        %5435 = vmatmul.mubr.f32.gmra.mrb[0].mxu0 %v3856
        %v5436 = vpop.f32.mrb[0].mxu0
        %v5437 = vadd.f32 0.0, %v5436
        %v5438 = vpop.f32.mrb[0].mxu0
        %5439 = vmatprep.mubr.f32.mxu0 0.0
        %5440 = vmatmul.mubr.f32.gmra.mrb[0].mxu0 %v3858
        %v5441 = vpop.f32.mrb[0].mxu0
        %v5442 = vadd.f32 0.0, %v5441
        %v5443 = vpop.f32.mrb[0].mxu0
        %5444 = vmatprep.mubr.f32.mxu0 0.0
        %5445 = vmatmul.mubr.f32.gmra.mrb[0].mxu0 %v3860
        %v5446 = vpop.f32.mrb[0].mxu0
        %v5447 = vadd.f32 0.0, %v5446
        %v5448 = vpop.f32.mrb[0].mxu0
        %5449 = vmatprep.mubr.f32.mxu0 0.0
        %5450 = vmatmul.mubr.f32.gmra.mrb[0].mxu0 %v3862
        %v5451 = vpop.f32.mrb[0].mxu0
        %v5452 = vadd.f32 0.0, %v5451
        %v5453 = vpop.f32.mrb[0].mxu0
        %5454 = vmatprep.mubr.f32.mxu0 0.0
        %5455 = vmatmul.mubr.f32.gmra.mrb[0].mxu0 %v3864
        %v5456 = vpop.f32.mrb[0].mxu0
        %v5457 = vadd.f32 0.0, %v5456
        %v5458 = vpop.f32.mrb[0].mxu0
        %5459 = vmatprep.mubr.f32.mxu0 0.0
        %5460 = vmatmul.mubr.f32.gmra.mrb[0].mxu0 %v3866
        %v5461 = vpop.f32.mrb[0].mxu0
        %v5462 = vadd.f32 0.0, %v5461
        %v5463 = vpop.f32.mrb[0].mxu0
        %5464 = vmatprep.mubr.f32.mxu0 0.0
        %5465 = vmatmul.mubr.f32.gmra.mrb[0].mxu0 %v3868
        %v5466 = vpop.f32.mrb[0].mxu0
        %v5467 = vadd.f32 0.0, %v5466
        %v5468 = vpop.f32.mrb[0].mxu0
        %5469 = vmatprep.mubr.f32.mxu0 0.0
        %5470 = vmatmul.mubr.f32.gmra.mrb[0].mxu0 %v3870
        %v5471 = vpop.f32.mrb[0].mxu0
        %v5472 = vadd.f32 0.0, %v5471
        %v5473 = vpop.f32.mrb[0].mxu0
        %5474 = vmatprep.mubr.f32.mxu0 0.0
        %5475 = vmatmul.mubr.f32.gmra.mrb[0].mxu0 %v3872
        %v5476 = vpop.f32.mrb[0].mxu0
        %v5477 = vadd.f32 0.0, %v5476
        %v5478 = vpop.f32.mrb[0].mxu0
        %5479 = vmatprep.mubr.f32.mxu0 0.0
        %5480 = vmatmul.mubr.f32.gmra.mrb[0].mxu0 %v3874
        %v5481 = vpop.f32.mrb[0].mxu0
        %v5482 = vadd.f32 0.0, %v5481
        %v5483 = vpop.f32.mrb[0].mxu0
        %5484 = vmatprep.mubr.f32.mxu0 0.0
        %5485 = vmatmul.mubr.f32.gmra.mrb[0].mxu0 %v3876
        %v5486 = vpop.f32.mrb[0].mxu0
        %v5487 = vadd.f32 0.0, %v5486
        %v5488 = vpop.f32.mrb[0].mxu0
        %5489 = vmatprep.mubr.f32.mxu0 0.0
        %5490 = vmatmul.mubr.f32.gmra.mrb[0].mxu0 %v3878
        %v5491 = vpop.f32.mrb[0].mxu0
        %v5492 = vadd.f32 0.0, %v5491
        %v5493 = vpop.f32.mrb[0].mxu0
        %5494 = vmatprep.mubr.f32.mxu0 0.0
        %5495 = vmatmul.mubr.f32.gmra.mrb[0].mxu0 %v3880
        %v5496 = vpop.f32.mrb[0].mxu0
        %v5497 = vadd.f32 0.0, %v5496
        %v5498 = vpop.f32.mrb[0].mxu0
        %5499 = vmatprep.mubr.f32.mxu0 0.0
        %5500 = vmatmul.mubr.f32.gmra.mrb[0].mxu0 %v3882
        %v5501 = vpop.f32.mrb[0].mxu0
        %v5502 = vadd.f32 0.0, %v5501
        %v5503 = vpop.f32.mrb[0].mxu0
        %5504 = vmatprep.mubr.f32.mxu0 0.0
        %5505 = vmatmul.mubr.f32.gmra.mrb[0].mxu0 %v3884
        %v5506 = vpop.f32.mrb[0].mxu0
        %v5507 = vadd.f32 0.0, %v5506
        %v5508 = vpop.f32.mrb[0].mxu0
        %5509 = vmatprep.mubr.f32.mxu0 0.0
        %5510 = vmatmul.mubr.f32.gmra.mrb[0].mxu0 %v3886
        %v5511 = vpop.f32.mrb[0].mxu0
        %v5512 = vadd.f32 0.0, %v5511
        %v5513 = vpop.f32.mrb[0].mxu0
        %5514 = vmatprep.mubr.f32.mxu0 0.0
        %5515 = vmatmul.mubr.f32.gmra.mrb[0].mxu0 %v3888
        %v5516 = vpop.f32.mrb[0].mxu0
        %v5517 = vadd.f32 0.0, %v5516
        %v5518 = vpop.f32.mrb[0].mxu0
        %5519 = vmatprep.mubr.f32.mxu0 0.0
        %5520 = vmatmul.mubr.f32.gmra.mrb[0].mxu0 %v3890
        %v5521 = vpop.f32.mrb[0].mxu0
        %v5522 = vadd.f32 0.0, %v5521
        %v5523 = vpop.f32.mrb[0].mxu0
        %5524 = vmatprep.mubr.f32.mxu0 0.0
        %5525 = vmatmul.mubr.f32.gmra.mrb[0].mxu0 %v3892
        %v5526 = vpop.f32.mrb[0].mxu0
        %v5527 = vadd.f32 0.0, %v5526
        %v5528 = vpop.f32.mrb[0].mxu0
        %5529 = vmatprep.mubr.f32.mxu0 0.0
        %5530 = vmatmul.mubr.f32.gmra.mrb[0].mxu0 %v3894
        %v5531 = vpop.f32.mrb[0].mxu0
        %v5532 = vadd.f32 0.0, %v5531
        %v5533 = vpop.f32.mrb[0].mxu0
        %5534 = vmatprep.mubr.f32.mxu0 0.0
        %5535 = vmatmul.mubr.f32.gmra.mrb[0].mxu0 %v3896
        %v5536 = vpop.f32.mrb[0].mxu0
        %v5537 = vadd.f32 0.0, %v5536
        %v5538 = vpop.f32.mrb[0].mxu0
        %5539 = vmatprep.mubr.f32.mxu0 0.0
        %5540 = vmatmul.mubr.f32.gmra.mrb[0].mxu0 %v3898
        %v5541 = vpop.f32.mrb[0].mxu0
        %v5542 = vadd.f32 0.0, %v5541
        %v5543 = vpop.f32.mrb[0].mxu0
        %5544 = vmatprep.mubr.f32.mxu0 0.0
        %5545 = vmatmul.mubr.f32.gmra.mrb[0].mxu0 %v3900
        %v5546 = vpop.f32.mrb[0].mxu0
        %v5547 = vadd.f32 0.0, %v5546
        %v5548 = vpop.f32.mrb[0].mxu0
        %5549 = vmatprep.mubr.f32.mxu0 0.0
        %5550 = vmatmul.mubr.f32.gmra.mrb[0].mxu0 %v3902
        %v5551 = vpop.f32.mrb[0].mxu0
        %v5552 = vadd.f32 0.0, %v5551
        %v5553 = vpop.f32.mrb[0].mxu0
        %5554 = vmatprep.mubr.f32.mxu0 0.0
        %5555 = vmatmul.mubr.f32.gmra.mrb[0].mxu0 %v3904
        %v5556 = vpop.f32.mrb[0].mxu0
        %v5557 = vadd.f32 0.0, %v5556
        %v5558 = vpop.f32.mrb[0].mxu0
        %5559 = vmatprep.mubr.f32.mxu0 0.0
        %5560 = vmatmul.mubr.f32.gmra.mrb[0].mxu0 %v3906
        %v5561 = vpop.f32.mrb[0].mxu0
        %v5562 = vadd.f32 0.0, %v5561
        %v5563 = vpop.f32.mrb[0].mxu0
        %5564 = vmatprep.mubr.f32.mxu0 0.0
        %5565 = vmatmul.mubr.f32.gmra.mrb[0].mxu0 %v4542
        %v5566 = vpop.f32.mrb[0].mxu0
        %v5567 = vadd.f32 0.0, %v5566
        %v5568 = vpop.f32.mrb[0].mxu0
        %5569 = vmatprep.mubr.f32.mxu0 0.0
        %5570 = vmatmul.mubr.f32.gmra.mrb[0].mxu0 %v4544
        %v5571 = vpop.f32.mrb[0].mxu0
        %v5572 = vadd.f32 0.0, %v5571
        %v5573 = vpop.f32.mrb[0].mxu0
        %5574 = vmatprep.mubr.f32.mxu0 0.0
        %5575 = vmatmul.mubr.f32.gmra.mrb[0].mxu0 %v921
        %v5576 = vpop.f32.mrb[0].mxu0
        %v5577 = vadd.f32 0.0, %v5576
        %v5578 = vpop.f32.mrb[0].mxu0
        %5579 = vmatprep.mubr.f32.mxu0 0.0
        %5580 = vmatmul.mubr.f32.gmra.mrb[0].mxu0 %v921
        %v5581 = vpop.f32.mrb[0].mxu0
        %v5582 = vadd.f32 0.0, %v5581
        %v5583 = vpop.f32.mrb[0].mxu0
        %5584 = vdwg.mxu0
        %v5585 = vadd.f32 %v5320, %v5427
        %v5586 = vadd.f32 %v5321, %v5432
        %v5587 = vadd.f32 %v5322, %v5437
        %v5588 = vadd.f32 %v5323, %v5442
        %v5589 = vadd.f32 %v5324, %v5447
        %v5590 = vadd.f32 %v5325, %v5452
        %v5591 = vadd.f32 %v5326, %v5457
        %v5592 = vadd.f32 %v5327, %v5462
        %v5593 = vadd.f32 %v5328, %v5467
        %v5594 = vadd.f32 %v5329, %v5472
        %v5595 = vadd.f32 %v5330, %v5477
        %v5596 = vadd.f32 %v5331, %v5482
        %v5597 = vadd.f32 %v5332, %v5487
        %v5598 = vadd.f32 %v5333, %v5492
        %v5599 = vadd.f32 %v5334, %v5497
        %v5600 = vadd.f32 %v5335, %v5502
        %v5601 = vadd.f32 %v5336, %v5507
        %v5602 = vadd.f32 %v5337, %v5512
        %v5603 = vadd.f32 %v5338, %v5517
        %v5604 = vadd.f32 %v5339, %v5522
        %v5605 = vadd.f32 %v5340, %v5527
        %v5606 = vadd.f32 %v5341, %v5532
        %v5607 = vadd.f32 %v5342, %v5537
        %v5608 = vadd.f32 %v5343, %v5542
        %v5609 = vadd.f32 %v5344, %v5547
        %v5610 = vadd.f32 %v5345, %v5552
        %v5611 = vadd.f32 %v5346, %v5557
        %v5612 = vadd.f32 %v5347, %v5562
        %v5613 = vadd.f32 %v5348, %v5567
        %v5614 = vadd.f32 %v5349, %v5572
        %v5615 = vadd.f32 %v5350, %v5577
        %v5616 = vadd.f32 %v5351, %v5582
        %v5617 = vld [vmem:[%s3 + $0x1c0] sm:$0xff]
        %v5618 = vld [vmem:[%s3 + $0x1c8] sm:$0xff]
        %v5619 = vld [vmem:[%s3 + $0x1d0] sm:$0xff]
        %v5620 = vld [vmem:[%s3 + $0x1d8] sm:$0xff]
        %v5621 = vld [vmem:[%s3 + $0x1e0] sm:$0xff]
        %v5622 = vld [vmem:[%s3 + $0x1e8] sm:$0xff]
        %v5623 = vld [vmem:[%s3 + $0x1f0] sm:$0xff]
        %v5624 = vld [vmem:[%s3 + $0x1f8] sm:$0xff]
        %5625 = vmatprep.subr.mxu0 0.0
        %5626 = vmatpush1.msra.mxu0 %v5617
        %5627 = vmatprep.subr.mxu0 0.0
        %5628 = vmatpush1.msra.mxu0 %v5618
        %5629 = vmatprep.subr.mxu0 0.0
        %5630 = vmatpush1.msra.mxu0 %v5619
        %5631 = vmatprep.subr.mxu0 0.0
        %5632 = vmatpush1.msra.mxu0 %v5620
        %5633 = vmatprep.subr.mxu0 0.0
        %5634 = vmatpush1.msra.mxu0 %v5621
        %5635 = vmatprep.subr.mxu0 0.0
        %5636 = vmatpush1.msra.mxu0 %v5622
        %5637 = vmatprep.subr.mxu0 0.0
        %5638 = vmatpush1.msra.mxu0 %v5623
        %5639 = vmatprep.subr.mxu0 0.0
        %5640 = vmatpush1.msra.mxu0 %v5624
        %5641 = vmatprep.subr.mxu0 0.0
        %5642 = vmatpush1.msra.mxu0 0.0
        %5643 = vmatprep.subr.mxu0 0.0
        %5644 = vmatpush1.msra.mxu0 0.0
        %5645 = vmatprep.subr.mxu0 0.0
        %5646 = vmatpush1.msra.mxu0 0.0
        %5647 = vmatprep.subr.mxu0 0.0
        %5648 = vmatpush1.msra.mxu0 0.0
        %5649 = vmatprep.subr.mxu0 0.0
        %5650 = vmatpush1.msra.mxu0 0.0
        %5651 = vmatprep.subr.mxu0 0.0
        %5652 = vmatpush1.msra.mxu0 0.0
        %5653 = vmatprep.subr.mxu0 0.0
        %5654 = vmatpush1.msra.mxu0 0.0
        %5655 = vmatprep.subr.mxu0 0.0
        %5656 = vmatpush1.msra.mxu0 0.0
        %5657 = vmatprep.subr.mxu0 0.0
        %5658 = vmatpush1.msra.mxu0 0.0
        %5659 = vmatprep.subr.mxu0 0.0
        %5660 = vmatpush1.msra.mxu0 0.0
        %5661 = vmatprep.subr.mxu0 0.0
        %5662 = vmatpush1.msra.mxu0 0.0
        %5663 = vmatprep.subr.mxu0 0.0
        %5664 = vmatpush1.msra.mxu0 0.0
        %5665 = vmatprep.subr.mxu0 0.0
        %5666 = vmatpush1.msra.mxu0 0.0
        %5667 = vmatprep.subr.mxu0 0.0
        %5668 = vmatpush1.msra.mxu0 0.0
        %5669 = vmatprep.subr.mxu0 0.0
        %5670 = vmatpush1.msra.mxu0 0.0
        %5671 = vmatprep.subr.mxu0 0.0
        %5672 = vmatpush1.msra.mxu0 0.0
        %5673 = vmatprep.subr.mxu0 0.0
        %5674 = vmatpush1.msra.mxu0 0.0
        %5675 = vmatprep.subr.mxu0 0.0
        %5676 = vmatpush1.msra.mxu0 0.0
        %5677 = vmatprep.subr.mxu0 0.0
        %5678 = vmatpush1.msra.mxu0 0.0
        %5679 = vmatprep.subr.mxu0 0.0
        %5680 = vmatpush1.msra.mxu0 0.0
        %5681 = vmatprep.subr.mxu0 0.0
        %5682 = vmatpush1.msra.mxu0 0.0
        %5683 = vmatprep.subr.mxu0 0.0
        %5684 = vmatpush1.msra.mxu0 0.0
        %5685 = vmatprep.subr.mxu0 0.0
        %5686 = vmatpush1.msra.mxu0 0.0
        %5687 = vmatprep.subr.mxu0 0.0
        %5688 = vmatpush1.msra.mxu0 0.0
        %5689 = vmatprep.mubr.f32.mxu0 0.0
        %5690 = vmatmul.mubr.f32.gmra.mrb[0].mxu0 %v3567
        %v5691 = vpop.f32.mrb[0].mxu0
        %v5692 = vadd.f32 0.0, %v5691
        %v5693 = vpop.f32.mrb[0].mxu0
        %5694 = vmatprep.mubr.f32.mxu0 0.0
        %5695 = vmatmul.mubr.f32.gmra.mrb[0].mxu0 %v3569
        %v5696 = vpop.f32.mrb[0].mxu0
        %v5697 = vadd.f32 0.0, %v5696
        %v5698 = vpop.f32.mrb[0].mxu0
        %5699 = vmatprep.mubr.f32.mxu0 0.0
        %5700 = vmatmul.mubr.f32.gmra.mrb[0].mxu0 %v3571
        %v5701 = vpop.f32.mrb[0].mxu0
        %v5702 = vadd.f32 0.0, %v5701
        %v5703 = vpop.f32.mrb[0].mxu0
        %5704 = vmatprep.mubr.f32.mxu0 0.0
        %5705 = vmatmul.mubr.f32.gmra.mrb[0].mxu0 %v3573
        %v5706 = vpop.f32.mrb[0].mxu0
        %v5707 = vadd.f32 0.0, %v5706
        %v5708 = vpop.f32.mrb[0].mxu0
        %5709 = vmatprep.mubr.f32.mxu0 0.0
        %5710 = vmatmul.mubr.f32.gmra.mrb[0].mxu0 %v3575
        %v5711 = vpop.f32.mrb[0].mxu0
        %v5712 = vadd.f32 0.0, %v5711
        %v5713 = vpop.f32.mrb[0].mxu0
        %5714 = vmatprep.mubr.f32.mxu0 0.0
        %5715 = vmatmul.mubr.f32.gmra.mrb[0].mxu0 %v3577
        %v5716 = vpop.f32.mrb[0].mxu0
        %v5717 = vadd.f32 0.0, %v5716
        %v5718 = vpop.f32.mrb[0].mxu0
        %5719 = vmatprep.mubr.f32.mxu0 0.0
        %5720 = vmatmul.mubr.f32.gmra.mrb[0].mxu0 %v3579
        %v5721 = vpop.f32.mrb[0].mxu0
        %v5722 = vadd.f32 0.0, %v5721
        %v5723 = vpop.f32.mrb[0].mxu0
        %5724 = vmatprep.mubr.f32.mxu0 0.0
        %5725 = vmatmul.mubr.f32.gmra.mrb[0].mxu0 %v3581
        %v5726 = vpop.f32.mrb[0].mxu0
        %v5727 = vadd.f32 0.0, %v5726
        %v5728 = vpop.f32.mrb[0].mxu0
        %5729 = vmatprep.mubr.f32.mxu0 0.0
        %5730 = vmatmul.mubr.f32.gmra.mrb[0].mxu0 %v3583
        %v5731 = vpop.f32.mrb[0].mxu0
        %v5732 = vadd.f32 0.0, %v5731
        %v5733 = vpop.f32.mrb[0].mxu0
        %5734 = vmatprep.mubr.f32.mxu0 0.0
        %5735 = vmatmul.mubr.f32.gmra.mrb[0].mxu0 %v3585
        %v5736 = vpop.f32.mrb[0].mxu0
        %v5737 = vadd.f32 0.0, %v5736
        %v5738 = vpop.f32.mrb[0].mxu0
        %5739 = vmatprep.mubr.f32.mxu0 0.0
        %5740 = vmatmul.mubr.f32.gmra.mrb[0].mxu0 %v3587
        %v5741 = vpop.f32.mrb[0].mxu0
        %v5742 = vadd.f32 0.0, %v5741
        %v5743 = vpop.f32.mrb[0].mxu0
        %5744 = vmatprep.mubr.f32.mxu0 0.0
        %5745 = vmatmul.mubr.f32.gmra.mrb[0].mxu0 %v3589
        %v5746 = vpop.f32.mrb[0].mxu0
        %v5747 = vadd.f32 0.0, %v5746
        %v5748 = vpop.f32.mrb[0].mxu0
        %5749 = vmatprep.mubr.f32.mxu0 0.0
        %5750 = vmatmul.mubr.f32.gmra.mrb[0].mxu0 %v3591
        %v5751 = vpop.f32.mrb[0].mxu0
        %v5752 = vadd.f32 0.0, %v5751
        %v5753 = vpop.f32.mrb[0].mxu0
        %5754 = vmatprep.mubr.f32.mxu0 0.0
        %5755 = vmatmul.mubr.f32.gmra.mrb[0].mxu0 %v3593
        %v5756 = vpop.f32.mrb[0].mxu0
        %v5757 = vadd.f32 0.0, %v5756
        %v5758 = vpop.f32.mrb[0].mxu0
        %5759 = vmatprep.mubr.f32.mxu0 0.0
        %5760 = vmatmul.mubr.f32.gmra.mrb[0].mxu0 %v3595
        %v5761 = vpop.f32.mrb[0].mxu0
        %v5762 = vadd.f32 0.0, %v5761
        %v5763 = vpop.f32.mrb[0].mxu0
        %5764 = vmatprep.mubr.f32.mxu0 0.0
        %5765 = vmatmul.mubr.f32.gmra.mrb[0].mxu0 %v3597
        %v5766 = vpop.f32.mrb[0].mxu0
        %v5767 = vadd.f32 0.0, %v5766
        %v5768 = vpop.f32.mrb[0].mxu0
        %5769 = vmatprep.mubr.f32.mxu0 0.0
        %5770 = vmatmul.mubr.f32.gmra.mrb[0].mxu0 %v3599
        %v5771 = vpop.f32.mrb[0].mxu0
        %v5772 = vadd.f32 0.0, %v5771
        %v5773 = vpop.f32.mrb[0].mxu0
        %5774 = vmatprep.mubr.f32.mxu0 0.0
        %5775 = vmatmul.mubr.f32.gmra.mrb[0].mxu0 %v3601
        %v5776 = vpop.f32.mrb[0].mxu0
        %v5777 = vadd.f32 0.0, %v5776
        %v5778 = vpop.f32.mrb[0].mxu0
        %5779 = vmatprep.mubr.f32.mxu0 0.0
        %5780 = vmatmul.mubr.f32.gmra.mrb[0].mxu0 %v3603
        %v5781 = vpop.f32.mrb[0].mxu0
        %v5782 = vadd.f32 0.0, %v5781
        %v5783 = vpop.f32.mrb[0].mxu0
        %5784 = vmatprep.mubr.f32.mxu0 0.0
        %5785 = vmatmul.mubr.f32.gmra.mrb[0].mxu0 %v3605
        %v5786 = vpop.f32.mrb[0].mxu0
        %v5787 = vadd.f32 0.0, %v5786
        %v5788 = vpop.f32.mrb[0].mxu0
        %5789 = vmatprep.mubr.f32.mxu0 0.0
        %5790 = vmatmul.mubr.f32.gmra.mrb[0].mxu0 %v3607
        %v5791 = vpop.f32.mrb[0].mxu0
        %v5792 = vadd.f32 0.0, %v5791
        %v5793 = vpop.f32.mrb[0].mxu0
        %5794 = vmatprep.mubr.f32.mxu0 0.0
        %5795 = vmatmul.mubr.f32.gmra.mrb[0].mxu0 %v3609
        %v5796 = vpop.f32.mrb[0].mxu0
        %v5797 = vadd.f32 0.0, %v5796
        %v5798 = vpop.f32.mrb[0].mxu0
        %5799 = vmatprep.mubr.f32.mxu0 0.0
        %5800 = vmatmul.mubr.f32.gmra.mrb[0].mxu0 %v3611
        %v5801 = vpop.f32.mrb[0].mxu0
        %v5802 = vadd.f32 0.0, %v5801
        %v5803 = vpop.f32.mrb[0].mxu0
        %5804 = vmatprep.mubr.f32.mxu0 0.0
        %5805 = vmatmul.mubr.f32.gmra.mrb[0].mxu0 %v3613
        %v5806 = vpop.f32.mrb[0].mxu0
        %v5807 = vadd.f32 0.0, %v5806
        %v5808 = vpop.f32.mrb[0].mxu0
        %5809 = vmatprep.mubr.f32.mxu0 0.0
        %5810 = vmatmul.mubr.f32.gmra.mrb[0].mxu0 %v3615
        %v5811 = vpop.f32.mrb[0].mxu0
        %v5812 = vadd.f32 0.0, %v5811
        %v5813 = vpop.f32.mrb[0].mxu0
        %5814 = vmatprep.mubr.f32.mxu0 0.0
        %5815 = vmatmul.mubr.f32.gmra.mrb[0].mxu0 %v3617
        %v5816 = vpop.f32.mrb[0].mxu0
        %v5817 = vadd.f32 0.0, %v5816
        %v5818 = vpop.f32.mrb[0].mxu0
        %5819 = vmatprep.mubr.f32.mxu0 0.0
        %5820 = vmatmul.mubr.f32.gmra.mrb[0].mxu0 %v3619
        %v5821 = vpop.f32.mrb[0].mxu0
        %v5822 = vadd.f32 0.0, %v5821
        %v5823 = vpop.f32.mrb[0].mxu0
        %5824 = vmatprep.mubr.f32.mxu0 0.0
        %5825 = vmatmul.mubr.f32.gmra.mrb[0].mxu0 %v3621
        %v5826 = vpop.f32.mrb[0].mxu0
        %v5827 = vadd.f32 0.0, %v5826
        %v5828 = vpop.f32.mrb[0].mxu0
        %5829 = vmatprep.mubr.f32.mxu0 0.0
        %5830 = vmatmul.mubr.f32.gmra.mrb[0].mxu0 %v4817
        %v5831 = vpop.f32.mrb[0].mxu0
        %v5832 = vadd.f32 0.0, %v5831
        %v5833 = vpop.f32.mrb[0].mxu0
        %5834 = vmatprep.mubr.f32.mxu0 0.0
        %5835 = vmatmul.mubr.f32.gmra.mrb[0].mxu0 %v4819
        %v5836 = vpop.f32.mrb[0].mxu0
        %v5837 = vadd.f32 0.0, %v5836
        %v5838 = vpop.f32.mrb[0].mxu0
        %5839 = vmatprep.mubr.f32.mxu0 0.0
        %5840 = vmatmul.mubr.f32.gmra.mrb[0].mxu0 %v634
        %v5841 = vpop.f32.mrb[0].mxu0
        %v5842 = vadd.f32 0.0, %v5841
        %v5843 = vpop.f32.mrb[0].mxu0
        %5844 = vmatprep.mubr.f32.mxu0 0.0
        %5845 = vmatmul.mubr.f32.gmra.mrb[0].mxu0 %v634
        %v5846 = vpop.f32.mrb[0].mxu0
        %v5847 = vadd.f32 0.0, %v5846
        %v5848 = vpop.f32.mrb[0].mxu0
        %5849 = vdwg.mxu0
        %v5850 = vadd.f32 %v5585, %v5692
        %v5851 = vadd.f32 %v5586, %v5697
        %v5852 = vadd.f32 %v5587, %v5702
        %v5853 = vadd.f32 %v5588, %v5707
        %v5854 = vadd.f32 %v5589, %v5712
        %v5855 = vadd.f32 %v5590, %v5717
        %v5856 = vadd.f32 %v5591, %v5722
        %v5857 = vadd.f32 %v5592, %v5727
        %v5858 = vadd.f32 %v5593, %v5732
        %v5859 = vadd.f32 %v5594, %v5737
        %v5860 = vadd.f32 %v5595, %v5742
        %v5861 = vadd.f32 %v5596, %v5747
        %v5862 = vadd.f32 %v5597, %v5752
        %v5863 = vadd.f32 %v5598, %v5757
        %v5864 = vadd.f32 %v5599, %v5762
        %v5865 = vadd.f32 %v5600, %v5767
        %v5866 = vadd.f32 %v5601, %v5772
        %v5867 = vadd.f32 %v5602, %v5777
        %v5868 = vadd.f32 %v5603, %v5782
        %v5869 = vadd.f32 %v5604, %v5787
        %v5870 = vadd.f32 %v5605, %v5792
        %v5871 = vadd.f32 %v5606, %v5797
        %v5872 = vadd.f32 %v5607, %v5802
        %v5873 = vadd.f32 %v5608, %v5807
        %v5874 = vadd.f32 %v5609, %v5812
        %v5875 = vadd.f32 %v5610, %v5817
        %v5876 = vadd.f32 %v5611, %v5822
        %v5877 = vadd.f32 %v5612, %v5827
        %v5878 = vadd.f32 %v5613, %v5832
        %v5879 = vadd.f32 %v5614, %v5837
        %v5880 = vadd.f32 %v5615, %v5842
        %v5881 = vadd.f32 %v5616, %v5847
        %v5882 = vld [vmem:[%s3 + $0x200] sm:$0xff]
        %v5883 = vld [vmem:[%s3 + $0x208] sm:$0xff]
        %v5884 = vld [vmem:[%s3 + $0x210] sm:$0xff]
        %v5885 = vld [vmem:[%s3 + $0x218] sm:$0xff]
        %v5886 = vld [vmem:[%s3 + $0x220] sm:$0xff]
        %v5887 = vld [vmem:[%s3 + $0x228] sm:$0xff]
        %v5888 = vld [vmem:[%s3 + $0x230] sm:$0xff]
        %v5889 = vld [vmem:[%s3 + $0x238] sm:$0xff]
        %5890 = vmatprep.subr.mxu0 0.0
        %5891 = vmatpush1.msra.mxu0 %v5882
        %5892 = vmatprep.subr.mxu0 0.0
        %5893 = vmatpush1.msra.mxu0 %v5883
        %5894 = vmatprep.subr.mxu0 0.0
        %5895 = vmatpush1.msra.mxu0 %v5884
        %5896 = vmatprep.subr.mxu0 0.0
        %5897 = vmatpush1.msra.mxu0 %v5885
        %5898 = vmatprep.subr.mxu0 0.0
        %5899 = vmatpush1.msra.mxu0 %v5886
        %5900 = vmatprep.subr.mxu0 0.0
        %5901 = vmatpush1.msra.mxu0 %v5887
        %5902 = vmatprep.subr.mxu0 0.0
        %5903 = vmatpush1.msra.mxu0 %v5888
        %5904 = vmatprep.subr.mxu0 0.0
        %5905 = vmatpush1.msra.mxu0 %v5889
        %5906 = vmatprep.subr.mxu0 0.0
        %5907 = vmatpush1.msra.mxu0 0.0
        %5908 = vmatprep.subr.mxu0 0.0
        %5909 = vmatpush1.msra.mxu0 0.0
        %5910 = vmatprep.subr.mxu0 0.0
        %5911 = vmatpush1.msra.mxu0 0.0
        %5912 = vmatprep.subr.mxu0 0.0
        %5913 = vmatpush1.msra.mxu0 0.0
        %5914 = vmatprep.subr.mxu0 0.0
        %5915 = vmatpush1.msra.mxu0 0.0
        %5916 = vmatprep.subr.mxu0 0.0
        %5917 = vmatpush1.msra.mxu0 0.0
        %5918 = vmatprep.subr.mxu0 0.0
        %5919 = vmatpush1.msra.mxu0 0.0
        %5920 = vmatprep.subr.mxu0 0.0
        %5921 = vmatpush1.msra.mxu0 0.0
        %5922 = vmatprep.subr.mxu0 0.0
        %5923 = vmatpush1.msra.mxu0 0.0
        %5924 = vmatprep.subr.mxu0 0.0
        %5925 = vmatpush1.msra.mxu0 0.0
        %5926 = vmatprep.subr.mxu0 0.0
        %5927 = vmatpush1.msra.mxu0 0.0
        %5928 = vmatprep.subr.mxu0 0.0
        %5929 = vmatpush1.msra.mxu0 0.0
        %5930 = vmatprep.subr.mxu0 0.0
        %5931 = vmatpush1.msra.mxu0 0.0
        %5932 = vmatprep.subr.mxu0 0.0
        %5933 = vmatpush1.msra.mxu0 0.0
        %5934 = vmatprep.subr.mxu0 0.0
        %5935 = vmatpush1.msra.mxu0 0.0
        %5936 = vmatprep.subr.mxu0 0.0
        %5937 = vmatpush1.msra.mxu0 0.0
        %5938 = vmatprep.subr.mxu0 0.0
        %5939 = vmatpush1.msra.mxu0 0.0
        %5940 = vmatprep.subr.mxu0 0.0
        %5941 = vmatpush1.msra.mxu0 0.0
        %5942 = vmatprep.subr.mxu0 0.0
        %5943 = vmatpush1.msra.mxu0 0.0
        %5944 = vmatprep.subr.mxu0 0.0
        %5945 = vmatpush1.msra.mxu0 0.0
        %5946 = vmatprep.subr.mxu0 0.0
        %5947 = vmatpush1.msra.mxu0 0.0
        %5948 = vmatprep.subr.mxu0 0.0
        %5949 = vmatpush1.msra.mxu0 0.0
        %5950 = vmatprep.subr.mxu0 0.0
        %5951 = vmatpush1.msra.mxu0 0.0
        %5952 = vmatprep.subr.mxu0 0.0
        %5953 = vmatpush1.msra.mxu0 0.0
        %5954 = vmatprep.mubr.f32.mxu0 0.0
        %5955 = vmatmul.mubr.f32.gmra.mrb[0].mxu0 %v4220
        %v5956 = vpop.f32.mrb[0].mxu0
        %v5957 = vadd.f32 0.0, %v5956
        %v5958 = vpop.f32.mrb[0].mxu0
        %5959 = vmatprep.mubr.f32.mxu0 0.0
        %5960 = vmatmul.mubr.f32.gmra.mrb[0].mxu0 %v4222
        %v5961 = vpop.f32.mrb[0].mxu0
        %v5962 = vadd.f32 0.0, %v5961
        %v5963 = vpop.f32.mrb[0].mxu0
        %5964 = vmatprep.mubr.f32.mxu0 0.0
        %5965 = vmatmul.mubr.f32.gmra.mrb[0].mxu0 %v4224
        %v5966 = vpop.f32.mrb[0].mxu0
        %v5967 = vadd.f32 0.0, %v5966
        %v5968 = vpop.f32.mrb[0].mxu0
        %5969 = vmatprep.mubr.f32.mxu0 0.0
        %5970 = vmatmul.mubr.f32.gmra.mrb[0].mxu0 %v4226
        %v5971 = vpop.f32.mrb[0].mxu0
        %v5972 = vadd.f32 0.0, %v5971
        %v5973 = vpop.f32.mrb[0].mxu0
        %5974 = vmatprep.mubr.f32.mxu0 0.0
        %5975 = vmatmul.mubr.f32.gmra.mrb[0].mxu0 %v4228
        %v5976 = vpop.f32.mrb[0].mxu0
        %v5977 = vadd.f32 0.0, %v5976
        %v5978 = vpop.f32.mrb[0].mxu0
        %5979 = vmatprep.mubr.f32.mxu0 0.0
        %5980 = vmatmul.mubr.f32.gmra.mrb[0].mxu0 %v4230
        %v5981 = vpop.f32.mrb[0].mxu0
        %v5982 = vadd.f32 0.0, %v5981
        %v5983 = vpop.f32.mrb[0].mxu0
        %5984 = vmatprep.mubr.f32.mxu0 0.0
        %5985 = vmatmul.mubr.f32.gmra.mrb[0].mxu0 %v4232
        %v5986 = vpop.f32.mrb[0].mxu0
        %v5987 = vadd.f32 0.0, %v5986
        %v5988 = vpop.f32.mrb[0].mxu0
        %5989 = vmatprep.mubr.f32.mxu0 0.0
        %5990 = vmatmul.mubr.f32.gmra.mrb[0].mxu0 %v4234
        %v5991 = vpop.f32.mrb[0].mxu0
        %v5992 = vadd.f32 0.0, %v5991
        %v5993 = vpop.f32.mrb[0].mxu0
        %5994 = vmatprep.mubr.f32.mxu0 0.0
        %5995 = vmatmul.mubr.f32.gmra.mrb[0].mxu0 %v4236
        %v5996 = vpop.f32.mrb[0].mxu0
        %v5997 = vadd.f32 0.0, %v5996
        %v5998 = vpop.f32.mrb[0].mxu0
        %5999 = vmatprep.mubr.f32.mxu0 0.0
        %6000 = vmatmul.mubr.f32.gmra.mrb[0].mxu0 %v4238
        %v6001 = vpop.f32.mrb[0].mxu0
        %v6002 = vadd.f32 0.0, %v6001
        %v6003 = vpop.f32.mrb[0].mxu0
        %6004 = vmatprep.mubr.f32.mxu0 0.0
        %6005 = vmatmul.mubr.f32.gmra.mrb[0].mxu0 %v4240
        %v6006 = vpop.f32.mrb[0].mxu0
        %v6007 = vadd.f32 0.0, %v6006
        %v6008 = vpop.f32.mrb[0].mxu0
        %6009 = vmatprep.mubr.f32.mxu0 0.0
        %6010 = vmatmul.mubr.f32.gmra.mrb[0].mxu0 %v4242
        %v6011 = vpop.f32.mrb[0].mxu0
        %v6012 = vadd.f32 0.0, %v6011
        %v6013 = vpop.f32.mrb[0].mxu0
        %6014 = vmatprep.mubr.f32.mxu0 0.0
        %6015 = vmatmul.mubr.f32.gmra.mrb[0].mxu0 %v4244
        %v6016 = vpop.f32.mrb[0].mxu0
        %v6017 = vadd.f32 0.0, %v6016
        %v6018 = vpop.f32.mrb[0].mxu0
        %6019 = vmatprep.mubr.f32.mxu0 0.0
        %6020 = vmatmul.mubr.f32.gmra.mrb[0].mxu0 %v4246
        %v6021 = vpop.f32.mrb[0].mxu0
        %v6022 = vadd.f32 0.0, %v6021
        %v6023 = vpop.f32.mrb[0].mxu0
        %6024 = vmatprep.mubr.f32.mxu0 0.0
        %6025 = vmatmul.mubr.f32.gmra.mrb[0].mxu0 %v4248
        %v6026 = vpop.f32.mrb[0].mxu0
        %v6027 = vadd.f32 0.0, %v6026
        %v6028 = vpop.f32.mrb[0].mxu0
        %6029 = vmatprep.mubr.f32.mxu0 0.0
        %6030 = vmatmul.mubr.f32.gmra.mrb[0].mxu0 %v4250
        %v6031 = vpop.f32.mrb[0].mxu0
        %v6032 = vadd.f32 0.0, %v6031
        %v6033 = vpop.f32.mrb[0].mxu0
        %6034 = vmatprep.mubr.f32.mxu0 0.0
        %6035 = vmatmul.mubr.f32.gmra.mrb[0].mxu0 %v4252
        %v6036 = vpop.f32.mrb[0].mxu0
        %v6037 = vadd.f32 0.0, %v6036
        %v6038 = vpop.f32.mrb[0].mxu0
        %6039 = vmatprep.mubr.f32.mxu0 0.0
        %6040 = vmatmul.mubr.f32.gmra.mrb[0].mxu0 %v4254
        %v6041 = vpop.f32.mrb[0].mxu0
        %v6042 = vadd.f32 0.0, %v6041
        %v6043 = vpop.f32.mrb[0].mxu0
        %6044 = vmatprep.mubr.f32.mxu0 0.0
        %6045 = vmatmul.mubr.f32.gmra.mrb[0].mxu0 %v4256
        %v6046 = vpop.f32.mrb[0].mxu0
        %v6047 = vadd.f32 0.0, %v6046
        %v6048 = vpop.f32.mrb[0].mxu0
        %6049 = vmatprep.mubr.f32.mxu0 0.0
        %6050 = vmatmul.mubr.f32.gmra.mrb[0].mxu0 %v4258
        %v6051 = vpop.f32.mrb[0].mxu0
        %v6052 = vadd.f32 0.0, %v6051
        %v6053 = vpop.f32.mrb[0].mxu0
        %6054 = vmatprep.mubr.f32.mxu0 0.0
        %6055 = vmatmul.mubr.f32.gmra.mrb[0].mxu0 %v4260
        %v6056 = vpop.f32.mrb[0].mxu0
        %v6057 = vadd.f32 0.0, %v6056
        %v6058 = vpop.f32.mrb[0].mxu0
        %6059 = vmatprep.mubr.f32.mxu0 0.0
        %6060 = vmatmul.mubr.f32.gmra.mrb[0].mxu0 %v4262
        %v6061 = vpop.f32.mrb[0].mxu0
        %v6062 = vadd.f32 0.0, %v6061
        %v6063 = vpop.f32.mrb[0].mxu0
        %6064 = vmatprep.mubr.f32.mxu0 0.0
        %6065 = vmatmul.mubr.f32.gmra.mrb[0].mxu0 %v4264
        %v6066 = vpop.f32.mrb[0].mxu0
        %v6067 = vadd.f32 0.0, %v6066
        %v6068 = vpop.f32.mrb[0].mxu0
        %6069 = vmatprep.mubr.f32.mxu0 0.0
        %6070 = vmatmul.mubr.f32.gmra.mrb[0].mxu0 %v4266
        %v6071 = vpop.f32.mrb[0].mxu0
        %v6072 = vadd.f32 0.0, %v6071
        %v6073 = vpop.f32.mrb[0].mxu0
        %6074 = vmatprep.mubr.f32.mxu0 0.0
        %6075 = vmatmul.mubr.f32.gmra.mrb[0].mxu0 %v4268
        %v6076 = vpop.f32.mrb[0].mxu0
        %v6077 = vadd.f32 0.0, %v6076
        %v6078 = vpop.f32.mrb[0].mxu0
        %6079 = vmatprep.mubr.f32.mxu0 0.0
        %6080 = vmatmul.mubr.f32.gmra.mrb[0].mxu0 %v4270
        %v6081 = vpop.f32.mrb[0].mxu0
        %v6082 = vadd.f32 0.0, %v6081
        %v6083 = vpop.f32.mrb[0].mxu0
        %6084 = vmatprep.mubr.f32.mxu0 0.0
        %6085 = vmatmul.mubr.f32.gmra.mrb[0].mxu0 %v4272
        %v6086 = vpop.f32.mrb[0].mxu0
        %v6087 = vadd.f32 0.0, %v6086
        %v6088 = vpop.f32.mrb[0].mxu0
        %6089 = vmatprep.mubr.f32.mxu0 0.0
        %6090 = vmatmul.mubr.f32.gmra.mrb[0].mxu0 %v4274
        %v6091 = vpop.f32.mrb[0].mxu0
        %v6092 = vadd.f32 0.0, %v6091
        %v6093 = vpop.f32.mrb[0].mxu0
        %6094 = vmatprep.mubr.f32.mxu0 0.0
        %6095 = vmatmul.mubr.f32.gmra.mrb[0].mxu0 %v5091
        %v6096 = vpop.f32.mrb[0].mxu0
        %v6097 = vadd.f32 0.0, %v6096
        %v6098 = vpop.f32.mrb[0].mxu0
        %6099 = vmatprep.mubr.f32.mxu0 0.0
        %6100 = vmatmul.mubr.f32.gmra.mrb[0].mxu0 %v5093
        %v6101 = vpop.f32.mrb[0].mxu0
        %v6102 = vadd.f32 0.0, %v6101
        %v6103 = vpop.f32.mrb[0].mxu0
        %6104 = vmatprep.mubr.f32.mxu0 0.0
        %6105 = vmatmul.mubr.f32.gmra.mrb[0].mxu0 %v1294
        %v6106 = vpop.f32.mrb[0].mxu0
        %v6107 = vadd.f32 0.0, %v6106
        %v6108 = vpop.f32.mrb[0].mxu0
        %6109 = vmatprep.mubr.f32.mxu0 0.0
        %6110 = vmatmul.mubr.f32.gmra.mrb[0].mxu0 %v1294
        %v6111 = vpop.f32.mrb[0].mxu0
        %v6112 = vadd.f32 0.0, %v6111
        %v6113 = vpop.f32.mrb[0].mxu0
        %6114 = vdwg.mxu0
        %v6115 = vadd.f32 %v5850, %v5957
        %v6116 = vadd.f32 %v5851, %v5962
        %v6117 = vadd.f32 %v5852, %v5967
        %v6118 = vadd.f32 %v5853, %v5972
        %v6119 = vadd.f32 %v5854, %v5977
        %v6120 = vadd.f32 %v5855, %v5982
        %v6121 = vadd.f32 %v5856, %v5987
        %v6122 = vadd.f32 %v5857, %v5992
        %v6123 = vadd.f32 %v5858, %v5997
        %v6124 = vadd.f32 %v5859, %v6002
        %v6125 = vadd.f32 %v5860, %v6007
        %v6126 = vadd.f32 %v5861, %v6012
        %v6127 = vadd.f32 %v5862, %v6017
        %v6128 = vadd.f32 %v5863, %v6022
        %v6129 = vadd.f32 %v5864, %v6027
        %v6130 = vadd.f32 %v5865, %v6032
        %v6131 = vadd.f32 %v5866, %v6037
        %v6132 = vadd.f32 %v5867, %v6042
        %v6133 = vadd.f32 %v5868, %v6047
        %v6134 = vadd.f32 %v5869, %v6052
        %v6135 = vadd.f32 %v5870, %v6057
        %v6136 = vadd.f32 %v5871, %v6062
        %v6137 = vadd.f32 %v5872, %v6067
        %v6138 = vadd.f32 %v5873, %v6072
        %v6139 = vadd.f32 %v5874, %v6077
        %v6140 = vadd.f32 %v5875, %v6082
        %v6141 = vadd.f32 %v5876, %v6087
        %v6142 = vadd.f32 %v5877, %v6092
        %v6143 = vadd.f32 %v5878, %v6097
        %v6144 = vadd.f32 %v5879, %v6102
        %v6145 = vadd.f32 %v5880, %v6107
        %v6146 = vadd.f32 %v5881, %v6112
        %v6147 = vld [vmem:[%s4] sm:$0x1]
        %v6149 = vlaneseq
        %v6150 = vshrl.u32 %v6149, 7
        %v6151 = vsub.s32 0, %v6150
        %v6152 = vrot.slane %v6147, %v6151
        %v6154 = vadd.f32 %v6115, %v6152
        %v6155 = vadd.f32 %v6116, %v6152
        %v6156 = vadd.f32 %v6117, %v6152
        %v6157 = vadd.f32 %v6118, %v6152
        %v6158 = vadd.f32 %v6119, %v6152
        %v6159 = vadd.f32 %v6120, %v6152
        %v6160 = vadd.f32 %v6121, %v6152
        %v6161 = vadd.f32 %v6122, %v6152
        %v6162 = vadd.f32 %v6123, %v6152
        %v6163 = vadd.f32 %v6124, %v6152
        %v6164 = vadd.f32 %v6125, %v6152
        %v6165 = vadd.f32 %v6126, %v6152
        %v6166 = vadd.f32 %v6127, %v6152
        %v6167 = vadd.f32 %v6128, %v6152
        %v6168 = vadd.f32 %v6129, %v6152
        %v6169 = vadd.f32 %v6130, %v6152
        %v6170 = vadd.f32 %v6131, %v6152
        %v6171 = vadd.f32 %v6132, %v6152
        %v6172 = vadd.f32 %v6133, %v6152
        %v6173 = vadd.f32 %v6134, %v6152
        %v6174 = vadd.f32 %v6135, %v6152
        %v6175 = vadd.f32 %v6136, %v6152
        %v6176 = vadd.f32 %v6137, %v6152
        %v6177 = vadd.f32 %v6138, %v6152
        %v6178 = vadd.f32 %v6139, %v6152
        %v6179 = vadd.f32 %v6140, %v6152
        %v6180 = vadd.f32 %v6141, %v6152
        %v6181 = vadd.f32 %v6142, %v6152
        %v6182 = vadd.f32 %v6143, %v6152
        %v6183 = vadd.f32 %v6144, %v6152
        %v6184 = vadd.f32 %v6145, %v6152
        %v6185 = vadd.f32 %v6146, %v6152
        %v6186 = vsel %vm633, %v6154, 0.0
        %v6187 = vsel %vm633, %v6155, 0.0
        %v6188 = vadd.f32 %v6186, %v6187
        %v6189 = vsel %vm633, %v6156, 0.0
        %v6190 = vadd.f32 %v6188, %v6189
        %v6191 = vsel %vm633, %v6157, 0.0
        %v6192 = vadd.f32 %v6190, %v6191
        %v6193 = vsel %vm633, %v6158, 0.0
        %v6194 = vadd.f32 %v6192, %v6193
        %v6195 = vsel %vm633, %v6159, 0.0
        %v6196 = vadd.f32 %v6194, %v6195
        %v6197 = vsel %vm633, %v6160, 0.0
        %v6198 = vadd.f32 %v6196, %v6197
        %v6199 = vsel %vm633, %v6161, 0.0
        %v6200 = vadd.f32 %v6198, %v6199
        %v6201 = vsel %vm633, %v6162, 0.0
        %v6202 = vadd.f32 %v6200, %v6201
        %v6203 = vsel %vm633, %v6163, 0.0
        %v6204 = vadd.f32 %v6202, %v6203
        %v6205 = vsel %vm633, %v6164, 0.0
        %v6206 = vadd.f32 %v6204, %v6205
        %v6207 = vsel %vm633, %v6165, 0.0
        %v6208 = vadd.f32 %v6206, %v6207
        %v6209 = vsel %vm633, %v6166, 0.0
        %v6210 = vadd.f32 %v6208, %v6209
        %v6211 = vsel %vm633, %v6167, 0.0
        %v6212 = vadd.f32 %v6210, %v6211
        %v6213 = vsel %vm633, %v6168, 0.0
        %v6214 = vadd.f32 %v6212, %v6213
        %v6215 = vsel %vm633, %v6169, 0.0
        %v6216 = vadd.f32 %v6214, %v6215
        %v6217 = vsel %vm633, %v6170, 0.0
        %v6218 = vadd.f32 %v6216, %v6217
        %v6219 = vsel %vm633, %v6171, 0.0
        %v6220 = vadd.f32 %v6218, %v6219
        %v6221 = vsel %vm633, %v6172, 0.0
        %v6222 = vadd.f32 %v6220, %v6221
        %v6223 = vsel %vm633, %v6173, 0.0
        %v6224 = vadd.f32 %v6222, %v6223
        %v6225 = vsel %vm633, %v6174, 0.0
        %v6226 = vadd.f32 %v6224, %v6225
        %v6227 = vsel %vm633, %v6175, 0.0
        %v6228 = vadd.f32 %v6226, %v6227
        %v6229 = vsel %vm633, %v6176, 0.0
        %v6230 = vadd.f32 %v6228, %v6229
        %v6231 = vsel %vm633, %v6177, 0.0
        %v6232 = vadd.f32 %v6230, %v6231
        %v6233 = vsel %vm633, %v6178, 0.0
        %v6234 = vadd.f32 %v6232, %v6233
        %v6235 = vsel %vm633, %v6179, 0.0
        %v6236 = vadd.f32 %v6234, %v6235
        %v6237 = vsel %vm633, %v6180, 0.0
        %v6238 = vadd.f32 %v6236, %v6237
        %v6239 = vsel %vm633, %v6181, 0.0
        %v6240 = vadd.f32 %v6238, %v6239
        %v6241 = vsel %vm633, %v6182, 0.0
        %v6242 = vadd.f32 %v6240, %v6241
        %v6243 = vsel %vm633, %v6183, 0.0
        %v6244 = vadd.f32 %v6242, %v6243
        %v6245 = vsel %vm633, %v6184, 0.0
        %v6246 = vadd.f32 %v6244, %v6245
        %v6247 = vsel %vm633, %v6185, 0.0
        %v6248 = vadd.f32 %v6246, %v6247
        %v6249 = vrot.slane %v6248, 4
        %v6250 = vadd.f32 %v6248, %v6249
        %v6251 = vrot.slane %v6250, 2
        %v6252 = vadd.f32 %v6250, %v6251
        %v6253 = vrot.slane %v6252, 1
        %v6254 = vadd.f32 %v6252, %v6253
        %v6255 = vmul.f32 %v6254, 0.00390625
        %v6256 = vld [vmem:[%s5] sm:$0xff]
        %v6257 = vld [vmem:[%s5 + $0x8] sm:$0xff]
        %v6258 = vld [vmem:[%s5 + $0x10] sm:$0xff]
        %v6259 = vld [vmem:[%s5 + $0x18] sm:$0xff]
        %v6260 = vld [vmem:[%s5 + $0x20] sm:$0xff]
        %v6261 = vld [vmem:[%s5 + $0x28] sm:$0xff]
        %v6262 = vld [vmem:[%s5 + $0x30] sm:$0xff]
        %v6263 = vld [vmem:[%s5 + $0x38] sm:$0xff]
        %v6264 = vld [vmem:[%s6] sm:$0x1]
        %v6266 = vsel %vm633, %v6255, 0
        %6268 = vmatprep.subr.mxu0 0.0
        %6269 = vmatpush1.msra.mxu0 %v6256
        %6270 = vmatprep.subr.mxu0 0.0
        %6271 = vmatpush1.msra.mxu0 %v6257
        %6272 = vmatprep.subr.mxu0 0.0
        %6273 = vmatpush1.msra.mxu0 %v6258
        %6274 = vmatprep.subr.mxu0 0.0
        %6275 = vmatpush1.msra.mxu0 %v6259
        %6276 = vmatprep.subr.mxu0 0.0
        %6277 = vmatpush1.msra.mxu0 %v6260
        %6278 = vmatprep.subr.mxu0 0.0
        %6279 = vmatpush1.msra.mxu0 %v6261
        %6280 = vmatprep.subr.mxu0 0.0
        %6281 = vmatpush1.msra.mxu0 %v6262
        %6282 = vmatprep.subr.mxu0 0.0
        %6283 = vmatpush1.msra.mxu0 %v6263
        %6284 = vmatprep.subr.mxu0 0.0
        %6285 = vmatpush1.msra.mxu0 0.0
        %6286 = vmatprep.subr.mxu0 0.0
        %6287 = vmatpush1.msra.mxu0 0.0
        %6288 = vmatprep.subr.mxu0 0.0
        %6289 = vmatpush1.msra.mxu0 0.0
        %6290 = vmatprep.subr.mxu0 0.0
        %6291 = vmatpush1.msra.mxu0 0.0
        %6292 = vmatprep.subr.mxu0 0.0
        %6293 = vmatpush1.msra.mxu0 0.0
        %6294 = vmatprep.subr.mxu0 0.0
        %6295 = vmatpush1.msra.mxu0 0.0
        %6296 = vmatprep.subr.mxu0 0.0
        %6297 = vmatpush1.msra.mxu0 0.0
        %6298 = vmatprep.subr.mxu0 0.0
        %6299 = vmatpush1.msra.mxu0 0.0
        %6300 = vmatprep.subr.mxu0 0.0
        %6301 = vmatpush1.msra.mxu0 0.0
        %6302 = vmatprep.subr.mxu0 0.0
        %6303 = vmatpush1.msra.mxu0 0.0
        %6304 = vmatprep.subr.mxu0 0.0
        %6305 = vmatpush1.msra.mxu0 0.0
        %6306 = vmatprep.subr.mxu0 0.0
        %6307 = vmatpush1.msra.mxu0 0.0
        %6308 = vmatprep.subr.mxu0 0.0
        %6309 = vmatpush1.msra.mxu0 0.0
        %6310 = vmatprep.subr.mxu0 0.0
        %6311 = vmatpush1.msra.mxu0 0.0
        %6312 = vmatprep.subr.mxu0 0.0
        %6313 = vmatpush1.msra.mxu0 0.0
        %6314 = vmatprep.subr.mxu0 0.0
        %6315 = vmatpush1.msra.mxu0 0.0
        %6316 = vmatprep.subr.mxu0 0.0
        %6317 = vmatpush1.msra.mxu0 0.0
        %6318 = vmatprep.subr.mxu0 0.0
        %6319 = vmatpush1.msra.mxu0 0.0
        %6320 = vmatprep.subr.mxu0 0.0
        %6321 = vmatpush1.msra.mxu0 0.0
        %6322 = vmatprep.subr.mxu0 0.0
        %6323 = vmatpush1.msra.mxu0 0.0
        %6324 = vmatprep.subr.mxu0 0.0
        %6325 = vmatpush1.msra.mxu0 0.0
        %6326 = vmatprep.subr.mxu0 0.0
        %6327 = vmatpush1.msra.mxu0 0.0
        %6328 = vmatprep.subr.mxu0 0.0
        %6329 = vmatpush1.msra.mxu0 0.0
        %6330 = vmatprep.subr.mxu0 0.0
        %6331 = vmatpush1.msra.mxu0 0.0
        %6332 = vmatprep.mubr.f32.mxu0 0.0
        %6333 = vmatmul.mubr.f32.gmra.mrb[0].mxu0 %v6266
        %v6334 = vpop.f32.mrb[0].mxu0
        %v6335 = vadd.f32 %v6264, %v6334
        %v6336 = vpop.f32.mrb[0].mxu0
        %6337 = vdwg.mxu0
        %v6338 = vmax.f32 %v6335, 0.0
        %v6339 = vld [vmem:[%s7] sm:$0xf]
        %v6340 = vld [vmem:[%s8] sm:$0x1]
        %vm6341 = vcmask 31744
        %v6343 = vsel %vm6341, %v6338, 0
        %vm6345 = vcmask 1043456
        %v6347 = vsel %vm6345, %v6339, 0
        %6349 = vmatprep.subr.mxu0 0.0
        %6350 = vmatpush1.msra.mxu0 %v6347
        %6351 = vmatprep.subr.mxu0 0.0
        %6352 = vmatpush1.msra.mxu0 0.0
        %6353 = vmatprep.subr.mxu0 0.0
        %6354 = vmatpush1.msra.mxu0 0.0
        %6355 = vmatprep.subr.mxu0 0.0
        %6356 = vmatpush1.msra.mxu0 0.0
        %6357 = vmatprep.subr.mxu0 0.0
        %6358 = vmatpush1.msra.mxu0 0.0
        %6359 = vmatprep.subr.mxu0 0.0
        %6360 = vmatpush1.msra.mxu0 0.0
        %6361 = vmatprep.subr.mxu0 0.0
        %6362 = vmatpush1.msra.mxu0 0.0
        %6363 = vmatprep.subr.mxu0 0.0
        %6364 = vmatpush1.msra.mxu0 0.0
        %6365 = vmatprep.subr.mxu0 0.0
        %6366 = vmatpush1.msra.mxu0 0.0
        %6367 = vmatprep.subr.mxu0 0.0
        %6368 = vmatpush1.msra.mxu0 0.0
        %6369 = vmatprep.subr.mxu0 0.0
        %6370 = vmatpush1.msra.mxu0 0.0
        %6371 = vmatprep.subr.mxu0 0.0
        %6372 = vmatpush1.msra.mxu0 0.0
        %6373 = vmatprep.subr.mxu0 0.0
        %6374 = vmatpush1.msra.mxu0 0.0
        %6375 = vmatprep.subr.mxu0 0.0
        %6376 = vmatpush1.msra.mxu0 0.0
        %6377 = vmatprep.subr.mxu0 0.0
        %6378 = vmatpush1.msra.mxu0 0.0
        %6379 = vmatprep.subr.mxu0 0.0
        %6380 = vmatpush1.msra.mxu0 0.0
        %6381 = vmatprep.subr.mxu0 0.0
        %6382 = vmatpush1.msra.mxu0 0.0
        %6383 = vmatprep.subr.mxu0 0.0
        %6384 = vmatpush1.msra.mxu0 0.0
        %6385 = vmatprep.subr.mxu0 0.0
        %6386 = vmatpush1.msra.mxu0 0.0
        %6387 = vmatprep.subr.mxu0 0.0
        %6388 = vmatpush1.msra.mxu0 0.0
        %6389 = vmatprep.subr.mxu0 0.0
        %6390 = vmatpush1.msra.mxu0 0.0
        %6391 = vmatprep.subr.mxu0 0.0
        %6392 = vmatpush1.msra.mxu0 0.0
        %6393 = vmatprep.subr.mxu0 0.0
        %6394 = vmatpush1.msra.mxu0 0.0
        %6395 = vmatprep.subr.mxu0 0.0
        %6396 = vmatpush1.msra.mxu0 0.0
        %6397 = vmatprep.subr.mxu0 0.0
        %6398 = vmatpush1.msra.mxu0 0.0
        %6399 = vmatprep.subr.mxu0 0.0
        %6400 = vmatpush1.msra.mxu0 0.0
        %6401 = vmatprep.subr.mxu0 0.0
        %6402 = vmatpush1.msra.mxu0 0.0
        %6403 = vmatprep.subr.mxu0 0.0
        %6404 = vmatpush1.msra.mxu0 0.0
        %6405 = vmatprep.subr.mxu0 0.0
        %6406 = vmatpush1.msra.mxu0 0.0
        %6407 = vmatprep.subr.mxu0 0.0
        %6408 = vmatpush1.msra.mxu0 0.0
        %6409 = vmatprep.subr.mxu0 0.0
        %6410 = vmatpush1.msra.mxu0 0.0
        %6411 = vmatprep.subr.mxu0 0.0
        %6412 = vmatpush1.msra.mxu0 0.0
        %6413 = vmatprep.mubr.f32.mxu0 0.0
        %6414 = vmatmul.mubr.f32.gmra.mrb[0].mxu0 %v6343
        %v6415 = vpop.f32.mrb[0].mxu0
        %v6416 = vadd.f32 %v6340, %v6415
        %v6417 = vpop.f32.mrb[0].mxu0
        %6418 = vdwg.mxu0
        %v6419 = vxor.u32 %v6416, 2147483648
        %v6420 = vmul.f32 %v6419, 1.442695
        %v6421 = vpow.pop %v6420
        %v6422 = vadd.f32 %v6421, 1.0
        %v6423 = vrcp.pop %v6422
        %v6424 = vmul.f32 1.0, %v6423
        %v6425 = vlaneseq
        %v6426 = vshrl.u32 %v6425, 7
        %v6427 = vsub.s32 0, %v6426
        %v6428 = vrot.slane %v6424, %v6427
        %v6429 = vmul.f32 %v6154, %v6428
        %v6430 = vmul.f32 %v6155, %v6428
        %v6431 = vmul.f32 %v6156, %v6428
        %v6432 = vmul.f32 %v6157, %v6428
        %v6433 = vmul.f32 %v6158, %v6428
        %v6434 = vmul.f32 %v6159, %v6428
        %v6435 = vmul.f32 %v6160, %v6428
        %v6436 = vmul.f32 %v6161, %v6428
        %v6437 = vmul.f32 %v6162, %v6428
        %v6438 = vmul.f32 %v6163, %v6428
        %v6439 = vmul.f32 %v6164, %v6428
        %v6440 = vmul.f32 %v6165, %v6428
        %v6441 = vmul.f32 %v6166, %v6428
        %v6442 = vmul.f32 %v6167, %v6428
        %v6443 = vmul.f32 %v6168, %v6428
        %v6444 = vmul.f32 %v6169, %v6428
        %v6445 = vmul.f32 %v6170, %v6428
        %v6446 = vmul.f32 %v6171, %v6428
        %v6447 = vmul.f32 %v6172, %v6428
        %v6448 = vmul.f32 %v6173, %v6428
        %v6449 = vmul.f32 %v6174, %v6428
        %v6450 = vmul.f32 %v6175, %v6428
        %v6451 = vmul.f32 %v6176, %v6428
        %v6452 = vmul.f32 %v6177, %v6428
        %v6453 = vmul.f32 %v6178, %v6428
        %v6454 = vmul.f32 %v6179, %v6428
        %v6455 = vmul.f32 %v6180, %v6428
        %v6456 = vmul.f32 %v6181, %v6428
        %v6457 = vmul.f32 %v6182, %v6428
        %v6458 = vmul.f32 %v6183, %v6428
        %v6459 = vmul.f32 %v6184, %v6428
        %v6460 = vmul.f32 %v6185, %v6428
        %v6461 = vadd.f32 %v6429, %v331
        %v6462 = vadd.f32 %v6430, %v332
        %v6463 = vadd.f32 %v6431, %v333
        %v6464 = vadd.f32 %v6432, %v334
        %v6465 = vadd.f32 %v6433, %v335
        %v6466 = vadd.f32 %v6434, %v336
        %v6467 = vadd.f32 %v6435, %v337
        %v6468 = vadd.f32 %v6436, %v338
        %v6469 = vadd.f32 %v6437, %v339
        %v6470 = vadd.f32 %v6438, %v340
        %v6471 = vadd.f32 %v6439, %v341
        %v6472 = vadd.f32 %v6440, %v342
        %v6473 = vadd.f32 %v6441, %v343
        %v6474 = vadd.f32 %v6442, %v344
        %v6475 = vadd.f32 %v6443, %v345
        %v6476 = vadd.f32 %v6444, %v346
        %v6477 = vadd.f32 %v6445, %v347
        %v6478 = vadd.f32 %v6446, %v348
        %v6479 = vadd.f32 %v6447, %v349
        %v6480 = vadd.f32 %v6448, %v350
        %v6481 = vadd.f32 %v6449, %v351
        %v6482 = vadd.f32 %v6450, %v352
        %v6483 = vadd.f32 %v6451, %v353
        %v6484 = vadd.f32 %v6452, %v354
        %v6485 = vadd.f32 %v6453, %v355
        %v6486 = vadd.f32 %v6454, %v356
        %v6487 = vadd.f32 %v6455, %v357
        %v6488 = vadd.f32 %v6456, %v358
        %v6489 = vadd.f32 %v6457, %v359
        %v6490 = vadd.f32 %v6458, %v360
        %v6491 = vadd.f32 %v6459, %v361
        %v6492 = vadd.f32 %v6460, %v362
        %6493 = vst.msk [vmem:[%s325] sm:$0xff] %vm633, %v6461
        %6494 = vst.msk [vmem:[%s325 + $0x8] sm:$0xff] %vm633, %v6462
        %6495 = vst.msk [vmem:[%s325 + $0x10] sm:$0xff] %vm633, %v6463
        %6496 = vst.msk [vmem:[%s325 + $0x18] sm:$0xff] %vm633, %v6464
        %6497 = vst.msk [vmem:[%s325 + $0x20] sm:$0xff] %vm633, %v6465
        %6498 = vst.msk [vmem:[%s325 + $0x28] sm:$0xff] %vm633, %v6466
        %6499 = vst.msk [vmem:[%s325 + $0x30] sm:$0xff] %vm633, %v6467
        %6500 = vst.msk [vmem:[%s325 + $0x38] sm:$0xff] %vm633, %v6468
        %6501 = vst.msk [vmem:[%s325 + $0x40] sm:$0xff] %vm633, %v6469
        %6502 = vst.msk [vmem:[%s325 + $0x48] sm:$0xff] %vm633, %v6470
        %6503 = vst.msk [vmem:[%s325 + $0x50] sm:$0xff] %vm633, %v6471
        %6504 = vst.msk [vmem:[%s325 + $0x58] sm:$0xff] %vm633, %v6472
        %6505 = vst.msk [vmem:[%s325 + $0x60] sm:$0xff] %vm633, %v6473
        %6506 = vst.msk [vmem:[%s325 + $0x68] sm:$0xff] %vm633, %v6474
        %6507 = vst.msk [vmem:[%s325 + $0x70] sm:$0xff] %vm633, %v6475
        %6508 = vst.msk [vmem:[%s325 + $0x78] sm:$0xff] %vm633, %v6476
        %6509 = vst.msk [vmem:[%s325 + $0x80] sm:$0xff] %vm633, %v6477
        %6510 = vst.msk [vmem:[%s325 + $0x88] sm:$0xff] %vm633, %v6478
        %6511 = vst.msk [vmem:[%s325 + $0x90] sm:$0xff] %vm633, %v6479
        %6512 = vst.msk [vmem:[%s325 + $0x98] sm:$0xff] %vm633, %v6480
        %6513 = vst.msk [vmem:[%s325 + $0xa0] sm:$0xff] %vm633, %v6481
        %6514 = vst.msk [vmem:[%s325 + $0xa8] sm:$0xff] %vm633, %v6482
        %6515 = vst.msk [vmem:[%s325 + $0xb0] sm:$0xff] %vm633, %v6483
        %6516 = vst.msk [vmem:[%s325 + $0xb8] sm:$0xff] %vm633, %v6484
        %6517 = vst.msk [vmem:[%s325 + $0xc0] sm:$0xff] %vm633, %v6485
        %6518 = vst.msk [vmem:[%s325 + $0xc8] sm:$0xff] %vm633, %v6486
        %6519 = vst.msk [vmem:[%s325 + $0xd0] sm:$0xff] %vm633, %v6487
        %6520 = vst.msk [vmem:[%s325 + $0xd8] sm:$0xff] %vm633, %v6488
        %6521 = vst.msk [vmem:[%s325 + $0xe0] sm:$0xff] %vm633, %v6489
        %6522 = vst.msk [vmem:[%s325 + $0xe8] sm:$0xff] %vm633, %v6490
        %6523 = vst.msk [vmem:[%s325 + $0xf0] sm:$0xff] %vm633, %v6491
        %6524 = vst.msk [vmem:[%s325 + $0xf8] sm:$0xff] %vm633, %v6492
        %s6525 = sand.u32 %s225, 1
        %s6526 = scalar_lea.sflag [#allocation3], %s6525
        %s6527 = sand.u32 %s225, 1
        %s6528 = smul.addr %s6527, 256
        %s6529 = scalar_lea.vmem [#allocation2], %s6528
        // Predicated region
        $region57: #{rcab_forward.1} parent=55 // pred_check
          %p6530 = pneg %p235
        $region58: #{rcab_forward.1} parent=55 // pred_check_branch
          %6532 = sbr.rel (%p6530) target = $region60
        $region59: #{rcab_forward.1} parent=55 // pred_region
          %s6534 = ssub.s32 4096, 4096
          %6535 = vsyncadd %s6526, %s6534
          %s6536 = smul.addr %s23, 32
          %s6537 = smul.addr %s6536, 128
          %s6538 = scalar_lea.hbm %s9, %s6537
          %s6539 = sshll.u32 %s6529, 4
          %s6540 = int_to_ptr.vmem [resolvable:$true] %s6539
          %6545 = dma.vmem_to_hbm [thread:$0]  %s6540, 4096, %s6538, %s6526, 128, 128, 8
        $region60: #{rcab_forward.1} parent=55 // pred_fallthru
          _
      $region56: #{rcab_forward.1} parent=5 // pred_fallthru
        _
      %p6546 = scmp.le.s32.totalorder 2, %s18
      // Predicated region
      $region61: #{rcab_forward.1} parent=5 // pred_check
        %p6547 = pneg %p6546
      $region62: #{rcab_forward.1} parent=5 // pred_check_branch
        %6549 = sbr.rel (%p6547) target = $region64
      $region63: #{rcab_forward.1} parent=5 // pred_region
        %s6550 = ssub.s32 %s18, 2
        // Predicated region
        $region65: #{rcab_forward.1} parent=63 // pred_check
          %p6551 = pneg %p241
        $region66: #{rcab_forward.1} parent=63 // pred_check_branch
          %6553 = sbr.rel (%p6551) target = $region68
        $region67: #{rcab_forward.1} parent=63 // pred_region
          %s6554 = sand.u32 %s226, 1
          %s6555 = scalar_lea.sflag [#allocation3], %s6554
          %s6556 = sand.u32 %s226, 1
          %s6557 = smul.addr %s6556, 256
          %s6558 = scalar_lea.vmem [#allocation2], %s6557
          %6559 = dma.done %s6555, 4096
        $region68: #{rcab_forward.1} parent=63 // pred_fallthru
          _
      $region64: #{rcab_forward.1} parent=5 // pred_fallthru
        _
    $region6: #{rcab_forward.1} parent=1 // loop_footer
      %s22 = sadd.s32 1, %s18
    $region7: #{rcab_forward.1} parent=1 // loop_footer_branch
      %17 = sbr.rel target = $region3
    $region8: #{rcab_forward.1} parent=1 // loop_exit
      _
    %6560 = vsyncpa [#allocation3], 1
    %s6561 = scalar_lea.sflag [#allocation3], 1
    %6562 = vsyncpa %s6561, 1

</llo_original>
